<compile_context>
chip_gen: v7x
topology: tpu7x:2x2x1
jax: 0.10.0
libtpu: 0.0.40
codegen_flags: <defaults>
</compile_context>

<pallas_src>
import math

import jax
import jax.numpy as jnp
import numpy as np
from jax.experimental import pallas as pl
from jax.experimental.pallas import tpu as pltpu

D_MODEL = 128
N_HEAD = 2
HEAD_DIM = D_MODEL // N_HEAD
D_FF = 512
N_LAYERS = 3
MAX_LEN = 24
LN_EPS = 1e-5


# ----------------------------- Pallas kernel ---------------------------------

def _layernorm(x, gamma, beta):
    mu = jnp.mean(x, axis=-1, keepdims=True)
    var = jnp.mean((x - mu) ** 2, axis=-1, keepdims=True)
    return (x - mu) * jax.lax.rsqrt(var + LN_EPS) * gamma + beta


def _make_kernel(b_tile, n_tok, seq, c3, in_dim):
    """Kernel factory; all shape constants are baked in as Python ints."""
    D, Hd, H = D_MODEL, HEAD_DIM, N_HEAD
    scale = 1.0 / math.sqrt(Hd)
    f32 = jnp.float32

    def kernel(x_ref, ctx_ref, small_ref, wqkv_ref, bqkv_ref, wo_ref,
               vec_ref, w1_ref, b1_ref, w2_ref, lin_ref, o_ref):
        mmt = wqkv_ref.dtype  # matmul dtype (f32, or bf16 on v6e/v7x)

        # --- unpack the packed 128-wide parameter slab (layout fixed in wrapper) ---
        yw = small_ref[0:in_dim, :]                       # y_up weight rows
        yb = small_ref[in_dim:in_dim + 1, :]              # y_up bias
        c0 = in_dim + 1
        cw = small_ref[c0:c0 + c3, :]                     # ctx_up weight rows
        cbias = small_ref[c0 + c3:c0 + c3 + 1, :]         # ctx_up bias
        p0 = c0 + c3 + 1
        pe_tok = small_ref[p0:p0 + n_tok, :]              # pe positions 1..N (x tokens)
        pe_ctx = small_ref[p0 + n_tok:p0 + seq, :]        # pe position 0 (ctx token)

        # --- y_up / ctx_up embeddings + positional encoding on the VPU ---
        pieces = []
        for b in range(b_tile):
            xb = x_ref[b]                                 # (N, in_dim)
            emb = yb + pe_tok                             # (N, D)
            for kk in range(in_dim):
                emb = emb + xb[:, kk:kk + 1] * yw[kk:kk + 1, :]
            cin = ctx_ref[b]                              # (1, c3)
            ctx = cbias + pe_ctx                          # (1, D)
            for kk in range(c3):
                ctx = ctx + cin[:, kk:kk + 1] * cw[kk:kk + 1, :]
            pieces += [emb, ctx]                          # context token LAST per batch elem
        h = jnp.concatenate(pieces, axis=0)               # (R, D), R = b_tile * seq
        # TODO(synk): dropout (p=0.1) in PositionalEncoding / encoder layers omitted (eval mode).

        # --- 3 post-norm encoder layers, statically unrolled, weights resident in VMEM ---
        for l in range(N_LAYERS):
            vl = vec_ref[l]                               # (6, D) packed per-layer vectors
            bo, g1, be1, b2o, g2, be2 = (vl[i:i + 1, :] for i in range(6))

            # fused QKV projection: ONE (R,128)x(128,384) MXU dot, lane-dense output
            qkv = jnp.dot(h.astype(mmt), wqkv_ref[l],
                          preferred_element_type=f32) + bqkv_ref[l]   # (R, 3D)

            attn_pieces = []
            for b in range(b_tile):
                qb = qkv[b * seq:(b + 1) * seq, :]        # (S, 3D) one batch element
                heads = []
                for hd in range(H):
                    qh = qb[:, hd * Hd:(hd + 1) * Hd]
                    kh = qb[:, D + hd * Hd:D + (hd + 1) * Hd]
                    vh = qb[:, 2 * D + hd * Hd:2 * D + (hd + 1) * Hd]
                    # contract last dims of q and k -> no explicit transpose of kh
                    s = jax.lax.dot_general(qh, kh, (((1,), (1,)), ((), ())),
                                            preferred_element_type=f32) * scale
                    s = s - jnp.max(s, axis=-1, keepdims=True)
                    p = jnp.exp(s)
                    p = p * pl.reciprocal(jnp.sum(p, axis=-1, keepdims=True),
                                          approx=True)
                    heads.append(jnp.dot(p, vh, preferred_element_type=f32))   # (S, Hd)
                attn_pieces.append(jnp.concatenate(heads, axis=-1))            # (S, D)
            attn = jnp.concatenate(attn_pieces, axis=0)                        # (R, D)
            # single full-depth (128) output projection for the whole batch block
            attn = jnp.dot(attn.astype(mmt), wo_ref[l],
                           preferred_element_type=f32) + bo
            h = _layernorm(h + attn, g1, be1)

            # feed-forward (ReLU)
            hid = jnp.maximum(
                jnp.dot(h.astype(mmt), w1_ref[l], preferred_element_type=f32)
                + b1_ref[l], 0.0)                                              # (R, F)
            ff = jnp.dot(hid.astype(mmt), w2_ref[l],
                         preferred_element_type=f32) + b2o                     # (R, D)
            h = _layernorm(h + ff, g2, be2)

        # --- final projection; drop the (trailing) context token per batch element ---
        out = jnp.dot(h, lin_ref[0:D, :], preferred_element_type=f32) \
              + lin_ref[D:D + 1, :]                                            # (R, P)
        for b in range(b_tile):
            o_ref[b] = out[b * seq:b * seq + n_tok, :]

    return kernel


# ----------------------------- wrapper ----------------------------------------

def _num_batch_blocks(batch):
    """One grid step per TensorCore: 2 blocks on v7x (2 TC/chip), else 1."""
    try:
        kind = jax.devices()[0].device_kind.lower()
    except Exception:
        kind = ""
    if "v7" in kind and batch >= 2 and batch % 2 == 0:
        return 2
    return 1


def _pack_params(params, n_tok, matmul_dtype):
    """Pack the many tiny parameter arrays into a few kernel inputs."""
    seq = n_tok + 1
    pe = params["pe"]
    # context token moved to the END of the sequence -> reorder pe rows to match
    pe_reord = jnp.concatenate([pe[1:seq], pe[0:1]], axis=0)
    small = jnp.concatenate([params["y_up_w"], params["y_up_b"],
                             params["ctx_up_w"], params["ctx_up_b"],
                             pe_reord], axis=0)                           # (2+1+C3+1+S, D)
    wqkv = jnp.concatenate([params["wq"], params["wk"], params["wv"]],
                           axis=-1).astype(matmul_dtype)                  # (L, D, 3D)
    bqkv = jnp.concatenate([params["bq"], params["bk"], params["bv"]], axis=-1)
    wo = params["wo"].astype(matmul_dtype)                                # (L, D, D)
    vec = jnp.concatenate([params["bo"], params["ln1_g"], params["ln1_b"],
                           params["b2"], params["ln2_g"], params["ln2_b"]],
                          axis=1)                                         # (L, 6, D)
    w1 = params["w1"].astype(matmul_dtype)
    b1 = params["b1"]
    w2 = params["w2"].astype(matmul_dtype)
    lin = jnp.concatenate([params["lin_w"], params["lin_b"]], axis=0)     # (D+1, P)
    return small, wqkv, bqkv, wo, vec, w1, b1, w2, lin


def transformer_linear_forward(params, x, beta, context, *, matmul_dtype=jnp.float32):
    """Mirror of TransformerLinear.forward (eval mode); one pallas_call total."""
    B, N, in_dim = x.shape
    S = N + 1
    C3 = context.shape[-1] + 3
    P = params["lin_w"].shape[1]
    assert in_dim == params["y_up_w"].shape[0]
    assert S <= MAX_LEN

    num_blocks = _num_batch_blocks(B)
    b_tile = B // num_blocks

    beta3 = beta.reshape(B, 1, 1)
    context3 = context.reshape(B, 1, -1)
    time_emb = jnp.concatenate([beta3, jnp.sin(beta3), jnp.cos(beta3)], axis=-1)  # (B,1,3)
    ctx_in = jnp.concatenate([time_emb, context3], axis=-1)                       # (B,1,C3)

    small, wqkv, bqkv, wo, vec, w1, b1, w2, lin = _pack_params(params, N, matmul_dtype)

    kernel = _make_kernel(b_tile, N, S, C3, in_dim)

    def rep(shape):  # whole-array block, constant across the batch-block grid
        n = len(shape)
        return pl.BlockSpec(shape, lambda i, _n=n: (0,) * _n)

    return pl.pallas_call(
        kernel,
        out_shape=jax.ShapeDtypeStruct((B, N, P), jnp.float32),
        grid=(num_blocks,),
        in_specs=[
            pl.BlockSpec((b_tile, N, in_dim), lambda i: (i, 0, 0)),
            pl.BlockSpec((b_tile, 1, C3), lambda i: (i, 0, 0)),
            rep(small.shape), rep(wqkv.shape), rep(bqkv.shape), rep(wo.shape),
            rep(vec.shape), rep(w1.shape), rep(b1.shape), rep(w2.shape),
            rep(lin.shape),
        ],
        out_specs=pl.BlockSpec((b_tile, N, P), lambda i: (i, 0, 0)),
        compiler_params=pltpu.CompilerParams(dimension_semantics=("parallel",)),
    )(x, ctx_in, small, wqkv, bqkv, wo, vec, w1, b1, w2, lin)


# ----------------------------- params & reference -----------------------------

def positional_encoding(max_len, d_model):
    position = jnp.arange(max_len, dtype=jnp.float32)[:, None]
    div_term = jnp.exp(jnp.arange(0, d_model, 2, dtype=jnp.float32)
                       * (-math.log(10000.0) / d_model))
    pe = jnp.zeros((max_len, d_model), jnp.float32)
    pe = pe.at[:, 0::2].set(jnp.sin(position * div_term))
    pe = pe.at[:, 1::2].set(jnp.cos(position * div_term))
    return pe


def init_params(key, point_dim, context_dim):
    keys = iter(jax.random.split(key, 64))
    L, D, F = N_LAYERS, D_MODEL, D_FF

    def mat(shape, s=0.02):
        return s * jax.random.normal(next(keys), shape, jnp.float32)

    return {
        "y_up_w": mat((2, D)), "y_up_b": mat((1, D)),
        "ctx_up_w": mat((context_dim + 3, D)), "ctx_up_b": mat((1, D)),
        "lin_w": mat((D, point_dim)), "lin_b": mat((1, point_dim)),
        "pe": positional_encoding(MAX_LEN, D),
        # full (unsplit) per-layer weights, matching nn.TransformerEncoderLayer layout
        "wq": mat((L, D, D)), "wk": mat((L, D, D)), "wv": mat((L, D, D)),
        "bq": mat((L, 1, D)), "bk": mat((L, 1, D)), "bv": mat((L, 1, D)),
        "wo": mat((L, D, D)), "bo": mat((L, 1, D)),
        "ln1_g": 1.0 + mat((L, 1, D), 0.05), "ln1_b": mat((L, 1, D), 0.05),
        "w1": mat((L, D, F)), "b1": mat((L, 1, F)),
        "w2": mat((L, F, D)), "b2": mat((L, 1, D)),
        "ln2_g": 1.0 + mat((L, 1, D), 0.05), "ln2_b": mat((L, 1, D), 0.05),
    }


def reference_forward(params, x, beta, context):
    """Plain-jnp reference (same semantics, ctx token first like PyTorch)."""
    B, N, _ = x.shape
    beta3 = beta.reshape(B, 1, 1)
    context3 = context.reshape(B, 1, -1)
    time_emb = jnp.concatenate([beta3, jnp.sin(beta3), jnp.cos(beta3)], axis=-1)
    ctx_in = jnp.concatenate([time_emb, context3], axis=-1)

    emb = x @ params["y_up_w"] + params["y_up_b"]
    ctx_emb = ctx_in @ params["ctx_up_w"] + params["ctx_up_b"]
    h = jnp.concatenate([ctx_emb, emb], axis=1) + params["pe"][:N + 1][None]

    def ln(v, g, b):
        mu = v.mean(-1, keepdims=True)
        var = ((v - mu) ** 2).mean(-1, keepdims=True)
        return (v - mu) * jax.lax.rsqrt(var + LN_EPS) * g + b

    scale = 1.0 / math.sqrt(HEAD_DIM)
    for l in range(N_LAYERS):
        q = h @ params["wq"][l] + params["bq"][l]
        k = h @ params["wk"][l] + params["bk"][l]
        v = h @ params["wv"][l] + params["bv"][l]
        heads = []
        for hd in range(N_HEAD):
            sl = slice(hd * HEAD_DIM, (hd + 1) * HEAD_DIM)
            p = jax.nn.softmax(
                jnp.einsum("bqd,bkd->bqk", q[..., sl], k[..., sl]) * scale, axis=-1)
            heads.append(jnp.einsum("bqk,bkd->bqd", p, v[..., sl]))
        attn = jnp.concatenate(heads, axis=-1) @ params["wo"][l] + params["bo"][l]
        h = ln(h + attn, params["ln1_g"][l], params["ln1_b"][l])
        ff = (jnp.maximum(h @ params["w1"][l] + params["b1"][l], 0.0)
              @ params["w2"][l] + params["b2"][l])
        h = ln(h + ff, params["ln2_g"][l], params["ln2_b"][l])
    return h[:, 1:] @ params["lin_w"] + params["lin_b"]


if __name__ == "__main__":
    B, N, point_dim, context_dim = 2, 8, 2, 5
    key = jax.random.PRNGKey(0)
    kp, kx, kb, kc = jax.random.split(key, 4)

    params = init_params(kp, point_dim, context_dim)
    x = jax.random.normal(kx, (B, N, 2), jnp.float32)               # points (last dim = 2)
    beta = jax.random.uniform(kb, (B,), jnp.float32)                # diffusion timestep
    context = jax.random.normal(kc, (B, context_dim), jnp.float32)  # conditioning context

    # f32 matmuls by default (tight parity with the f32 reference); pass
    # matmul_dtype=jnp.bfloat16 on v6e/v7x for the native single-pass MXU path.
    fwd = jax.jit(transformer_linear_forward)
    out = jax.block_until_ready(fwd(params, x, beta, context))
    assert out.shape == (B, N, point_dim) and out.dtype == jnp.float32

    ref = jax.block_until_ready(reference_forward(params, x, beta, context))
    max_err = float(np.max(np.abs(np.asarray(out) - np.asarray(ref))))
    assert max_err < 5e-3, f"mismatch vs reference, max abs err {max_err}"

    print("KERNEL_OK")
</pallas_src>

<mosaic_0001>
module attributes {stable_mosaic.version = 11 : i64} {
  func.func @kernel(%arg0: i32, %arg1: memref<2x8x2xf32, #tpu.memory_space<vmem>>, %arg2: memref<2x1x8xf32, #tpu.memory_space<vmem>>, %arg3: memref<21x128xf32, #tpu.memory_space<vmem>>, %arg4: memref<3x128x384xf32, #tpu.memory_space<vmem>>, %arg5: memref<3x1x384xf32, #tpu.memory_space<vmem>>, %arg6: memref<3x128x128xf32, #tpu.memory_space<vmem>>, %arg7: memref<3x6x128xf32, #tpu.memory_space<vmem>>, %arg8: memref<3x128x512xf32, #tpu.memory_space<vmem>>, %arg9: memref<3x1x512xf32, #tpu.memory_space<vmem>>, %arg10: memref<3x512x128xf32, #tpu.memory_space<vmem>>, %arg11: memref<129x2xf32, #tpu.memory_space<vmem>>, %arg12: memref<2x8x2xf32, #tpu.memory_space<vmem>>) attributes {dimension_semantics = [#tpu.dimension_semantics<parallel>], iteration_bounds = array<i64: 1>, scalar_prefetch = 0 : i64, scratch_operands = 0 : i64, tpu.core_type = #tpu.core_type<tc>, window_params = [{transform_indices = @transform_0, window_bounds = array<i64: 2, 8, 2>}, {transform_indices = @transform_1, window_bounds = array<i64: 2, 1, 8>}, {pipeline_mode = #tpu.pipeline_mode<synchronous>, transform_indices = @transform_2, window_bounds = array<i64: 21, 128>}, {pipeline_mode = #tpu.pipeline_mode<synchronous>, transform_indices = @transform_3, window_bounds = array<i64: 3, 128, 384>}, {pipeline_mode = #tpu.pipeline_mode<synchronous>, transform_indices = @transform_4, window_bounds = array<i64: 3, 1, 384>}, {pipeline_mode = #tpu.pipeline_mode<synchronous>, transform_indices = @transform_5, window_bounds = array<i64: 3, 128, 128>}, {pipeline_mode = #tpu.pipeline_mode<synchronous>, transform_indices = @transform_6, window_bounds = array<i64: 3, 6, 128>}, {pipeline_mode = #tpu.pipeline_mode<synchronous>, transform_indices = @transform_7, window_bounds = array<i64: 3, 128, 512>}, {pipeline_mode = #tpu.pipeline_mode<synchronous>, transform_indices = @transform_8, window_bounds = array<i64: 3, 1, 512>}, {pipeline_mode = #tpu.pipeline_mode<synchronous>, transform_indices = @transform_9, window_bounds = array<i64: 3, 512, 128>}, {pipeline_mode = #tpu.pipeline_mode<synchronous>, transform_indices = @transform_10, window_bounds = array<i64: 129, 2>}, {transform_indices = @transform_11, window_bounds = array<i64: 2, 8, 2>}]} {
    %c0 = arith.constant 0 : index
    %c0_0 = arith.constant 0 : index
    %0 = vector.load %arg3[%c0, %c0_0] : memref<21x128xf32, #tpu.memory_space<vmem>>, vector<2x128xf32>
    %c2 = arith.constant 2 : index
    %c0_1 = arith.constant 0 : index
    %1 = vector.load %arg3[%c2, %c0_1] : memref<21x128xf32, #tpu.memory_space<vmem>>, vector<1x128xf32>
    %c3 = arith.constant 3 : index
    %c0_2 = arith.constant 0 : index
    %2 = vector.load %arg3[%c3, %c0_2] : memref<21x128xf32, #tpu.memory_space<vmem>>, vector<8x128xf32>
    %c11 = arith.constant 11 : index
    %c0_3 = arith.constant 0 : index
    %3 = vector.load %arg3[%c11, %c0_3] : memref<21x128xf32, #tpu.memory_space<vmem>>, vector<1x128xf32>
    %c12 = arith.constant 12 : index
    %c0_4 = arith.constant 0 : index
    %4 = vector.load %arg3[%c12, %c0_4] : memref<21x128xf32, #tpu.memory_space<vmem>>, vector<8x128xf32>
    %c20 = arith.constant 20 : index
    %c0_5 = arith.constant 0 : index
    %5 = vector.load %arg3[%c20, %c0_5] : memref<21x128xf32, #tpu.memory_space<vmem>>, vector<1x128xf32>
    %c0_6 = arith.constant 0 : index
    %c0_7 = arith.constant 0 : index
    %c0_8 = arith.constant 0 : index
    %6 = vector.load %arg1[%c0_6, %c0_7, %c0_8] : memref<2x8x2xf32, #tpu.memory_space<vmem>>, vector<1x8x2xf32>
    %7 = vector.shape_cast %6 : vector<1x8x2xf32> to vector<8x2xf32>
    %8 = vector.broadcast %1 : vector<1x128xf32> to vector<8x128xf32>
    %9 = arith.addf %8, %4 : vector<8x128xf32>
    %10 = vector.extract_strided_slice %7 {offsets = [0, 0], sizes = [8, 1], strides = [1, 1]} : vector<8x2xf32> to vector<8x1xf32>
    %11 = vector.extract_strided_slice %0 {offsets = [0, 0], sizes = [1, 128], strides = [1, 1]} : vector<2x128xf32> to vector<1x128xf32>
    %12 = vector.broadcast %10 : vector<8x1xf32> to vector<8x128xf32>
    %13 = vector.broadcast %11 : vector<1x128xf32> to vector<8x128xf32>
    %14 = arith.mulf %12, %13 : vector<8x128xf32>
    %15 = arith.addf %9, %14 : vector<8x128xf32>
    %16 = vector.extract_strided_slice %7 {offsets = [0, 1], sizes = [8, 1], strides = [1, 1]} : vector<8x2xf32> to vector<8x1xf32>
    %17 = vector.extract_strided_slice %0 {offsets = [1, 0], sizes = [1, 128], strides = [1, 1]} : vector<2x128xf32> to vector<1x128xf32>
    %18 = vector.broadcast %16 : vector<8x1xf32> to vector<8x128xf32>
    %19 = vector.broadcast %17 : vector<1x128xf32> to vector<8x128xf32>
    %20 = arith.mulf %18, %19 : vector<8x128xf32>
    %21 = arith.addf %15, %20 : vector<8x128xf32>
    %c0_9 = arith.constant 0 : index
    %c0_10 = arith.constant 0 : index
    %c0_11 = arith.constant 0 : index
    %22 = vector.load %arg2[%c0_9, %c0_10, %c0_11] : memref<2x1x8xf32, #tpu.memory_space<vmem>>, vector<1x1x8xf32>
    %23 = vector.shape_cast %22 : vector<1x1x8xf32> to vector<1x8xf32>
    %24 = arith.addf %3, %5 : vector<1x128xf32>
    %25 = vector.extract_strided_slice %23 {offsets = [0, 0], sizes = [1, 1], strides = [1, 1]} : vector<1x8xf32> to vector<1x1xf32>
    %26 = vector.extract_strided_slice %2 {offsets = [0, 0], sizes = [1, 128], strides = [1, 1]} : vector<8x128xf32> to vector<1x128xf32>
    %27 = vector.broadcast %25 : vector<1x1xf32> to vector<1x128xf32>
    %28 = arith.mulf %27, %26 : vector<1x128xf32>
    %29 = arith.addf %24, %28 : vector<1x128xf32>
    %30 = vector.extract_strided_slice %23 {offsets = [0, 1], sizes = [1, 1], strides = [1, 1]} : vector<1x8xf32> to vector<1x1xf32>
    %31 = vector.extract_strided_slice %2 {offsets = [1, 0], sizes = [1, 128], strides = [1, 1]} : vector<8x128xf32> to vector<1x128xf32>
    %32 = vector.broadcast %30 : vector<1x1xf32> to vector<1x128xf32>
    %33 = arith.mulf %32, %31 : vector<1x128xf32>
    %34 = arith.addf %29, %33 : vector<1x128xf32>
    %35 = vector.extract_strided_slice %23 {offsets = [0, 2], sizes = [1, 1], strides = [1, 1]} : vector<1x8xf32> to vector<1x1xf32>
    %36 = vector.extract_strided_slice %2 {offsets = [2, 0], sizes = [1, 128], strides = [1, 1]} : vector<8x128xf32> to vector<1x128xf32>
    %37 = vector.broadcast %35 : vector<1x1xf32> to vector<1x128xf32>
    %38 = arith.mulf %37, %36 : vector<1x128xf32>
    %39 = arith.addf %34, %38 : vector<1x128xf32>
    %40 = vector.extract_strided_slice %23 {offsets = [0, 3], sizes = [1, 1], strides = [1, 1]} : vector<1x8xf32> to vector<1x1xf32>
    %41 = vector.extract_strided_slice %2 {offsets = [3, 0], sizes = [1, 128], strides = [1, 1]} : vector<8x128xf32> to vector<1x128xf32>
    %42 = vector.broadcast %40 : vector<1x1xf32> to vector<1x128xf32>
    %43 = arith.mulf %42, %41 : vector<1x128xf32>
    %44 = arith.addf %39, %43 : vector<1x128xf32>
    %45 = vector.extract_strided_slice %23 {offsets = [0, 4], sizes = [1, 1], strides = [1, 1]} : vector<1x8xf32> to vector<1x1xf32>
    %46 = vector.extract_strided_slice %2 {offsets = [4, 0], sizes = [1, 128], strides = [1, 1]} : vector<8x128xf32> to vector<1x128xf32>
    %47 = vector.broadcast %45 : vector<1x1xf32> to vector<1x128xf32>
    %48 = arith.mulf %47, %46 : vector<1x128xf32>
    %49 = arith.addf %44, %48 : vector<1x128xf32>
    %50 = vector.extract_strided_slice %23 {offsets = [0, 5], sizes = [1, 1], strides = [1, 1]} : vector<1x8xf32> to vector<1x1xf32>
    %51 = vector.extract_strided_slice %2 {offsets = [5, 0], sizes = [1, 128], strides = [1, 1]} : vector<8x128xf32> to vector<1x128xf32>
    %52 = vector.broadcast %50 : vector<1x1xf32> to vector<1x128xf32>
    %53 = arith.mulf %52, %51 : vector<1x128xf32>
    %54 = arith.addf %49, %53 : vector<1x128xf32>
    %55 = vector.extract_strided_slice %23 {offsets = [0, 6], sizes = [1, 1], strides = [1, 1]} : vector<1x8xf32> to vector<1x1xf32>
    %56 = vector.extract_strided_slice %2 {offsets = [6, 0], sizes = [1, 128], strides = [1, 1]} : vector<8x128xf32> to vector<1x128xf32>
    %57 = vector.broadcast %55 : vector<1x1xf32> to vector<1x128xf32>
    %58 = arith.mulf %57, %56 : vector<1x128xf32>
    %59 = arith.addf %54, %58 : vector<1x128xf32>
    %60 = vector.extract_strided_slice %23 {offsets = [0, 7], sizes = [1, 1], strides = [1, 1]} : vector<1x8xf32> to vector<1x1xf32>
    %61 = vector.extract_strided_slice %2 {offsets = [7, 0], sizes = [1, 128], strides = [1, 1]} : vector<8x128xf32> to vector<1x128xf32>
    %62 = vector.broadcast %60 : vector<1x1xf32> to vector<1x128xf32>
    %63 = arith.mulf %62, %61 : vector<1x128xf32>
    %64 = arith.addf %59, %63 : vector<1x128xf32>
    %c1 = arith.constant 1 : index
    %c0_12 = arith.constant 0 : index
    %c0_13 = arith.constant 0 : index
    %65 = vector.load %arg1[%c1, %c0_12, %c0_13] : memref<2x8x2xf32, #tpu.memory_space<vmem>>, vector<1x8x2xf32>
    %66 = vector.shape_cast %65 : vector<1x8x2xf32> to vector<8x2xf32>
    %67 = vector.broadcast %1 : vector<1x128xf32> to vector<8x128xf32>
    %68 = arith.addf %67, %4 : vector<8x128xf32>
    %69 = vector.extract_strided_slice %66 {offsets = [0, 0], sizes = [8, 1], strides = [1, 1]} : vector<8x2xf32> to vector<8x1xf32>
    %70 = vector.extract_strided_slice %0 {offsets = [0, 0], sizes = [1, 128], strides = [1, 1]} : vector<2x128xf32> to vector<1x128xf32>
    %71 = vector.broadcast %69 : vector<8x1xf32> to vector<8x128xf32>
    %72 = vector.broadcast %70 : vector<1x128xf32> to vector<8x128xf32>
    %73 = arith.mulf %71, %72 : vector<8x128xf32>
    %74 = arith.addf %68, %73 : vector<8x128xf32>
    %75 = vector.extract_strided_slice %66 {offsets = [0, 1], sizes = [8, 1], strides = [1, 1]} : vector<8x2xf32> to vector<8x1xf32>
    %76 = vector.extract_strided_slice %0 {offsets = [1, 0], sizes = [1, 128], strides = [1, 1]} : vector<2x128xf32> to vector<1x128xf32>
    %77 = vector.broadcast %75 : vector<8x1xf32> to vector<8x128xf32>
    %78 = vector.broadcast %76 : vector<1x128xf32> to vector<8x128xf32>
    %79 = arith.mulf %77, %78 : vector<8x128xf32>
    %80 = arith.addf %74, %79 : vector<8x128xf32>
    %c1_14 = arith.constant 1 : index
    %c0_15 = arith.constant 0 : index
    %c0_16 = arith.constant 0 : index
    %81 = vector.load %arg2[%c1_14, %c0_15, %c0_16] : memref<2x1x8xf32, #tpu.memory_space<vmem>>, vector<1x1x8xf32>
    %82 = vector.shape_cast %81 : vector<1x1x8xf32> to vector<1x8xf32>
    %83 = arith.addf %3, %5 : vector<1x128xf32>
    %84 = vector.extract_strided_slice %82 {offsets = [0, 0], sizes = [1, 1], strides = [1, 1]} : vector<1x8xf32> to vector<1x1xf32>
    %85 = vector.extract_strided_slice %2 {offsets = [0, 0], sizes = [1, 128], strides = [1, 1]} : vector<8x128xf32> to vector<1x128xf32>
    %86 = vector.broadcast %84 : vector<1x1xf32> to vector<1x128xf32>
    %87 = arith.mulf %86, %85 : vector<1x128xf32>
    %88 = arith.addf %83, %87 : vector<1x128xf32>
    %89 = vector.extract_strided_slice %82 {offsets = [0, 1], sizes = [1, 1], strides = [1, 1]} : vector<1x8xf32> to vector<1x1xf32>
    %90 = vector.extract_strided_slice %2 {offsets = [1, 0], sizes = [1, 128], strides = [1, 1]} : vector<8x128xf32> to vector<1x128xf32>
    %91 = vector.broadcast %89 : vector<1x1xf32> to vector<1x128xf32>
    %92 = arith.mulf %91, %90 : vector<1x128xf32>
    %93 = arith.addf %88, %92 : vector<1x128xf32>
    %94 = vector.extract_strided_slice %82 {offsets = [0, 2], sizes = [1, 1], strides = [1, 1]} : vector<1x8xf32> to vector<1x1xf32>
    %95 = vector.extract_strided_slice %2 {offsets = [2, 0], sizes = [1, 128], strides = [1, 1]} : vector<8x128xf32> to vector<1x128xf32>
    %96 = vector.broadcast %94 : vector<1x1xf32> to vector<1x128xf32>
    %97 = arith.mulf %96, %95 : vector<1x128xf32>
    %98 = arith.addf %93, %97 : vector<1x128xf32>
    %99 = vector.extract_strided_slice %82 {offsets = [0, 3], sizes = [1, 1], strides = [1, 1]} : vector<1x8xf32> to vector<1x1xf32>
    %100 = vector.extract_strided_slice %2 {offsets = [3, 0], sizes = [1, 128], strides = [1, 1]} : vector<8x128xf32> to vector<1x128xf32>
    %101 = vector.broadcast %99 : vector<1x1xf32> to vector<1x128xf32>
    %102 = arith.mulf %101, %100 : vector<1x128xf32>
    %103 = arith.addf %98, %102 : vector<1x128xf32>
    %104 = vector.extract_strided_slice %82 {offsets = [0, 4], sizes = [1, 1], strides = [1, 1]} : vector<1x8xf32> to vector<1x1xf32>
    %105 = vector.extract_strided_slice %2 {offsets = [4, 0], sizes = [1, 128], strides = [1, 1]} : vector<8x128xf32> to vector<1x128xf32>
    %106 = vector.broadcast %104 : vector<1x1xf32> to vector<1x128xf32>
    %107 = arith.mulf %106, %105 : vector<1x128xf32>
    %108 = arith.addf %103, %107 : vector<1x128xf32>
    %109 = vector.extract_strided_slice %82 {offsets = [0, 5], sizes = [1, 1], strides = [1, 1]} : vector<1x8xf32> to vector<1x1xf32>
    %110 = vector.extract_strided_slice %2 {offsets = [5, 0], sizes = [1, 128], strides = [1, 1]} : vector<8x128xf32> to vector<1x128xf32>
    %111 = vector.broadcast %109 : vector<1x1xf32> to vector<1x128xf32>
    %112 = arith.mulf %111, %110 : vector<1x128xf32>
    %113 = arith.addf %108, %112 : vector<1x128xf32>
    %114 = vector.extract_strided_slice %82 {offsets = [0, 6], sizes = [1, 1], strides = [1, 1]} : vector<1x8xf32> to vector<1x1xf32>
    %115 = vector.extract_strided_slice %2 {offsets = [6, 0], sizes = [1, 128], strides = [1, 1]} : vector<8x128xf32> to vector<1x128xf32>
    %116 = vector.broadcast %114 : vector<1x1xf32> to vector<1x128xf32>
    %117 = arith.mulf %116, %115 : vector<1x128xf32>
    %118 = arith.addf %113, %117 : vector<1x128xf32>
    %119 = vector.extract_strided_slice %82 {offsets = [0, 7], sizes = [1, 1], strides = [1, 1]} : vector<1x8xf32> to vector<1x1xf32>
    %120 = vector.extract_strided_slice %2 {offsets = [7, 0], sizes = [1, 128], strides = [1, 1]} : vector<8x128xf32> to vector<1x128xf32>
    %121 = vector.broadcast %119 : vector<1x1xf32> to vector<1x128xf32>
    %122 = arith.mulf %121, %120 : vector<1x128xf32>
    %123 = arith.addf %118, %122 : vector<1x128xf32>
    %124 = tpu.concatenate %21, %64, %80, %123 in 0 : vector<8x128xf32>, vector<1x128xf32>, vector<8x128xf32>, vector<1x128xf32> -> vector<18x128xf32>
    %c0_17 = arith.constant 0 : index
    %c0_18 = arith.constant 0 : index
    %c0_19 = arith.constant 0 : index
    %125 = vector.load %arg7[%c0_17, %c0_18, %c0_19] : memref<3x6x128xf32, #tpu.memory_space<vmem>>, vector<1x6x128xf32>
    %126 = vector.shape_cast %125 : vector<1x6x128xf32> to vector<6x128xf32>
    %127 = vector.extract_strided_slice %126 {offsets = [0, 0], sizes = [1, 128], strides = [1, 1]} : vector<6x128xf32> to vector<1x128xf32>
    %128 = vector.extract_strided_slice %126 {offsets = [1, 0], sizes = [1, 128], strides = [1, 1]} : vector<6x128xf32> to vector<1x128xf32>
    %129 = vector.extract_strided_slice %126 {offsets = [2, 0], sizes = [1, 128], strides = [1, 1]} : vector<6x128xf32> to vector<1x128xf32>
    %130 = vector.extract_strided_slice %126 {offsets = [3, 0], sizes = [1, 128], strides = [1, 1]} : vector<6x128xf32> to vector<1x128xf32>
    %131 = vector.extract_strided_slice %126 {offsets = [4, 0], sizes = [1, 128], strides = [1, 1]} : vector<6x128xf32> to vector<1x128xf32>
    %132 = vector.extract_strided_slice %126 {offsets = [5, 0], sizes = [1, 128], strides = [1, 1]} : vector<6x128xf32> to vector<1x128xf32>
    %c0_20 = arith.constant 0 : index
    %c0_21 = arith.constant 0 : index
    %c0_22 = arith.constant 0 : index
    %133 = vector.load %arg4[%c0_20, %c0_21, %c0_22] : memref<3x128x384xf32, #tpu.memory_space<vmem>>, vector<1x128x384xf32>
    %134 = vector.shape_cast %133 : vector<1x128x384xf32> to vector<128x384xf32>
    %cst = arith.constant dense<0.000000e+00> : vector<18x384xf32>
    %135 = tpu.matmul %124, %134, %cst {dimension_numbers = #tpu.dot_dimension_numbers<[1], [0], [0], [1], [0, 0, 1, 1], [], []>} : vector<18x128xf32>, vector<128x384xf32>, vector<18x384xf32> -> vector<18x384xf32>
    %c0_23 = arith.constant 0 : index
    %c0_24 = arith.constant 0 : index
    %c0_25 = arith.constant 0 : index
    %136 = vector.load %arg5[%c0_23, %c0_24, %c0_25] : memref<3x1x384xf32, #tpu.memory_space<vmem>>, vector<1x1x384xf32>
    %137 = vector.shape_cast %136 : vector<1x1x384xf32> to vector<1x384xf32>
    %138 = vector.broadcast %137 : vector<1x384xf32> to vector<18x384xf32>
    %139 = arith.addf %135, %138 : vector<18x384xf32>
    %140 = vector.extract_strided_slice %139 {offsets = [0, 0], sizes = [9, 384], strides = [1, 1]} : vector<18x384xf32> to vector<9x384xf32>
    %141 = vector.extract_strided_slice %140 {offsets = [0, 0], sizes = [9, 64], strides = [1, 1]} : vector<9x384xf32> to vector<9x64xf32>
    %142 = vector.extract_strided_slice %140 {offsets = [0, 128], sizes = [9, 64], strides = [1, 1]} : vector<9x384xf32> to vector<9x64xf32>
    %143 = vector.extract_strided_slice %140 {offsets = [0, 256], sizes = [9, 64], strides = [1, 1]} : vector<9x384xf32> to vector<9x64xf32>
    %cst_26 = arith.constant dense<0.000000e+00> : vector<9x9xf32>
    %144 = tpu.matmul %141, %142, %cst_26 {dimension_numbers = #tpu.dot_dimension_numbers<[1], [1], [0], [0], [0, 0, 1, 0], [], []>} : vector<9x64xf32>, vector<9x64xf32>, vector<9x9xf32> -> vector<9x9xf32>
    %cst_27 = arith.constant 1.250000e-01 : f32
    %145 = vector.broadcast %cst_27 : f32 to vector<9x9xf32>
    %146 = arith.mulf %144, %145 : vector<9x9xf32>
    %cst_28 = arith.constant dense<0xFF800000> : vector<9xf32>
    %147 = vector.multi_reduction <maximumf>, %146, %cst_28 [1] : vector<9x9xf32> to vector<9xf32>
    %148 = vector.shape_cast %147 : vector<9xf32> to vector<9x1xf32>
    %149 = vector.broadcast %148 : vector<9x1xf32> to vector<9x9xf32>
    %150 = arith.subf %146, %149 : vector<9x9xf32>
    %151 = math.exp %150 : vector<9x9xf32>
    %cst_29 = arith.constant dense<0.000000e+00> : vector<9xf32>
    %152 = vector.multi_reduction <add>, %151, %cst_29 [1] : vector<9x9xf32> to vector<9xf32>
    %153 = vector.shape_cast %152 : vector<9xf32> to vector<9x1xf32>
    %154 = tpu.reciprocal %153 {approx = true} : vector<9x1xf32> -> vector<9x1xf32>
    %155 = vector.broadcast %154 : vector<9x1xf32> to vector<9x9xf32>
    %156 = arith.mulf %151, %155 : vector<9x9xf32>
    %cst_30 = arith.constant dense<0.000000e+00> : vector<9x64xf32>
    %157 = tpu.matmul %156, %143, %cst_30 {dimension_numbers = #tpu.dot_dimension_numbers<[1], [0], [0], [1], [0, 0, 1, 1], [], []>} : vector<9x9xf32>, vector<9x64xf32>, vector<9x64xf32> -> vector<9x64xf32>
    %158 = vector.extract_strided_slice %140 {offsets = [0, 64], sizes = [9, 64], strides = [1, 1]} : vector<9x384xf32> to vector<9x64xf32>
    %159 = vector.extract_strided_slice %140 {offsets = [0, 192], sizes = [9, 64], strides = [1, 1]} : vector<9x384xf32> to vector<9x64xf32>
    %160 = vector.extract_strided_slice %140 {offsets = [0, 320], sizes = [9, 64], strides = [1, 1]} : vector<9x384xf32> to vector<9x64xf32>
    %cst_31 = arith.constant dense<0.000000e+00> : vector<9x9xf32>
    %161 = tpu.matmul %158, %159, %cst_31 {dimension_numbers = #tpu.dot_dimension_numbers<[1], [1], [0], [0], [0, 0, 1, 0], [], []>} : vector<9x64xf32>, vector<9x64xf32>, vector<9x9xf32> -> vector<9x9xf32>
    %cst_32 = arith.constant 1.250000e-01 : f32
    %162 = vector.broadcast %cst_32 : f32 to vector<9x9xf32>
    %163 = arith.mulf %161, %162 : vector<9x9xf32>
    %cst_33 = arith.constant dense<0xFF800000> : vector<9xf32>
    %164 = vector.multi_reduction <maximumf>, %163, %cst_33 [1] : vector<9x9xf32> to vector<9xf32>
    %165 = vector.shape_cast %164 : vector<9xf32> to vector<9x1xf32>
    %166 = vector.broadcast %165 : vector<9x1xf32> to vector<9x9xf32>
    %167 = arith.subf %163, %166 : vector<9x9xf32>
    %168 = math.exp %167 : vector<9x9xf32>
    %cst_34 = arith.constant dense<0.000000e+00> : vector<9xf32>
    %169 = vector.multi_reduction <add>, %168, %cst_34 [1] : vector<9x9xf32> to vector<9xf32>
    %170 = vector.shape_cast %169 : vector<9xf32> to vector<9x1xf32>
    %171 = tpu.reciprocal %170 {approx = true} : vector<9x1xf32> -> vector<9x1xf32>
    %172 = vector.broadcast %171 : vector<9x1xf32> to vector<9x9xf32>
    %173 = arith.mulf %168, %172 : vector<9x9xf32>
    %cst_35 = arith.constant dense<0.000000e+00> : vector<9x64xf32>
    %174 = tpu.matmul %173, %160, %cst_35 {dimension_numbers = #tpu.dot_dimension_numbers<[1], [0], [0], [1], [0, 0, 1, 1], [], []>} : vector<9x9xf32>, vector<9x64xf32>, vector<9x64xf32> -> vector<9x64xf32>
    %175 = tpu.concatenate %157, %174 in 1 : vector<9x64xf32>, vector<9x64xf32> -> vector<9x128xf32>
    %176 = vector.extract_strided_slice %139 {offsets = [9, 0], sizes = [9, 384], strides = [1, 1]} : vector<18x384xf32> to vector<9x384xf32>
    %177 = vector.extract_strided_slice %176 {offsets = [0, 0], sizes = [9, 64], strides = [1, 1]} : vector<9x384xf32> to vector<9x64xf32>
    %178 = vector.extract_strided_slice %176 {offsets = [0, 128], sizes = [9, 64], strides = [1, 1]} : vector<9x384xf32> to vector<9x64xf32>
    %179 = vector.extract_strided_slice %176 {offsets = [0, 256], sizes = [9, 64], strides = [1, 1]} : vector<9x384xf32> to vector<9x64xf32>
    %cst_36 = arith.constant dense<0.000000e+00> : vector<9x9xf32>
    %180 = tpu.matmul %177, %178, %cst_36 {dimension_numbers = #tpu.dot_dimension_numbers<[1], [1], [0], [0], [0, 0, 1, 0], [], []>} : vector<9x64xf32>, vector<9x64xf32>, vector<9x9xf32> -> vector<9x9xf32>
    %cst_37 = arith.constant 1.250000e-01 : f32
    %181 = vector.broadcast %cst_37 : f32 to vector<9x9xf32>
    %182 = arith.mulf %180, %181 : vector<9x9xf32>
    %cst_38 = arith.constant dense<0xFF800000> : vector<9xf32>
    %183 = vector.multi_reduction <maximumf>, %182, %cst_38 [1] : vector<9x9xf32> to vector<9xf32>
    %184 = vector.shape_cast %183 : vector<9xf32> to vector<9x1xf32>
    %185 = vector.broadcast %184 : vector<9x1xf32> to vector<9x9xf32>
    %186 = arith.subf %182, %185 : vector<9x9xf32>
    %187 = math.exp %186 : vector<9x9xf32>
    %cst_39 = arith.constant dense<0.000000e+00> : vector<9xf32>
    %188 = vector.multi_reduction <add>, %187, %cst_39 [1] : vector<9x9xf32> to vector<9xf32>
    %189 = vector.shape_cast %188 : vector<9xf32> to vector<9x1xf32>
    %190 = tpu.reciprocal %189 {approx = true} : vector<9x1xf32> -> vector<9x1xf32>
    %191 = vector.broadcast %190 : vector<9x1xf32> to vector<9x9xf32>
    %192 = arith.mulf %187, %191 : vector<9x9xf32>
    %cst_40 = arith.constant dense<0.000000e+00> : vector<9x64xf32>
    %193 = tpu.matmul %192, %179, %cst_40 {dimension_numbers = #tpu.dot_dimension_numbers<[1], [0], [0], [1], [0, 0, 1, 1], [], []>} : vector<9x9xf32>, vector<9x64xf32>, vector<9x64xf32> -> vector<9x64xf32>
    %194 = vector.extract_strided_slice %176 {offsets = [0, 64], sizes = [9, 64], strides = [1, 1]} : vector<9x384xf32> to vector<9x64xf32>
    %195 = vector.extract_strided_slice %176 {offsets = [0, 192], sizes = [9, 64], strides = [1, 1]} : vector<9x384xf32> to vector<9x64xf32>
    %196 = vector.extract_strided_slice %176 {offsets = [0, 320], sizes = [9, 64], strides = [1, 1]} : vector<9x384xf32> to vector<9x64xf32>
    %cst_41 = arith.constant dense<0.000000e+00> : vector<9x9xf32>
    %197 = tpu.matmul %194, %195, %cst_41 {dimension_numbers = #tpu.dot_dimension_numbers<[1], [1], [0], [0], [0, 0, 1, 0], [], []>} : vector<9x64xf32>, vector<9x64xf32>, vector<9x9xf32> -> vector<9x9xf32>
    %cst_42 = arith.constant 1.250000e-01 : f32
    %198 = vector.broadcast %cst_42 : f32 to vector<9x9xf32>
    %199 = arith.mulf %197, %198 : vector<9x9xf32>
    %cst_43 = arith.constant dense<0xFF800000> : vector<9xf32>
    %200 = vector.multi_reduction <maximumf>, %199, %cst_43 [1] : vector<9x9xf32> to vector<9xf32>
    %201 = vector.shape_cast %200 : vector<9xf32> to vector<9x1xf32>
    %202 = vector.broadcast %201 : vector<9x1xf32> to vector<9x9xf32>
    %203 = arith.subf %199, %202 : vector<9x9xf32>
    %204 = math.exp %203 : vector<9x9xf32>
    %cst_44 = arith.constant dense<0.000000e+00> : vector<9xf32>
    %205 = vector.multi_reduction <add>, %204, %cst_44 [1] : vector<9x9xf32> to vector<9xf32>
    %206 = vector.shape_cast %205 : vector<9xf32> to vector<9x1xf32>
    %207 = tpu.reciprocal %206 {approx = true} : vector<9x1xf32> -> vector<9x1xf32>
    %208 = vector.broadcast %207 : vector<9x1xf32> to vector<9x9xf32>
    %209 = arith.mulf %204, %208 : vector<9x9xf32>
    %cst_45 = arith.constant dense<0.000000e+00> : vector<9x64xf32>
    %210 = tpu.matmul %209, %196, %cst_45 {dimension_numbers = #tpu.dot_dimension_numbers<[1], [0], [0], [1], [0, 0, 1, 1], [], []>} : vector<9x9xf32>, vector<9x64xf32>, vector<9x64xf32> -> vector<9x64xf32>
    %211 = tpu.concatenate %193, %210 in 1 : vector<9x64xf32>, vector<9x64xf32> -> vector<9x128xf32>
    %212 = tpu.concatenate %175, %211 in 0 : vector<9x128xf32>, vector<9x128xf32> -> vector<18x128xf32>
    %c0_46 = arith.constant 0 : index
    %c0_47 = arith.constant 0 : index
    %c0_48 = arith.constant 0 : index
    %213 = vector.load %arg6[%c0_46, %c0_47, %c0_48] : memref<3x128x128xf32, #tpu.memory_space<vmem>>, vector<1x128x128xf32>
    %214 = vector.shape_cast %213 : vector<1x128x128xf32> to vector<128x128xf32>
    %cst_49 = arith.constant dense<0.000000e+00> : vector<18x128xf32>
    %215 = tpu.matmul %212, %214, %cst_49 {dimension_numbers = #tpu.dot_dimension_numbers<[1], [0], [0], [1], [0, 0, 1, 1], [], []>} : vector<18x128xf32>, vector<128x128xf32>, vector<18x128xf32> -> vector<18x128xf32>
    %216 = vector.broadcast %127 : vector<1x128xf32> to vector<18x128xf32>
    %217 = arith.addf %215, %216 : vector<18x128xf32>
    %218 = arith.addf %124, %217 : vector<18x128xf32>
    %cst_50 = arith.constant dense<0.000000e+00> : vector<18xf32>
    %219 = vector.multi_reduction <add>, %218, %cst_50 [1] : vector<18x128xf32> to vector<18xf32>
    %220 = vector.shape_cast %219 : vector<18xf32> to vector<18x1xf32>
    %cst_51 = arith.constant 1.280000e+02 : f32
    %221 = vector.broadcast %cst_51 : f32 to vector<18x1xf32>
    %222 = arith.divf %220, %221 : vector<18x1xf32>
    %223 = vector.broadcast %222 : vector<18x1xf32> to vector<18x128xf32>
    %224 = arith.subf %218, %223 : vector<18x128xf32>
    %225 = arith.mulf %224, %224 : vector<18x128xf32>
    %cst_52 = arith.constant dense<0.000000e+00> : vector<18xf32>
    %226 = vector.multi_reduction <add>, %225, %cst_52 [1] : vector<18x128xf32> to vector<18xf32>
    %227 = vector.shape_cast %226 : vector<18xf32> to vector<18x1xf32>
    %cst_53 = arith.constant 1.280000e+02 : f32
    %228 = vector.broadcast %cst_53 : f32 to vector<18x1xf32>
    %229 = arith.divf %227, %228 : vector<18x1xf32>
    %230 = vector.broadcast %222 : vector<18x1xf32> to vector<18x128xf32>
    %231 = arith.subf %218, %230 : vector<18x128xf32>
    %cst_54 = arith.constant 9.99999974E-6 : f32
    %232 = vector.broadcast %cst_54 : f32 to vector<18x1xf32>
    %233 = arith.addf %229, %232 : vector<18x1xf32>
    %234 = math.rsqrt %233 : vector<18x1xf32>
    %235 = vector.broadcast %234 : vector<18x1xf32> to vector<18x128xf32>
    %236 = arith.mulf %231, %235 : vector<18x128xf32>
    %237 = vector.broadcast %128 : vector<1x128xf32> to vector<18x128xf32>
    %238 = arith.mulf %236, %237 : vector<18x128xf32>
    %239 = vector.broadcast %129 : vector<1x128xf32> to vector<18x128xf32>
    %240 = arith.addf %238, %239 : vector<18x128xf32>
    %c0_55 = arith.constant 0 : index
    %c0_56 = arith.constant 0 : index
    %c0_57 = arith.constant 0 : index
    %241 = vector.load %arg8[%c0_55, %c0_56, %c0_57] : memref<3x128x512xf32, #tpu.memory_space<vmem>>, vector<1x128x512xf32>
    %242 = vector.shape_cast %241 : vector<1x128x512xf32> to vector<128x512xf32>
    %cst_58 = arith.constant dense<0.000000e+00> : vector<18x512xf32>
    %243 = tpu.matmul %240, %242, %cst_58 {dimension_numbers = #tpu.dot_dimension_numbers<[1], [0], [0], [1], [0, 0, 1, 1], [], []>} : vector<18x128xf32>, vector<128x512xf32>, vector<18x512xf32> -> vector<18x512xf32>
    %c0_59 = arith.constant 0 : index
    %c0_60 = arith.constant 0 : index
    %c0_61 = arith.constant 0 : index
    %244 = vector.load %arg9[%c0_59, %c0_60, %c0_61] : memref<3x1x512xf32, #tpu.memory_space<vmem>>, vector<1x1x512xf32>
    %245 = vector.shape_cast %244 : vector<1x1x512xf32> to vector<1x512xf32>
    %246 = vector.broadcast %245 : vector<1x512xf32> to vector<18x512xf32>
    %247 = arith.addf %243, %246 : vector<18x512xf32>
    %cst_62 = arith.constant 0.000000e+00 : f32
    %248 = vector.broadcast %cst_62 : f32 to vector<18x512xf32>
    %249 = arith.maximumf %247, %248 : vector<18x512xf32>
    %c0_63 = arith.constant 0 : index
    %c0_64 = arith.constant 0 : index
    %c0_65 = arith.constant 0 : index
    %250 = vector.load %arg10[%c0_63, %c0_64, %c0_65] : memref<3x512x128xf32, #tpu.memory_space<vmem>>, vector<1x512x128xf32>
    %251 = vector.shape_cast %250 : vector<1x512x128xf32> to vector<512x128xf32>
    %cst_66 = arith.constant dense<0.000000e+00> : vector<18x128xf32>
    %252 = tpu.matmul %249, %251, %cst_66 {dimension_numbers = #tpu.dot_dimension_numbers<[1], [0], [0], [1], [0, 0, 1, 1], [], []>} : vector<18x512xf32>, vector<512x128xf32>, vector<18x128xf32> -> vector<18x128xf32>
    %253 = vector.broadcast %130 : vector<1x128xf32> to vector<18x128xf32>
    %254 = arith.addf %252, %253 : vector<18x128xf32>
    %255 = arith.addf %240, %254 : vector<18x128xf32>
    %cst_67 = arith.constant dense<0.000000e+00> : vector<18xf32>
    %256 = vector.multi_reduction <add>, %255, %cst_67 [1] : vector<18x128xf32> to vector<18xf32>
    %257 = vector.shape_cast %256 : vector<18xf32> to vector<18x1xf32>
    %cst_68 = arith.constant 1.280000e+02 : f32
    %258 = vector.broadcast %cst_68 : f32 to vector<18x1xf32>
    %259 = arith.divf %257, %258 : vector<18x1xf32>
    %260 = vector.broadcast %259 : vector<18x1xf32> to vector<18x128xf32>
    %261 = arith.subf %255, %260 : vector<18x128xf32>
    %262 = arith.mulf %261, %261 : vector<18x128xf32>
    %cst_69 = arith.constant dense<0.000000e+00> : vector<18xf32>
    %263 = vector.multi_reduction <add>, %262, %cst_69 [1] : vector<18x128xf32> to vector<18xf32>
    %264 = vector.shape_cast %263 : vector<18xf32> to vector<18x1xf32>
    %cst_70 = arith.constant 1.280000e+02 : f32
    %265 = vector.broadcast %cst_70 : f32 to vector<18x1xf32>
    %266 = arith.divf %264, %265 : vector<18x1xf32>
    %267 = vector.broadcast %259 : vector<18x1xf32> to vector<18x128xf32>
    %268 = arith.subf %255, %267 : vector<18x128xf32>
    %cst_71 = arith.constant 9.99999974E-6 : f32
    %269 = vector.broadcast %cst_71 : f32 to vector<18x1xf32>
    %270 = arith.addf %266, %269 : vector<18x1xf32>
    %271 = math.rsqrt %270 : vector<18x1xf32>
    %272 = vector.broadcast %271 : vector<18x1xf32> to vector<18x128xf32>
    %273 = arith.mulf %268, %272 : vector<18x128xf32>
    %274 = vector.broadcast %131 : vector<1x128xf32> to vector<18x128xf32>
    %275 = arith.mulf %273, %274 : vector<18x128xf32>
    %276 = vector.broadcast %132 : vector<1x128xf32> to vector<18x128xf32>
    %277 = arith.addf %275, %276 : vector<18x128xf32>
    %c1_72 = arith.constant 1 : index
    %c0_73 = arith.constant 0 : index
    %c0_74 = arith.constant 0 : index
    %278 = vector.load %arg7[%c1_72, %c0_73, %c0_74] : memref<3x6x128xf32, #tpu.memory_space<vmem>>, vector<1x6x128xf32>
    %279 = vector.shape_cast %278 : vector<1x6x128xf32> to vector<6x128xf32>
    %280 = vector.extract_strided_slice %279 {offsets = [0, 0], sizes = [1, 128], strides = [1, 1]} : vector<6x128xf32> to vector<1x128xf32>
    %281 = vector.extract_strided_slice %279 {offsets = [1, 0], sizes = [1, 128], strides = [1, 1]} : vector<6x128xf32> to vector<1x128xf32>
    %282 = vector.extract_strided_slice %279 {offsets = [2, 0], sizes = [1, 128], strides = [1, 1]} : vector<6x128xf32> to vector<1x128xf32>
    %283 = vector.extract_strided_slice %279 {offsets = [3, 0], sizes = [1, 128], strides = [1, 1]} : vector<6x128xf32> to vector<1x128xf32>
    %284 = vector.extract_strided_slice %279 {offsets = [4, 0], sizes = [1, 128], strides = [1, 1]} : vector<6x128xf32> to vector<1x128xf32>
    %285 = vector.extract_strided_slice %279 {offsets = [5, 0], sizes = [1, 128], strides = [1, 1]} : vector<6x128xf32> to vector<1x128xf32>
    %c1_75 = arith.constant 1 : index
    %c0_76 = arith.constant 0 : index
    %c0_77 = arith.constant 0 : index
    %286 = vector.load %arg4[%c1_75, %c0_76, %c0_77] : memref<3x128x384xf32, #tpu.memory_space<vmem>>, vector<1x128x384xf32>
    %287 = vector.shape_cast %286 : vector<1x128x384xf32> to vector<128x384xf32>
    %cst_78 = arith.constant dense<0.000000e+00> : vector<18x384xf32>
    %288 = tpu.matmul %277, %287, %cst_78 {dimension_numbers = #tpu.dot_dimension_numbers<[1], [0], [0], [1], [0, 0, 1, 1], [], []>} : vector<18x128xf32>, vector<128x384xf32>, vector<18x384xf32> -> vector<18x384xf32>
    %c1_79 = arith.constant 1 : index
    %c0_80 = arith.constant 0 : index
    %c0_81 = arith.constant 0 : index
    %289 = vector.load %arg5[%c1_79, %c0_80, %c0_81] : memref<3x1x384xf32, #tpu.memory_space<vmem>>, vector<1x1x384xf32>
    %290 = vector.shape_cast %289 : vector<1x1x384xf32> to vector<1x384xf32>
    %291 = vector.broadcast %290 : vector<1x384xf32> to vector<18x384xf32>
    %292 = arith.addf %288, %291 : vector<18x384xf32>
    %293 = vector.extract_strided_slice %292 {offsets = [0, 0], sizes = [9, 384], strides = [1, 1]} : vector<18x384xf32> to vector<9x384xf32>
    %294 = vector.extract_strided_slice %293 {offsets = [0, 0], sizes = [9, 64], strides = [1, 1]} : vector<9x384xf32> to vector<9x64xf32>
    %295 = vector.extract_strided_slice %293 {offsets = [0, 128], sizes = [9, 64], strides = [1, 1]} : vector<9x384xf32> to vector<9x64xf32>
    %296 = vector.extract_strided_slice %293 {offsets = [0, 256], sizes = [9, 64], strides = [1, 1]} : vector<9x384xf32> to vector<9x64xf32>
    %cst_82 = arith.constant dense<0.000000e+00> : vector<9x9xf32>
    %297 = tpu.matmul %294, %295, %cst_82 {dimension_numbers = #tpu.dot_dimension_numbers<[1], [1], [0], [0], [0, 0, 1, 0], [], []>} : vector<9x64xf32>, vector<9x64xf32>, vector<9x9xf32> -> vector<9x9xf32>
    %cst_83 = arith.constant 1.250000e-01 : f32
    %298 = vector.broadcast %cst_83 : f32 to vector<9x9xf32>
    %299 = arith.mulf %297, %298 : vector<9x9xf32>
    %cst_84 = arith.constant dense<0xFF800000> : vector<9xf32>
    %300 = vector.multi_reduction <maximumf>, %299, %cst_84 [1] : vector<9x9xf32> to vector<9xf32>
    %301 = vector.shape_cast %300 : vector<9xf32> to vector<9x1xf32>
    %302 = vector.broadcast %301 : vector<9x1xf32> to vector<9x9xf32>
    %303 = arith.subf %299, %302 : vector<9x9xf32>
    %304 = math.exp %303 : vector<9x9xf32>
    %cst_85 = arith.constant dense<0.000000e+00> : vector<9xf32>
    %305 = vector.multi_reduction <add>, %304, %cst_85 [1] : vector<9x9xf32> to vector<9xf32>
    %306 = vector.shape_cast %305 : vector<9xf32> to vector<9x1xf32>
    %307 = tpu.reciprocal %306 {approx = true} : vector<9x1xf32> -> vector<9x1xf32>
    %308 = vector.broadcast %307 : vector<9x1xf32> to vector<9x9xf32>
    %309 = arith.mulf %304, %308 : vector<9x9xf32>
    %cst_86 = arith.constant dense<0.000000e+00> : vector<9x64xf32>
    %310 = tpu.matmul %309, %296, %cst_86 {dimension_numbers = #tpu.dot_dimension_numbers<[1], [0], [0], [1], [0, 0, 1, 1], [], []>} : vector<9x9xf32>, vector<9x64xf32>, vector<9x64xf32> -> vector<9x64xf32>
    %311 = vector.extract_strided_slice %293 {offsets = [0, 64], sizes = [9, 64], strides = [1, 1]} : vector<9x384xf32> to vector<9x64xf32>
    %312 = vector.extract_strided_slice %293 {offsets = [0, 192], sizes = [9, 64], strides = [1, 1]} : vector<9x384xf32> to vector<9x64xf32>
    %313 = vector.extract_strided_slice %293 {offsets = [0, 320], sizes = [9, 64], strides = [1, 1]} : vector<9x384xf32> to vector<9x64xf32>
    %cst_87 = arith.constant dense<0.000000e+00> : vector<9x9xf32>
    %314 = tpu.matmul %311, %312, %cst_87 {dimension_numbers = #tpu.dot_dimension_numbers<[1], [1], [0], [0], [0, 0, 1, 0], [], []>} : vector<9x64xf32>, vector<9x64xf32>, vector<9x9xf32> -> vector<9x9xf32>
    %cst_88 = arith.constant 1.250000e-01 : f32
    %315 = vector.broadcast %cst_88 : f32 to vector<9x9xf32>
    %316 = arith.mulf %314, %315 : vector<9x9xf32>
    %cst_89 = arith.constant dense<0xFF800000> : vector<9xf32>
    %317 = vector.multi_reduction <maximumf>, %316, %cst_89 [1] : vector<9x9xf32> to vector<9xf32>
    %318 = vector.shape_cast %317 : vector<9xf32> to vector<9x1xf32>
    %319 = vector.broadcast %318 : vector<9x1xf32> to vector<9x9xf32>
    %320 = arith.subf %316, %319 : vector<9x9xf32>
    %321 = math.exp %320 : vector<9x9xf32>
    %cst_90 = arith.constant dense<0.000000e+00> : vector<9xf32>
    %322 = vector.multi_reduction <add>, %321, %cst_90 [1] : vector<9x9xf32> to vector<9xf32>
    %323 = vector.shape_cast %322 : vector<9xf32> to vector<9x1xf32>
    %324 = tpu.reciprocal %323 {approx = true} : vector<9x1xf32> -> vector<9x1xf32>
    %325 = vector.broadcast %324 : vector<9x1xf32> to vector<9x9xf32>
    %326 = arith.mulf %321, %325 : vector<9x9xf32>
    %cst_91 = arith.constant dense<0.000000e+00> : vector<9x64xf32>
    %327 = tpu.matmul %326, %313, %cst_91 {dimension_numbers = #tpu.dot_dimension_numbers<[1], [0], [0], [1], [0, 0, 1, 1], [], []>} : vector<9x9xf32>, vector<9x64xf32>, vector<9x64xf32> -> vector<9x64xf32>
    %328 = tpu.concatenate %310, %327 in 1 : vector<9x64xf32>, vector<9x64xf32> -> vector<9x128xf32>
    %329 = vector.extract_strided_slice %292 {offsets = [9, 0], sizes = [9, 384], strides = [1, 1]} : vector<18x384xf32> to vector<9x384xf32>
    %330 = vector.extract_strided_slice %329 {offsets = [0, 0], sizes = [9, 64], strides = [1, 1]} : vector<9x384xf32> to vector<9x64xf32>
    %331 = vector.extract_strided_slice %329 {offsets = [0, 128], sizes = [9, 64], strides = [1, 1]} : vector<9x384xf32> to vector<9x64xf32>
    %332 = vector.extract_strided_slice %329 {offsets = [0, 256], sizes = [9, 64], strides = [1, 1]} : vector<9x384xf32> to vector<9x64xf32>
    %cst_92 = arith.constant dense<0.000000e+00> : vector<9x9xf32>
    %333 = tpu.matmul %330, %331, %cst_92 {dimension_numbers = #tpu.dot_dimension_numbers<[1], [1], [0], [0], [0, 0, 1, 0], [], []>} : vector<9x64xf32>, vector<9x64xf32>, vector<9x9xf32> -> vector<9x9xf32>
    %cst_93 = arith.constant 1.250000e-01 : f32
    %334 = vector.broadcast %cst_93 : f32 to vector<9x9xf32>
    %335 = arith.mulf %333, %334 : vector<9x9xf32>
    %cst_94 = arith.constant dense<0xFF800000> : vector<9xf32>
    %336 = vector.multi_reduction <maximumf>, %335, %cst_94 [1] : vector<9x9xf32> to vector<9xf32>
    %337 = vector.shape_cast %336 : vector<9xf32> to vector<9x1xf32>
    %338 = vector.broadcast %337 : vector<9x1xf32> to vector<9x9xf32>
    %339 = arith.subf %335, %338 : vector<9x9xf32>
    %340 = math.exp %339 : vector<9x9xf32>
    %cst_95 = arith.constant dense<0.000000e+00> : vector<9xf32>
    %341 = vector.multi_reduction <add>, %340, %cst_95 [1] : vector<9x9xf32> to vector<9xf32>
    %342 = vector.shape_cast %341 : vector<9xf32> to vector<9x1xf32>
    %343 = tpu.reciprocal %342 {approx = true} : vector<9x1xf32> -> vector<9x1xf32>
    %344 = vector.broadcast %343 : vector<9x1xf32> to vector<9x9xf32>
    %345 = arith.mulf %340, %344 : vector<9x9xf32>
    %cst_96 = arith.constant dense<0.000000e+00> : vector<9x64xf32>
    %346 = tpu.matmul %345, %332, %cst_96 {dimension_numbers = #tpu.dot_dimension_numbers<[1], [0], [0], [1], [0, 0, 1, 1], [], []>} : vector<9x9xf32>, vector<9x64xf32>, vector<9x64xf32> -> vector<9x64xf32>
    %347 = vector.extract_strided_slice %329 {offsets = [0, 64], sizes = [9, 64], strides = [1, 1]} : vector<9x384xf32> to vector<9x64xf32>
    %348 = vector.extract_strided_slice %329 {offsets = [0, 192], sizes = [9, 64], strides = [1, 1]} : vector<9x384xf32> to vector<9x64xf32>
    %349 = vector.extract_strided_slice %329 {offsets = [0, 320], sizes = [9, 64], strides = [1, 1]} : vector<9x384xf32> to vector<9x64xf32>
    %cst_97 = arith.constant dense<0.000000e+00> : vector<9x9xf32>
    %350 = tpu.matmul %347, %348, %cst_97 {dimension_numbers = #tpu.dot_dimension_numbers<[1], [1], [0], [0], [0, 0, 1, 0], [], []>} : vector<9x64xf32>, vector<9x64xf32>, vector<9x9xf32> -> vector<9x9xf32>
    %cst_98 = arith.constant 1.250000e-01 : f32
    %351 = vector.broadcast %cst_98 : f32 to vector<9x9xf32>
    %352 = arith.mulf %350, %351 : vector<9x9xf32>
    %cst_99 = arith.constant dense<0xFF800000> : vector<9xf32>
    %353 = vector.multi_reduction <maximumf>, %352, %cst_99 [1] : vector<9x9xf32> to vector<9xf32>
    %354 = vector.shape_cast %353 : vector<9xf32> to vector<9x1xf32>
    %355 = vector.broadcast %354 : vector<9x1xf32> to vector<9x9xf32>
    %356 = arith.subf %352, %355 : vector<9x9xf32>
    %357 = math.exp %356 : vector<9x9xf32>
    %cst_100 = arith.constant dense<0.000000e+00> : vector<9xf32>
    %358 = vector.multi_reduction <add>, %357, %cst_100 [1] : vector<9x9xf32> to vector<9xf32>
    %359 = vector.shape_cast %358 : vector<9xf32> to vector<9x1xf32>
    %360 = tpu.reciprocal %359 {approx = true} : vector<9x1xf32> -> vector<9x1xf32>
    %361 = vector.broadcast %360 : vector<9x1xf32> to vector<9x9xf32>
    %362 = arith.mulf %357, %361 : vector<9x9xf32>
    %cst_101 = arith.constant dense<0.000000e+00> : vector<9x64xf32>
    %363 = tpu.matmul %362, %349, %cst_101 {dimension_numbers = #tpu.dot_dimension_numbers<[1], [0], [0], [1], [0, 0, 1, 1], [], []>} : vector<9x9xf32>, vector<9x64xf32>, vector<9x64xf32> -> vector<9x64xf32>
    %364 = tpu.concatenate %346, %363 in 1 : vector<9x64xf32>, vector<9x64xf32> -> vector<9x128xf32>
    %365 = tpu.concatenate %328, %364 in 0 : vector<9x128xf32>, vector<9x128xf32> -> vector<18x128xf32>
    %c1_102 = arith.constant 1 : index
    %c0_103 = arith.constant 0 : index
    %c0_104 = arith.constant 0 : index
    %366 = vector.load %arg6[%c1_102, %c0_103, %c0_104] : memref<3x128x128xf32, #tpu.memory_space<vmem>>, vector<1x128x128xf32>
    %367 = vector.shape_cast %366 : vector<1x128x128xf32> to vector<128x128xf32>
    %cst_105 = arith.constant dense<0.000000e+00> : vector<18x128xf32>
    %368 = tpu.matmul %365, %367, %cst_105 {dimension_numbers = #tpu.dot_dimension_numbers<[1], [0], [0], [1], [0, 0, 1, 1], [], []>} : vector<18x128xf32>, vector<128x128xf32>, vector<18x128xf32> -> vector<18x128xf32>
    %369 = vector.broadcast %280 : vector<1x128xf32> to vector<18x128xf32>
    %370 = arith.addf %368, %369 : vector<18x128xf32>
    %371 = arith.addf %277, %370 : vector<18x128xf32>
    %cst_106 = arith.constant dense<0.000000e+00> : vector<18xf32>
    %372 = vector.multi_reduction <add>, %371, %cst_106 [1] : vector<18x128xf32> to vector<18xf32>
    %373 = vector.shape_cast %372 : vector<18xf32> to vector<18x1xf32>
    %cst_107 = arith.constant 1.280000e+02 : f32
    %374 = vector.broadcast %cst_107 : f32 to vector<18x1xf32>
    %375 = arith.divf %373, %374 : vector<18x1xf32>
    %376 = vector.broadcast %375 : vector<18x1xf32> to vector<18x128xf32>
    %377 = arith.subf %371, %376 : vector<18x128xf32>
    %378 = arith.mulf %377, %377 : vector<18x128xf32>
    %cst_108 = arith.constant dense<0.000000e+00> : vector<18xf32>
    %379 = vector.multi_reduction <add>, %378, %cst_108 [1] : vector<18x128xf32> to vector<18xf32>
    %380 = vector.shape_cast %379 : vector<18xf32> to vector<18x1xf32>
    %cst_109 = arith.constant 1.280000e+02 : f32
    %381 = vector.broadcast %cst_109 : f32 to vector<18x1xf32>
    %382 = arith.divf %380, %381 : vector<18x1xf32>
    %383 = vector.broadcast %375 : vector<18x1xf32> to vector<18x128xf32>
    %384 = arith.subf %371, %383 : vector<18x128xf32>
    %cst_110 = arith.constant 9.99999974E-6 : f32
    %385 = vector.broadcast %cst_110 : f32 to vector<18x1xf32>
    %386 = arith.addf %382, %385 : vector<18x1xf32>
    %387 = math.rsqrt %386 : vector<18x1xf32>
    %388 = vector.broadcast %387 : vector<18x1xf32> to vector<18x128xf32>
    %389 = arith.mulf %384, %388 : vector<18x128xf32>
    %390 = vector.broadcast %281 : vector<1x128xf32> to vector<18x128xf32>
    %391 = arith.mulf %389, %390 : vector<18x128xf32>
    %392 = vector.broadcast %282 : vector<1x128xf32> to vector<18x128xf32>
    %393 = arith.addf %391, %392 : vector<18x128xf32>
    %c1_111 = arith.constant 1 : index
    %c0_112 = arith.constant 0 : index
    %c0_113 = arith.constant 0 : index
    %394 = vector.load %arg8[%c1_111, %c0_112, %c0_113] : memref<3x128x512xf32, #tpu.memory_space<vmem>>, vector<1x128x512xf32>
    %395 = vector.shape_cast %394 : vector<1x128x512xf32> to vector<128x512xf32>
    %cst_114 = arith.constant dense<0.000000e+00> : vector<18x512xf32>
    %396 = tpu.matmul %393, %395, %cst_114 {dimension_numbers = #tpu.dot_dimension_numbers<[1], [0], [0], [1], [0, 0, 1, 1], [], []>} : vector<18x128xf32>, vector<128x512xf32>, vector<18x512xf32> -> vector<18x512xf32>
    %c1_115 = arith.constant 1 : index
    %c0_116 = arith.constant 0 : index
    %c0_117 = arith.constant 0 : index
    %397 = vector.load %arg9[%c1_115, %c0_116, %c0_117] : memref<3x1x512xf32, #tpu.memory_space<vmem>>, vector<1x1x512xf32>
    %398 = vector.shape_cast %397 : vector<1x1x512xf32> to vector<1x512xf32>
    %399 = vector.broadcast %398 : vector<1x512xf32> to vector<18x512xf32>
    %400 = arith.addf %396, %399 : vector<18x512xf32>
    %cst_118 = arith.constant 0.000000e+00 : f32
    %401 = vector.broadcast %cst_118 : f32 to vector<18x512xf32>
    %402 = arith.maximumf %400, %401 : vector<18x512xf32>
    %c1_119 = arith.constant 1 : index
    %c0_120 = arith.constant 0 : index
    %c0_121 = arith.constant 0 : index
    %403 = vector.load %arg10[%c1_119, %c0_120, %c0_121] : memref<3x512x128xf32, #tpu.memory_space<vmem>>, vector<1x512x128xf32>
    %404 = vector.shape_cast %403 : vector<1x512x128xf32> to vector<512x128xf32>
    %cst_122 = arith.constant dense<0.000000e+00> : vector<18x128xf32>
    %405 = tpu.matmul %402, %404, %cst_122 {dimension_numbers = #tpu.dot_dimension_numbers<[1], [0], [0], [1], [0, 0, 1, 1], [], []>} : vector<18x512xf32>, vector<512x128xf32>, vector<18x128xf32> -> vector<18x128xf32>
    %406 = vector.broadcast %283 : vector<1x128xf32> to vector<18x128xf32>
    %407 = arith.addf %405, %406 : vector<18x128xf32>
    %408 = arith.addf %393, %407 : vector<18x128xf32>
    %cst_123 = arith.constant dense<0.000000e+00> : vector<18xf32>
    %409 = vector.multi_reduction <add>, %408, %cst_123 [1] : vector<18x128xf32> to vector<18xf32>
    %410 = vector.shape_cast %409 : vector<18xf32> to vector<18x1xf32>
    %cst_124 = arith.constant 1.280000e+02 : f32
    %411 = vector.broadcast %cst_124 : f32 to vector<18x1xf32>
    %412 = arith.divf %410, %411 : vector<18x1xf32>
    %413 = vector.broadcast %412 : vector<18x1xf32> to vector<18x128xf32>
    %414 = arith.subf %408, %413 : vector<18x128xf32>
    %415 = arith.mulf %414, %414 : vector<18x128xf32>
    %cst_125 = arith.constant dense<0.000000e+00> : vector<18xf32>
    %416 = vector.multi_reduction <add>, %415, %cst_125 [1] : vector<18x128xf32> to vector<18xf32>
    %417 = vector.shape_cast %416 : vector<18xf32> to vector<18x1xf32>
    %cst_126 = arith.constant 1.280000e+02 : f32
    %418 = vector.broadcast %cst_126 : f32 to vector<18x1xf32>
    %419 = arith.divf %417, %418 : vector<18x1xf32>
    %420 = vector.broadcast %412 : vector<18x1xf32> to vector<18x128xf32>
    %421 = arith.subf %408, %420 : vector<18x128xf32>
    %cst_127 = arith.constant 9.99999974E-6 : f32
    %422 = vector.broadcast %cst_127 : f32 to vector<18x1xf32>
    %423 = arith.addf %419, %422 : vector<18x1xf32>
    %424 = math.rsqrt %423 : vector<18x1xf32>
    %425 = vector.broadcast %424 : vector<18x1xf32> to vector<18x128xf32>
    %426 = arith.mulf %421, %425 : vector<18x128xf32>
    %427 = vector.broadcast %284 : vector<1x128xf32> to vector<18x128xf32>
    %428 = arith.mulf %426, %427 : vector<18x128xf32>
    %429 = vector.broadcast %285 : vector<1x128xf32> to vector<18x128xf32>
    %430 = arith.addf %428, %429 : vector<18x128xf32>
    %c2_128 = arith.constant 2 : index
    %c0_129 = arith.constant 0 : index
    %c0_130 = arith.constant 0 : index
    %431 = vector.load %arg7[%c2_128, %c0_129, %c0_130] : memref<3x6x128xf32, #tpu.memory_space<vmem>>, vector<1x6x128xf32>
    %432 = vector.shape_cast %431 : vector<1x6x128xf32> to vector<6x128xf32>
    %433 = vector.extract_strided_slice %432 {offsets = [0, 0], sizes = [1, 128], strides = [1, 1]} : vector<6x128xf32> to vector<1x128xf32>
    %434 = vector.extract_strided_slice %432 {offsets = [1, 0], sizes = [1, 128], strides = [1, 1]} : vector<6x128xf32> to vector<1x128xf32>
    %435 = vector.extract_strided_slice %432 {offsets = [2, 0], sizes = [1, 128], strides = [1, 1]} : vector<6x128xf32> to vector<1x128xf32>
    %436 = vector.extract_strided_slice %432 {offsets = [3, 0], sizes = [1, 128], strides = [1, 1]} : vector<6x128xf32> to vector<1x128xf32>
    %437 = vector.extract_strided_slice %432 {offsets = [4, 0], sizes = [1, 128], strides = [1, 1]} : vector<6x128xf32> to vector<1x128xf32>
    %438 = vector.extract_strided_slice %432 {offsets = [5, 0], sizes = [1, 128], strides = [1, 1]} : vector<6x128xf32> to vector<1x128xf32>
    %c2_131 = arith.constant 2 : index
    %c0_132 = arith.constant 0 : index
    %c0_133 = arith.constant 0 : index
    %439 = vector.load %arg4[%c2_131, %c0_132, %c0_133] : memref<3x128x384xf32, #tpu.memory_space<vmem>>, vector<1x128x384xf32>
    %440 = vector.shape_cast %439 : vector<1x128x384xf32> to vector<128x384xf32>
    %cst_134 = arith.constant dense<0.000000e+00> : vector<18x384xf32>
    %441 = tpu.matmul %430, %440, %cst_134 {dimension_numbers = #tpu.dot_dimension_numbers<[1], [0], [0], [1], [0, 0, 1, 1], [], []>} : vector<18x128xf32>, vector<128x384xf32>, vector<18x384xf32> -> vector<18x384xf32>
    %c2_135 = arith.constant 2 : index
    %c0_136 = arith.constant 0 : index
    %c0_137 = arith.constant 0 : index
    %442 = vector.load %arg5[%c2_135, %c0_136, %c0_137] : memref<3x1x384xf32, #tpu.memory_space<vmem>>, vector<1x1x384xf32>
    %443 = vector.shape_cast %442 : vector<1x1x384xf32> to vector<1x384xf32>
    %444 = vector.broadcast %443 : vector<1x384xf32> to vector<18x384xf32>
    %445 = arith.addf %441, %444 : vector<18x384xf32>
    %446 = vector.extract_strided_slice %445 {offsets = [0, 0], sizes = [9, 384], strides = [1, 1]} : vector<18x384xf32> to vector<9x384xf32>
    %447 = vector.extract_strided_slice %446 {offsets = [0, 0], sizes = [9, 64], strides = [1, 1]} : vector<9x384xf32> to vector<9x64xf32>
    %448 = vector.extract_strided_slice %446 {offsets = [0, 128], sizes = [9, 64], strides = [1, 1]} : vector<9x384xf32> to vector<9x64xf32>
    %449 = vector.extract_strided_slice %446 {offsets = [0, 256], sizes = [9, 64], strides = [1, 1]} : vector<9x384xf32> to vector<9x64xf32>
    %cst_138 = arith.constant dense<0.000000e+00> : vector<9x9xf32>
    %450 = tpu.matmul %447, %448, %cst_138 {dimension_numbers = #tpu.dot_dimension_numbers<[1], [1], [0], [0], [0, 0, 1, 0], [], []>} : vector<9x64xf32>, vector<9x64xf32>, vector<9x9xf32> -> vector<9x9xf32>
    %cst_139 = arith.constant 1.250000e-01 : f32
    %451 = vector.broadcast %cst_139 : f32 to vector<9x9xf32>
    %452 = arith.mulf %450, %451 : vector<9x9xf32>
    %cst_140 = arith.constant dense<0xFF800000> : vector<9xf32>
    %453 = vector.multi_reduction <maximumf>, %452, %cst_140 [1] : vector<9x9xf32> to vector<9xf32>
    %454 = vector.shape_cast %453 : vector<9xf32> to vector<9x1xf32>
    %455 = vector.broadcast %454 : vector<9x1xf32> to vector<9x9xf32>
    %456 = arith.subf %452, %455 : vector<9x9xf32>
    %457 = math.exp %456 : vector<9x9xf32>
    %cst_141 = arith.constant dense<0.000000e+00> : vector<9xf32>
    %458 = vector.multi_reduction <add>, %457, %cst_141 [1] : vector<9x9xf32> to vector<9xf32>
    %459 = vector.shape_cast %458 : vector<9xf32> to vector<9x1xf32>
    %460 = tpu.reciprocal %459 {approx = true} : vector<9x1xf32> -> vector<9x1xf32>
    %461 = vector.broadcast %460 : vector<9x1xf32> to vector<9x9xf32>
    %462 = arith.mulf %457, %461 : vector<9x9xf32>
    %cst_142 = arith.constant dense<0.000000e+00> : vector<9x64xf32>
    %463 = tpu.matmul %462, %449, %cst_142 {dimension_numbers = #tpu.dot_dimension_numbers<[1], [0], [0], [1], [0, 0, 1, 1], [], []>} : vector<9x9xf32>, vector<9x64xf32>, vector<9x64xf32> -> vector<9x64xf32>
    %464 = vector.extract_strided_slice %446 {offsets = [0, 64], sizes = [9, 64], strides = [1, 1]} : vector<9x384xf32> to vector<9x64xf32>
    %465 = vector.extract_strided_slice %446 {offsets = [0, 192], sizes = [9, 64], strides = [1, 1]} : vector<9x384xf32> to vector<9x64xf32>
    %466 = vector.extract_strided_slice %446 {offsets = [0, 320], sizes = [9, 64], strides = [1, 1]} : vector<9x384xf32> to vector<9x64xf32>
    %cst_143 = arith.constant dense<0.000000e+00> : vector<9x9xf32>
    %467 = tpu.matmul %464, %465, %cst_143 {dimension_numbers = #tpu.dot_dimension_numbers<[1], [1], [0], [0], [0, 0, 1, 0], [], []>} : vector<9x64xf32>, vector<9x64xf32>, vector<9x9xf32> -> vector<9x9xf32>
    %cst_144 = arith.constant 1.250000e-01 : f32
    %468 = vector.broadcast %cst_144 : f32 to vector<9x9xf32>
    %469 = arith.mulf %467, %468 : vector<9x9xf32>
    %cst_145 = arith.constant dense<0xFF800000> : vector<9xf32>
    %470 = vector.multi_reduction <maximumf>, %469, %cst_145 [1] : vector<9x9xf32> to vector<9xf32>
    %471 = vector.shape_cast %470 : vector<9xf32> to vector<9x1xf32>
    %472 = vector.broadcast %471 : vector<9x1xf32> to vector<9x9xf32>
    %473 = arith.subf %469, %472 : vector<9x9xf32>
    %474 = math.exp %473 : vector<9x9xf32>
    %cst_146 = arith.constant dense<0.000000e+00> : vector<9xf32>
    %475 = vector.multi_reduction <add>, %474, %cst_146 [1] : vector<9x9xf32> to vector<9xf32>
    %476 = vector.shape_cast %475 : vector<9xf32> to vector<9x1xf32>
    %477 = tpu.reciprocal %476 {approx = true} : vector<9x1xf32> -> vector<9x1xf32>
    %478 = vector.broadcast %477 : vector<9x1xf32> to vector<9x9xf32>
    %479 = arith.mulf %474, %478 : vector<9x9xf32>
    %cst_147 = arith.constant dense<0.000000e+00> : vector<9x64xf32>
    %480 = tpu.matmul %479, %466, %cst_147 {dimension_numbers = #tpu.dot_dimension_numbers<[1], [0], [0], [1], [0, 0, 1, 1], [], []>} : vector<9x9xf32>, vector<9x64xf32>, vector<9x64xf32> -> vector<9x64xf32>
    %481 = tpu.concatenate %463, %480 in 1 : vector<9x64xf32>, vector<9x64xf32> -> vector<9x128xf32>
    %482 = vector.extract_strided_slice %445 {offsets = [9, 0], sizes = [9, 384], strides = [1, 1]} : vector<18x384xf32> to vector<9x384xf32>
    %483 = vector.extract_strided_slice %482 {offsets = [0, 0], sizes = [9, 64], strides = [1, 1]} : vector<9x384xf32> to vector<9x64xf32>
    %484 = vector.extract_strided_slice %482 {offsets = [0, 128], sizes = [9, 64], strides = [1, 1]} : vector<9x384xf32> to vector<9x64xf32>
    %485 = vector.extract_strided_slice %482 {offsets = [0, 256], sizes = [9, 64], strides = [1, 1]} : vector<9x384xf32> to vector<9x64xf32>
    %cst_148 = arith.constant dense<0.000000e+00> : vector<9x9xf32>
    %486 = tpu.matmul %483, %484, %cst_148 {dimension_numbers = #tpu.dot_dimension_numbers<[1], [1], [0], [0], [0, 0, 1, 0], [], []>} : vector<9x64xf32>, vector<9x64xf32>, vector<9x9xf32> -> vector<9x9xf32>
    %cst_149 = arith.constant 1.250000e-01 : f32
    %487 = vector.broadcast %cst_149 : f32 to vector<9x9xf32>
    %488 = arith.mulf %486, %487 : vector<9x9xf32>
    %cst_150 = arith.constant dense<0xFF800000> : vector<9xf32>
    %489 = vector.multi_reduction <maximumf>, %488, %cst_150 [1] : vector<9x9xf32> to vector<9xf32>
    %490 = vector.shape_cast %489 : vector<9xf32> to vector<9x1xf32>
    %491 = vector.broadcast %490 : vector<9x1xf32> to vector<9x9xf32>
    %492 = arith.subf %488, %491 : vector<9x9xf32>
    %493 = math.exp %492 : vector<9x9xf32>
    %cst_151 = arith.constant dense<0.000000e+00> : vector<9xf32>
    %494 = vector.multi_reduction <add>, %493, %cst_151 [1] : vector<9x9xf32> to vector<9xf32>
    %495 = vector.shape_cast %494 : vector<9xf32> to vector<9x1xf32>
    %496 = tpu.reciprocal %495 {approx = true} : vector<9x1xf32> -> vector<9x1xf32>
    %497 = vector.broadcast %496 : vector<9x1xf32> to vector<9x9xf32>
    %498 = arith.mulf %493, %497 : vector<9x9xf32>
    %cst_152 = arith.constant dense<0.000000e+00> : vector<9x64xf32>
    %499 = tpu.matmul %498, %485, %cst_152 {dimension_numbers = #tpu.dot_dimension_numbers<[1], [0], [0], [1], [0, 0, 1, 1], [], []>} : vector<9x9xf32>, vector<9x64xf32>, vector<9x64xf32> -> vector<9x64xf32>
    %500 = vector.extract_strided_slice %482 {offsets = [0, 64], sizes = [9, 64], strides = [1, 1]} : vector<9x384xf32> to vector<9x64xf32>
    %501 = vector.extract_strided_slice %482 {offsets = [0, 192], sizes = [9, 64], strides = [1, 1]} : vector<9x384xf32> to vector<9x64xf32>
    %502 = vector.extract_strided_slice %482 {offsets = [0, 320], sizes = [9, 64], strides = [1, 1]} : vector<9x384xf32> to vector<9x64xf32>
    %cst_153 = arith.constant dense<0.000000e+00> : vector<9x9xf32>
    %503 = tpu.matmul %500, %501, %cst_153 {dimension_numbers = #tpu.dot_dimension_numbers<[1], [1], [0], [0], [0, 0, 1, 0], [], []>} : vector<9x64xf32>, vector<9x64xf32>, vector<9x9xf32> -> vector<9x9xf32>
    %cst_154 = arith.constant 1.250000e-01 : f32
    %504 = vector.broadcast %cst_154 : f32 to vector<9x9xf32>
    %505 = arith.mulf %503, %504 : vector<9x9xf32>
    %cst_155 = arith.constant dense<0xFF800000> : vector<9xf32>
    %506 = vector.multi_reduction <maximumf>, %505, %cst_155 [1] : vector<9x9xf32> to vector<9xf32>
    %507 = vector.shape_cast %506 : vector<9xf32> to vector<9x1xf32>
    %508 = vector.broadcast %507 : vector<9x1xf32> to vector<9x9xf32>
    %509 = arith.subf %505, %508 : vector<9x9xf32>
    %510 = math.exp %509 : vector<9x9xf32>
    %cst_156 = arith.constant dense<0.000000e+00> : vector<9xf32>
    %511 = vector.multi_reduction <add>, %510, %cst_156 [1] : vector<9x9xf32> to vector<9xf32>
    %512 = vector.shape_cast %511 : vector<9xf32> to vector<9x1xf32>
    %513 = tpu.reciprocal %512 {approx = true} : vector<9x1xf32> -> vector<9x1xf32>
    %514 = vector.broadcast %513 : vector<9x1xf32> to vector<9x9xf32>
    %515 = arith.mulf %510, %514 : vector<9x9xf32>
    %cst_157 = arith.constant dense<0.000000e+00> : vector<9x64xf32>
    %516 = tpu.matmul %515, %502, %cst_157 {dimension_numbers = #tpu.dot_dimension_numbers<[1], [0], [0], [1], [0, 0, 1, 1], [], []>} : vector<9x9xf32>, vector<9x64xf32>, vector<9x64xf32> -> vector<9x64xf32>
    %517 = tpu.concatenate %499, %516 in 1 : vector<9x64xf32>, vector<9x64xf32> -> vector<9x128xf32>
    %518 = tpu.concatenate %481, %517 in 0 : vector<9x128xf32>, vector<9x128xf32> -> vector<18x128xf32>
    %c2_158 = arith.constant 2 : index
    %c0_159 = arith.constant 0 : index
    %c0_160 = arith.constant 0 : index
    %519 = vector.load %arg6[%c2_158, %c0_159, %c0_160] : memref<3x128x128xf32, #tpu.memory_space<vmem>>, vector<1x128x128xf32>
    %520 = vector.shape_cast %519 : vector<1x128x128xf32> to vector<128x128xf32>
    %cst_161 = arith.constant dense<0.000000e+00> : vector<18x128xf32>
    %521 = tpu.matmul %518, %520, %cst_161 {dimension_numbers = #tpu.dot_dimension_numbers<[1], [0], [0], [1], [0, 0, 1, 1], [], []>} : vector<18x128xf32>, vector<128x128xf32>, vector<18x128xf32> -> vector<18x128xf32>
    %522 = vector.broadcast %433 : vector<1x128xf32> to vector<18x128xf32>
    %523 = arith.addf %521, %522 : vector<18x128xf32>
    %524 = arith.addf %430, %523 : vector<18x128xf32>
    %cst_162 = arith.constant dense<0.000000e+00> : vector<18xf32>
    %525 = vector.multi_reduction <add>, %524, %cst_162 [1] : vector<18x128xf32> to vector<18xf32>
    %526 = vector.shape_cast %525 : vector<18xf32> to vector<18x1xf32>
    %cst_163 = arith.constant 1.280000e+02 : f32
    %527 = vector.broadcast %cst_163 : f32 to vector<18x1xf32>
    %528 = arith.divf %526, %527 : vector<18x1xf32>
    %529 = vector.broadcast %528 : vector<18x1xf32> to vector<18x128xf32>
    %530 = arith.subf %524, %529 : vector<18x128xf32>
    %531 = arith.mulf %530, %530 : vector<18x128xf32>
    %cst_164 = arith.constant dense<0.000000e+00> : vector<18xf32>
    %532 = vector.multi_reduction <add>, %531, %cst_164 [1] : vector<18x128xf32> to vector<18xf32>
    %533 = vector.shape_cast %532 : vector<18xf32> to vector<18x1xf32>
    %cst_165 = arith.constant 1.280000e+02 : f32
    %534 = vector.broadcast %cst_165 : f32 to vector<18x1xf32>
    %535 = arith.divf %533, %534 : vector<18x1xf32>
    %536 = vector.broadcast %528 : vector<18x1xf32> to vector<18x128xf32>
    %537 = arith.subf %524, %536 : vector<18x128xf32>
    %cst_166 = arith.constant 9.99999974E-6 : f32
    %538 = vector.broadcast %cst_166 : f32 to vector<18x1xf32>
    %539 = arith.addf %535, %538 : vector<18x1xf32>
    %540 = math.rsqrt %539 : vector<18x1xf32>
    %541 = vector.broadcast %540 : vector<18x1xf32> to vector<18x128xf32>
    %542 = arith.mulf %537, %541 : vector<18x128xf32>
    %543 = vector.broadcast %434 : vector<1x128xf32> to vector<18x128xf32>
    %544 = arith.mulf %542, %543 : vector<18x128xf32>
    %545 = vector.broadcast %435 : vector<1x128xf32> to vector<18x128xf32>
    %546 = arith.addf %544, %545 : vector<18x128xf32>
    %c2_167 = arith.constant 2 : index
    %c0_168 = arith.constant 0 : index
    %c0_169 = arith.constant 0 : index
    %547 = vector.load %arg8[%c2_167, %c0_168, %c0_169] : memref<3x128x512xf32, #tpu.memory_space<vmem>>, vector<1x128x512xf32>
    %548 = vector.shape_cast %547 : vector<1x128x512xf32> to vector<128x512xf32>
    %cst_170 = arith.constant dense<0.000000e+00> : vector<18x512xf32>
    %549 = tpu.matmul %546, %548, %cst_170 {dimension_numbers = #tpu.dot_dimension_numbers<[1], [0], [0], [1], [0, 0, 1, 1], [], []>} : vector<18x128xf32>, vector<128x512xf32>, vector<18x512xf32> -> vector<18x512xf32>
    %c2_171 = arith.constant 2 : index
    %c0_172 = arith.constant 0 : index
    %c0_173 = arith.constant 0 : index
    %550 = vector.load %arg9[%c2_171, %c0_172, %c0_173] : memref<3x1x512xf32, #tpu.memory_space<vmem>>, vector<1x1x512xf32>
    %551 = vector.shape_cast %550 : vector<1x1x512xf32> to vector<1x512xf32>
    %552 = vector.broadcast %551 : vector<1x512xf32> to vector<18x512xf32>
    %553 = arith.addf %549, %552 : vector<18x512xf32>
    %cst_174 = arith.constant 0.000000e+00 : f32
    %554 = vector.broadcast %cst_174 : f32 to vector<18x512xf32>
    %555 = arith.maximumf %553, %554 : vector<18x512xf32>
    %c2_175 = arith.constant 2 : index
    %c0_176 = arith.constant 0 : index
    %c0_177 = arith.constant 0 : index
    %556 = vector.load %arg10[%c2_175, %c0_176, %c0_177] : memref<3x512x128xf32, #tpu.memory_space<vmem>>, vector<1x512x128xf32>
    %557 = vector.shape_cast %556 : vector<1x512x128xf32> to vector<512x128xf32>
    %cst_178 = arith.constant dense<0.000000e+00> : vector<18x128xf32>
    %558 = tpu.matmul %555, %557, %cst_178 {dimension_numbers = #tpu.dot_dimension_numbers<[1], [0], [0], [1], [0, 0, 1, 1], [], []>} : vector<18x512xf32>, vector<512x128xf32>, vector<18x128xf32> -> vector<18x128xf32>
    %559 = vector.broadcast %436 : vector<1x128xf32> to vector<18x128xf32>
    %560 = arith.addf %558, %559 : vector<18x128xf32>
    %561 = arith.addf %546, %560 : vector<18x128xf32>
    %cst_179 = arith.constant dense<0.000000e+00> : vector<18xf32>
    %562 = vector.multi_reduction <add>, %561, %cst_179 [1] : vector<18x128xf32> to vector<18xf32>
    %563 = vector.shape_cast %562 : vector<18xf32> to vector<18x1xf32>
    %cst_180 = arith.constant 1.280000e+02 : f32
    %564 = vector.broadcast %cst_180 : f32 to vector<18x1xf32>
    %565 = arith.divf %563, %564 : vector<18x1xf32>
    %566 = vector.broadcast %565 : vector<18x1xf32> to vector<18x128xf32>
    %567 = arith.subf %561, %566 : vector<18x128xf32>
    %568 = arith.mulf %567, %567 : vector<18x128xf32>
    %cst_181 = arith.constant dense<0.000000e+00> : vector<18xf32>
    %569 = vector.multi_reduction <add>, %568, %cst_181 [1] : vector<18x128xf32> to vector<18xf32>
    %570 = vector.shape_cast %569 : vector<18xf32> to vector<18x1xf32>
    %cst_182 = arith.constant 1.280000e+02 : f32
    %571 = vector.broadcast %cst_182 : f32 to vector<18x1xf32>
    %572 = arith.divf %570, %571 : vector<18x1xf32>
    %573 = vector.broadcast %565 : vector<18x1xf32> to vector<18x128xf32>
    %574 = arith.subf %561, %573 : vector<18x128xf32>
    %cst_183 = arith.constant 9.99999974E-6 : f32
    %575 = vector.broadcast %cst_183 : f32 to vector<18x1xf32>
    %576 = arith.addf %572, %575 : vector<18x1xf32>
    %577 = math.rsqrt %576 : vector<18x1xf32>
    %578 = vector.broadcast %577 : vector<18x1xf32> to vector<18x128xf32>
    %579 = arith.mulf %574, %578 : vector<18x128xf32>
    %580 = vector.broadcast %437 : vector<1x128xf32> to vector<18x128xf32>
    %581 = arith.mulf %579, %580 : vector<18x128xf32>
    %582 = vector.broadcast %438 : vector<1x128xf32> to vector<18x128xf32>
    %583 = arith.addf %581, %582 : vector<18x128xf32>
    %c0_184 = arith.constant 0 : index
    %c0_185 = arith.constant 0 : index
    %584 = vector.load %arg11[%c0_184, %c0_185] : memref<129x2xf32, #tpu.memory_space<vmem>>, vector<128x2xf32>
    %cst_186 = arith.constant dense<0.000000e+00> : vector<18x2xf32>
    %585 = tpu.matmul %583, %584, %cst_186 {dimension_numbers = #tpu.dot_dimension_numbers<[1], [0], [0], [1], [0, 0, 1, 1], [], []>} : vector<18x128xf32>, vector<128x2xf32>, vector<18x2xf32> -> vector<18x2xf32>
    %c128 = arith.constant 128 : index
    %c0_187 = arith.constant 0 : index
    %586 = vector.load %arg11[%c128, %c0_187] : memref<129x2xf32, #tpu.memory_space<vmem>>, vector<1x2xf32>
    %587 = vector.broadcast %586 : vector<1x2xf32> to vector<18x2xf32>
    %588 = arith.addf %585, %587 : vector<18x2xf32>
    %589 = vector.extract_strided_slice %588 {offsets = [0, 0], sizes = [8, 2], strides = [1, 1]} : vector<18x2xf32> to vector<8x2xf32>
    %c0_188 = arith.constant 0 : index
    %c0_189 = arith.constant 0 : index
    %c0_190 = arith.constant 0 : index
    %590 = vector.load %arg12[%c0_188, %c0_189, %c0_190] : memref<2x8x2xf32, #tpu.memory_space<vmem>>, vector<1x8x2xf32>
    %591 = vector.shape_cast %590 : vector<1x8x2xf32> to vector<8x2xf32>
    %592 = vector.shape_cast %589 : vector<8x2xf32> to vector<1x8x2xf32>
    tpu.vector_store %arg12[%c0_188, %c0_189, %c0_190], %592 {strides = array<i32>} : memref<2x8x2xf32, #tpu.memory_space<vmem>>, vector<1x8x2xf32>,
    %593 = vector.extract_strided_slice %588 {offsets = [9, 0], sizes = [8, 2], strides = [1, 1]} : vector<18x2xf32> to vector<8x2xf32>
    %c1_191 = arith.constant 1 : index
    %c0_192 = arith.constant 0 : index
    %c0_193 = arith.constant 0 : index
    %594 = vector.load %arg12[%c1_191, %c0_192, %c0_193] : memref<2x8x2xf32, #tpu.memory_space<vmem>>, vector<1x8x2xf32>
    %595 = vector.shape_cast %594 : vector<1x8x2xf32> to vector<8x2xf32>
    %596 = vector.shape_cast %593 : vector<8x2xf32> to vector<1x8x2xf32>
    tpu.vector_store %arg12[%c1_191, %c0_192, %c0_193], %596 {strides = array<i32>} : memref<2x8x2xf32, #tpu.memory_space<vmem>>, vector<1x8x2xf32>,
    return
  }
  func.func @transform_0(%arg0: i32) -> (i32, i32, i32) {
    %c0_i32 = arith.constant 0 : i32
    %c0_i32_0 = arith.constant 0 : i32
    %c0_i32_1 = arith.constant 0 : i32
    return %arg0, %c0_i32, %c0_i32_0 : i32, i32, i32
  }
  func.func @transform_1(%arg0: i32) -> (i32, i32, i32) {
    %c0_i32 = arith.constant 0 : i32
    %c0_i32_0 = arith.constant 0 : i32
    %c0_i32_1 = arith.constant 0 : i32
    return %arg0, %c0_i32, %c0_i32_0 : i32, i32, i32
  }
  func.func @transform_2(%arg0: i32) -> (i32, i32) {
    %c0_i32 = arith.constant 0 : i32
    %c0_i32_0 = arith.constant 0 : i32
    %c0_i32_1 = arith.constant 0 : i32
    return %c0_i32, %c0_i32_0 : i32, i32
  }
  func.func @transform_3(%arg0: i32) -> (i32, i32, i32) {
    %c0_i32 = arith.constant 0 : i32
    %c0_i32_0 = arith.constant 0 : i32
    %c0_i32_1 = arith.constant 0 : i32
    %c0_i32_2 = arith.constant 0 : i32
    return %c0_i32, %c0_i32_0, %c0_i32_1 : i32, i32, i32
  }
  func.func @transform_4(%arg0: i32) -> (i32, i32, i32) {
    %c0_i32 = arith.constant 0 : i32
    %c0_i32_0 = arith.constant 0 : i32
    %c0_i32_1 = arith.constant 0 : i32
    %c0_i32_2 = arith.constant 0 : i32
    return %c0_i32, %c0_i32_0, %c0_i32_1 : i32, i32, i32
  }
  func.func @transform_5(%arg0: i32) -> (i32, i32, i32) {
    %c0_i32 = arith.constant 0 : i32
    %c0_i32_0 = arith.constant 0 : i32
    %c0_i32_1 = arith.constant 0 : i32
    %c0_i32_2 = arith.constant 0 : i32
    return %c0_i32, %c0_i32_0, %c0_i32_1 : i32, i32, i32
  }
  func.func @transform_6(%arg0: i32) -> (i32, i32, i32) {
    %c0_i32 = arith.constant 0 : i32
    %c0_i32_0 = arith.constant 0 : i32
    %c0_i32_1 = arith.constant 0 : i32
    %c0_i32_2 = arith.constant 0 : i32
    return %c0_i32, %c0_i32_0, %c0_i32_1 : i32, i32, i32
  }
  func.func @transform_7(%arg0: i32) -> (i32, i32, i32) {
    %c0_i32 = arith.constant 0 : i32
    %c0_i32_0 = arith.constant 0 : i32
    %c0_i32_1 = arith.constant 0 : i32
    %c0_i32_2 = arith.constant 0 : i32
    return %c0_i32, %c0_i32_0, %c0_i32_1 : i32, i32, i32
  }
  func.func @transform_8(%arg0: i32) -> (i32, i32, i32) {
    %c0_i32 = arith.constant 0 : i32
    %c0_i32_0 = arith.constant 0 : i32
    %c0_i32_1 = arith.constant 0 : i32
    %c0_i32_2 = arith.constant 0 : i32
    return %c0_i32, %c0_i32_0, %c0_i32_1 : i32, i32, i32
  }
  func.func @transform_9(%arg0: i32) -> (i32, i32, i32) {
    %c0_i32 = arith.constant 0 : i32
    %c0_i32_0 = arith.constant 0 : i32
    %c0_i32_1 = arith.constant 0 : i32
    %c0_i32_2 = arith.constant 0 : i32
    return %c0_i32, %c0_i32_0, %c0_i32_1 : i32, i32, i32
  }
  func.func @transform_10(%arg0: i32) -> (i32, i32) {
    %c0_i32 = arith.constant 0 : i32
    %c0_i32_0 = arith.constant 0 : i32
    %c0_i32_1 = arith.constant 0 : i32
    return %c0_i32, %c0_i32_0 : i32, i32
  }
  func.func @transform_11(%arg0: i32) -> (i32, i32, i32) {
    %c0_i32 = arith.constant 0 : i32
    %c0_i32_0 = arith.constant 0 : i32
    %c0_i32_1 = arith.constant 0 : i32
    return %arg0, %c0_i32, %c0_i32_0 : i32, i32, i32
  }
}

</mosaic_0001>

<llo_original>
// kernel: transformer_linear_forward.1
$region0: #{transformer_linear_forward.1}
  #allocation0 [shape = 'u32[]', space=smem, size = 0x4, offset = 0x4, fixed_abs, tag = 'smem constant byte address 0x4 - core index']
  #allocation1 [shape = 'u32[144,128]{1,0:T(1,128)}', space=vmem, size = 0x12000, scoped, tag = 'internal scratch']
  %s0 = inlined_call_operand.vmem [shape: f32[2,8,2], index: 0, kind: input, shape index: {}]
  %s1 = inlined_call_operand.vmem [shape: f32[2,1,8], index: 1, kind: input, shape index: {}]
  %s2 = inlined_call_operand.vmem [shape: f32[21,128], index: 2, kind: input, shape index: {}]
  %s3 = inlined_call_operand.vmem [shape: f32[3,128,384], index: 3, kind: input, shape index: {}]
  %s4 = inlined_call_operand.vmem [shape: f32[3,1,384], index: 4, kind: input, shape index: {}]
  %s5 = inlined_call_operand.vmem [shape: f32[3,128,128], index: 5, kind: input, shape index: {}]
  %s6 = inlined_call_operand.vmem [shape: f32[3,6,128], index: 6, kind: input, shape index: {}]
  %s7 = inlined_call_operand.vmem [shape: f32[3,128,512], index: 7, kind: input, shape index: {}]
  %s8 = inlined_call_operand.vmem [shape: f32[3,1,512], index: 8, kind: input, shape index: {}]
  %s9 = inlined_call_operand.hbm [shape: f32[3,512,128], index: 9, kind: input, shape index: {}]
  %s10 = inlined_call_operand.vmem [shape: f32[129,2], index: 10, kind: input, shape index: {}]
  %s11 = inlined_call_operand.vmem [shape: f32[2,8,2], index: 11, kind: output, shape index: {}]
  %s12 = sld [smem:[#allocation0]]
  $region58: #{transformer_linear_forward.1} parent=0
    _
  %s14 = ssub.s32 1, %s12
  %s15 = scalar_select 0, %s14, %s12
  $region1: #{transformer_linear_forward.1} parent=0
    #allocation2 [shape = 'u8[786432]{0}', space=vmem, size = 0xc0000, scoped, tag = 'input window, operand 9, single buffered']
    #allocation3 [shape = 's32[1]{0}', space=sflag, size = 0x4, scoped, tag = 'scoped memory for transformer_linear_forward.1']
    %16 = vsyncpa [#allocation3], 0
    // Predicated region
    $region2: #{transformer_linear_forward.1} parent=1 // pred_check
      _
    $region3: #{transformer_linear_forward.1} parent=1 // pred_check_branch
      %18 = sbr.rel (0) target = $region5
    $region4: #{transformer_linear_forward.1} parent=1 // pred_region
      _
    $region5: #{transformer_linear_forward.1} parent=1 // pred_fallthru
      _
    // Predicated region
    $region6: #{transformer_linear_forward.1} parent=1 // pred_check
      _
    $region7: #{transformer_linear_forward.1} parent=1 // pred_check_branch
      %20 = sbr.rel (0) target = $region9
    $region8: #{transformer_linear_forward.1} parent=1 // pred_region
      _
    $region9: #{transformer_linear_forward.1} parent=1 // pred_fallthru
      _
    // Predicated region
    $region10: #{transformer_linear_forward.1} parent=1 // pred_check
      _
    $region11: #{transformer_linear_forward.1} parent=1 // pred_check_branch
      %22 = sbr.rel (0) target = $region13
    $region12: #{transformer_linear_forward.1} parent=1 // pred_region
      _
    $region13: #{transformer_linear_forward.1} parent=1 // pred_fallthru
      _
    // Predicated region
    $region14: #{transformer_linear_forward.1} parent=1 // pred_check
      _
    $region15: #{transformer_linear_forward.1} parent=1 // pred_check_branch
      %24 = sbr.rel (0) target = $region17
    $region16: #{transformer_linear_forward.1} parent=1 // pred_region
      _
    $region17: #{transformer_linear_forward.1} parent=1 // pred_fallthru
      _
    // Predicated region
    $region18: #{transformer_linear_forward.1} parent=1 // pred_check
      _
    $region19: #{transformer_linear_forward.1} parent=1 // pred_check_branch
      %26 = sbr.rel (0) target = $region21
    $region20: #{transformer_linear_forward.1} parent=1 // pred_region
      _
    $region21: #{transformer_linear_forward.1} parent=1 // pred_fallthru
      _
    // Predicated region
    $region22: #{transformer_linear_forward.1} parent=1 // pred_check
      _
    $region23: #{transformer_linear_forward.1} parent=1 // pred_check_branch
      %28 = sbr.rel (0) target = $region25
    $region24: #{transformer_linear_forward.1} parent=1 // pred_region
      _
    $region25: #{transformer_linear_forward.1} parent=1 // pred_fallthru
      _
    // Predicated region
    $region26: #{transformer_linear_forward.1} parent=1 // pred_check
      _
    $region27: #{transformer_linear_forward.1} parent=1 // pred_check_branch
      %30 = sbr.rel (0) target = $region29
    $region28: #{transformer_linear_forward.1} parent=1 // pred_region
      _
    $region29: #{transformer_linear_forward.1} parent=1 // pred_fallthru
      _
    // Predicated region
    $region30: #{transformer_linear_forward.1} parent=1 // pred_check
      _
    $region31: #{transformer_linear_forward.1} parent=1 // pred_check_branch
      %32 = sbr.rel (0) target = $region33
    $region32: #{transformer_linear_forward.1} parent=1 // pred_region
      _
    $region33: #{transformer_linear_forward.1} parent=1 // pred_fallthru
      _
    // Predicated region
    $region34: #{transformer_linear_forward.1} parent=1 // pred_check
      _
    $region35: #{transformer_linear_forward.1} parent=1 // pred_check_branch
      %34 = sbr.rel (0) target = $region37
    $region36: #{transformer_linear_forward.1} parent=1 // pred_region
      _
    $region37: #{transformer_linear_forward.1} parent=1 // pred_fallthru
      _
    // Predicated region
    $region38: #{transformer_linear_forward.1} parent=1 // pred_check
      _
    $region39: #{transformer_linear_forward.1} parent=1 // pred_check_branch
      %36 = sbr.rel (0) target = $region41
    $region40: #{transformer_linear_forward.1} parent=1 // pred_region
      %s38 = ssub.s32 24576, 24576
      %39 = vsyncadd [#allocation3], %s38
      %s40 = sshll.u32 [#allocation2], 4
      %s41 = int_to_ptr.vmem [resolvable:$true] %s40
      %46 = dma.hbm_to_vmem [thread:$0]  %s9, 24576, %s41, [#allocation3], 128, 128, 8
    $region41: #{transformer_linear_forward.1} parent=1 // pred_fallthru
      _
    // Predicated region
    $region42: #{transformer_linear_forward.1} parent=1 // pred_check
      _
    $region43: #{transformer_linear_forward.1} parent=1 // pred_check_branch
      %48 = sbr.rel (0) target = $region45
    $region44: #{transformer_linear_forward.1} parent=1 // pred_region
      _
    $region45: #{transformer_linear_forward.1} parent=1 // pred_fallthru
      _
    // Predicated region
    $region46: #{transformer_linear_forward.1} parent=1 // pred_check
      _
    $region47: #{transformer_linear_forward.1} parent=1 // pred_check_branch
      %50 = sbr.rel (0) target = $region49
    $region48: #{transformer_linear_forward.1} parent=1 // pred_region
      %51 = dma.done [#allocation3], 24576
    $region49: #{transformer_linear_forward.1} parent=1 // pred_fallthru
      _
    %v52 = vld [vmem:[%s2] sm:$0x3]
    %v53 = vld [vmem:[%s2 + $0x2] sm:$0x1]
    %v54 = vld [vmem:[%s2 + $0x3] sm:$0xff]
    %v55 = vld [vmem:[%s2 + $0xb] sm:$0x1]
    %v56 = vld [vmem:[%s2 + $0xc] sm:$0xff]
    %v57 = vld [vmem:[%s2 + $0x14] sm:$0x1]
    %v58 = vld [vmem:[%s0] sm:$0xff]
    %v59 = vlaneseq
    %v60 = vshrl.u32 %v59, 7
    %v61 = vsub.s32 0, %v60
    %v62 = vrot.slane %v53, %v61
    %v63 = vadd.f32 %v62, %v56
    %65 = vset.pattern.permute.xlu0 0
    %66 = vperm.xlu0 %65, %v58
    %v67 = vpop.permute.xlu0 %66
    %v69 = vlaneseq
    %v70 = vshrl.u32 %v69, 7
    %v71 = vsub.s32 0, %v70
    %v72 = vrot.slane %v52, %v71
    %v73 = vmul.f32 %v67, %v72
    %v74 = vadd.f32 %v63, %v73
    %75 = vset.pattern.permute.xlu0 1
    %76 = vperm.xlu0 %75, %v58
    %v77 = vpop.permute.xlu0 %76
    %v79 = vlaneseq
    %v80 = vshrl.u32 %v79, 7
    %v81 = vsub.s32 1, %v80
    %v82 = vrot.slane %v52, %v81
    %v83 = vmul.f32 %v77, %v82
    %v84 = vadd.f32 %v74, %v83
    %v85 = vld [vmem:[%s1] sm:$0x1]
    %v86 = vadd.f32 %v55, %v57
    %88 = vset.pattern.permute.xlu0 0
    %89 = vperm.xlu0 %88, %v85
    %v90 = vpop.permute.xlu0 %89
    %v92 = vlaneseq
    %v93 = vshrl.u32 %v92, 7
    %v94 = vsub.s32 0, %v93
    %v95 = vrot.slane %v90, %v94
    %v96 = vmul.f32 %v95, %v54
    %v97 = vadd.f32 %v86, %v96
    %98 = vset.pattern.permute.xlu0 1
    %99 = vperm.xlu0 %98, %v85
    %v100 = vpop.permute.xlu0 %99
    %v102 = vlaneseq
    %v103 = vshrl.u32 %v102, 7
    %v104 = vsub.s32 0, %v103
    %v105 = vrot.slane %v100, %v104
    %v106 = vmul.f32 %v105, %v54
    %v108 = vrot.slane %v106, 1
    %v110 = vadd.f32 %v97, %v108
    %111 = vset.pattern.permute.xlu0 2
    %112 = vperm.xlu0 %111, %v85
    %v113 = vpop.permute.xlu0 %112
    %v115 = vlaneseq
    %v116 = vshrl.u32 %v115, 7
    %v117 = vsub.s32 0, %v116
    %v118 = vrot.slane %v113, %v117
    %v119 = vmul.f32 %v118, %v54
    %v121 = vrot.slane %v119, 2
    %v123 = vadd.f32 %v110, %v121
    %124 = vset.pattern.permute.xlu0 3
    %125 = vperm.xlu0 %124, %v85
    %v126 = vpop.permute.xlu0 %125
    %v128 = vlaneseq
    %v129 = vshrl.u32 %v128, 7
    %v130 = vsub.s32 0, %v129
    %v131 = vrot.slane %v126, %v130
    %v132 = vmul.f32 %v131, %v54
    %v134 = vrot.slane %v132, 3
    %v136 = vadd.f32 %v123, %v134
    %137 = vset.pattern.permute.xlu0 4
    %138 = vperm.xlu0 %137, %v85
    %v139 = vpop.permute.xlu0 %138
    %v141 = vlaneseq
    %v142 = vshrl.u32 %v141, 7
    %v143 = vsub.s32 0, %v142
    %v144 = vrot.slane %v139, %v143
    %v145 = vmul.f32 %v144, %v54
    %v147 = vrot.slane %v145, 4
    %v149 = vadd.f32 %v136, %v147
    %150 = vset.pattern.permute.xlu0 5
    %151 = vperm.xlu0 %150, %v85
    %v152 = vpop.permute.xlu0 %151
    %v154 = vlaneseq
    %v155 = vshrl.u32 %v154, 7
    %v156 = vsub.s32 0, %v155
    %v157 = vrot.slane %v152, %v156
    %v158 = vmul.f32 %v157, %v54
    %v160 = vrot.slane %v158, 5
    %v162 = vadd.f32 %v149, %v160
    %163 = vset.pattern.permute.xlu0 6
    %164 = vperm.xlu0 %163, %v85
    %v165 = vpop.permute.xlu0 %164
    %v167 = vlaneseq
    %v168 = vshrl.u32 %v167, 7
    %v169 = vsub.s32 0, %v168
    %v170 = vrot.slane %v165, %v169
    %v171 = vmul.f32 %v170, %v54
    %v173 = vrot.slane %v171, 6
    %v175 = vadd.f32 %v162, %v173
    %176 = vset.pattern.permute.xlu0 7
    %177 = vperm.xlu0 %176, %v85
    %v178 = vpop.permute.xlu0 %177
    %v180 = vlaneseq
    %v181 = vshrl.u32 %v180, 7
    %v182 = vsub.s32 0, %v181
    %v183 = vrot.slane %v178, %v182
    %v184 = vmul.f32 %v183, %v54
    %v186 = vrot.slane %v184, 7
    %v188 = vadd.f32 %v175, %v186
    %s189 = scalar_lea.vmem %s0, 8
    %v190 = vld [vmem:[%s189] sm:$0xff]
    %192 = vset.pattern.permute.xlu0 0
    %193 = vperm.xlu0 %192, %v190
    %v194 = vpop.permute.xlu0 %193
    %v196 = vmul.f32 %v194, %v72
    %v197 = vadd.f32 %v63, %v196
    %198 = vset.pattern.permute.xlu0 1
    %199 = vperm.xlu0 %198, %v190
    %v200 = vpop.permute.xlu0 %199
    %v202 = vmul.f32 %v200, %v82
    %v203 = vadd.f32 %v197, %v202
    %s204 = scalar_lea.vmem %s1, 1
    %v205 = vld [vmem:[%s204] sm:$0x1]
    %207 = vset.pattern.permute.xlu0 0
    %208 = vperm.xlu0 %207, %v205
    %v209 = vpop.permute.xlu0 %208
    %v211 = vlaneseq
    %v212 = vshrl.u32 %v211, 7
    %v213 = vsub.s32 0, %v212
    %v214 = vrot.slane %v209, %v213
    %v215 = vmul.f32 %v214, %v54
    %v216 = vadd.f32 %v86, %v215
    %217 = vset.pattern.permute.xlu0 1
    %218 = vperm.xlu0 %217, %v205
    %v219 = vpop.permute.xlu0 %218
    %v221 = vlaneseq
    %v222 = vshrl.u32 %v221, 7
    %v223 = vsub.s32 0, %v222
    %v224 = vrot.slane %v219, %v223
    %v225 = vmul.f32 %v224, %v54
    %v227 = vrot.slane %v225, 1
    %v229 = vadd.f32 %v216, %v227
    %230 = vset.pattern.permute.xlu0 2
    %231 = vperm.xlu0 %230, %v205
    %v232 = vpop.permute.xlu0 %231
    %v234 = vlaneseq
    %v235 = vshrl.u32 %v234, 7
    %v236 = vsub.s32 0, %v235
    %v237 = vrot.slane %v232, %v236
    %v238 = vmul.f32 %v237, %v54
    %v240 = vrot.slane %v238, 2
    %v242 = vadd.f32 %v229, %v240
    %243 = vset.pattern.permute.xlu0 3
    %244 = vperm.xlu0 %243, %v205
    %v245 = vpop.permute.xlu0 %244
    %v247 = vlaneseq
    %v248 = vshrl.u32 %v247, 7
    %v249 = vsub.s32 0, %v248
    %v250 = vrot.slane %v245, %v249
    %v251 = vmul.f32 %v250, %v54
    %v253 = vrot.slane %v251, 3
    %v255 = vadd.f32 %v242, %v253
    %256 = vset.pattern.permute.xlu0 4
    %257 = vperm.xlu0 %256, %v205
    %v258 = vpop.permute.xlu0 %257
    %v260 = vlaneseq
    %v261 = vshrl.u32 %v260, 7
    %v262 = vsub.s32 0, %v261
    %v263 = vrot.slane %v258, %v262
    %v264 = vmul.f32 %v263, %v54
    %v266 = vrot.slane %v264, 4
    %v268 = vadd.f32 %v255, %v266
    %269 = vset.pattern.permute.xlu0 5
    %270 = vperm.xlu0 %269, %v205
    %v271 = vpop.permute.xlu0 %270
    %v273 = vlaneseq
    %v274 = vshrl.u32 %v273, 7
    %v275 = vsub.s32 0, %v274
    %v276 = vrot.slane %v271, %v275
    %v277 = vmul.f32 %v276, %v54
    %v279 = vrot.slane %v277, 5
    %v281 = vadd.f32 %v268, %v279
    %282 = vset.pattern.permute.xlu0 6
    %283 = vperm.xlu0 %282, %v205
    %v284 = vpop.permute.xlu0 %283
    %v286 = vlaneseq
    %v287 = vshrl.u32 %v286, 7
    %v288 = vsub.s32 0, %v287
    %v289 = vrot.slane %v284, %v288
    %v290 = vmul.f32 %v289, %v54
    %v292 = vrot.slane %v290, 6
    %v294 = vadd.f32 %v281, %v292
    %295 = vset.pattern.permute.xlu0 7
    %296 = vperm.xlu0 %295, %v205
    %v297 = vpop.permute.xlu0 %296
    %v299 = vlaneseq
    %v300 = vshrl.u32 %v299, 7
    %v301 = vsub.s32 0, %v300
    %v302 = vrot.slane %v297, %v301
    %v303 = vmul.f32 %v302, %v54
    %v305 = vrot.slane %v303, 7
    %v307 = vadd.f32 %v294, %v305
    %v309 = vrot.slane %v203, 7
    %v312 = vrot.slane %v307, 7
    %vm314 = vcmask 1040384
    %v315 = vsel %vm314, %v188, %v309
    %v316 = vsel %vm314, %v309, %v312
    %v317 = vld [vmem:[%s6] sm:$0x3f]
    %v318 = vld [vmem:[%s3] sm:$0xff]
    %v319 = vld [vmem:[%s3 + $0x8] sm:$0xff]
    %v320 = vld [vmem:[%s3 + $0x10] sm:$0xff]
    %v321 = vld [vmem:[%s3 + $0x18] sm:$0xff]
    %v322 = vld [vmem:[%s3 + $0x20] sm:$0xff]
    %v323 = vld [vmem:[%s3 + $0x28] sm:$0xff]
    %v324 = vld [vmem:[%s3 + $0x30] sm:$0xff]
    %v325 = vld [vmem:[%s3 + $0x38] sm:$0xff]
    %v326 = vld [vmem:[%s3 + $0x40] sm:$0xff]
    %v327 = vld [vmem:[%s3 + $0x48] sm:$0xff]
    %v328 = vld [vmem:[%s3 + $0x50] sm:$0xff]
    %v329 = vld [vmem:[%s3 + $0x58] sm:$0xff]
    %v330 = vld [vmem:[%s3 + $0x60] sm:$0xff]
    %v331 = vld [vmem:[%s3 + $0x68] sm:$0xff]
    %v332 = vld [vmem:[%s3 + $0x70] sm:$0xff]
    %v333 = vld [vmem:[%s3 + $0x78] sm:$0xff]
    %v334 = vld [vmem:[%s3 + $0x80] sm:$0xff]
    %v335 = vld [vmem:[%s3 + $0x88] sm:$0xff]
    %v336 = vld [vmem:[%s3 + $0x90] sm:$0xff]
    %v337 = vld [vmem:[%s3 + $0x98] sm:$0xff]
    %v338 = vld [vmem:[%s3 + $0xa0] sm:$0xff]
    %v339 = vld [vmem:[%s3 + $0xa8] sm:$0xff]
    %v340 = vld [vmem:[%s3 + $0xb0] sm:$0xff]
    %v341 = vld [vmem:[%s3 + $0xb8] sm:$0xff]
    %v342 = vld [vmem:[%s3 + $0xc0] sm:$0xff]
    %v343 = vld [vmem:[%s3 + $0xc8] sm:$0xff]
    %v344 = vld [vmem:[%s3 + $0xd0] sm:$0xff]
    %v345 = vld [vmem:[%s3 + $0xd8] sm:$0xff]
    %v346 = vld [vmem:[%s3 + $0xe0] sm:$0xff]
    %v347 = vld [vmem:[%s3 + $0xe8] sm:$0xff]
    %v348 = vld [vmem:[%s3 + $0xf0] sm:$0xff]
    %v349 = vld [vmem:[%s3 + $0xf8] sm:$0xff]
    %v350 = vld [vmem:[%s3 + $0x100] sm:$0xff]
    %v351 = vld [vmem:[%s3 + $0x108] sm:$0xff]
    %v352 = vld [vmem:[%s3 + $0x110] sm:$0xff]
    %v353 = vld [vmem:[%s3 + $0x118] sm:$0xff]
    %v354 = vld [vmem:[%s3 + $0x120] sm:$0xff]
    %v355 = vld [vmem:[%s3 + $0x128] sm:$0xff]
    %v356 = vld [vmem:[%s3 + $0x130] sm:$0xff]
    %v357 = vld [vmem:[%s3 + $0x138] sm:$0xff]
    %v358 = vld [vmem:[%s3 + $0x140] sm:$0xff]
    %v359 = vld [vmem:[%s3 + $0x148] sm:$0xff]
    %v360 = vld [vmem:[%s3 + $0x150] sm:$0xff]
    %v361 = vld [vmem:[%s3 + $0x158] sm:$0xff]
    %v362 = vld [vmem:[%s3 + $0x160] sm:$0xff]
    %v363 = vld [vmem:[%s3 + $0x168] sm:$0xff]
    %v364 = vld [vmem:[%s3 + $0x170] sm:$0xff]
    %v365 = vld [vmem:[%s3 + $0x178] sm:$0xff]
    %v366 = vld [vmem:[%s4] sm:$0x7]
    %v368 = vlaneseq
    %v369 = vshrl.u32 %v368, 7
    %v370 = vsub.s32 0, %v369
    %v371 = vrot.slane %v366, %v370
    %v372 = vlaneseq
    %v373 = vshrl.u32 %v372, 7
    %v374 = vsub.s32 1, %v373
    %v375 = vrot.slane %v366, %v374
    %v376 = vlaneseq
    %v377 = vshrl.u32 %v376, 7
    %v378 = vsub.s32 2, %v377
    %v379 = vrot.slane %v366, %v378
    %383 = vmatprep.subr.mxu0 %v319
    %384 = vmatpush1.msra.mxu0 %v318
    %385 = vmatprep.subr.mxu0 %v322
    %386 = vmatpush1.msra.mxu0 %v321
    %387 = vmatprep.subr.mxu0 %v325
    %388 = vmatpush1.msra.mxu0 %v324
    %389 = vmatprep.subr.mxu0 %v328
    %390 = vmatpush1.msra.mxu0 %v327
    %391 = vmatprep.subr.mxu0 %v331
    %392 = vmatpush1.msra.mxu0 %v330
    %393 = vmatprep.subr.mxu0 %v334
    %394 = vmatpush1.msra.mxu0 %v333
    %395 = vmatprep.subr.mxu0 %v337
    %396 = vmatpush1.msra.mxu0 %v336
    %397 = vmatprep.subr.mxu0 %v340
    %398 = vmatpush1.msra.mxu0 %v339
    %399 = vmatprep.subr.mxu0 %v343
    %400 = vmatpush1.msra.mxu0 %v342
    %401 = vmatprep.subr.mxu0 %v346
    %402 = vmatpush1.msra.mxu0 %v345
    %403 = vmatprep.subr.mxu0 %v349
    %404 = vmatpush1.msra.mxu0 %v348
    %405 = vmatprep.subr.mxu0 %v352
    %406 = vmatpush1.msra.mxu0 %v351
    %407 = vmatprep.subr.mxu0 %v355
    %408 = vmatpush1.msra.mxu0 %v354
    %409 = vmatprep.subr.mxu0 %v358
    %410 = vmatpush1.msra.mxu0 %v357
    %411 = vmatprep.subr.mxu0 %v361
    %412 = vmatpush1.msra.mxu0 %v360
    %413 = vmatprep.subr.mxu0 %v364
    %414 = vmatpush1.msra.mxu0 %v363
    %415 = vmatprep.subr.mxu0 0.0
    %416 = vmatpush1.msra.mxu0 0.0
    %417 = vmatprep.subr.mxu0 0.0
    %418 = vmatpush1.msra.mxu0 0.0
    %419 = vmatprep.subr.mxu0 0.0
    %420 = vmatpush1.msra.mxu0 0.0
    %421 = vmatprep.subr.mxu0 0.0
    %422 = vmatpush1.msra.mxu0 0.0
    %423 = vmatprep.subr.mxu0 0.0
    %424 = vmatpush1.msra.mxu0 0.0
    %425 = vmatprep.subr.mxu0 0.0
    %426 = vmatpush1.msra.mxu0 0.0
    %427 = vmatprep.subr.mxu0 0.0
    %428 = vmatpush1.msra.mxu0 0.0
    %429 = vmatprep.subr.mxu0 0.0
    %430 = vmatpush1.msra.mxu0 0.0
    %431 = vmatprep.subr.mxu0 0.0
    %432 = vmatpush1.msra.mxu0 0.0
    %433 = vmatprep.subr.mxu0 0.0
    %434 = vmatpush1.msra.mxu0 0.0
    %435 = vmatprep.subr.mxu0 0.0
    %436 = vmatpush1.msra.mxu0 0.0
    %437 = vmatprep.subr.mxu0 0.0
    %438 = vmatpush1.msra.mxu0 0.0
    %439 = vmatprep.subr.mxu0 0.0
    %440 = vmatpush1.msra.mxu0 0.0
    %441 = vmatprep.subr.mxu0 0.0
    %442 = vmatpush1.msra.mxu0 0.0
    %443 = vmatprep.subr.mxu0 0.0
    %444 = vmatpush1.msra.mxu0 0.0
    %445 = vmatprep.subr.mxu0 0.0
    %446 = vmatpush1.msra.mxu0 0.0
    %447 = vmatprep.mubr.f32.mxu0 0.0
    %448 = vmatmul.mubr.f32.gmra.mrb[0].mxu0 %v84
    %v449 = vpop.f32.mrb[0].mxu0
    %v450 = vadd.f32 %v371, %v449
    %v451 = vpop.f32.mrb[0].mxu0
    %v452 = vadd.f32 %v375, %v451
    %453 = vmatprep.mubr.f32.mxu0 0.0
    %454 = vmatmul.mubr.f32.gmra.mrb[0].mxu0 %v315
    %v455 = vpop.f32.mrb[0].mxu0
    %v456 = vadd.f32 %v371, %v455
    %v457 = vpop.f32.mrb[0].mxu0
    %v458 = vadd.f32 %v375, %v457
    %459 = vmatprep.mubr.f32.mxu0 0.0
    %460 = vmatmul.mubr.f32.gmra.mrb[0].mxu0 %v316
    %v461 = vpop.f32.mrb[0].mxu0
    %v462 = vadd.f32 %v371, %v461
    %v463 = vpop.f32.mrb[0].mxu0
    %v464 = vadd.f32 %v375, %v463
    %465 = vdwg.mxu0
    %466 = vmatprep.subr.mxu0 0.0
    %467 = vmatpush1.msra.mxu0 %v320
    %468 = vmatprep.subr.mxu0 0.0
    %469 = vmatpush1.msra.mxu0 %v323
    %470 = vmatprep.subr.mxu0 0.0
    %471 = vmatpush1.msra.mxu0 %v326
    %472 = vmatprep.subr.mxu0 0.0
    %473 = vmatpush1.msra.mxu0 %v329
    %474 = vmatprep.subr.mxu0 0.0
    %475 = vmatpush1.msra.mxu0 %v332
    %476 = vmatprep.subr.mxu0 0.0
    %477 = vmatpush1.msra.mxu0 %v335
    %478 = vmatprep.subr.mxu0 0.0
    %479 = vmatpush1.msra.mxu0 %v338
    %480 = vmatprep.subr.mxu0 0.0
    %481 = vmatpush1.msra.mxu0 %v341
    %482 = vmatprep.subr.mxu0 0.0
    %483 = vmatpush1.msra.mxu0 %v344
    %484 = vmatprep.subr.mxu0 0.0
    %485 = vmatpush1.msra.mxu0 %v347
    %486 = vmatprep.subr.mxu0 0.0
    %487 = vmatpush1.msra.mxu0 %v350
    %488 = vmatprep.subr.mxu0 0.0
    %489 = vmatpush1.msra.mxu0 %v353
    %490 = vmatprep.subr.mxu0 0.0
    %491 = vmatpush1.msra.mxu0 %v356
    %492 = vmatprep.subr.mxu0 0.0
    %493 = vmatpush1.msra.mxu0 %v359
    %494 = vmatprep.subr.mxu0 0.0
    %495 = vmatpush1.msra.mxu0 %v362
    %496 = vmatprep.subr.mxu0 0.0
    %497 = vmatpush1.msra.mxu0 %v365
    %498 = vmatprep.subr.mxu0 0.0
    %499 = vmatpush1.msra.mxu0 0.0
    %500 = vmatprep.subr.mxu0 0.0
    %501 = vmatpush1.msra.mxu0 0.0
    %502 = vmatprep.subr.mxu0 0.0
    %503 = vmatpush1.msra.mxu0 0.0
    %504 = vmatprep.subr.mxu0 0.0
    %505 = vmatpush1.msra.mxu0 0.0
    %506 = vmatprep.subr.mxu0 0.0
    %507 = vmatpush1.msra.mxu0 0.0
    %508 = vmatprep.subr.mxu0 0.0
    %509 = vmatpush1.msra.mxu0 0.0
    %510 = vmatprep.subr.mxu0 0.0
    %511 = vmatpush1.msra.mxu0 0.0
    %512 = vmatprep.subr.mxu0 0.0
    %513 = vmatpush1.msra.mxu0 0.0
    %514 = vmatprep.subr.mxu0 0.0
    %515 = vmatpush1.msra.mxu0 0.0
    %516 = vmatprep.subr.mxu0 0.0
    %517 = vmatpush1.msra.mxu0 0.0
    %518 = vmatprep.subr.mxu0 0.0
    %519 = vmatpush1.msra.mxu0 0.0
    %520 = vmatprep.subr.mxu0 0.0
    %521 = vmatpush1.msra.mxu0 0.0
    %522 = vmatprep.subr.mxu0 0.0
    %523 = vmatpush1.msra.mxu0 0.0
    %524 = vmatprep.subr.mxu0 0.0
    %525 = vmatpush1.msra.mxu0 0.0
    %526 = vmatprep.subr.mxu0 0.0
    %527 = vmatpush1.msra.mxu0 0.0
    %528 = vmatprep.subr.mxu0 0.0
    %529 = vmatpush1.msra.mxu0 0.0
    %530 = vmatprep.mubr.f32.mxu0 0.0
    %531 = vmatmul.mubr.f32.gmra.mrb[0].mxu0 %v84
    %v532 = vpop.f32.mrb[0].mxu0
    %v533 = vadd.f32 %v379, %v532
    %v534 = vpop.f32.mrb[0].mxu0
    %535 = vmatprep.mubr.f32.mxu0 0.0
    %536 = vmatmul.mubr.f32.gmra.mrb[0].mxu0 %v315
    %v537 = vpop.f32.mrb[0].mxu0
    %v538 = vadd.f32 %v379, %v537
    %v539 = vpop.f32.mrb[0].mxu0
    %540 = vmatprep.mubr.f32.mxu0 0.0
    %541 = vmatmul.mubr.f32.gmra.mrb[0].mxu0 %v316
    %v542 = vpop.f32.mrb[0].mxu0
    %v543 = vadd.f32 %v379, %v542
    %v544 = vpop.f32.mrb[0].mxu0
    %545 = vdwg.mxu0
    %vm546 = vcmask 523264
    %v548 = vsel %vm546, %v450, 0
    %v551 = vsel %vm546, %v456, 0
    %v554 = vsel %vm546, %v452, 0
    %v557 = vsel %vm546, %v458, 0
    %559 = vmatprep.subr.mxu0 0.0
    %560 = vmatpush1.xpose.msra.mxu0 %v554
    %561 = vmatprep.subr.mxu0 0.0
    %562 = vmatpush1.xpose.msra.mxu0 %v557
    %563 = vmatprep.subr.mxu0 0.0
    %564 = vmatpush1.xpose.msra.mxu0 0.0
    %565 = vmatprep.subr.mxu0 0.0
    %566 = vmatpush1.xpose.msra.mxu0 0.0
    %567 = vmatprep.subr.mxu0 0.0
    %568 = vmatpush1.xpose.msra.mxu0 0.0
    %569 = vmatprep.subr.mxu0 0.0
    %570 = vmatpush1.xpose.msra.mxu0 0.0
    %571 = vmatprep.subr.mxu0 0.0
    %572 = vmatpush1.xpose.msra.mxu0 0.0
    %573 = vmatprep.subr.mxu0 0.0
    %574 = vmatpush1.xpose.msra.mxu0 0.0
    %575 = vmatprep.subr.mxu0 0.0
    %576 = vmatpush1.xpose.msra.mxu0 0.0
    %577 = vmatprep.subr.mxu0 0.0
    %578 = vmatpush1.xpose.msra.mxu0 0.0
    %579 = vmatprep.subr.mxu0 0.0
    %580 = vmatpush1.xpose.msra.mxu0 0.0
    %581 = vmatprep.subr.mxu0 0.0
    %582 = vmatpush1.xpose.msra.mxu0 0.0
    %583 = vmatprep.subr.mxu0 0.0
    %584 = vmatpush1.xpose.msra.mxu0 0.0
    %585 = vmatprep.subr.mxu0 0.0
    %586 = vmatpush1.xpose.msra.mxu0 0.0
    %587 = vmatprep.subr.mxu0 0.0
    %588 = vmatpush1.xpose.msra.mxu0 0.0
    %589 = vmatprep.subr.mxu0 0.0
    %590 = vmatpush1.xpose.msra.mxu0 0.0
    %591 = vmatprep.subr.mxu0 0.0
    %592 = vmatpush1.xpose.msra.mxu0 0.0
    %593 = vmatprep.subr.mxu0 0.0
    %594 = vmatpush1.xpose.msra.mxu0 0.0
    %595 = vmatprep.subr.mxu0 0.0
    %596 = vmatpush1.xpose.msra.mxu0 0.0
    %597 = vmatprep.subr.mxu0 0.0
    %598 = vmatpush1.xpose.msra.mxu0 0.0
    %599 = vmatprep.subr.mxu0 0.0
    %600 = vmatpush1.xpose.msra.mxu0 0.0
    %601 = vmatprep.subr.mxu0 0.0
    %602 = vmatpush1.xpose.msra.mxu0 0.0
    %603 = vmatprep.subr.mxu0 0.0
    %604 = vmatpush1.xpose.msra.mxu0 0.0
    %605 = vmatprep.subr.mxu0 0.0
    %606 = vmatpush1.xpose.msra.mxu0 0.0
    %607 = vmatprep.subr.mxu0 0.0
    %608 = vmatpush1.xpose.msra.mxu0 0.0
    %609 = vmatprep.subr.mxu0 0.0
    %610 = vmatpush1.xpose.msra.mxu0 0.0
    %611 = vmatprep.subr.mxu0 0.0
    %612 = vmatpush1.xpose.msra.mxu0 0.0
    %613 = vmatprep.subr.mxu0 0.0
    %614 = vmatpush1.xpose.msra.mxu0 0.0
    %615 = vmatprep.subr.mxu0 0.0
    %616 = vmatpush1.xpose.msra.mxu0 0.0
    %617 = vmatprep.subr.mxu0 0.0
    %618 = vmatpush1.xpose.msra.mxu0 0.0
    %619 = vmatprep.subr.mxu0 0.0
    %620 = vmatpush1.xpose.msra.mxu0 0.0
    %621 = vmatprep.subr.mxu0 0.0
    %622 = vmatpush1.xpose.msra.mxu0 0.0
    %623 = vmatprep.mubr.f32.mxu0 0.0
    %624 = vmatmul.mubr.f32.gmra.mrb[0].mxu0 %v548
    %v625 = vpop.f32.mrb[0].mxu0
    %v626 = vadd.f32 0.0, %v625
    %v627 = vpop.f32.mrb[0].mxu0
    %628 = vmatprep.mubr.f32.mxu0 0.0
    %629 = vmatmul.mubr.f32.gmra.mrb[0].mxu0 %v551
    %v630 = vpop.f32.mrb[0].mxu0
    %v631 = vadd.f32 0.0, %v630
    %v632 = vpop.f32.mrb[0].mxu0
    %633 = vdwg.mxu0
    %v634 = vmul.f32 %v626, 0.125
    %v635 = vmul.f32 %v631, 0.125
    %vm636 = vcmask 72704
    %v637 = vsel %vm636, %v634, -inf
    %638 = vmax.xlane.f32.xlu0 %v637
    %v639 = vpop.xlane.xlu0 %638
    %vm640 = vcmask 65536
    %v641 = vsel %vm640, %v635, -inf
    %642 = vmax.xlane.f32.xlu0 %v641
    %v643 = vpop.xlane.xlu0 %642
    %v644 = vsub.f32 %v634, %v639
    %v645 = vsub.f32 %v635, %v643
    %v646 = vmul.f32 %v644, 1.442695
    %v647 = vpow.pop %v646
    %v648 = vmul.f32 %v645, 1.442695
    %v649 = vpow.pop %v648
    %v650 = vsel %vm636, %v647, 0.0
    %651 = vadd.xlane.f32.xlu0 %v650
    %v652 = vpop.xlane.xlu0 %651
    %v653 = vsel %vm640, %v649, 0.0
    %654 = vadd.xlane.f32.xlu0 %v653
    %v655 = vpop.xlane.xlu0 %654
    %v656 = vrcp.pop %v652
    %v657 = vrcp.pop %v655
    %v658 = vmul.f32 %v647, %v656
    %v659 = vmul.f32 %v649, %v657
    %v661 = vsel %vm636, %v658, 0
    %v664 = vsel %vm636, %v659, 0
    %v667 = vsel %vm314, %v538, 0
    %669 = vmatprep.subr.mxu0 0.0
    %670 = vmatpush1.msra.mxu0 %v533
    %671 = vmatprep.subr.mxu0 0.0
    %672 = vmatpush1.msra.mxu0 %v667
    %673 = vmatprep.subr.mxu0 0.0
    %674 = vmatpush1.msra.mxu0 0.0
    %675 = vmatprep.subr.mxu0 0.0
    %676 = vmatpush1.msra.mxu0 0.0
    %677 = vmatprep.subr.mxu0 0.0
    %678 = vmatpush1.msra.mxu0 0.0
    %679 = vmatprep.subr.mxu0 0.0
    %680 = vmatpush1.msra.mxu0 0.0
    %681 = vmatprep.subr.mxu0 0.0
    %682 = vmatpush1.msra.mxu0 0.0
    %683 = vmatprep.subr.mxu0 0.0
    %684 = vmatpush1.msra.mxu0 0.0
    %685 = vmatprep.subr.mxu0 0.0
    %686 = vmatpush1.msra.mxu0 0.0
    %687 = vmatprep.subr.mxu0 0.0
    %688 = vmatpush1.msra.mxu0 0.0
    %689 = vmatprep.subr.mxu0 0.0
    %690 = vmatpush1.msra.mxu0 0.0
    %691 = vmatprep.subr.mxu0 0.0
    %692 = vmatpush1.msra.mxu0 0.0
    %693 = vmatprep.subr.mxu0 0.0
    %694 = vmatpush1.msra.mxu0 0.0
    %695 = vmatprep.subr.mxu0 0.0
    %696 = vmatpush1.msra.mxu0 0.0
    %697 = vmatprep.subr.mxu0 0.0
    %698 = vmatpush1.msra.mxu0 0.0
    %699 = vmatprep.subr.mxu0 0.0
    %700 = vmatpush1.msra.mxu0 0.0
    %701 = vmatprep.subr.mxu0 0.0
    %702 = vmatpush1.msra.mxu0 0.0
    %703 = vmatprep.subr.mxu0 0.0
    %704 = vmatpush1.msra.mxu0 0.0
    %705 = vmatprep.subr.mxu0 0.0
    %706 = vmatpush1.msra.mxu0 0.0
    %707 = vmatprep.subr.mxu0 0.0
    %708 = vmatpush1.msra.mxu0 0.0
    %709 = vmatprep.subr.mxu0 0.0
    %710 = vmatpush1.msra.mxu0 0.0
    %711 = vmatprep.subr.mxu0 0.0
    %712 = vmatpush1.msra.mxu0 0.0
    %713 = vmatprep.subr.mxu0 0.0
    %714 = vmatpush1.msra.mxu0 0.0
    %715 = vmatprep.subr.mxu0 0.0
    %716 = vmatpush1.msra.mxu0 0.0
    %717 = vmatprep.subr.mxu0 0.0
    %718 = vmatpush1.msra.mxu0 0.0
    %719 = vmatprep.subr.mxu0 0.0
    %720 = vmatpush1.msra.mxu0 0.0
    %721 = vmatprep.subr.mxu0 0.0
    %722 = vmatpush1.msra.mxu0 0.0
    %723 = vmatprep.subr.mxu0 0.0
    %724 = vmatpush1.msra.mxu0 0.0
    %725 = vmatprep.subr.mxu0 0.0
    %726 = vmatpush1.msra.mxu0 0.0
    %727 = vmatprep.subr.mxu0 0.0
    %728 = vmatpush1.msra.mxu0 0.0
    %729 = vmatprep.subr.mxu0 0.0
    %730 = vmatpush1.msra.mxu0 0.0
    %731 = vmatprep.subr.mxu0 0.0
    %732 = vmatpush1.msra.mxu0 0.0
    %733 = vmatprep.mubr.f32.mxu0 0.0
    %734 = vmatmul.mubr.f32.gmra.mrb[0].mxu0 %v661
    %v735 = vpop.f32.mrb[0].mxu0
    %v736 = vadd.f32 0.0, %v735
    %v737 = vpop.f32.mrb[0].mxu0
    %738 = vmatprep.mubr.f32.mxu0 0.0
    %739 = vmatmul.mubr.f32.gmra.mrb[0].mxu0 %v664
    %v740 = vpop.f32.mrb[0].mxu0
    %v741 = vadd.f32 0.0, %v740
    %v742 = vpop.f32.mrb[0].mxu0
    %743 = vdwg.mxu0
    %744 = vrot.lane.b32.xlu0 %v450, 64
    %v745 = vpop.permute.xlu0 %744
    %746 = vrot.lane.b32.xlu0 %v456, 64
    %v747 = vpop.permute.xlu0 %746
    %748 = vrot.lane.b32.xlu0 %v452, 64
    %v749 = vpop.permute.xlu0 %748
    %750 = vrot.lane.b32.xlu0 %v458, 64
    %v751 = vpop.permute.xlu0 %750
    %v752 = vsel %vm546, %v745, 0
    %v754 = vsel %vm546, %v747, 0
    %v756 = vsel %vm546, %v749, 0
    %v758 = vsel %vm546, %v751, 0
    %760 = vmatprep.subr.mxu0 0.0
    %761 = vmatpush1.xpose.msra.mxu0 %v756
    %762 = vmatprep.subr.mxu0 0.0
    %763 = vmatpush1.xpose.msra.mxu0 %v758
    %764 = vmatprep.subr.mxu0 0.0
    %765 = vmatpush1.xpose.msra.mxu0 0.0
    %766 = vmatprep.subr.mxu0 0.0
    %767 = vmatpush1.xpose.msra.mxu0 0.0
    %768 = vmatprep.subr.mxu0 0.0
    %769 = vmatpush1.xpose.msra.mxu0 0.0
    %770 = vmatprep.subr.mxu0 0.0
    %771 = vmatpush1.xpose.msra.mxu0 0.0
    %772 = vmatprep.subr.mxu0 0.0
    %773 = vmatpush1.xpose.msra.mxu0 0.0
    %774 = vmatprep.subr.mxu0 0.0
    %775 = vmatpush1.xpose.msra.mxu0 0.0
    %776 = vmatprep.subr.mxu0 0.0
    %777 = vmatpush1.xpose.msra.mxu0 0.0
    %778 = vmatprep.subr.mxu0 0.0
    %779 = vmatpush1.xpose.msra.mxu0 0.0
    %780 = vmatprep.subr.mxu0 0.0
    %781 = vmatpush1.xpose.msra.mxu0 0.0
    %782 = vmatprep.subr.mxu0 0.0
    %783 = vmatpush1.xpose.msra.mxu0 0.0
    %784 = vmatprep.subr.mxu0 0.0
    %785 = vmatpush1.xpose.msra.mxu0 0.0
    %786 = vmatprep.subr.mxu0 0.0
    %787 = vmatpush1.xpose.msra.mxu0 0.0
    %788 = vmatprep.subr.mxu0 0.0
    %789 = vmatpush1.xpose.msra.mxu0 0.0
    %790 = vmatprep.subr.mxu0 0.0
    %791 = vmatpush1.xpose.msra.mxu0 0.0
    %792 = vmatprep.subr.mxu0 0.0
    %793 = vmatpush1.xpose.msra.mxu0 0.0
    %794 = vmatprep.subr.mxu0 0.0
    %795 = vmatpush1.xpose.msra.mxu0 0.0
    %796 = vmatprep.subr.mxu0 0.0
    %797 = vmatpush1.xpose.msra.mxu0 0.0
    %798 = vmatprep.subr.mxu0 0.0
    %799 = vmatpush1.xpose.msra.mxu0 0.0
    %800 = vmatprep.subr.mxu0 0.0
    %801 = vmatpush1.xpose.msra.mxu0 0.0
    %802 = vmatprep.subr.mxu0 0.0
    %803 = vmatpush1.xpose.msra.mxu0 0.0
    %804 = vmatprep.subr.mxu0 0.0
    %805 = vmatpush1.xpose.msra.mxu0 0.0
    %806 = vmatprep.subr.mxu0 0.0
    %807 = vmatpush1.xpose.msra.mxu0 0.0
    %808 = vmatprep.subr.mxu0 0.0
    %809 = vmatpush1.xpose.msra.mxu0 0.0
    %810 = vmatprep.subr.mxu0 0.0
    %811 = vmatpush1.xpose.msra.mxu0 0.0
    %812 = vmatprep.subr.mxu0 0.0
    %813 = vmatpush1.xpose.msra.mxu0 0.0
    %814 = vmatprep.subr.mxu0 0.0
    %815 = vmatpush1.xpose.msra.mxu0 0.0
    %816 = vmatprep.subr.mxu0 0.0
    %817 = vmatpush1.xpose.msra.mxu0 0.0
    %818 = vmatprep.subr.mxu0 0.0
    %819 = vmatpush1.xpose.msra.mxu0 0.0
    %820 = vmatprep.subr.mxu0 0.0
    %821 = vmatpush1.xpose.msra.mxu0 0.0
    %822 = vmatprep.subr.mxu0 0.0
    %823 = vmatpush1.xpose.msra.mxu0 0.0
    %824 = vmatprep.mubr.f32.mxu0 0.0
    %825 = vmatmul.mubr.f32.gmra.mrb[0].mxu0 %v752
    %v826 = vpop.f32.mrb[0].mxu0
    %v827 = vadd.f32 0.0, %v826
    %v828 = vpop.f32.mrb[0].mxu0
    %829 = vmatprep.mubr.f32.mxu0 0.0
    %830 = vmatmul.mubr.f32.gmra.mrb[0].mxu0 %v754
    %v831 = vpop.f32.mrb[0].mxu0
    %v832 = vadd.f32 0.0, %v831
    %v833 = vpop.f32.mrb[0].mxu0
    %834 = vdwg.mxu0
    %v835 = vmul.f32 %v827, 0.125
    %v836 = vmul.f32 %v832, 0.125
    %v837 = vsel %vm636, %v835, -inf
    %838 = vmax.xlane.f32.xlu0 %v837
    %v839 = vpop.xlane.xlu0 %838
    %v840 = vsel %vm640, %v836, -inf
    %841 = vmax.xlane.f32.xlu0 %v840
    %v842 = vpop.xlane.xlu0 %841
    %v843 = vsub.f32 %v835, %v839
    %v844 = vsub.f32 %v836, %v842
    %v845 = vmul.f32 %v843, 1.442695
    %v846 = vpow.pop %v845
    %v847 = vmul.f32 %v844, 1.442695
    %v848 = vpow.pop %v847
    %v849 = vsel %vm636, %v846, 0.0
    %850 = vadd.xlane.f32.xlu0 %v849
    %v851 = vpop.xlane.xlu0 %850
    %v852 = vsel %vm640, %v848, 0.0
    %853 = vadd.xlane.f32.xlu0 %v852
    %v854 = vpop.xlane.xlu0 %853
    %v855 = vrcp.pop %v851
    %v856 = vrcp.pop %v854
    %v857 = vmul.f32 %v846, %v855
    %v858 = vmul.f32 %v848, %v856
    %860 = vrot.lane.b32.xlu0 %v533, 64
    %v861 = vpop.permute.xlu0 %860
    %862 = vrot.lane.b32.xlu0 %v538, 64
    %v863 = vpop.permute.xlu0 %862
    %v866 = vsel %vm636, %v857, 0
    %v869 = vsel %vm636, %v858, 0
    %v871 = vsel %vm314, %v863, 0
    %873 = vmatprep.subr.mxu0 0.0
    %874 = vmatpush1.msra.mxu0 %v861
    %875 = vmatprep.subr.mxu0 0.0
    %876 = vmatpush1.msra.mxu0 %v871
    %877 = vmatprep.subr.mxu0 0.0
    %878 = vmatpush1.msra.mxu0 0.0
    %879 = vmatprep.subr.mxu0 0.0
    %880 = vmatpush1.msra.mxu0 0.0
    %881 = vmatprep.subr.mxu0 0.0
    %882 = vmatpush1.msra.mxu0 0.0
    %883 = vmatprep.subr.mxu0 0.0
    %884 = vmatpush1.msra.mxu0 0.0
    %885 = vmatprep.subr.mxu0 0.0
    %886 = vmatpush1.msra.mxu0 0.0
    %887 = vmatprep.subr.mxu0 0.0
    %888 = vmatpush1.msra.mxu0 0.0
    %889 = vmatprep.subr.mxu0 0.0
    %890 = vmatpush1.msra.mxu0 0.0
    %891 = vmatprep.subr.mxu0 0.0
    %892 = vmatpush1.msra.mxu0 0.0
    %893 = vmatprep.subr.mxu0 0.0
    %894 = vmatpush1.msra.mxu0 0.0
    %895 = vmatprep.subr.mxu0 0.0
    %896 = vmatpush1.msra.mxu0 0.0
    %897 = vmatprep.subr.mxu0 0.0
    %898 = vmatpush1.msra.mxu0 0.0
    %899 = vmatprep.subr.mxu0 0.0
    %900 = vmatpush1.msra.mxu0 0.0
    %901 = vmatprep.subr.mxu0 0.0
    %902 = vmatpush1.msra.mxu0 0.0
    %903 = vmatprep.subr.mxu0 0.0
    %904 = vmatpush1.msra.mxu0 0.0
    %905 = vmatprep.subr.mxu0 0.0
    %906 = vmatpush1.msra.mxu0 0.0
    %907 = vmatprep.subr.mxu0 0.0
    %908 = vmatpush1.msra.mxu0 0.0
    %909 = vmatprep.subr.mxu0 0.0
    %910 = vmatpush1.msra.mxu0 0.0
    %911 = vmatprep.subr.mxu0 0.0
    %912 = vmatpush1.msra.mxu0 0.0
    %913 = vmatprep.subr.mxu0 0.0
    %914 = vmatpush1.msra.mxu0 0.0
    %915 = vmatprep.subr.mxu0 0.0
    %916 = vmatpush1.msra.mxu0 0.0
    %917 = vmatprep.subr.mxu0 0.0
    %918 = vmatpush1.msra.mxu0 0.0
    %919 = vmatprep.subr.mxu0 0.0
    %920 = vmatpush1.msra.mxu0 0.0
    %921 = vmatprep.subr.mxu0 0.0
    %922 = vmatpush1.msra.mxu0 0.0
    %923 = vmatprep.subr.mxu0 0.0
    %924 = vmatpush1.msra.mxu0 0.0
    %925 = vmatprep.subr.mxu0 0.0
    %926 = vmatpush1.msra.mxu0 0.0
    %927 = vmatprep.subr.mxu0 0.0
    %928 = vmatpush1.msra.mxu0 0.0
    %929 = vmatprep.subr.mxu0 0.0
    %930 = vmatpush1.msra.mxu0 0.0
    %931 = vmatprep.subr.mxu0 0.0
    %932 = vmatpush1.msra.mxu0 0.0
    %933 = vmatprep.subr.mxu0 0.0
    %934 = vmatpush1.msra.mxu0 0.0
    %935 = vmatprep.subr.mxu0 0.0
    %936 = vmatpush1.msra.mxu0 0.0
    %937 = vmatprep.mubr.f32.mxu0 0.0
    %938 = vmatmul.mubr.f32.gmra.mrb[0].mxu0 %v866
    %v939 = vpop.f32.mrb[0].mxu0
    %v940 = vadd.f32 0.0, %v939
    %v941 = vpop.f32.mrb[0].mxu0
    %942 = vmatprep.mubr.f32.mxu0 0.0
    %943 = vmatmul.mubr.f32.gmra.mrb[0].mxu0 %v869
    %v944 = vpop.f32.mrb[0].mxu0
    %v945 = vadd.f32 0.0, %v944
    %v946 = vpop.f32.mrb[0].mxu0
    %947 = vdwg.mxu0
    %950 = vrot.lane.b32.xlu0 %v940, 64
    %v951 = vpop.permute.xlu0 %950
    %952 = vrot.lane.b32.xlu0 %v945, 64
    %v953 = vpop.permute.xlu0 %952
    %v956 = vsel %vm546, %v736, %v951
    %v957 = vsel %vm546, %v741, %v953
    %vm959 = vcmask 1046528
    %v960 = vrot.slane %v456, 1
    %v961 = vrot.slane %v462, 1
    %v962 = vsel %vm959, %v960, %v961
    %v964 = vrot.slane %v458, 1
    %v965 = vrot.slane %v464, 1
    %v966 = vsel %vm959, %v964, %v965
    %v967 = vsel %vm546, %v962, 0
    %v969 = vsel %vm546, %v961, 0
    %v971 = vsel %vm546, %v966, 0
    %v973 = vsel %vm546, %v965, 0
    %975 = vmatprep.subr.mxu0 0.0
    %976 = vmatpush1.xpose.msra.mxu0 %v971
    %977 = vmatprep.subr.mxu0 0.0
    %978 = vmatpush1.xpose.msra.mxu0 %v973
    %979 = vmatprep.subr.mxu0 0.0
    %980 = vmatpush1.xpose.msra.mxu0 0.0
    %981 = vmatprep.subr.mxu0 0.0
    %982 = vmatpush1.xpose.msra.mxu0 0.0
    %983 = vmatprep.subr.mxu0 0.0
    %984 = vmatpush1.xpose.msra.mxu0 0.0
    %985 = vmatprep.subr.mxu0 0.0
    %986 = vmatpush1.xpose.msra.mxu0 0.0
    %987 = vmatprep.subr.mxu0 0.0
    %988 = vmatpush1.xpose.msra.mxu0 0.0
    %989 = vmatprep.subr.mxu0 0.0
    %990 = vmatpush1.xpose.msra.mxu0 0.0
    %991 = vmatprep.subr.mxu0 0.0
    %992 = vmatpush1.xpose.msra.mxu0 0.0
    %993 = vmatprep.subr.mxu0 0.0
    %994 = vmatpush1.xpose.msra.mxu0 0.0
    %995 = vmatprep.subr.mxu0 0.0
    %996 = vmatpush1.xpose.msra.mxu0 0.0
    %997 = vmatprep.subr.mxu0 0.0
    %998 = vmatpush1.xpose.msra.mxu0 0.0
    %999 = vmatprep.subr.mxu0 0.0
    %1000 = vmatpush1.xpose.msra.mxu0 0.0
    %1001 = vmatprep.subr.mxu0 0.0
    %1002 = vmatpush1.xpose.msra.mxu0 0.0
    %1003 = vmatprep.subr.mxu0 0.0
    %1004 = vmatpush1.xpose.msra.mxu0 0.0
    %1005 = vmatprep.subr.mxu0 0.0
    %1006 = vmatpush1.xpose.msra.mxu0 0.0
    %1007 = vmatprep.subr.mxu0 0.0
    %1008 = vmatpush1.xpose.msra.mxu0 0.0
    %1009 = vmatprep.subr.mxu0 0.0
    %1010 = vmatpush1.xpose.msra.mxu0 0.0
    %1011 = vmatprep.subr.mxu0 0.0
    %1012 = vmatpush1.xpose.msra.mxu0 0.0
    %1013 = vmatprep.subr.mxu0 0.0
    %1014 = vmatpush1.xpose.msra.mxu0 0.0
    %1015 = vmatprep.subr.mxu0 0.0
    %1016 = vmatpush1.xpose.msra.mxu0 0.0
    %1017 = vmatprep.subr.mxu0 0.0
    %1018 = vmatpush1.xpose.msra.mxu0 0.0
    %1019 = vmatprep.subr.mxu0 0.0
    %1020 = vmatpush1.xpose.msra.mxu0 0.0
    %1021 = vmatprep.subr.mxu0 0.0
    %1022 = vmatpush1.xpose.msra.mxu0 0.0
    %1023 = vmatprep.subr.mxu0 0.0
    %1024 = vmatpush1.xpose.msra.mxu0 0.0
    %1025 = vmatprep.subr.mxu0 0.0
    %1026 = vmatpush1.xpose.msra.mxu0 0.0
    %1027 = vmatprep.subr.mxu0 0.0
    %1028 = vmatpush1.xpose.msra.mxu0 0.0
    %1029 = vmatprep.subr.mxu0 0.0
    %1030 = vmatpush1.xpose.msra.mxu0 0.0
    %1031 = vmatprep.subr.mxu0 0.0
    %1032 = vmatpush1.xpose.msra.mxu0 0.0
    %1033 = vmatprep.subr.mxu0 0.0
    %1034 = vmatpush1.xpose.msra.mxu0 0.0
    %1035 = vmatprep.subr.mxu0 0.0
    %1036 = vmatpush1.xpose.msra.mxu0 0.0
    %1037 = vmatprep.subr.mxu0 0.0
    %1038 = vmatpush1.xpose.msra.mxu0 0.0
    %1039 = vmatprep.mubr.f32.mxu0 0.0
    %1040 = vmatmul.mubr.f32.gmra.mrb[0].mxu0 %v967
    %v1041 = vpop.f32.mrb[0].mxu0
    %v1042 = vadd.f32 0.0, %v1041
    %v1043 = vpop.f32.mrb[0].mxu0
    %1044 = vmatprep.mubr.f32.mxu0 0.0
    %1045 = vmatmul.mubr.f32.gmra.mrb[0].mxu0 %v969
    %v1046 = vpop.f32.mrb[0].mxu0
    %v1047 = vadd.f32 0.0, %v1046
    %v1048 = vpop.f32.mrb[0].mxu0
    %1049 = vdwg.mxu0
    %v1050 = vmul.f32 %v1042, 0.125
    %v1051 = vmul.f32 %v1047, 0.125
    %v1052 = vsel %vm636, %v1050, -inf
    %1053 = vmax.xlane.f32.xlu0 %v1052
    %v1054 = vpop.xlane.xlu0 %1053
    %v1055 = vsel %vm640, %v1051, -inf
    %1056 = vmax.xlane.f32.xlu0 %v1055
    %v1057 = vpop.xlane.xlu0 %1056
    %v1058 = vsub.f32 %v1050, %v1054
    %v1059 = vsub.f32 %v1051, %v1057
    %v1060 = vmul.f32 %v1058, 1.442695
    %v1061 = vpow.pop %v1060
    %v1062 = vmul.f32 %v1059, 1.442695
    %v1063 = vpow.pop %v1062
    %v1064 = vsel %vm636, %v1061, 0.0
    %1065 = vadd.xlane.f32.xlu0 %v1064
    %v1066 = vpop.xlane.xlu0 %1065
    %v1067 = vsel %vm640, %v1063, 0.0
    %1068 = vadd.xlane.f32.xlu0 %v1067
    %v1069 = vpop.xlane.xlu0 %1068
    %v1070 = vrcp.pop %v1066
    %v1071 = vrcp.pop %v1069
    %v1072 = vmul.f32 %v1061, %v1070
    %v1073 = vmul.f32 %v1063, %v1071
    %v1075 = vrot.slane %v538, 1
    %v1076 = vrot.slane %v543, 1
    %v1077 = vsel %vm959, %v1075, %v1076
    %v1080 = vsel %vm636, %v1072, 0
    %v1083 = vsel %vm636, %v1073, 0
    %v1085 = vsel %vm314, %v1076, 0
    %1087 = vmatprep.subr.mxu0 0.0
    %1088 = vmatpush1.msra.mxu0 %v1077
    %1089 = vmatprep.subr.mxu0 0.0
    %1090 = vmatpush1.msra.mxu0 %v1085
    %1091 = vmatprep.subr.mxu0 0.0
    %1092 = vmatpush1.msra.mxu0 0.0
    %1093 = vmatprep.subr.mxu0 0.0
    %1094 = vmatpush1.msra.mxu0 0.0
    %1095 = vmatprep.subr.mxu0 0.0
    %1096 = vmatpush1.msra.mxu0 0.0
    %1097 = vmatprep.subr.mxu0 0.0
    %1098 = vmatpush1.msra.mxu0 0.0
    %1099 = vmatprep.subr.mxu0 0.0
    %1100 = vmatpush1.msra.mxu0 0.0
    %1101 = vmatprep.subr.mxu0 0.0
    %1102 = vmatpush1.msra.mxu0 0.0
    %1103 = vmatprep.subr.mxu0 0.0
    %1104 = vmatpush1.msra.mxu0 0.0
    %1105 = vmatprep.subr.mxu0 0.0
    %1106 = vmatpush1.msra.mxu0 0.0
    %1107 = vmatprep.subr.mxu0 0.0
    %1108 = vmatpush1.msra.mxu0 0.0
    %1109 = vmatprep.subr.mxu0 0.0
    %1110 = vmatpush1.msra.mxu0 0.0
    %1111 = vmatprep.subr.mxu0 0.0
    %1112 = vmatpush1.msra.mxu0 0.0
    %1113 = vmatprep.subr.mxu0 0.0
    %1114 = vmatpush1.msra.mxu0 0.0
    %1115 = vmatprep.subr.mxu0 0.0
    %1116 = vmatpush1.msra.mxu0 0.0
    %1117 = vmatprep.subr.mxu0 0.0
    %1118 = vmatpush1.msra.mxu0 0.0
    %1119 = vmatprep.subr.mxu0 0.0
    %1120 = vmatpush1.msra.mxu0 0.0
    %1121 = vmatprep.subr.mxu0 0.0
    %1122 = vmatpush1.msra.mxu0 0.0
    %1123 = vmatprep.subr.mxu0 0.0
    %1124 = vmatpush1.msra.mxu0 0.0
    %1125 = vmatprep.subr.mxu0 0.0
    %1126 = vmatpush1.msra.mxu0 0.0
    %1127 = vmatprep.subr.mxu0 0.0
    %1128 = vmatpush1.msra.mxu0 0.0
    %1129 = vmatprep.subr.mxu0 0.0
    %1130 = vmatpush1.msra.mxu0 0.0
    %1131 = vmatprep.subr.mxu0 0.0
    %1132 = vmatpush1.msra.mxu0 0.0
    %1133 = vmatprep.subr.mxu0 0.0
    %1134 = vmatpush1.msra.mxu0 0.0
    %1135 = vmatprep.subr.mxu0 0.0
    %1136 = vmatpush1.msra.mxu0 0.0
    %1137 = vmatprep.subr.mxu0 0.0
    %1138 = vmatpush1.msra.mxu0 0.0
    %1139 = vmatprep.subr.mxu0 0.0
    %1140 = vmatpush1.msra.mxu0 0.0
    %1141 = vmatprep.subr.mxu0 0.0
    %1142 = vmatpush1.msra.mxu0 0.0
    %1143 = vmatprep.subr.mxu0 0.0
    %1144 = vmatpush1.msra.mxu0 0.0
    %1145 = vmatprep.subr.mxu0 0.0
    %1146 = vmatpush1.msra.mxu0 0.0
    %1147 = vmatprep.subr.mxu0 0.0
    %1148 = vmatpush1.msra.mxu0 0.0
    %1149 = vmatprep.subr.mxu0 0.0
    %1150 = vmatpush1.msra.mxu0 0.0
    %1151 = vmatprep.mubr.f32.mxu0 0.0
    %1152 = vmatmul.mubr.f32.gmra.mrb[0].mxu0 %v1080
    %v1153 = vpop.f32.mrb[0].mxu0
    %v1154 = vadd.f32 0.0, %v1153
    %v1155 = vpop.f32.mrb[0].mxu0
    %1156 = vmatprep.mubr.f32.mxu0 0.0
    %1157 = vmatmul.mubr.f32.gmra.mrb[0].mxu0 %v1083
    %v1158 = vpop.f32.mrb[0].mxu0
    %v1159 = vadd.f32 0.0, %v1158
    %v1160 = vpop.f32.mrb[0].mxu0
    %1161 = vdwg.mxu0
    %1162 = vrot.lane.b32.xlu0 %v962, 64
    %v1163 = vpop.permute.xlu0 %1162
    %1164 = vrot.lane.b32.xlu0 %v961, 64
    %v1165 = vpop.permute.xlu0 %1164
    %1166 = vrot.lane.b32.xlu0 %v966, 64
    %v1167 = vpop.permute.xlu0 %1166
    %1168 = vrot.lane.b32.xlu0 %v965, 64
    %v1169 = vpop.permute.xlu0 %1168
    %v1170 = vsel %vm546, %v1163, 0
    %v1172 = vsel %vm546, %v1165, 0
    %v1174 = vsel %vm546, %v1167, 0
    %v1176 = vsel %vm546, %v1169, 0
    %1178 = vmatprep.subr.mxu0 0.0
    %1179 = vmatpush1.xpose.msra.mxu0 %v1174
    %1180 = vmatprep.subr.mxu0 0.0
    %1181 = vmatpush1.xpose.msra.mxu0 %v1176
    %1182 = vmatprep.subr.mxu0 0.0
    %1183 = vmatpush1.xpose.msra.mxu0 0.0
    %1184 = vmatprep.subr.mxu0 0.0
    %1185 = vmatpush1.xpose.msra.mxu0 0.0
    %1186 = vmatprep.subr.mxu0 0.0
    %1187 = vmatpush1.xpose.msra.mxu0 0.0
    %1188 = vmatprep.subr.mxu0 0.0
    %1189 = vmatpush1.xpose.msra.mxu0 0.0
    %1190 = vmatprep.subr.mxu0 0.0
    %1191 = vmatpush1.xpose.msra.mxu0 0.0
    %1192 = vmatprep.subr.mxu0 0.0
    %1193 = vmatpush1.xpose.msra.mxu0 0.0
    %1194 = vmatprep.subr.mxu0 0.0
    %1195 = vmatpush1.xpose.msra.mxu0 0.0
    %1196 = vmatprep.subr.mxu0 0.0
    %1197 = vmatpush1.xpose.msra.mxu0 0.0
    %1198 = vmatprep.subr.mxu0 0.0
    %1199 = vmatpush1.xpose.msra.mxu0 0.0
    %1200 = vmatprep.subr.mxu0 0.0
    %1201 = vmatpush1.xpose.msra.mxu0 0.0
    %1202 = vmatprep.subr.mxu0 0.0
    %1203 = vmatpush1.xpose.msra.mxu0 0.0
    %1204 = vmatprep.subr.mxu0 0.0
    %1205 = vmatpush1.xpose.msra.mxu0 0.0
    %1206 = vmatprep.subr.mxu0 0.0
    %1207 = vmatpush1.xpose.msra.mxu0 0.0
    %1208 = vmatprep.subr.mxu0 0.0
    %1209 = vmatpush1.xpose.msra.mxu0 0.0
    %1210 = vmatprep.subr.mxu0 0.0
    %1211 = vmatpush1.xpose.msra.mxu0 0.0
    %1212 = vmatprep.subr.mxu0 0.0
    %1213 = vmatpush1.xpose.msra.mxu0 0.0
    %1214 = vmatprep.subr.mxu0 0.0
    %1215 = vmatpush1.xpose.msra.mxu0 0.0
    %1216 = vmatprep.subr.mxu0 0.0
    %1217 = vmatpush1.xpose.msra.mxu0 0.0
    %1218 = vmatprep.subr.mxu0 0.0
    %1219 = vmatpush1.xpose.msra.mxu0 0.0
    %1220 = vmatprep.subr.mxu0 0.0
    %1221 = vmatpush1.xpose.msra.mxu0 0.0
    %1222 = vmatprep.subr.mxu0 0.0
    %1223 = vmatpush1.xpose.msra.mxu0 0.0
    %1224 = vmatprep.subr.mxu0 0.0
    %1225 = vmatpush1.xpose.msra.mxu0 0.0
    %1226 = vmatprep.subr.mxu0 0.0
    %1227 = vmatpush1.xpose.msra.mxu0 0.0
    %1228 = vmatprep.subr.mxu0 0.0
    %1229 = vmatpush1.xpose.msra.mxu0 0.0
    %1230 = vmatprep.subr.mxu0 0.0
    %1231 = vmatpush1.xpose.msra.mxu0 0.0
    %1232 = vmatprep.subr.mxu0 0.0
    %1233 = vmatpush1.xpose.msra.mxu0 0.0
    %1234 = vmatprep.subr.mxu0 0.0
    %1235 = vmatpush1.xpose.msra.mxu0 0.0
    %1236 = vmatprep.subr.mxu0 0.0
    %1237 = vmatpush1.xpose.msra.mxu0 0.0
    %1238 = vmatprep.subr.mxu0 0.0
    %1239 = vmatpush1.xpose.msra.mxu0 0.0
    %1240 = vmatprep.subr.mxu0 0.0
    %1241 = vmatpush1.xpose.msra.mxu0 0.0
    %1242 = vmatprep.mubr.f32.mxu0 0.0
    %1243 = vmatmul.mubr.f32.gmra.mrb[0].mxu0 %v1170
    %v1244 = vpop.f32.mrb[0].mxu0
    %v1245 = vadd.f32 0.0, %v1244
    %v1246 = vpop.f32.mrb[0].mxu0
    %1247 = vmatprep.mubr.f32.mxu0 0.0
    %1248 = vmatmul.mubr.f32.gmra.mrb[0].mxu0 %v1172
    %v1249 = vpop.f32.mrb[0].mxu0
    %v1250 = vadd.f32 0.0, %v1249
    %v1251 = vpop.f32.mrb[0].mxu0
    %1252 = vdwg.mxu0
    %v1253 = vmul.f32 %v1245, 0.125
    %v1254 = vmul.f32 %v1250, 0.125
    %v1255 = vsel %vm636, %v1253, -inf
    %1256 = vmax.xlane.f32.xlu0 %v1255
    %v1257 = vpop.xlane.xlu0 %1256
    %v1258 = vsel %vm640, %v1254, -inf
    %1259 = vmax.xlane.f32.xlu0 %v1258
    %v1260 = vpop.xlane.xlu0 %1259
    %v1261 = vsub.f32 %v1253, %v1257
    %v1262 = vsub.f32 %v1254, %v1260
    %v1263 = vmul.f32 %v1261, 1.442695
    %v1264 = vpow.pop %v1263
    %v1265 = vmul.f32 %v1262, 1.442695
    %v1266 = vpow.pop %v1265
    %v1267 = vsel %vm636, %v1264, 0.0
    %1268 = vadd.xlane.f32.xlu0 %v1267
    %v1269 = vpop.xlane.xlu0 %1268
    %v1270 = vsel %vm640, %v1266, 0.0
    %1271 = vadd.xlane.f32.xlu0 %v1270
    %v1272 = vpop.xlane.xlu0 %1271
    %v1273 = vrcp.pop %v1269
    %v1274 = vrcp.pop %v1272
    %v1275 = vmul.f32 %v1264, %v1273
    %v1276 = vmul.f32 %v1266, %v1274
    %1277 = vrot.lane.b32.xlu0 %v1077, 64
    %v1278 = vpop.permute.xlu0 %1277
    %1279 = vrot.lane.b32.xlu0 %v1076, 64
    %v1280 = vpop.permute.xlu0 %1279
    %v1283 = vsel %vm636, %v1275, 0
    %v1286 = vsel %vm636, %v1276, 0
    %v1288 = vsel %vm314, %v1280, 0
    %1290 = vmatprep.subr.mxu0 0.0
    %1291 = vmatpush1.msra.mxu0 %v1278
    %1292 = vmatprep.subr.mxu0 0.0
    %1293 = vmatpush1.msra.mxu0 %v1288
    %1294 = vmatprep.subr.mxu0 0.0
    %1295 = vmatpush1.msra.mxu0 0.0
    %1296 = vmatprep.subr.mxu0 0.0
    %1297 = vmatpush1.msra.mxu0 0.0
    %1298 = vmatprep.subr.mxu0 0.0
    %1299 = vmatpush1.msra.mxu0 0.0
    %1300 = vmatprep.subr.mxu0 0.0
    %1301 = vmatpush1.msra.mxu0 0.0
    %1302 = vmatprep.subr.mxu0 0.0
    %1303 = vmatpush1.msra.mxu0 0.0
    %1304 = vmatprep.subr.mxu0 0.0
    %1305 = vmatpush1.msra.mxu0 0.0
    %1306 = vmatprep.subr.mxu0 0.0
    %1307 = vmatpush1.msra.mxu0 0.0
    %1308 = vmatprep.subr.mxu0 0.0
    %1309 = vmatpush1.msra.mxu0 0.0
    %1310 = vmatprep.subr.mxu0 0.0
    %1311 = vmatpush1.msra.mxu0 0.0
    %1312 = vmatprep.subr.mxu0 0.0
    %1313 = vmatpush1.msra.mxu0 0.0
    %1314 = vmatprep.subr.mxu0 0.0
    %1315 = vmatpush1.msra.mxu0 0.0
    %1316 = vmatprep.subr.mxu0 0.0
    %1317 = vmatpush1.msra.mxu0 0.0
    %1318 = vmatprep.subr.mxu0 0.0
    %1319 = vmatpush1.msra.mxu0 0.0
    %1320 = vmatprep.subr.mxu0 0.0
    %1321 = vmatpush1.msra.mxu0 0.0
    %1322 = vmatprep.subr.mxu0 0.0
    %1323 = vmatpush1.msra.mxu0 0.0
    %1324 = vmatprep.subr.mxu0 0.0
    %1325 = vmatpush1.msra.mxu0 0.0
    %1326 = vmatprep.subr.mxu0 0.0
    %1327 = vmatpush1.msra.mxu0 0.0
    %1328 = vmatprep.subr.mxu0 0.0
    %1329 = vmatpush1.msra.mxu0 0.0
    %1330 = vmatprep.subr.mxu0 0.0
    %1331 = vmatpush1.msra.mxu0 0.0
    %1332 = vmatprep.subr.mxu0 0.0
    %1333 = vmatpush1.msra.mxu0 0.0
    %1334 = vmatprep.subr.mxu0 0.0
    %1335 = vmatpush1.msra.mxu0 0.0
    %1336 = vmatprep.subr.mxu0 0.0
    %1337 = vmatpush1.msra.mxu0 0.0
    %1338 = vmatprep.subr.mxu0 0.0
    %1339 = vmatpush1.msra.mxu0 0.0
    %1340 = vmatprep.subr.mxu0 0.0
    %1341 = vmatpush1.msra.mxu0 0.0
    %1342 = vmatprep.subr.mxu0 0.0
    %1343 = vmatpush1.msra.mxu0 0.0
    %1344 = vmatprep.subr.mxu0 0.0
    %1345 = vmatpush1.msra.mxu0 0.0
    %1346 = vmatprep.subr.mxu0 0.0
    %1347 = vmatpush1.msra.mxu0 0.0
    %1348 = vmatprep.subr.mxu0 0.0
    %1349 = vmatpush1.msra.mxu0 0.0
    %1350 = vmatprep.subr.mxu0 0.0
    %1351 = vmatpush1.msra.mxu0 0.0
    %1352 = vmatprep.subr.mxu0 0.0
    %1353 = vmatpush1.msra.mxu0 0.0
    %1354 = vmatprep.mubr.f32.mxu0 0.0
    %1355 = vmatmul.mubr.f32.gmra.mrb[0].mxu0 %v1283
    %v1356 = vpop.f32.mrb[0].mxu0
    %v1357 = vadd.f32 0.0, %v1356
    %v1358 = vpop.f32.mrb[0].mxu0
    %1359 = vmatprep.mubr.f32.mxu0 0.0
    %1360 = vmatmul.mubr.f32.gmra.mrb[0].mxu0 %v1286
    %v1361 = vpop.f32.mrb[0].mxu0
    %v1362 = vadd.f32 0.0, %v1361
    %v1363 = vpop.f32.mrb[0].mxu0
    %1364 = vdwg.mxu0
    %1367 = vrot.lane.b32.xlu0 %v1357, 64
    %v1368 = vpop.permute.xlu0 %1367
    %1369 = vrot.lane.b32.xlu0 %v1362, 64
    %v1370 = vpop.permute.xlu0 %1369
    %v1373 = vsel %vm546, %v1154, %v1368
    %v1374 = vsel %vm546, %v1159, %v1370
    %v1377 = vrot.slane %v1373, 7
    %v1378 = vrot.slane %v1374, 7
    %v1379 = vsel %vm314, %v1377, %v1378
    %v1382 = vsel %vm314, %v957, %v1377
    %v1383 = vld [vmem:[%s5] sm:$0xff]
    %v1384 = vld [vmem:[%s5 + $0x8] sm:$0xff]
    %v1385 = vld [vmem:[%s5 + $0x10] sm:$0xff]
    %v1386 = vld [vmem:[%s5 + $0x18] sm:$0xff]
    %v1387 = vld [vmem:[%s5 + $0x20] sm:$0xff]
    %v1388 = vld [vmem:[%s5 + $0x28] sm:$0xff]
    %v1389 = vld [vmem:[%s5 + $0x30] sm:$0xff]
    %v1390 = vld [vmem:[%s5 + $0x38] sm:$0xff]
    %v1391 = vld [vmem:[%s5 + $0x40] sm:$0xff]
    %v1392 = vld [vmem:[%s5 + $0x48] sm:$0xff]
    %v1393 = vld [vmem:[%s5 + $0x50] sm:$0xff]
    %v1394 = vld [vmem:[%s5 + $0x58] sm:$0xff]
    %v1395 = vld [vmem:[%s5 + $0x60] sm:$0xff]
    %v1396 = vld [vmem:[%s5 + $0x68] sm:$0xff]
    %v1397 = vld [vmem:[%s5 + $0x70] sm:$0xff]
    %v1398 = vld [vmem:[%s5 + $0x78] sm:$0xff]
    %v1399 = vlaneseq
    %v1400 = vshrl.u32 %v1399, 7
    %v1401 = vsub.s32 0, %v1400
    %v1402 = vrot.slane %v317, %v1401
    %1403 = vmatprep.subr.mxu0 0.0
    %1404 = vmatpush1.msra.mxu0 %v1383
    %1405 = vmatprep.subr.mxu0 0.0
    %1406 = vmatpush1.msra.mxu0 %v1384
    %1407 = vmatprep.subr.mxu0 0.0
    %1408 = vmatpush1.msra.mxu0 %v1385
    %1409 = vmatprep.subr.mxu0 0.0
    %1410 = vmatpush1.msra.mxu0 %v1386
    %1411 = vmatprep.subr.mxu0 0.0
    %1412 = vmatpush1.msra.mxu0 %v1387
    %1413 = vmatprep.subr.mxu0 0.0
    %1414 = vmatpush1.msra.mxu0 %v1388
    %1415 = vmatprep.subr.mxu0 0.0
    %1416 = vmatpush1.msra.mxu0 %v1389
    %1417 = vmatprep.subr.mxu0 0.0
    %1418 = vmatpush1.msra.mxu0 %v1390
    %1419 = vmatprep.subr.mxu0 0.0
    %1420 = vmatpush1.msra.mxu0 %v1391
    %1421 = vmatprep.subr.mxu0 0.0
    %1422 = vmatpush1.msra.mxu0 %v1392
    %1423 = vmatprep.subr.mxu0 0.0
    %1424 = vmatpush1.msra.mxu0 %v1393
    %1425 = vmatprep.subr.mxu0 0.0
    %1426 = vmatpush1.msra.mxu0 %v1394
    %1427 = vmatprep.subr.mxu0 0.0
    %1428 = vmatpush1.msra.mxu0 %v1395
    %1429 = vmatprep.subr.mxu0 0.0
    %1430 = vmatpush1.msra.mxu0 %v1396
    %1431 = vmatprep.subr.mxu0 0.0
    %1432 = vmatpush1.msra.mxu0 %v1397
    %1433 = vmatprep.subr.mxu0 0.0
    %1434 = vmatpush1.msra.mxu0 %v1398
    %1435 = vmatprep.subr.mxu0 0.0
    %1436 = vmatpush1.msra.mxu0 0.0
    %1437 = vmatprep.subr.mxu0 0.0
    %1438 = vmatpush1.msra.mxu0 0.0
    %1439 = vmatprep.subr.mxu0 0.0
    %1440 = vmatpush1.msra.mxu0 0.0
    %1441 = vmatprep.subr.mxu0 0.0
    %1442 = vmatpush1.msra.mxu0 0.0
    %1443 = vmatprep.subr.mxu0 0.0
    %1444 = vmatpush1.msra.mxu0 0.0
    %1445 = vmatprep.subr.mxu0 0.0
    %1446 = vmatpush1.msra.mxu0 0.0
    %1447 = vmatprep.subr.mxu0 0.0
    %1448 = vmatpush1.msra.mxu0 0.0
    %1449 = vmatprep.subr.mxu0 0.0
    %1450 = vmatpush1.msra.mxu0 0.0
    %1451 = vmatprep.subr.mxu0 0.0
    %1452 = vmatpush1.msra.mxu0 0.0
    %1453 = vmatprep.subr.mxu0 0.0
    %1454 = vmatpush1.msra.mxu0 0.0
    %1455 = vmatprep.subr.mxu0 0.0
    %1456 = vmatpush1.msra.mxu0 0.0
    %1457 = vmatprep.subr.mxu0 0.0
    %1458 = vmatpush1.msra.mxu0 0.0
    %1459 = vmatprep.subr.mxu0 0.0
    %1460 = vmatpush1.msra.mxu0 0.0
    %1461 = vmatprep.subr.mxu0 0.0
    %1462 = vmatpush1.msra.mxu0 0.0
    %1463 = vmatprep.subr.mxu0 0.0
    %1464 = vmatpush1.msra.mxu0 0.0
    %1465 = vmatprep.subr.mxu0 0.0
    %1466 = vmatpush1.msra.mxu0 0.0
    %1467 = vmatprep.mubr.f32.mxu0 0.0
    %1468 = vmatmul.mubr.f32.gmra.mrb[0].mxu0 %v956
    %v1469 = vpop.f32.mrb[0].mxu0
    %v1470 = vadd.f32 %v1402, %v1469
    %v1471 = vpop.f32.mrb[0].mxu0
    %1472 = vmatprep.mubr.f32.mxu0 0.0
    %1473 = vmatmul.mubr.f32.gmra.mrb[0].mxu0 %v1382
    %v1474 = vpop.f32.mrb[0].mxu0
    %v1475 = vadd.f32 %v1402, %v1474
    %v1476 = vpop.f32.mrb[0].mxu0
    %1477 = vmatprep.mubr.f32.mxu0 0.0
    %1478 = vmatmul.mubr.f32.gmra.mrb[0].mxu0 %v1379
    %v1479 = vpop.f32.mrb[0].mxu0
    %v1480 = vadd.f32 %v1402, %v1479
    %v1481 = vpop.f32.mrb[0].mxu0
    %1482 = vdwg.mxu0
    %v1483 = vadd.f32 %v84, %v1470
    %v1484 = vadd.f32 %v315, %v1475
    %v1485 = vadd.f32 %v316, %v1480
    %1486 = vadd.xlane.f32.xlu0 %v1483
    %v1487 = vpop.xlane.xlu0 %1486
    %1488 = vadd.xlane.f32.xlu0 %v1484
    %v1489 = vpop.xlane.xlu0 %1488
    %vm1490 = vcmask 1041408
    %v1491 = vsel %vm1490, %v1485, 0.0
    %1492 = vadd.xlane.f32.xlu0 %v1491
    %v1493 = vpop.xlane.xlu0 %1492
    %v1494 = vrcp.pop 128.0
    %v1495 = vmul.f32 %v1487, %v1494
    %v1496 = vmul.f32 %v1489, %v1494
    %v1497 = vmul.f32 %v1493, %v1494
    %v1498 = vsub.f32 %v1483, %v1495
    %v1499 = vsub.f32 %v1484, %v1496
    %v1500 = vsub.f32 %v1485, %v1497
    %v1501 = vmul.f32 %v1498, %v1498
    %v1502 = vmul.f32 %v1499, %v1499
    %v1503 = vmul.f32 %v1500, %v1500
    %1504 = vadd.xlane.f32.xlu0 %v1501
    %v1505 = vpop.xlane.xlu0 %1504
    %1506 = vadd.xlane.f32.xlu0 %v1502
    %v1507 = vpop.xlane.xlu0 %1506
    %v1508 = vsel %vm1490, %v1503, 0.0
    %1509 = vadd.xlane.f32.xlu0 %v1508
    %v1510 = vpop.xlane.xlu0 %1509
    %v1511 = vmul.f32 %v1505, %v1494
    %v1512 = vmul.f32 %v1507, %v1494
    %v1513 = vmul.f32 %v1510, %v1494
    %v1514 = vadd.f32 %v1511, 1e-05
    %v1515 = vadd.f32 %v1512, 1e-05
    %v1516 = vadd.f32 %v1513, 1e-05
    %v1517 = vrsqrt.pop %v1514
    %v1518 = vrsqrt.pop %v1515
    %v1519 = vrsqrt.pop %v1516
    %v1520 = vmul.f32 %v1498, %v1517
    %v1521 = vmul.f32 %v1499, %v1518
    %v1522 = vmul.f32 %v1500, %v1519
    %v1523 = vlaneseq
    %v1524 = vshrl.u32 %v1523, 7
    %v1525 = vsub.s32 1, %v1524
    %v1526 = vrot.slane %v317, %v1525
    %v1527 = vmul.f32 %v1520, %v1526
    %v1528 = vmul.f32 %v1521, %v1526
    %v1529 = vmul.f32 %v1522, %v1526
    %v1530 = vlaneseq
    %v1531 = vshrl.u32 %v1530, 7
    %v1532 = vsub.s32 2, %v1531
    %v1533 = vrot.slane %v317, %v1532
    %v1534 = vadd.f32 %v1527, %v1533
    %v1535 = vadd.f32 %v1528, %v1533
    %v1536 = vadd.f32 %v1529, %v1533
    %v1537 = vld [vmem:[%s7] sm:$0xff]
    %v1538 = vld [vmem:[%s7 + $0x8] sm:$0xff]
    %v1539 = vld [vmem:[%s7 + $0x10] sm:$0xff]
    %v1540 = vld [vmem:[%s7 + $0x18] sm:$0xff]
    %v1541 = vld [vmem:[%s7 + $0x20] sm:$0xff]
    %v1542 = vld [vmem:[%s7 + $0x28] sm:$0xff]
    %v1543 = vld [vmem:[%s7 + $0x30] sm:$0xff]
    %v1544 = vld [vmem:[%s7 + $0x38] sm:$0xff]
    %v1545 = vld [vmem:[%s7 + $0x40] sm:$0xff]
    %v1546 = vld [vmem:[%s7 + $0x48] sm:$0xff]
    %v1547 = vld [vmem:[%s7 + $0x50] sm:$0xff]
    %v1548 = vld [vmem:[%s7 + $0x58] sm:$0xff]
    %v1549 = vld [vmem:[%s7 + $0x60] sm:$0xff]
    %v1550 = vld [vmem:[%s7 + $0x68] sm:$0xff]
    %v1551 = vld [vmem:[%s7 + $0x70] sm:$0xff]
    %v1552 = vld [vmem:[%s7 + $0x78] sm:$0xff]
    %v1553 = vld [vmem:[%s7 + $0x80] sm:$0xff]
    %v1554 = vld [vmem:[%s7 + $0x88] sm:$0xff]
    %v1555 = vld [vmem:[%s7 + $0x90] sm:$0xff]
    %v1556 = vld [vmem:[%s7 + $0x98] sm:$0xff]
    %v1557 = vld [vmem:[%s7 + $0xa0] sm:$0xff]
    %v1558 = vld [vmem:[%s7 + $0xa8] sm:$0xff]
    %v1559 = vld [vmem:[%s7 + $0xb0] sm:$0xff]
    %v1560 = vld [vmem:[%s7 + $0xb8] sm:$0xff]
    %v1561 = vld [vmem:[%s7 + $0xc0] sm:$0xff]
    %v1562 = vld [vmem:[%s7 + $0xc8] sm:$0xff]
    %v1563 = vld [vmem:[%s7 + $0xd0] sm:$0xff]
    %v1564 = vld [vmem:[%s7 + $0xd8] sm:$0xff]
    %v1565 = vld [vmem:[%s7 + $0xe0] sm:$0xff]
    %v1566 = vld [vmem:[%s7 + $0xe8] sm:$0xff]
    %v1567 = vld [vmem:[%s7 + $0xf0] sm:$0xff]
    %v1568 = vld [vmem:[%s7 + $0xf8] sm:$0xff]
    %v1569 = vld [vmem:[%s7 + $0x100] sm:$0xff]
    %v1570 = vld [vmem:[%s7 + $0x108] sm:$0xff]
    %v1571 = vld [vmem:[%s7 + $0x110] sm:$0xff]
    %v1572 = vld [vmem:[%s7 + $0x118] sm:$0xff]
    %v1573 = vld [vmem:[%s7 + $0x120] sm:$0xff]
    %v1574 = vld [vmem:[%s7 + $0x128] sm:$0xff]
    %v1575 = vld [vmem:[%s7 + $0x130] sm:$0xff]
    %v1576 = vld [vmem:[%s7 + $0x138] sm:$0xff]
    %v1577 = vld [vmem:[%s7 + $0x140] sm:$0xff]
    %v1578 = vld [vmem:[%s7 + $0x148] sm:$0xff]
    %v1579 = vld [vmem:[%s7 + $0x150] sm:$0xff]
    %v1580 = vld [vmem:[%s7 + $0x158] sm:$0xff]
    %v1581 = vld [vmem:[%s7 + $0x160] sm:$0xff]
    %v1582 = vld [vmem:[%s7 + $0x168] sm:$0xff]
    %v1583 = vld [vmem:[%s7 + $0x170] sm:$0xff]
    %v1584 = vld [vmem:[%s7 + $0x178] sm:$0xff]
    %v1585 = vld [vmem:[%s7 + $0x180] sm:$0xff]
    %v1586 = vld [vmem:[%s7 + $0x188] sm:$0xff]
    %v1587 = vld [vmem:[%s7 + $0x190] sm:$0xff]
    %v1588 = vld [vmem:[%s7 + $0x198] sm:$0xff]
    %v1589 = vld [vmem:[%s7 + $0x1a0] sm:$0xff]
    %v1590 = vld [vmem:[%s7 + $0x1a8] sm:$0xff]
    %v1591 = vld [vmem:[%s7 + $0x1b0] sm:$0xff]
    %v1592 = vld [vmem:[%s7 + $0x1b8] sm:$0xff]
    %v1593 = vld [vmem:[%s7 + $0x1c0] sm:$0xff]
    %v1594 = vld [vmem:[%s7 + $0x1c8] sm:$0xff]
    %v1595 = vld [vmem:[%s7 + $0x1d0] sm:$0xff]
    %v1596 = vld [vmem:[%s7 + $0x1d8] sm:$0xff]
    %v1597 = vld [vmem:[%s7 + $0x1e0] sm:$0xff]
    %v1598 = vld [vmem:[%s7 + $0x1e8] sm:$0xff]
    %v1599 = vld [vmem:[%s7 + $0x1f0] sm:$0xff]
    %v1600 = vld [vmem:[%s7 + $0x1f8] sm:$0xff]
    %v1601 = vld [vmem:[%s8] sm:$0xf]
    %v1603 = vlaneseq
    %v1604 = vshrl.u32 %v1603, 7
    %v1605 = vsub.s32 0, %v1604
    %v1606 = vrot.slane %v1601, %v1605
    %v1607 = vlaneseq
    %v1608 = vshrl.u32 %v1607, 7
    %v1609 = vsub.s32 1, %v1608
    %v1610 = vrot.slane %v1601, %v1609
    %v1611 = vlaneseq
    %v1612 = vshrl.u32 %v1611, 7
    %v1613 = vsub.s32 2, %v1612
    %v1614 = vrot.slane %v1601, %v1613
    %v1615 = vlaneseq
    %v1616 = vshrl.u32 %v1615, 7
    %v1617 = vsub.s32 3, %v1616
    %v1618 = vrot.slane %v1601, %v1617
    %1623 = vmatprep.subr.mxu0 %v1538
    %1624 = vmatpush1.msra.mxu0 %v1537
    %1625 = vmatprep.subr.mxu0 %v1542
    %1626 = vmatpush1.msra.mxu0 %v1541
    %1627 = vmatprep.subr.mxu0 %v1546
    %1628 = vmatpush1.msra.mxu0 %v1545
    %1629 = vmatprep.subr.mxu0 %v1550
    %1630 = vmatpush1.msra.mxu0 %v1549
    %1631 = vmatprep.subr.mxu0 %v1554
    %1632 = vmatpush1.msra.mxu0 %v1553
    %1633 = vmatprep.subr.mxu0 %v1558
    %1634 = vmatpush1.msra.mxu0 %v1557
    %1635 = vmatprep.subr.mxu0 %v1562
    %1636 = vmatpush1.msra.mxu0 %v1561
    %1637 = vmatprep.subr.mxu0 %v1566
    %1638 = vmatpush1.msra.mxu0 %v1565
    %1639 = vmatprep.subr.mxu0 %v1570
    %1640 = vmatpush1.msra.mxu0 %v1569
    %1641 = vmatprep.subr.mxu0 %v1574
    %1642 = vmatpush1.msra.mxu0 %v1573
    %1643 = vmatprep.subr.mxu0 %v1578
    %1644 = vmatpush1.msra.mxu0 %v1577
    %1645 = vmatprep.subr.mxu0 %v1582
    %1646 = vmatpush1.msra.mxu0 %v1581
    %1647 = vmatprep.subr.mxu0 %v1586
    %1648 = vmatpush1.msra.mxu0 %v1585
    %1649 = vmatprep.subr.mxu0 %v1590
    %1650 = vmatpush1.msra.mxu0 %v1589
    %1651 = vmatprep.subr.mxu0 %v1594
    %1652 = vmatpush1.msra.mxu0 %v1593
    %1653 = vmatprep.subr.mxu0 %v1598
    %1654 = vmatpush1.msra.mxu0 %v1597
    %1655 = vmatprep.subr.mxu0 0.0
    %1656 = vmatpush1.msra.mxu0 0.0
    %1657 = vmatprep.subr.mxu0 0.0
    %1658 = vmatpush1.msra.mxu0 0.0
    %1659 = vmatprep.subr.mxu0 0.0
    %1660 = vmatpush1.msra.mxu0 0.0
    %1661 = vmatprep.subr.mxu0 0.0
    %1662 = vmatpush1.msra.mxu0 0.0
    %1663 = vmatprep.subr.mxu0 0.0
    %1664 = vmatpush1.msra.mxu0 0.0
    %1665 = vmatprep.subr.mxu0 0.0
    %1666 = vmatpush1.msra.mxu0 0.0
    %1667 = vmatprep.subr.mxu0 0.0
    %1668 = vmatpush1.msra.mxu0 0.0
    %1669 = vmatprep.subr.mxu0 0.0
    %1670 = vmatpush1.msra.mxu0 0.0
    %1671 = vmatprep.subr.mxu0 0.0
    %1672 = vmatpush1.msra.mxu0 0.0
    %1673 = vmatprep.subr.mxu0 0.0
    %1674 = vmatpush1.msra.mxu0 0.0
    %1675 = vmatprep.subr.mxu0 0.0
    %1676 = vmatpush1.msra.mxu0 0.0
    %1677 = vmatprep.subr.mxu0 0.0
    %1678 = vmatpush1.msra.mxu0 0.0
    %1679 = vmatprep.subr.mxu0 0.0
    %1680 = vmatpush1.msra.mxu0 0.0
    %1681 = vmatprep.subr.mxu0 0.0
    %1682 = vmatpush1.msra.mxu0 0.0
    %1683 = vmatprep.subr.mxu0 0.0
    %1684 = vmatpush1.msra.mxu0 0.0
    %1685 = vmatprep.subr.mxu0 0.0
    %1686 = vmatpush1.msra.mxu0 0.0
    %1687 = vmatprep.mubr.f32.mxu0 0.0
    %1688 = vmatmul.mubr.f32.gmra.mrb[0].mxu0 %v1534
    %v1689 = vpop.f32.mrb[0].mxu0
    %v1690 = vadd.f32 %v1606, %v1689
    %v1691 = vpop.f32.mrb[0].mxu0
    %v1692 = vadd.f32 %v1610, %v1691
    %1693 = vmatprep.mubr.f32.mxu0 0.0
    %1694 = vmatmul.mubr.f32.gmra.mrb[0].mxu0 %v1535
    %v1695 = vpop.f32.mrb[0].mxu0
    %v1696 = vadd.f32 %v1606, %v1695
    %v1697 = vpop.f32.mrb[0].mxu0
    %v1698 = vadd.f32 %v1610, %v1697
    %1699 = vmatprep.mubr.f32.mxu0 0.0
    %1700 = vmatmul.mubr.f32.gmra.mrb[0].mxu0 %v1536
    %v1701 = vpop.f32.mrb[0].mxu0
    %v1702 = vadd.f32 %v1606, %v1701
    %v1703 = vpop.f32.mrb[0].mxu0
    %v1704 = vadd.f32 %v1610, %v1703
    %1705 = vdwg.mxu0
    %1706 = vmatprep.subr.mxu0 %v1540
    %1707 = vmatpush1.msra.mxu0 %v1539
    %1708 = vmatprep.subr.mxu0 %v1544
    %1709 = vmatpush1.msra.mxu0 %v1543
    %1710 = vmatprep.subr.mxu0 %v1548
    %1711 = vmatpush1.msra.mxu0 %v1547
    %1712 = vmatprep.subr.mxu0 %v1552
    %1713 = vmatpush1.msra.mxu0 %v1551
    %1714 = vmatprep.subr.mxu0 %v1556
    %1715 = vmatpush1.msra.mxu0 %v1555
    %1716 = vmatprep.subr.mxu0 %v1560
    %1717 = vmatpush1.msra.mxu0 %v1559
    %1718 = vmatprep.subr.mxu0 %v1564
    %1719 = vmatpush1.msra.mxu0 %v1563
    %1720 = vmatprep.subr.mxu0 %v1568
    %1721 = vmatpush1.msra.mxu0 %v1567
    %1722 = vmatprep.subr.mxu0 %v1572
    %1723 = vmatpush1.msra.mxu0 %v1571
    %1724 = vmatprep.subr.mxu0 %v1576
    %1725 = vmatpush1.msra.mxu0 %v1575
    %1726 = vmatprep.subr.mxu0 %v1580
    %1727 = vmatpush1.msra.mxu0 %v1579
    %1728 = vmatprep.subr.mxu0 %v1584
    %1729 = vmatpush1.msra.mxu0 %v1583
    %1730 = vmatprep.subr.mxu0 %v1588
    %1731 = vmatpush1.msra.mxu0 %v1587
    %1732 = vmatprep.subr.mxu0 %v1592
    %1733 = vmatpush1.msra.mxu0 %v1591
    %1734 = vmatprep.subr.mxu0 %v1596
    %1735 = vmatpush1.msra.mxu0 %v1595
    %1736 = vmatprep.subr.mxu0 %v1600
    %1737 = vmatpush1.msra.mxu0 %v1599
    %1738 = vmatprep.subr.mxu0 0.0
    %1739 = vmatpush1.msra.mxu0 0.0
    %1740 = vmatprep.subr.mxu0 0.0
    %1741 = vmatpush1.msra.mxu0 0.0
    %1742 = vmatprep.subr.mxu0 0.0
    %1743 = vmatpush1.msra.mxu0 0.0
    %1744 = vmatprep.subr.mxu0 0.0
    %1745 = vmatpush1.msra.mxu0 0.0
    %1746 = vmatprep.subr.mxu0 0.0
    %1747 = vmatpush1.msra.mxu0 0.0
    %1748 = vmatprep.subr.mxu0 0.0
    %1749 = vmatpush1.msra.mxu0 0.0
    %1750 = vmatprep.subr.mxu0 0.0
    %1751 = vmatpush1.msra.mxu0 0.0
    %1752 = vmatprep.subr.mxu0 0.0
    %1753 = vmatpush1.msra.mxu0 0.0
    %1754 = vmatprep.subr.mxu0 0.0
    %1755 = vmatpush1.msra.mxu0 0.0
    %1756 = vmatprep.subr.mxu0 0.0
    %1757 = vmatpush1.msra.mxu0 0.0
    %1758 = vmatprep.subr.mxu0 0.0
    %1759 = vmatpush1.msra.mxu0 0.0
    %1760 = vmatprep.subr.mxu0 0.0
    %1761 = vmatpush1.msra.mxu0 0.0
    %1762 = vmatprep.subr.mxu0 0.0
    %1763 = vmatpush1.msra.mxu0 0.0
    %1764 = vmatprep.subr.mxu0 0.0
    %1765 = vmatpush1.msra.mxu0 0.0
    %1766 = vmatprep.subr.mxu0 0.0
    %1767 = vmatpush1.msra.mxu0 0.0
    %1768 = vmatprep.subr.mxu0 0.0
    %1769 = vmatpush1.msra.mxu0 0.0
    %1770 = vmatprep.mubr.f32.mxu0 0.0
    %1771 = vmatmul.mubr.f32.gmra.mrb[0].mxu0 %v1534
    %v1772 = vpop.f32.mrb[0].mxu0
    %v1773 = vadd.f32 %v1614, %v1772
    %v1774 = vpop.f32.mrb[0].mxu0
    %v1775 = vadd.f32 %v1618, %v1774
    %1776 = vmatprep.mubr.f32.mxu0 0.0
    %1777 = vmatmul.mubr.f32.gmra.mrb[0].mxu0 %v1535
    %v1778 = vpop.f32.mrb[0].mxu0
    %v1779 = vadd.f32 %v1614, %v1778
    %v1780 = vpop.f32.mrb[0].mxu0
    %v1781 = vadd.f32 %v1618, %v1780
    %1782 = vmatprep.mubr.f32.mxu0 0.0
    %1783 = vmatmul.mubr.f32.gmra.mrb[0].mxu0 %v1536
    %v1784 = vpop.f32.mrb[0].mxu0
    %v1785 = vadd.f32 %v1614, %v1784
    %v1786 = vpop.f32.mrb[0].mxu0
    %v1787 = vadd.f32 %v1618, %v1786
    %1788 = vdwg.mxu0
    %v1789 = vmax.f32 %v1690, 0.0
    %v1790 = vmax.f32 %v1692, 0.0
    %v1791 = vmax.f32 %v1773, 0.0
    %v1792 = vmax.f32 %v1775, 0.0
    %v1793 = vmax.f32 %v1696, 0.0
    %v1794 = vmax.f32 %v1698, 0.0
    %v1795 = vmax.f32 %v1779, 0.0
    %v1796 = vmax.f32 %v1781, 0.0
    %v1797 = vmax.f32 %v1702, 0.0
    %v1798 = vmax.f32 %v1704, 0.0
    %v1799 = vmax.f32 %v1785, 0.0
    %v1800 = vmax.f32 %v1787, 0.0
    %v1801 = vld [vmem:[#allocation2] sm:$0xff]
    %v1802 = vld [vmem:[#allocation2 + $0x8] sm:$0xff]
    %v1803 = vld [vmem:[#allocation2 + $0x10] sm:$0xff]
    %v1804 = vld [vmem:[#allocation2 + $0x18] sm:$0xff]
    %v1805 = vld [vmem:[#allocation2 + $0x20] sm:$0xff]
    %v1806 = vld [vmem:[#allocation2 + $0x28] sm:$0xff]
    %v1807 = vld [vmem:[#allocation2 + $0x30] sm:$0xff]
    %v1808 = vld [vmem:[#allocation2 + $0x38] sm:$0xff]
    %v1809 = vld [vmem:[#allocation2 + $0x40] sm:$0xff]
    %v1810 = vld [vmem:[#allocation2 + $0x48] sm:$0xff]
    %v1811 = vld [vmem:[#allocation2 + $0x50] sm:$0xff]
    %v1812 = vld [vmem:[#allocation2 + $0x58] sm:$0xff]
    %v1813 = vld [vmem:[#allocation2 + $0x60] sm:$0xff]
    %v1814 = vld [vmem:[#allocation2 + $0x68] sm:$0xff]
    %v1815 = vld [vmem:[#allocation2 + $0x70] sm:$0xff]
    %v1816 = vld [vmem:[#allocation2 + $0x78] sm:$0xff]
    %v1817 = vld [vmem:[#allocation2 + $0x80] sm:$0xff]
    %v1818 = vld [vmem:[#allocation2 + $0x88] sm:$0xff]
    %v1819 = vld [vmem:[#allocation2 + $0x90] sm:$0xff]
    %v1820 = vld [vmem:[#allocation2 + $0x98] sm:$0xff]
    %v1821 = vld [vmem:[#allocation2 + $0xa0] sm:$0xff]
    %v1822 = vld [vmem:[#allocation2 + $0xa8] sm:$0xff]
    %v1823 = vld [vmem:[#allocation2 + $0xb0] sm:$0xff]
    %v1824 = vld [vmem:[#allocation2 + $0xb8] sm:$0xff]
    %v1825 = vld [vmem:[#allocation2 + $0xc0] sm:$0xff]
    %v1826 = vld [vmem:[#allocation2 + $0xc8] sm:$0xff]
    %v1827 = vld [vmem:[#allocation2 + $0xd0] sm:$0xff]
    %v1828 = vld [vmem:[#allocation2 + $0xd8] sm:$0xff]
    %v1829 = vld [vmem:[#allocation2 + $0xe0] sm:$0xff]
    %v1830 = vld [vmem:[#allocation2 + $0xe8] sm:$0xff]
    %v1831 = vld [vmem:[#allocation2 + $0xf0] sm:$0xff]
    %v1832 = vld [vmem:[#allocation2 + $0xf8] sm:$0xff]
    %v1833 = vld [vmem:[#allocation2 + $0x100] sm:$0xff]
    %v1834 = vld [vmem:[#allocation2 + $0x108] sm:$0xff]
    %v1835 = vld [vmem:[#allocation2 + $0x110] sm:$0xff]
    %v1836 = vld [vmem:[#allocation2 + $0x118] sm:$0xff]
    %v1837 = vld [vmem:[#allocation2 + $0x120] sm:$0xff]
    %v1838 = vld [vmem:[#allocation2 + $0x128] sm:$0xff]
    %v1839 = vld [vmem:[#allocation2 + $0x130] sm:$0xff]
    %v1840 = vld [vmem:[#allocation2 + $0x138] sm:$0xff]
    %v1841 = vld [vmem:[#allocation2 + $0x140] sm:$0xff]
    %v1842 = vld [vmem:[#allocation2 + $0x148] sm:$0xff]
    %v1843 = vld [vmem:[#allocation2 + $0x150] sm:$0xff]
    %v1844 = vld [vmem:[#allocation2 + $0x158] sm:$0xff]
    %v1845 = vld [vmem:[#allocation2 + $0x160] sm:$0xff]
    %v1846 = vld [vmem:[#allocation2 + $0x168] sm:$0xff]
    %v1847 = vld [vmem:[#allocation2 + $0x170] sm:$0xff]
    %v1848 = vld [vmem:[#allocation2 + $0x178] sm:$0xff]
    %v1849 = vld [vmem:[#allocation2 + $0x180] sm:$0xff]
    %v1850 = vld [vmem:[#allocation2 + $0x188] sm:$0xff]
    %v1851 = vld [vmem:[#allocation2 + $0x190] sm:$0xff]
    %v1852 = vld [vmem:[#allocation2 + $0x198] sm:$0xff]
    %v1853 = vld [vmem:[#allocation2 + $0x1a0] sm:$0xff]
    %v1854 = vld [vmem:[#allocation2 + $0x1a8] sm:$0xff]
    %v1855 = vld [vmem:[#allocation2 + $0x1b0] sm:$0xff]
    %v1856 = vld [vmem:[#allocation2 + $0x1b8] sm:$0xff]
    %v1857 = vld [vmem:[#allocation2 + $0x1c0] sm:$0xff]
    %v1858 = vld [vmem:[#allocation2 + $0x1c8] sm:$0xff]
    %v1859 = vld [vmem:[#allocation2 + $0x1d0] sm:$0xff]
    %v1860 = vld [vmem:[#allocation2 + $0x1d8] sm:$0xff]
    %v1861 = vld [vmem:[#allocation2 + $0x1e0] sm:$0xff]
    %v1862 = vld [vmem:[#allocation2 + $0x1e8] sm:$0xff]
    %v1863 = vld [vmem:[#allocation2 + $0x1f0] sm:$0xff]
    %v1864 = vld [vmem:[#allocation2 + $0x1f8] sm:$0xff]
    %v1865 = vlaneseq
    %v1866 = vshrl.u32 %v1865, 7
    %v1867 = vsub.s32 3, %v1866
    %v1868 = vrot.slane %v317, %v1867
    %1869 = vmatprep.subr.mxu0 0.0
    %1870 = vmatpush1.msra.mxu0 %v1801
    %1871 = vmatprep.subr.mxu0 0.0
    %1872 = vmatpush1.msra.mxu0 %v1802
    %1873 = vmatprep.subr.mxu0 0.0
    %1874 = vmatpush1.msra.mxu0 %v1803
    %1875 = vmatprep.subr.mxu0 0.0
    %1876 = vmatpush1.msra.mxu0 %v1804
    %1877 = vmatprep.subr.mxu0 0.0
    %1878 = vmatpush1.msra.mxu0 %v1805
    %1879 = vmatprep.subr.mxu0 0.0
    %1880 = vmatpush1.msra.mxu0 %v1806
    %1881 = vmatprep.subr.mxu0 0.0
    %1882 = vmatpush1.msra.mxu0 %v1807
    %1883 = vmatprep.subr.mxu0 0.0
    %1884 = vmatpush1.msra.mxu0 %v1808
    %1885 = vmatprep.subr.mxu0 0.0
    %1886 = vmatpush1.msra.mxu0 %v1809
    %1887 = vmatprep.subr.mxu0 0.0
    %1888 = vmatpush1.msra.mxu0 %v1810
    %1889 = vmatprep.subr.mxu0 0.0
    %1890 = vmatpush1.msra.mxu0 %v1811
    %1891 = vmatprep.subr.mxu0 0.0
    %1892 = vmatpush1.msra.mxu0 %v1812
    %1893 = vmatprep.subr.mxu0 0.0
    %1894 = vmatpush1.msra.mxu0 %v1813
    %1895 = vmatprep.subr.mxu0 0.0
    %1896 = vmatpush1.msra.mxu0 %v1814
    %1897 = vmatprep.subr.mxu0 0.0
    %1898 = vmatpush1.msra.mxu0 %v1815
    %1899 = vmatprep.subr.mxu0 0.0
    %1900 = vmatpush1.msra.mxu0 %v1816
    %1901 = vmatprep.subr.mxu0 0.0
    %1902 = vmatpush1.msra.mxu0 %v1817
    %1903 = vmatprep.subr.mxu0 0.0
    %1904 = vmatpush1.msra.mxu0 %v1818
    %1905 = vmatprep.subr.mxu0 0.0
    %1906 = vmatpush1.msra.mxu0 %v1819
    %1907 = vmatprep.subr.mxu0 0.0
    %1908 = vmatpush1.msra.mxu0 %v1820
    %1909 = vmatprep.subr.mxu0 0.0
    %1910 = vmatpush1.msra.mxu0 %v1821
    %1911 = vmatprep.subr.mxu0 0.0
    %1912 = vmatpush1.msra.mxu0 %v1822
    %1913 = vmatprep.subr.mxu0 0.0
    %1914 = vmatpush1.msra.mxu0 %v1823
    %1915 = vmatprep.subr.mxu0 0.0
    %1916 = vmatpush1.msra.mxu0 %v1824
    %1917 = vmatprep.subr.mxu0 0.0
    %1918 = vmatpush1.msra.mxu0 %v1825
    %1919 = vmatprep.subr.mxu0 0.0
    %1920 = vmatpush1.msra.mxu0 %v1826
    %1921 = vmatprep.subr.mxu0 0.0
    %1922 = vmatpush1.msra.mxu0 %v1827
    %1923 = vmatprep.subr.mxu0 0.0
    %1924 = vmatpush1.msra.mxu0 %v1828
    %1925 = vmatprep.subr.mxu0 0.0
    %1926 = vmatpush1.msra.mxu0 %v1829
    %1927 = vmatprep.subr.mxu0 0.0
    %1928 = vmatpush1.msra.mxu0 %v1830
    %1929 = vmatprep.subr.mxu0 0.0
    %1930 = vmatpush1.msra.mxu0 %v1831
    %1931 = vmatprep.subr.mxu0 0.0
    %1932 = vmatpush1.msra.mxu0 %v1832
    %1933 = vmatprep.mubr.f32.mxu0 %v1790
    %1934 = vmatmul.mubr.f32.gmra.mrb[0].mxu0 %v1789
    %v1935 = vpop.f32.mrb[0].mxu0
    %v1936 = vadd.f32 %v1868, %v1935
    %v1937 = vpop.f32.mrb[0].mxu0
    %1938 = vmatprep.mubr.f32.mxu0 %v1794
    %1939 = vmatmul.mubr.f32.gmra.mrb[0].mxu0 %v1793
    %v1940 = vpop.f32.mrb[0].mxu0
    %v1941 = vadd.f32 %v1868, %v1940
    %v1942 = vpop.f32.mrb[0].mxu0
    %1943 = vmatprep.mubr.f32.mxu0 %v1798
    %1944 = vmatmul.mubr.f32.gmra.mrb[0].mxu0 %v1797
    %v1945 = vpop.f32.mrb[0].mxu0
    %v1946 = vadd.f32 %v1868, %v1945
    %v1947 = vpop.f32.mrb[0].mxu0
    %1948 = vdwg.mxu0
    %1949 = vmatprep.subr.mxu0 0.0
    %1950 = vmatpush1.msra.mxu0 %v1833
    %1951 = vmatprep.subr.mxu0 0.0
    %1952 = vmatpush1.msra.mxu0 %v1834
    %1953 = vmatprep.subr.mxu0 0.0
    %1954 = vmatpush1.msra.mxu0 %v1835
    %1955 = vmatprep.subr.mxu0 0.0
    %1956 = vmatpush1.msra.mxu0 %v1836
    %1957 = vmatprep.subr.mxu0 0.0
    %1958 = vmatpush1.msra.mxu0 %v1837
    %1959 = vmatprep.subr.mxu0 0.0
    %1960 = vmatpush1.msra.mxu0 %v1838
    %1961 = vmatprep.subr.mxu0 0.0
    %1962 = vmatpush1.msra.mxu0 %v1839
    %1963 = vmatprep.subr.mxu0 0.0
    %1964 = vmatpush1.msra.mxu0 %v1840
    %1965 = vmatprep.subr.mxu0 0.0
    %1966 = vmatpush1.msra.mxu0 %v1841
    %1967 = vmatprep.subr.mxu0 0.0
    %1968 = vmatpush1.msra.mxu0 %v1842
    %1969 = vmatprep.subr.mxu0 0.0
    %1970 = vmatpush1.msra.mxu0 %v1843
    %1971 = vmatprep.subr.mxu0 0.0
    %1972 = vmatpush1.msra.mxu0 %v1844
    %1973 = vmatprep.subr.mxu0 0.0
    %1974 = vmatpush1.msra.mxu0 %v1845
    %1975 = vmatprep.subr.mxu0 0.0
    %1976 = vmatpush1.msra.mxu0 %v1846
    %1977 = vmatprep.subr.mxu0 0.0
    %1978 = vmatpush1.msra.mxu0 %v1847
    %1979 = vmatprep.subr.mxu0 0.0
    %1980 = vmatpush1.msra.mxu0 %v1848
    %1981 = vmatprep.subr.mxu0 0.0
    %1982 = vmatpush1.msra.mxu0 %v1849
    %1983 = vmatprep.subr.mxu0 0.0
    %1984 = vmatpush1.msra.mxu0 %v1850
    %1985 = vmatprep.subr.mxu0 0.0
    %1986 = vmatpush1.msra.mxu0 %v1851
    %1987 = vmatprep.subr.mxu0 0.0
    %1988 = vmatpush1.msra.mxu0 %v1852
    %1989 = vmatprep.subr.mxu0 0.0
    %1990 = vmatpush1.msra.mxu0 %v1853
    %1991 = vmatprep.subr.mxu0 0.0
    %1992 = vmatpush1.msra.mxu0 %v1854
    %1993 = vmatprep.subr.mxu0 0.0
    %1994 = vmatpush1.msra.mxu0 %v1855
    %1995 = vmatprep.subr.mxu0 0.0
    %1996 = vmatpush1.msra.mxu0 %v1856
    %1997 = vmatprep.subr.mxu0 0.0
    %1998 = vmatpush1.msra.mxu0 %v1857
    %1999 = vmatprep.subr.mxu0 0.0
    %2000 = vmatpush1.msra.mxu0 %v1858
    %2001 = vmatprep.subr.mxu0 0.0
    %2002 = vmatpush1.msra.mxu0 %v1859
    %2003 = vmatprep.subr.mxu0 0.0
    %2004 = vmatpush1.msra.mxu0 %v1860
    %2005 = vmatprep.subr.mxu0 0.0
    %2006 = vmatpush1.msra.mxu0 %v1861
    %2007 = vmatprep.subr.mxu0 0.0
    %2008 = vmatpush1.msra.mxu0 %v1862
    %2009 = vmatprep.subr.mxu0 0.0
    %2010 = vmatpush1.msra.mxu0 %v1863
    %2011 = vmatprep.subr.mxu0 0.0
    %2012 = vmatpush1.msra.mxu0 %v1864
    %2013 = vmatprep.mubr.f32.mxu0 %v1792
    %2014 = vmatmul.mubr.f32.gmra.mrb[0].mxu0 %v1791
    %v2015 = vpop.f32.mrb[0].mxu0
    %v2016 = vadd.f32 %v1936, %v2015
    %v2017 = vpop.f32.mrb[0].mxu0
    %2018 = vmatprep.mubr.f32.mxu0 %v1796
    %2019 = vmatmul.mubr.f32.gmra.mrb[0].mxu0 %v1795
    %v2020 = vpop.f32.mrb[0].mxu0
    %v2021 = vadd.f32 %v1941, %v2020
    %v2022 = vpop.f32.mrb[0].mxu0
    %2023 = vmatprep.mubr.f32.mxu0 %v1800
    %2024 = vmatmul.mubr.f32.gmra.mrb[0].mxu0 %v1799
    %v2025 = vpop.f32.mrb[0].mxu0
    %v2026 = vadd.f32 %v1946, %v2025
    %v2027 = vpop.f32.mrb[0].mxu0
    %2028 = vdwg.mxu0
    %v2029 = vadd.f32 %v1534, %v2016
    %v2030 = vadd.f32 %v1535, %v2021
    %v2031 = vadd.f32 %v1536, %v2026
    %2032 = vadd.xlane.f32.xlu0 %v2029
    %v2033 = vpop.xlane.xlu0 %2032
    %2034 = vadd.xlane.f32.xlu0 %v2030
    %v2035 = vpop.xlane.xlu0 %2034
    %v2036 = vsel %vm1490, %v2031, 0.0
    %2037 = vadd.xlane.f32.xlu0 %v2036
    %v2038 = vpop.xlane.xlu0 %2037
    %v2039 = vmul.f32 %v2033, %v1494
    %v2040 = vmul.f32 %v2035, %v1494
    %v2041 = vmul.f32 %v2038, %v1494
    %v2042 = vsub.f32 %v2029, %v2039
    %v2043 = vsub.f32 %v2030, %v2040
    %v2044 = vsub.f32 %v2031, %v2041
    %v2045 = vmul.f32 %v2042, %v2042
    %v2046 = vmul.f32 %v2043, %v2043
    %v2047 = vmul.f32 %v2044, %v2044
    %2048 = vadd.xlane.f32.xlu0 %v2045
    %v2049 = vpop.xlane.xlu0 %2048
    %2050 = vadd.xlane.f32.xlu0 %v2046
    %v2051 = vpop.xlane.xlu0 %2050
    %v2052 = vsel %vm1490, %v2047, 0.0
    %2053 = vadd.xlane.f32.xlu0 %v2052
    %v2054 = vpop.xlane.xlu0 %2053
    %v2055 = vmul.f32 %v2049, %v1494
    %v2056 = vmul.f32 %v2051, %v1494
    %v2057 = vmul.f32 %v2054, %v1494
    %v2058 = vadd.f32 %v2055, 1e-05
    %v2059 = vadd.f32 %v2056, 1e-05
    %v2060 = vadd.f32 %v2057, 1e-05
    %v2061 = vrsqrt.pop %v2058
    %v2062 = vrsqrt.pop %v2059
    %v2063 = vrsqrt.pop %v2060
    %v2064 = vmul.f32 %v2042, %v2061
    %v2065 = vmul.f32 %v2043, %v2062
    %v2066 = vmul.f32 %v2044, %v2063
    %v2067 = vlaneseq
    %v2068 = vshrl.u32 %v2067, 7
    %v2069 = vsub.s32 4, %v2068
    %v2070 = vrot.slane %v317, %v2069
    %v2071 = vmul.f32 %v2064, %v2070
    %v2072 = vmul.f32 %v2065, %v2070
    %v2073 = vmul.f32 %v2066, %v2070
    %v2074 = vlaneseq
    %v2075 = vshrl.u32 %v2074, 7
    %v2076 = vsub.s32 5, %v2075
    %v2077 = vrot.slane %v317, %v2076
    %v2078 = vadd.f32 %v2071, %v2077
    %v2079 = vadd.f32 %v2072, %v2077
    %v2080 = vadd.f32 %v2073, %v2077
    %s2081 = scalar_lea.vmem %s6, 8
    %v2082 = vld [vmem:[%s2081] sm:$0x3f]
    %s2083 = scalar_lea.vmem %s3, 384
    %v2084 = vld [vmem:[%s2083] sm:$0xff]
    %v2085 = vld [vmem:[%s2083 + $0x8] sm:$0xff]
    %v2086 = vld [vmem:[%s2083 + $0x10] sm:$0xff]
    %v2087 = vld [vmem:[%s2083 + $0x18] sm:$0xff]
    %v2088 = vld [vmem:[%s2083 + $0x20] sm:$0xff]
    %v2089 = vld [vmem:[%s2083 + $0x28] sm:$0xff]
    %v2090 = vld [vmem:[%s2083 + $0x30] sm:$0xff]
    %v2091 = vld [vmem:[%s2083 + $0x38] sm:$0xff]
    %v2092 = vld [vmem:[%s2083 + $0x40] sm:$0xff]
    %v2093 = vld [vmem:[%s2083 + $0x48] sm:$0xff]
    %v2094 = vld [vmem:[%s2083 + $0x50] sm:$0xff]
    %v2095 = vld [vmem:[%s2083 + $0x58] sm:$0xff]
    %v2096 = vld [vmem:[%s2083 + $0x60] sm:$0xff]
    %v2097 = vld [vmem:[%s2083 + $0x68] sm:$0xff]
    %v2098 = vld [vmem:[%s2083 + $0x70] sm:$0xff]
    %v2099 = vld [vmem:[%s2083 + $0x78] sm:$0xff]
    %v2100 = vld [vmem:[%s2083 + $0x80] sm:$0xff]
    %v2101 = vld [vmem:[%s2083 + $0x88] sm:$0xff]
    %v2102 = vld [vmem:[%s2083 + $0x90] sm:$0xff]
    %v2103 = vld [vmem:[%s2083 + $0x98] sm:$0xff]
    %v2104 = vld [vmem:[%s2083 + $0xa0] sm:$0xff]
    %v2105 = vld [vmem:[%s2083 + $0xa8] sm:$0xff]
    %v2106 = vld [vmem:[%s2083 + $0xb0] sm:$0xff]
    %v2107 = vld [vmem:[%s2083 + $0xb8] sm:$0xff]
    %v2108 = vld [vmem:[%s2083 + $0xc0] sm:$0xff]
    %v2109 = vld [vmem:[%s2083 + $0xc8] sm:$0xff]
    %v2110 = vld [vmem:[%s2083 + $0xd0] sm:$0xff]
    %v2111 = vld [vmem:[%s2083 + $0xd8] sm:$0xff]
    %v2112 = vld [vmem:[%s2083 + $0xe0] sm:$0xff]
    %v2113 = vld [vmem:[%s2083 + $0xe8] sm:$0xff]
    %v2114 = vld [vmem:[%s2083 + $0xf0] sm:$0xff]
    %v2115 = vld [vmem:[%s2083 + $0xf8] sm:$0xff]
    %v2116 = vld [vmem:[%s2083 + $0x100] sm:$0xff]
    %v2117 = vld [vmem:[%s2083 + $0x108] sm:$0xff]
    %v2118 = vld [vmem:[%s2083 + $0x110] sm:$0xff]
    %v2119 = vld [vmem:[%s2083 + $0x118] sm:$0xff]
    %v2120 = vld [vmem:[%s2083 + $0x120] sm:$0xff]
    %v2121 = vld [vmem:[%s2083 + $0x128] sm:$0xff]
    %v2122 = vld [vmem:[%s2083 + $0x130] sm:$0xff]
    %v2123 = vld [vmem:[%s2083 + $0x138] sm:$0xff]
    %v2124 = vld [vmem:[%s2083 + $0x140] sm:$0xff]
    %v2125 = vld [vmem:[%s2083 + $0x148] sm:$0xff]
    %v2126 = vld [vmem:[%s2083 + $0x150] sm:$0xff]
    %v2127 = vld [vmem:[%s2083 + $0x158] sm:$0xff]
    %v2128 = vld [vmem:[%s2083 + $0x160] sm:$0xff]
    %v2129 = vld [vmem:[%s2083 + $0x168] sm:$0xff]
    %v2130 = vld [vmem:[%s2083 + $0x170] sm:$0xff]
    %v2131 = vld [vmem:[%s2083 + $0x178] sm:$0xff]
    %s2132 = scalar_lea.vmem %s4, 3
    %v2133 = vld [vmem:[%s2132] sm:$0x7]
    %v2135 = vlaneseq
    %v2136 = vshrl.u32 %v2135, 7
    %v2137 = vsub.s32 0, %v2136
    %v2138 = vrot.slane %v2133, %v2137
    %v2139 = vlaneseq
    %v2140 = vshrl.u32 %v2139, 7
    %v2141 = vsub.s32 1, %v2140
    %v2142 = vrot.slane %v2133, %v2141
    %v2143 = vlaneseq
    %v2144 = vshrl.u32 %v2143, 7
    %v2145 = vsub.s32 2, %v2144
    %v2146 = vrot.slane %v2133, %v2145
    %2150 = vmatprep.subr.mxu0 %v2085
    %2151 = vmatpush1.msra.mxu0 %v2084
    %2152 = vmatprep.subr.mxu0 %v2088
    %2153 = vmatpush1.msra.mxu0 %v2087
    %2154 = vmatprep.subr.mxu0 %v2091
    %2155 = vmatpush1.msra.mxu0 %v2090
    %2156 = vmatprep.subr.mxu0 %v2094
    %2157 = vmatpush1.msra.mxu0 %v2093
    %2158 = vmatprep.subr.mxu0 %v2097
    %2159 = vmatpush1.msra.mxu0 %v2096
    %2160 = vmatprep.subr.mxu0 %v2100
    %2161 = vmatpush1.msra.mxu0 %v2099
    %2162 = vmatprep.subr.mxu0 %v2103
    %2163 = vmatpush1.msra.mxu0 %v2102
    %2164 = vmatprep.subr.mxu0 %v2106
    %2165 = vmatpush1.msra.mxu0 %v2105
    %2166 = vmatprep.subr.mxu0 %v2109
    %2167 = vmatpush1.msra.mxu0 %v2108
    %2168 = vmatprep.subr.mxu0 %v2112
    %2169 = vmatpush1.msra.mxu0 %v2111
    %2170 = vmatprep.subr.mxu0 %v2115
    %2171 = vmatpush1.msra.mxu0 %v2114
    %2172 = vmatprep.subr.mxu0 %v2118
    %2173 = vmatpush1.msra.mxu0 %v2117
    %2174 = vmatprep.subr.mxu0 %v2121
    %2175 = vmatpush1.msra.mxu0 %v2120
    %2176 = vmatprep.subr.mxu0 %v2124
    %2177 = vmatpush1.msra.mxu0 %v2123
    %2178 = vmatprep.subr.mxu0 %v2127
    %2179 = vmatpush1.msra.mxu0 %v2126
    %2180 = vmatprep.subr.mxu0 %v2130
    %2181 = vmatpush1.msra.mxu0 %v2129
    %2182 = vmatprep.subr.mxu0 0.0
    %2183 = vmatpush1.msra.mxu0 0.0
    %2184 = vmatprep.subr.mxu0 0.0
    %2185 = vmatpush1.msra.mxu0 0.0
    %2186 = vmatprep.subr.mxu0 0.0
    %2187 = vmatpush1.msra.mxu0 0.0
    %2188 = vmatprep.subr.mxu0 0.0
    %2189 = vmatpush1.msra.mxu0 0.0
    %2190 = vmatprep.subr.mxu0 0.0
    %2191 = vmatpush1.msra.mxu0 0.0
    %2192 = vmatprep.subr.mxu0 0.0
    %2193 = vmatpush1.msra.mxu0 0.0
    %2194 = vmatprep.subr.mxu0 0.0
    %2195 = vmatpush1.msra.mxu0 0.0
    %2196 = vmatprep.subr.mxu0 0.0
    %2197 = vmatpush1.msra.mxu0 0.0
    %2198 = vmatprep.subr.mxu0 0.0
    %2199 = vmatpush1.msra.mxu0 0.0
    %2200 = vmatprep.subr.mxu0 0.0
    %2201 = vmatpush1.msra.mxu0 0.0
    %2202 = vmatprep.subr.mxu0 0.0
    %2203 = vmatpush1.msra.mxu0 0.0
    %2204 = vmatprep.subr.mxu0 0.0
    %2205 = vmatpush1.msra.mxu0 0.0
    %2206 = vmatprep.subr.mxu0 0.0
    %2207 = vmatpush1.msra.mxu0 0.0
    %2208 = vmatprep.subr.mxu0 0.0
    %2209 = vmatpush1.msra.mxu0 0.0
    %2210 = vmatprep.subr.mxu0 0.0
    %2211 = vmatpush1.msra.mxu0 0.0
    %2212 = vmatprep.subr.mxu0 0.0
    %2213 = vmatpush1.msra.mxu0 0.0
    %2214 = vmatprep.mubr.f32.mxu0 0.0
    %2215 = vmatmul.mubr.f32.gmra.mrb[0].mxu0 %v2078
    %v2216 = vpop.f32.mrb[0].mxu0
    %v2217 = vadd.f32 %v2138, %v2216
    %v2218 = vpop.f32.mrb[0].mxu0
    %v2219 = vadd.f32 %v2142, %v2218
    %2220 = vmatprep.mubr.f32.mxu0 0.0
    %2221 = vmatmul.mubr.f32.gmra.mrb[0].mxu0 %v2079
    %v2222 = vpop.f32.mrb[0].mxu0
    %v2223 = vadd.f32 %v2138, %v2222
    %v2224 = vpop.f32.mrb[0].mxu0
    %v2225 = vadd.f32 %v2142, %v2224
    %2226 = vmatprep.mubr.f32.mxu0 0.0
    %2227 = vmatmul.mubr.f32.gmra.mrb[0].mxu0 %v2080
    %v2228 = vpop.f32.mrb[0].mxu0
    %v2229 = vadd.f32 %v2138, %v2228
    %v2230 = vpop.f32.mrb[0].mxu0
    %v2231 = vadd.f32 %v2142, %v2230
    %2232 = vdwg.mxu0
    %2233 = vmatprep.subr.mxu0 0.0
    %2234 = vmatpush1.msra.mxu0 %v2086
    %2235 = vmatprep.subr.mxu0 0.0
    %2236 = vmatpush1.msra.mxu0 %v2089
    %2237 = vmatprep.subr.mxu0 0.0
    %2238 = vmatpush1.msra.mxu0 %v2092
    %2239 = vmatprep.subr.mxu0 0.0
    %2240 = vmatpush1.msra.mxu0 %v2095
    %2241 = vmatprep.subr.mxu0 0.0
    %2242 = vmatpush1.msra.mxu0 %v2098
    %2243 = vmatprep.subr.mxu0 0.0
    %2244 = vmatpush1.msra.mxu0 %v2101
    %2245 = vmatprep.subr.mxu0 0.0
    %2246 = vmatpush1.msra.mxu0 %v2104
    %2247 = vmatprep.subr.mxu0 0.0
    %2248 = vmatpush1.msra.mxu0 %v2107
    %2249 = vmatprep.subr.mxu0 0.0
    %2250 = vmatpush1.msra.mxu0 %v2110
    %2251 = vmatprep.subr.mxu0 0.0
    %2252 = vmatpush1.msra.mxu0 %v2113
    %2253 = vmatprep.subr.mxu0 0.0
    %2254 = vmatpush1.msra.mxu0 %v2116
    %2255 = vmatprep.subr.mxu0 0.0
    %2256 = vmatpush1.msra.mxu0 %v2119
    %2257 = vmatprep.subr.mxu0 0.0
    %2258 = vmatpush1.msra.mxu0 %v2122
    %2259 = vmatprep.subr.mxu0 0.0
    %2260 = vmatpush1.msra.mxu0 %v2125
    %2261 = vmatprep.subr.mxu0 0.0
    %2262 = vmatpush1.msra.mxu0 %v2128
    %2263 = vmatprep.subr.mxu0 0.0
    %2264 = vmatpush1.msra.mxu0 %v2131
    %2265 = vmatprep.subr.mxu0 0.0
    %2266 = vmatpush1.msra.mxu0 0.0
    %2267 = vmatprep.subr.mxu0 0.0
    %2268 = vmatpush1.msra.mxu0 0.0
    %2269 = vmatprep.subr.mxu0 0.0
    %2270 = vmatpush1.msra.mxu0 0.0
    %2271 = vmatprep.subr.mxu0 0.0
    %2272 = vmatpush1.msra.mxu0 0.0
    %2273 = vmatprep.subr.mxu0 0.0
    %2274 = vmatpush1.msra.mxu0 0.0
    %2275 = vmatprep.subr.mxu0 0.0
    %2276 = vmatpush1.msra.mxu0 0.0
    %2277 = vmatprep.subr.mxu0 0.0
    %2278 = vmatpush1.msra.mxu0 0.0
    %2279 = vmatprep.subr.mxu0 0.0
    %2280 = vmatpush1.msra.mxu0 0.0
    %2281 = vmatprep.subr.mxu0 0.0
    %2282 = vmatpush1.msra.mxu0 0.0
    %2283 = vmatprep.subr.mxu0 0.0
    %2284 = vmatpush1.msra.mxu0 0.0
    %2285 = vmatprep.subr.mxu0 0.0
    %2286 = vmatpush1.msra.mxu0 0.0
    %2287 = vmatprep.subr.mxu0 0.0
    %2288 = vmatpush1.msra.mxu0 0.0
    %2289 = vmatprep.subr.mxu0 0.0
    %2290 = vmatpush1.msra.mxu0 0.0
    %2291 = vmatprep.subr.mxu0 0.0
    %2292 = vmatpush1.msra.mxu0 0.0
    %2293 = vmatprep.subr.mxu0 0.0
    %2294 = vmatpush1.msra.mxu0 0.0
    %2295 = vmatprep.subr.mxu0 0.0
    %2296 = vmatpush1.msra.mxu0 0.0
    %2297 = vmatprep.mubr.f32.mxu0 0.0
    %2298 = vmatmul.mubr.f32.gmra.mrb[0].mxu0 %v2078
    %v2299 = vpop.f32.mrb[0].mxu0
    %v2300 = vadd.f32 %v2146, %v2299
    %v2301 = vpop.f32.mrb[0].mxu0
    %2302 = vmatprep.mubr.f32.mxu0 0.0
    %2303 = vmatmul.mubr.f32.gmra.mrb[0].mxu0 %v2079
    %v2304 = vpop.f32.mrb[0].mxu0
    %v2305 = vadd.f32 %v2146, %v2304
    %v2306 = vpop.f32.mrb[0].mxu0
    %2307 = vmatprep.mubr.f32.mxu0 0.0
    %2308 = vmatmul.mubr.f32.gmra.mrb[0].mxu0 %v2080
    %v2309 = vpop.f32.mrb[0].mxu0
    %v2310 = vadd.f32 %v2146, %v2309
    %v2311 = vpop.f32.mrb[0].mxu0
    %2312 = vdwg.mxu0
    %v2314 = vsel %vm546, %v2217, 0
    %v2317 = vsel %vm546, %v2223, 0
    %v2320 = vsel %vm546, %v2219, 0
    %v2323 = vsel %vm546, %v2225, 0
    %2325 = vmatprep.subr.mxu0 0.0
    %2326 = vmatpush1.xpose.msra.mxu0 %v2320
    %2327 = vmatprep.subr.mxu0 0.0
    %2328 = vmatpush1.xpose.msra.mxu0 %v2323
    %2329 = vmatprep.subr.mxu0 0.0
    %2330 = vmatpush1.xpose.msra.mxu0 0.0
    %2331 = vmatprep.subr.mxu0 0.0
    %2332 = vmatpush1.xpose.msra.mxu0 0.0
    %2333 = vmatprep.subr.mxu0 0.0
    %2334 = vmatpush1.xpose.msra.mxu0 0.0
    %2335 = vmatprep.subr.mxu0 0.0
    %2336 = vmatpush1.xpose.msra.mxu0 0.0
    %2337 = vmatprep.subr.mxu0 0.0
    %2338 = vmatpush1.xpose.msra.mxu0 0.0
    %2339 = vmatprep.subr.mxu0 0.0
    %2340 = vmatpush1.xpose.msra.mxu0 0.0
    %2341 = vmatprep.subr.mxu0 0.0
    %2342 = vmatpush1.xpose.msra.mxu0 0.0
    %2343 = vmatprep.subr.mxu0 0.0
    %2344 = vmatpush1.xpose.msra.mxu0 0.0
    %2345 = vmatprep.subr.mxu0 0.0
    %2346 = vmatpush1.xpose.msra.mxu0 0.0
    %2347 = vmatprep.subr.mxu0 0.0
    %2348 = vmatpush1.xpose.msra.mxu0 0.0
    %2349 = vmatprep.subr.mxu0 0.0
    %2350 = vmatpush1.xpose.msra.mxu0 0.0
    %2351 = vmatprep.subr.mxu0 0.0
    %2352 = vmatpush1.xpose.msra.mxu0 0.0
    %2353 = vmatprep.subr.mxu0 0.0
    %2354 = vmatpush1.xpose.msra.mxu0 0.0
    %2355 = vmatprep.subr.mxu0 0.0
    %2356 = vmatpush1.xpose.msra.mxu0 0.0
    %2357 = vmatprep.subr.mxu0 0.0
    %2358 = vmatpush1.xpose.msra.mxu0 0.0
    %2359 = vmatprep.subr.mxu0 0.0
    %2360 = vmatpush1.xpose.msra.mxu0 0.0
    %2361 = vmatprep.subr.mxu0 0.0
    %2362 = vmatpush1.xpose.msra.mxu0 0.0
    %2363 = vmatprep.subr.mxu0 0.0
    %2364 = vmatpush1.xpose.msra.mxu0 0.0
    %2365 = vmatprep.subr.mxu0 0.0
    %2366 = vmatpush1.xpose.msra.mxu0 0.0
    %2367 = vmatprep.subr.mxu0 0.0
    %2368 = vmatpush1.xpose.msra.mxu0 0.0
    %2369 = vmatprep.subr.mxu0 0.0
    %2370 = vmatpush1.xpose.msra.mxu0 0.0
    %2371 = vmatprep.subr.mxu0 0.0
    %2372 = vmatpush1.xpose.msra.mxu0 0.0
    %2373 = vmatprep.subr.mxu0 0.0
    %2374 = vmatpush1.xpose.msra.mxu0 0.0
    %2375 = vmatprep.subr.mxu0 0.0
    %2376 = vmatpush1.xpose.msra.mxu0 0.0
    %2377 = vmatprep.subr.mxu0 0.0
    %2378 = vmatpush1.xpose.msra.mxu0 0.0
    %2379 = vmatprep.subr.mxu0 0.0
    %2380 = vmatpush1.xpose.msra.mxu0 0.0
    %2381 = vmatprep.subr.mxu0 0.0
    %2382 = vmatpush1.xpose.msra.mxu0 0.0
    %2383 = vmatprep.subr.mxu0 0.0
    %2384 = vmatpush1.xpose.msra.mxu0 0.0
    %2385 = vmatprep.subr.mxu0 0.0
    %2386 = vmatpush1.xpose.msra.mxu0 0.0
    %2387 = vmatprep.subr.mxu0 0.0
    %2388 = vmatpush1.xpose.msra.mxu0 0.0
    %2389 = vmatprep.mubr.f32.mxu0 0.0
    %2390 = vmatmul.mubr.f32.gmra.mrb[0].mxu0 %v2314
    %v2391 = vpop.f32.mrb[0].mxu0
    %v2392 = vadd.f32 0.0, %v2391
    %v2393 = vpop.f32.mrb[0].mxu0
    %2394 = vmatprep.mubr.f32.mxu0 0.0
    %2395 = vmatmul.mubr.f32.gmra.mrb[0].mxu0 %v2317
    %v2396 = vpop.f32.mrb[0].mxu0
    %v2397 = vadd.f32 0.0, %v2396
    %v2398 = vpop.f32.mrb[0].mxu0
    %2399 = vdwg.mxu0
    %v2400 = vmul.f32 %v2392, 0.125
    %v2401 = vmul.f32 %v2397, 0.125
    %v2402 = vsel %vm636, %v2400, -inf
    %2403 = vmax.xlane.f32.xlu0 %v2402
    %v2404 = vpop.xlane.xlu0 %2403
    %v2405 = vsel %vm640, %v2401, -inf
    %2406 = vmax.xlane.f32.xlu0 %v2405
    %v2407 = vpop.xlane.xlu0 %2406
    %v2408 = vsub.f32 %v2400, %v2404
    %v2409 = vsub.f32 %v2401, %v2407
    %v2410 = vmul.f32 %v2408, 1.442695
    %v2411 = vpow.pop %v2410
    %v2412 = vmul.f32 %v2409, 1.442695
    %v2413 = vpow.pop %v2412
    %v2414 = vsel %vm636, %v2411, 0.0
    %2415 = vadd.xlane.f32.xlu0 %v2414
    %v2416 = vpop.xlane.xlu0 %2415
    %v2417 = vsel %vm640, %v2413, 0.0
    %2418 = vadd.xlane.f32.xlu0 %v2417
    %v2419 = vpop.xlane.xlu0 %2418
    %v2420 = vrcp.pop %v2416
    %v2421 = vrcp.pop %v2419
    %v2422 = vmul.f32 %v2411, %v2420
    %v2423 = vmul.f32 %v2413, %v2421
    %v2425 = vsel %vm636, %v2422, 0
    %v2428 = vsel %vm636, %v2423, 0
    %v2431 = vsel %vm314, %v2305, 0
    %2433 = vmatprep.subr.mxu0 0.0
    %2434 = vmatpush1.msra.mxu0 %v2300
    %2435 = vmatprep.subr.mxu0 0.0
    %2436 = vmatpush1.msra.mxu0 %v2431
    %2437 = vmatprep.subr.mxu0 0.0
    %2438 = vmatpush1.msra.mxu0 0.0
    %2439 = vmatprep.subr.mxu0 0.0
    %2440 = vmatpush1.msra.mxu0 0.0
    %2441 = vmatprep.subr.mxu0 0.0
    %2442 = vmatpush1.msra.mxu0 0.0
    %2443 = vmatprep.subr.mxu0 0.0
    %2444 = vmatpush1.msra.mxu0 0.0
    %2445 = vmatprep.subr.mxu0 0.0
    %2446 = vmatpush1.msra.mxu0 0.0
    %2447 = vmatprep.subr.mxu0 0.0
    %2448 = vmatpush1.msra.mxu0 0.0
    %2449 = vmatprep.subr.mxu0 0.0
    %2450 = vmatpush1.msra.mxu0 0.0
    %2451 = vmatprep.subr.mxu0 0.0
    %2452 = vmatpush1.msra.mxu0 0.0
    %2453 = vmatprep.subr.mxu0 0.0
    %2454 = vmatpush1.msra.mxu0 0.0
    %2455 = vmatprep.subr.mxu0 0.0
    %2456 = vmatpush1.msra.mxu0 0.0
    %2457 = vmatprep.subr.mxu0 0.0
    %2458 = vmatpush1.msra.mxu0 0.0
    %2459 = vmatprep.subr.mxu0 0.0
    %2460 = vmatpush1.msra.mxu0 0.0
    %2461 = vmatprep.subr.mxu0 0.0
    %2462 = vmatpush1.msra.mxu0 0.0
    %2463 = vmatprep.subr.mxu0 0.0
    %2464 = vmatpush1.msra.mxu0 0.0
    %2465 = vmatprep.subr.mxu0 0.0
    %2466 = vmatpush1.msra.mxu0 0.0
    %2467 = vmatprep.subr.mxu0 0.0
    %2468 = vmatpush1.msra.mxu0 0.0
    %2469 = vmatprep.subr.mxu0 0.0
    %2470 = vmatpush1.msra.mxu0 0.0
    %2471 = vmatprep.subr.mxu0 0.0
    %2472 = vmatpush1.msra.mxu0 0.0
    %2473 = vmatprep.subr.mxu0 0.0
    %2474 = vmatpush1.msra.mxu0 0.0
    %2475 = vmatprep.subr.mxu0 0.0
    %2476 = vmatpush1.msra.mxu0 0.0
    %2477 = vmatprep.subr.mxu0 0.0
    %2478 = vmatpush1.msra.mxu0 0.0
    %2479 = vmatprep.subr.mxu0 0.0
    %2480 = vmatpush1.msra.mxu0 0.0
    %2481 = vmatprep.subr.mxu0 0.0
    %2482 = vmatpush1.msra.mxu0 0.0
    %2483 = vmatprep.subr.mxu0 0.0
    %2484 = vmatpush1.msra.mxu0 0.0
    %2485 = vmatprep.subr.mxu0 0.0
    %2486 = vmatpush1.msra.mxu0 0.0
    %2487 = vmatprep.subr.mxu0 0.0
    %2488 = vmatpush1.msra.mxu0 0.0
    %2489 = vmatprep.subr.mxu0 0.0
    %2490 = vmatpush1.msra.mxu0 0.0
    %2491 = vmatprep.subr.mxu0 0.0
    %2492 = vmatpush1.msra.mxu0 0.0
    %2493 = vmatprep.subr.mxu0 0.0
    %2494 = vmatpush1.msra.mxu0 0.0
    %2495 = vmatprep.subr.mxu0 0.0
    %2496 = vmatpush1.msra.mxu0 0.0
    %2497 = vmatprep.mubr.f32.mxu0 0.0
    %2498 = vmatmul.mubr.f32.gmra.mrb[0].mxu0 %v2425
    %v2499 = vpop.f32.mrb[0].mxu0
    %v2500 = vadd.f32 0.0, %v2499
    %v2501 = vpop.f32.mrb[0].mxu0
    %2502 = vmatprep.mubr.f32.mxu0 0.0
    %2503 = vmatmul.mubr.f32.gmra.mrb[0].mxu0 %v2428
    %v2504 = vpop.f32.mrb[0].mxu0
    %v2505 = vadd.f32 0.0, %v2504
    %v2506 = vpop.f32.mrb[0].mxu0
    %2507 = vdwg.mxu0
    %2508 = vrot.lane.b32.xlu0 %v2217, 64
    %v2509 = vpop.permute.xlu0 %2508
    %2510 = vrot.lane.b32.xlu0 %v2223, 64
    %v2511 = vpop.permute.xlu0 %2510
    %2512 = vrot.lane.b32.xlu0 %v2219, 64
    %v2513 = vpop.permute.xlu0 %2512
    %2514 = vrot.lane.b32.xlu0 %v2225, 64
    %v2515 = vpop.permute.xlu0 %2514
    %v2516 = vsel %vm546, %v2509, 0
    %v2518 = vsel %vm546, %v2511, 0
    %v2520 = vsel %vm546, %v2513, 0
    %v2522 = vsel %vm546, %v2515, 0
    %2524 = vmatprep.subr.mxu0 0.0
    %2525 = vmatpush1.xpose.msra.mxu0 %v2520
    %2526 = vmatprep.subr.mxu0 0.0
    %2527 = vmatpush1.xpose.msra.mxu0 %v2522
    %2528 = vmatprep.subr.mxu0 0.0
    %2529 = vmatpush1.xpose.msra.mxu0 0.0
    %2530 = vmatprep.subr.mxu0 0.0
    %2531 = vmatpush1.xpose.msra.mxu0 0.0
    %2532 = vmatprep.subr.mxu0 0.0
    %2533 = vmatpush1.xpose.msra.mxu0 0.0
    %2534 = vmatprep.subr.mxu0 0.0
    %2535 = vmatpush1.xpose.msra.mxu0 0.0
    %2536 = vmatprep.subr.mxu0 0.0
    %2537 = vmatpush1.xpose.msra.mxu0 0.0
    %2538 = vmatprep.subr.mxu0 0.0
    %2539 = vmatpush1.xpose.msra.mxu0 0.0
    %2540 = vmatprep.subr.mxu0 0.0
    %2541 = vmatpush1.xpose.msra.mxu0 0.0
    %2542 = vmatprep.subr.mxu0 0.0
    %2543 = vmatpush1.xpose.msra.mxu0 0.0
    %2544 = vmatprep.subr.mxu0 0.0
    %2545 = vmatpush1.xpose.msra.mxu0 0.0
    %2546 = vmatprep.subr.mxu0 0.0
    %2547 = vmatpush1.xpose.msra.mxu0 0.0
    %2548 = vmatprep.subr.mxu0 0.0
    %2549 = vmatpush1.xpose.msra.mxu0 0.0
    %2550 = vmatprep.subr.mxu0 0.0
    %2551 = vmatpush1.xpose.msra.mxu0 0.0
    %2552 = vmatprep.subr.mxu0 0.0
    %2553 = vmatpush1.xpose.msra.mxu0 0.0
    %2554 = vmatprep.subr.mxu0 0.0
    %2555 = vmatpush1.xpose.msra.mxu0 0.0
    %2556 = vmatprep.subr.mxu0 0.0
    %2557 = vmatpush1.xpose.msra.mxu0 0.0
    %2558 = vmatprep.subr.mxu0 0.0
    %2559 = vmatpush1.xpose.msra.mxu0 0.0
    %2560 = vmatprep.subr.mxu0 0.0
    %2561 = vmatpush1.xpose.msra.mxu0 0.0
    %2562 = vmatprep.subr.mxu0 0.0
    %2563 = vmatpush1.xpose.msra.mxu0 0.0
    %2564 = vmatprep.subr.mxu0 0.0
    %2565 = vmatpush1.xpose.msra.mxu0 0.0
    %2566 = vmatprep.subr.mxu0 0.0
    %2567 = vmatpush1.xpose.msra.mxu0 0.0
    %2568 = vmatprep.subr.mxu0 0.0
    %2569 = vmatpush1.xpose.msra.mxu0 0.0
    %2570 = vmatprep.subr.mxu0 0.0
    %2571 = vmatpush1.xpose.msra.mxu0 0.0
    %2572 = vmatprep.subr.mxu0 0.0
    %2573 = vmatpush1.xpose.msra.mxu0 0.0
    %2574 = vmatprep.subr.mxu0 0.0
    %2575 = vmatpush1.xpose.msra.mxu0 0.0
    %2576 = vmatprep.subr.mxu0 0.0
    %2577 = vmatpush1.xpose.msra.mxu0 0.0
    %2578 = vmatprep.subr.mxu0 0.0
    %2579 = vmatpush1.xpose.msra.mxu0 0.0
    %2580 = vmatprep.subr.mxu0 0.0
    %2581 = vmatpush1.xpose.msra.mxu0 0.0
    %2582 = vmatprep.subr.mxu0 0.0
    %2583 = vmatpush1.xpose.msra.mxu0 0.0
    %2584 = vmatprep.subr.mxu0 0.0
    %2585 = vmatpush1.xpose.msra.mxu0 0.0
    %2586 = vmatprep.subr.mxu0 0.0
    %2587 = vmatpush1.xpose.msra.mxu0 0.0
    %2588 = vmatprep.mubr.f32.mxu0 0.0
    %2589 = vmatmul.mubr.f32.gmra.mrb[0].mxu0 %v2516
    %v2590 = vpop.f32.mrb[0].mxu0
    %v2591 = vadd.f32 0.0, %v2590
    %v2592 = vpop.f32.mrb[0].mxu0
    %2593 = vmatprep.mubr.f32.mxu0 0.0
    %2594 = vmatmul.mubr.f32.gmra.mrb[0].mxu0 %v2518
    %v2595 = vpop.f32.mrb[0].mxu0
    %v2596 = vadd.f32 0.0, %v2595
    %v2597 = vpop.f32.mrb[0].mxu0
    %2598 = vdwg.mxu0
    %v2599 = vmul.f32 %v2591, 0.125
    %v2600 = vmul.f32 %v2596, 0.125
    %v2601 = vsel %vm636, %v2599, -inf
    %2602 = vmax.xlane.f32.xlu0 %v2601
    %v2603 = vpop.xlane.xlu0 %2602
    %v2604 = vsel %vm640, %v2600, -inf
    %2605 = vmax.xlane.f32.xlu0 %v2604
    %v2606 = vpop.xlane.xlu0 %2605
    %v2607 = vsub.f32 %v2599, %v2603
    %v2608 = vsub.f32 %v2600, %v2606
    %v2609 = vmul.f32 %v2607, 1.442695
    %v2610 = vpow.pop %v2609
    %v2611 = vmul.f32 %v2608, 1.442695
    %v2612 = vpow.pop %v2611
    %v2613 = vsel %vm636, %v2610, 0.0
    %2614 = vadd.xlane.f32.xlu0 %v2613
    %v2615 = vpop.xlane.xlu0 %2614
    %v2616 = vsel %vm640, %v2612, 0.0
    %2617 = vadd.xlane.f32.xlu0 %v2616
    %v2618 = vpop.xlane.xlu0 %2617
    %v2619 = vrcp.pop %v2615
    %v2620 = vrcp.pop %v2618
    %v2621 = vmul.f32 %v2610, %v2619
    %v2622 = vmul.f32 %v2612, %v2620
    %2624 = vrot.lane.b32.xlu0 %v2300, 64
    %v2625 = vpop.permute.xlu0 %2624
    %2626 = vrot.lane.b32.xlu0 %v2305, 64
    %v2627 = vpop.permute.xlu0 %2626
    %v2630 = vsel %vm636, %v2621, 0
    %v2633 = vsel %vm636, %v2622, 0
    %v2635 = vsel %vm314, %v2627, 0
    %2637 = vmatprep.subr.mxu0 0.0
    %2638 = vmatpush1.msra.mxu0 %v2625
    %2639 = vmatprep.subr.mxu0 0.0
    %2640 = vmatpush1.msra.mxu0 %v2635
    %2641 = vmatprep.subr.mxu0 0.0
    %2642 = vmatpush1.msra.mxu0 0.0
    %2643 = vmatprep.subr.mxu0 0.0
    %2644 = vmatpush1.msra.mxu0 0.0
    %2645 = vmatprep.subr.mxu0 0.0
    %2646 = vmatpush1.msra.mxu0 0.0
    %2647 = vmatprep.subr.mxu0 0.0
    %2648 = vmatpush1.msra.mxu0 0.0
    %2649 = vmatprep.subr.mxu0 0.0
    %2650 = vmatpush1.msra.mxu0 0.0
    %2651 = vmatprep.subr.mxu0 0.0
    %2652 = vmatpush1.msra.mxu0 0.0
    %2653 = vmatprep.subr.mxu0 0.0
    %2654 = vmatpush1.msra.mxu0 0.0
    %2655 = vmatprep.subr.mxu0 0.0
    %2656 = vmatpush1.msra.mxu0 0.0
    %2657 = vmatprep.subr.mxu0 0.0
    %2658 = vmatpush1.msra.mxu0 0.0
    %2659 = vmatprep.subr.mxu0 0.0
    %2660 = vmatpush1.msra.mxu0 0.0
    %2661 = vmatprep.subr.mxu0 0.0
    %2662 = vmatpush1.msra.mxu0 0.0
    %2663 = vmatprep.subr.mxu0 0.0
    %2664 = vmatpush1.msra.mxu0 0.0
    %2665 = vmatprep.subr.mxu0 0.0
    %2666 = vmatpush1.msra.mxu0 0.0
    %2667 = vmatprep.subr.mxu0 0.0
    %2668 = vmatpush1.msra.mxu0 0.0
    %2669 = vmatprep.subr.mxu0 0.0
    %2670 = vmatpush1.msra.mxu0 0.0
    %2671 = vmatprep.subr.mxu0 0.0
    %2672 = vmatpush1.msra.mxu0 0.0
    %2673 = vmatprep.subr.mxu0 0.0
    %2674 = vmatpush1.msra.mxu0 0.0
    %2675 = vmatprep.subr.mxu0 0.0
    %2676 = vmatpush1.msra.mxu0 0.0
    %2677 = vmatprep.subr.mxu0 0.0
    %2678 = vmatpush1.msra.mxu0 0.0
    %2679 = vmatprep.subr.mxu0 0.0
    %2680 = vmatpush1.msra.mxu0 0.0
    %2681 = vmatprep.subr.mxu0 0.0
    %2682 = vmatpush1.msra.mxu0 0.0
    %2683 = vmatprep.subr.mxu0 0.0
    %2684 = vmatpush1.msra.mxu0 0.0
    %2685 = vmatprep.subr.mxu0 0.0
    %2686 = vmatpush1.msra.mxu0 0.0
    %2687 = vmatprep.subr.mxu0 0.0
    %2688 = vmatpush1.msra.mxu0 0.0
    %2689 = vmatprep.subr.mxu0 0.0
    %2690 = vmatpush1.msra.mxu0 0.0
    %2691 = vmatprep.subr.mxu0 0.0
    %2692 = vmatpush1.msra.mxu0 0.0
    %2693 = vmatprep.subr.mxu0 0.0
    %2694 = vmatpush1.msra.mxu0 0.0
    %2695 = vmatprep.subr.mxu0 0.0
    %2696 = vmatpush1.msra.mxu0 0.0
    %2697 = vmatprep.subr.mxu0 0.0
    %2698 = vmatpush1.msra.mxu0 0.0
    %2699 = vmatprep.subr.mxu0 0.0
    %2700 = vmatpush1.msra.mxu0 0.0
    %2701 = vmatprep.mubr.f32.mxu0 0.0
    %2702 = vmatmul.mubr.f32.gmra.mrb[0].mxu0 %v2630
    %v2703 = vpop.f32.mrb[0].mxu0
    %v2704 = vadd.f32 0.0, %v2703
    %v2705 = vpop.f32.mrb[0].mxu0
    %2706 = vmatprep.mubr.f32.mxu0 0.0
    %2707 = vmatmul.mubr.f32.gmra.mrb[0].mxu0 %v2633
    %v2708 = vpop.f32.mrb[0].mxu0
    %v2709 = vadd.f32 0.0, %v2708
    %v2710 = vpop.f32.mrb[0].mxu0
    %2711 = vdwg.mxu0
    %2714 = vrot.lane.b32.xlu0 %v2704, 64
    %v2715 = vpop.permute.xlu0 %2714
    %2716 = vrot.lane.b32.xlu0 %v2709, 64
    %v2717 = vpop.permute.xlu0 %2716
    %v2720 = vsel %vm546, %v2500, %v2715
    %v2721 = vsel %vm546, %v2505, %v2717
    %v2723 = vrot.slane %v2223, 1
    %v2724 = vrot.slane %v2229, 1
    %v2725 = vsel %vm959, %v2723, %v2724
    %v2727 = vrot.slane %v2225, 1
    %v2728 = vrot.slane %v2231, 1
    %v2729 = vsel %vm959, %v2727, %v2728
    %v2730 = vsel %vm546, %v2725, 0
    %v2732 = vsel %vm546, %v2724, 0
    %v2734 = vsel %vm546, %v2729, 0
    %v2736 = vsel %vm546, %v2728, 0
    %2738 = vmatprep.subr.mxu0 0.0
    %2739 = vmatpush1.xpose.msra.mxu0 %v2734
    %2740 = vmatprep.subr.mxu0 0.0
    %2741 = vmatpush1.xpose.msra.mxu0 %v2736
    %2742 = vmatprep.subr.mxu0 0.0
    %2743 = vmatpush1.xpose.msra.mxu0 0.0
    %2744 = vmatprep.subr.mxu0 0.0
    %2745 = vmatpush1.xpose.msra.mxu0 0.0
    %2746 = vmatprep.subr.mxu0 0.0
    %2747 = vmatpush1.xpose.msra.mxu0 0.0
    %2748 = vmatprep.subr.mxu0 0.0
    %2749 = vmatpush1.xpose.msra.mxu0 0.0
    %2750 = vmatprep.subr.mxu0 0.0
    %2751 = vmatpush1.xpose.msra.mxu0 0.0
    %2752 = vmatprep.subr.mxu0 0.0
    %2753 = vmatpush1.xpose.msra.mxu0 0.0
    %2754 = vmatprep.subr.mxu0 0.0
    %2755 = vmatpush1.xpose.msra.mxu0 0.0
    %2756 = vmatprep.subr.mxu0 0.0
    %2757 = vmatpush1.xpose.msra.mxu0 0.0
    %2758 = vmatprep.subr.mxu0 0.0
    %2759 = vmatpush1.xpose.msra.mxu0 0.0
    %2760 = vmatprep.subr.mxu0 0.0
    %2761 = vmatpush1.xpose.msra.mxu0 0.0
    %2762 = vmatprep.subr.mxu0 0.0
    %2763 = vmatpush1.xpose.msra.mxu0 0.0
    %2764 = vmatprep.subr.mxu0 0.0
    %2765 = vmatpush1.xpose.msra.mxu0 0.0
    %2766 = vmatprep.subr.mxu0 0.0
    %2767 = vmatpush1.xpose.msra.mxu0 0.0
    %2768 = vmatprep.subr.mxu0 0.0
    %2769 = vmatpush1.xpose.msra.mxu0 0.0
    %2770 = vmatprep.subr.mxu0 0.0
    %2771 = vmatpush1.xpose.msra.mxu0 0.0
    %2772 = vmatprep.subr.mxu0 0.0
    %2773 = vmatpush1.xpose.msra.mxu0 0.0
    %2774 = vmatprep.subr.mxu0 0.0
    %2775 = vmatpush1.xpose.msra.mxu0 0.0
    %2776 = vmatprep.subr.mxu0 0.0
    %2777 = vmatpush1.xpose.msra.mxu0 0.0
    %2778 = vmatprep.subr.mxu0 0.0
    %2779 = vmatpush1.xpose.msra.mxu0 0.0
    %2780 = vmatprep.subr.mxu0 0.0
    %2781 = vmatpush1.xpose.msra.mxu0 0.0
    %2782 = vmatprep.subr.mxu0 0.0
    %2783 = vmatpush1.xpose.msra.mxu0 0.0
    %2784 = vmatprep.subr.mxu0 0.0
    %2785 = vmatpush1.xpose.msra.mxu0 0.0
    %2786 = vmatprep.subr.mxu0 0.0
    %2787 = vmatpush1.xpose.msra.mxu0 0.0
    %2788 = vmatprep.subr.mxu0 0.0
    %2789 = vmatpush1.xpose.msra.mxu0 0.0
    %2790 = vmatprep.subr.mxu0 0.0
    %2791 = vmatpush1.xpose.msra.mxu0 0.0
    %2792 = vmatprep.subr.mxu0 0.0
    %2793 = vmatpush1.xpose.msra.mxu0 0.0
    %2794 = vmatprep.subr.mxu0 0.0
    %2795 = vmatpush1.xpose.msra.mxu0 0.0
    %2796 = vmatprep.subr.mxu0 0.0
    %2797 = vmatpush1.xpose.msra.mxu0 0.0
    %2798 = vmatprep.subr.mxu0 0.0
    %2799 = vmatpush1.xpose.msra.mxu0 0.0
    %2800 = vmatprep.subr.mxu0 0.0
    %2801 = vmatpush1.xpose.msra.mxu0 0.0
    %2802 = vmatprep.mubr.f32.mxu0 0.0
    %2803 = vmatmul.mubr.f32.gmra.mrb[0].mxu0 %v2730
    %v2804 = vpop.f32.mrb[0].mxu0
    %v2805 = vadd.f32 0.0, %v2804
    %v2806 = vpop.f32.mrb[0].mxu0
    %2807 = vmatprep.mubr.f32.mxu0 0.0
    %2808 = vmatmul.mubr.f32.gmra.mrb[0].mxu0 %v2732
    %v2809 = vpop.f32.mrb[0].mxu0
    %v2810 = vadd.f32 0.0, %v2809
    %v2811 = vpop.f32.mrb[0].mxu0
    %2812 = vdwg.mxu0
    %v2813 = vmul.f32 %v2805, 0.125
    %v2814 = vmul.f32 %v2810, 0.125
    %v2815 = vsel %vm636, %v2813, -inf
    %2816 = vmax.xlane.f32.xlu0 %v2815
    %v2817 = vpop.xlane.xlu0 %2816
    %v2818 = vsel %vm640, %v2814, -inf
    %2819 = vmax.xlane.f32.xlu0 %v2818
    %v2820 = vpop.xlane.xlu0 %2819
    %v2821 = vsub.f32 %v2813, %v2817
    %v2822 = vsub.f32 %v2814, %v2820
    %v2823 = vmul.f32 %v2821, 1.442695
    %v2824 = vpow.pop %v2823
    %v2825 = vmul.f32 %v2822, 1.442695
    %v2826 = vpow.pop %v2825
    %v2827 = vsel %vm636, %v2824, 0.0
    %2828 = vadd.xlane.f32.xlu0 %v2827
    %v2829 = vpop.xlane.xlu0 %2828
    %v2830 = vsel %vm640, %v2826, 0.0
    %2831 = vadd.xlane.f32.xlu0 %v2830
    %v2832 = vpop.xlane.xlu0 %2831
    %v2833 = vrcp.pop %v2829
    %v2834 = vrcp.pop %v2832
    %v2835 = vmul.f32 %v2824, %v2833
    %v2836 = vmul.f32 %v2826, %v2834
    %v2838 = vrot.slane %v2305, 1
    %v2839 = vrot.slane %v2310, 1
    %v2840 = vsel %vm959, %v2838, %v2839
    %v2843 = vsel %vm636, %v2835, 0
    %v2846 = vsel %vm636, %v2836, 0
    %v2848 = vsel %vm314, %v2839, 0
    %2850 = vmatprep.subr.mxu0 0.0
    %2851 = vmatpush1.msra.mxu0 %v2840
    %2852 = vmatprep.subr.mxu0 0.0
    %2853 = vmatpush1.msra.mxu0 %v2848
    %2854 = vmatprep.subr.mxu0 0.0
    %2855 = vmatpush1.msra.mxu0 0.0
    %2856 = vmatprep.subr.mxu0 0.0
    %2857 = vmatpush1.msra.mxu0 0.0
    %2858 = vmatprep.subr.mxu0 0.0
    %2859 = vmatpush1.msra.mxu0 0.0
    %2860 = vmatprep.subr.mxu0 0.0
    %2861 = vmatpush1.msra.mxu0 0.0
    %2862 = vmatprep.subr.mxu0 0.0
    %2863 = vmatpush1.msra.mxu0 0.0
    %2864 = vmatprep.subr.mxu0 0.0
    %2865 = vmatpush1.msra.mxu0 0.0
    %2866 = vmatprep.subr.mxu0 0.0
    %2867 = vmatpush1.msra.mxu0 0.0
    %2868 = vmatprep.subr.mxu0 0.0
    %2869 = vmatpush1.msra.mxu0 0.0
    %2870 = vmatprep.subr.mxu0 0.0
    %2871 = vmatpush1.msra.mxu0 0.0
    %2872 = vmatprep.subr.mxu0 0.0
    %2873 = vmatpush1.msra.mxu0 0.0
    %2874 = vmatprep.subr.mxu0 0.0
    %2875 = vmatpush1.msra.mxu0 0.0
    %2876 = vmatprep.subr.mxu0 0.0
    %2877 = vmatpush1.msra.mxu0 0.0
    %2878 = vmatprep.subr.mxu0 0.0
    %2879 = vmatpush1.msra.mxu0 0.0
    %2880 = vmatprep.subr.mxu0 0.0
    %2881 = vmatpush1.msra.mxu0 0.0
    %2882 = vmatprep.subr.mxu0 0.0
    %2883 = vmatpush1.msra.mxu0 0.0
    %2884 = vmatprep.subr.mxu0 0.0
    %2885 = vmatpush1.msra.mxu0 0.0
    %2886 = vmatprep.subr.mxu0 0.0
    %2887 = vmatpush1.msra.mxu0 0.0
    %2888 = vmatprep.subr.mxu0 0.0
    %2889 = vmatpush1.msra.mxu0 0.0
    %2890 = vmatprep.subr.mxu0 0.0
    %2891 = vmatpush1.msra.mxu0 0.0
    %2892 = vmatprep.subr.mxu0 0.0
    %2893 = vmatpush1.msra.mxu0 0.0
    %2894 = vmatprep.subr.mxu0 0.0
    %2895 = vmatpush1.msra.mxu0 0.0
    %2896 = vmatprep.subr.mxu0 0.0
    %2897 = vmatpush1.msra.mxu0 0.0
    %2898 = vmatprep.subr.mxu0 0.0
    %2899 = vmatpush1.msra.mxu0 0.0
    %2900 = vmatprep.subr.mxu0 0.0
    %2901 = vmatpush1.msra.mxu0 0.0
    %2902 = vmatprep.subr.mxu0 0.0
    %2903 = vmatpush1.msra.mxu0 0.0
    %2904 = vmatprep.subr.mxu0 0.0
    %2905 = vmatpush1.msra.mxu0 0.0
    %2906 = vmatprep.subr.mxu0 0.0
    %2907 = vmatpush1.msra.mxu0 0.0
    %2908 = vmatprep.subr.mxu0 0.0
    %2909 = vmatpush1.msra.mxu0 0.0
    %2910 = vmatprep.subr.mxu0 0.0
    %2911 = vmatpush1.msra.mxu0 0.0
    %2912 = vmatprep.subr.mxu0 0.0
    %2913 = vmatpush1.msra.mxu0 0.0
    %2914 = vmatprep.mubr.f32.mxu0 0.0
    %2915 = vmatmul.mubr.f32.gmra.mrb[0].mxu0 %v2843
    %v2916 = vpop.f32.mrb[0].mxu0
    %v2917 = vadd.f32 0.0, %v2916
    %v2918 = vpop.f32.mrb[0].mxu0
    %2919 = vmatprep.mubr.f32.mxu0 0.0
    %2920 = vmatmul.mubr.f32.gmra.mrb[0].mxu0 %v2846
    %v2921 = vpop.f32.mrb[0].mxu0
    %v2922 = vadd.f32 0.0, %v2921
    %v2923 = vpop.f32.mrb[0].mxu0
    %2924 = vdwg.mxu0
    %2925 = vrot.lane.b32.xlu0 %v2725, 64
    %v2926 = vpop.permute.xlu0 %2925
    %2927 = vrot.lane.b32.xlu0 %v2724, 64
    %v2928 = vpop.permute.xlu0 %2927
    %2929 = vrot.lane.b32.xlu0 %v2729, 64
    %v2930 = vpop.permute.xlu0 %2929
    %2931 = vrot.lane.b32.xlu0 %v2728, 64
    %v2932 = vpop.permute.xlu0 %2931
    %v2933 = vsel %vm546, %v2926, 0
    %v2935 = vsel %vm546, %v2928, 0
    %v2937 = vsel %vm546, %v2930, 0
    %v2939 = vsel %vm546, %v2932, 0
    %2941 = vmatprep.subr.mxu0 0.0
    %2942 = vmatpush1.xpose.msra.mxu0 %v2937
    %2943 = vmatprep.subr.mxu0 0.0
    %2944 = vmatpush1.xpose.msra.mxu0 %v2939
    %2945 = vmatprep.subr.mxu0 0.0
    %2946 = vmatpush1.xpose.msra.mxu0 0.0
    %2947 = vmatprep.subr.mxu0 0.0
    %2948 = vmatpush1.xpose.msra.mxu0 0.0
    %2949 = vmatprep.subr.mxu0 0.0
    %2950 = vmatpush1.xpose.msra.mxu0 0.0
    %2951 = vmatprep.subr.mxu0 0.0
    %2952 = vmatpush1.xpose.msra.mxu0 0.0
    %2953 = vmatprep.subr.mxu0 0.0
    %2954 = vmatpush1.xpose.msra.mxu0 0.0
    %2955 = vmatprep.subr.mxu0 0.0
    %2956 = vmatpush1.xpose.msra.mxu0 0.0
    %2957 = vmatprep.subr.mxu0 0.0
    %2958 = vmatpush1.xpose.msra.mxu0 0.0
    %2959 = vmatprep.subr.mxu0 0.0
    %2960 = vmatpush1.xpose.msra.mxu0 0.0
    %2961 = vmatprep.subr.mxu0 0.0
    %2962 = vmatpush1.xpose.msra.mxu0 0.0
    %2963 = vmatprep.subr.mxu0 0.0
    %2964 = vmatpush1.xpose.msra.mxu0 0.0
    %2965 = vmatprep.subr.mxu0 0.0
    %2966 = vmatpush1.xpose.msra.mxu0 0.0
    %2967 = vmatprep.subr.mxu0 0.0
    %2968 = vmatpush1.xpose.msra.mxu0 0.0
    %2969 = vmatprep.subr.mxu0 0.0
    %2970 = vmatpush1.xpose.msra.mxu0 0.0
    %2971 = vmatprep.subr.mxu0 0.0
    %2972 = vmatpush1.xpose.msra.mxu0 0.0
    %2973 = vmatprep.subr.mxu0 0.0
    %2974 = vmatpush1.xpose.msra.mxu0 0.0
    %2975 = vmatprep.subr.mxu0 0.0
    %2976 = vmatpush1.xpose.msra.mxu0 0.0
    %2977 = vmatprep.subr.mxu0 0.0
    %2978 = vmatpush1.xpose.msra.mxu0 0.0
    %2979 = vmatprep.subr.mxu0 0.0
    %2980 = vmatpush1.xpose.msra.mxu0 0.0
    %2981 = vmatprep.subr.mxu0 0.0
    %2982 = vmatpush1.xpose.msra.mxu0 0.0
    %2983 = vmatprep.subr.mxu0 0.0
    %2984 = vmatpush1.xpose.msra.mxu0 0.0
    %2985 = vmatprep.subr.mxu0 0.0
    %2986 = vmatpush1.xpose.msra.mxu0 0.0
    %2987 = vmatprep.subr.mxu0 0.0
    %2988 = vmatpush1.xpose.msra.mxu0 0.0
    %2989 = vmatprep.subr.mxu0 0.0
    %2990 = vmatpush1.xpose.msra.mxu0 0.0
    %2991 = vmatprep.subr.mxu0 0.0
    %2992 = vmatpush1.xpose.msra.mxu0 0.0
    %2993 = vmatprep.subr.mxu0 0.0
    %2994 = vmatpush1.xpose.msra.mxu0 0.0
    %2995 = vmatprep.subr.mxu0 0.0
    %2996 = vmatpush1.xpose.msra.mxu0 0.0
    %2997 = vmatprep.subr.mxu0 0.0
    %2998 = vmatpush1.xpose.msra.mxu0 0.0
    %2999 = vmatprep.subr.mxu0 0.0
    %3000 = vmatpush1.xpose.msra.mxu0 0.0
    %3001 = vmatprep.subr.mxu0 0.0
    %3002 = vmatpush1.xpose.msra.mxu0 0.0
    %3003 = vmatprep.subr.mxu0 0.0
    %3004 = vmatpush1.xpose.msra.mxu0 0.0
    %3005 = vmatprep.mubr.f32.mxu0 0.0
    %3006 = vmatmul.mubr.f32.gmra.mrb[0].mxu0 %v2933
    %v3007 = vpop.f32.mrb[0].mxu0
    %v3008 = vadd.f32 0.0, %v3007
    %v3009 = vpop.f32.mrb[0].mxu0
    %3010 = vmatprep.mubr.f32.mxu0 0.0
    %3011 = vmatmul.mubr.f32.gmra.mrb[0].mxu0 %v2935
    %v3012 = vpop.f32.mrb[0].mxu0
    %v3013 = vadd.f32 0.0, %v3012
    %v3014 = vpop.f32.mrb[0].mxu0
    %3015 = vdwg.mxu0
    %v3016 = vmul.f32 %v3008, 0.125
    %v3017 = vmul.f32 %v3013, 0.125
    %v3018 = vsel %vm636, %v3016, -inf
    %3019 = vmax.xlane.f32.xlu0 %v3018
    %v3020 = vpop.xlane.xlu0 %3019
    %v3021 = vsel %vm640, %v3017, -inf
    %3022 = vmax.xlane.f32.xlu0 %v3021
    %v3023 = vpop.xlane.xlu0 %3022
    %v3024 = vsub.f32 %v3016, %v3020
    %v3025 = vsub.f32 %v3017, %v3023
    %v3026 = vmul.f32 %v3024, 1.442695
    %v3027 = vpow.pop %v3026
    %v3028 = vmul.f32 %v3025, 1.442695
    %v3029 = vpow.pop %v3028
    %v3030 = vsel %vm636, %v3027, 0.0
    %3031 = vadd.xlane.f32.xlu0 %v3030
    %v3032 = vpop.xlane.xlu0 %3031
    %v3033 = vsel %vm640, %v3029, 0.0
    %3034 = vadd.xlane.f32.xlu0 %v3033
    %v3035 = vpop.xlane.xlu0 %3034
    %v3036 = vrcp.pop %v3032
    %v3037 = vrcp.pop %v3035
    %v3038 = vmul.f32 %v3027, %v3036
    %v3039 = vmul.f32 %v3029, %v3037
    %3040 = vrot.lane.b32.xlu0 %v2840, 64
    %v3041 = vpop.permute.xlu0 %3040
    %3042 = vrot.lane.b32.xlu0 %v2839, 64
    %v3043 = vpop.permute.xlu0 %3042
    %v3046 = vsel %vm636, %v3038, 0
    %v3049 = vsel %vm636, %v3039, 0
    %v3051 = vsel %vm314, %v3043, 0
    %3053 = vmatprep.subr.mxu0 0.0
    %3054 = vmatpush1.msra.mxu0 %v3041
    %3055 = vmatprep.subr.mxu0 0.0
    %3056 = vmatpush1.msra.mxu0 %v3051
    %3057 = vmatprep.subr.mxu0 0.0
    %3058 = vmatpush1.msra.mxu0 0.0
    %3059 = vmatprep.subr.mxu0 0.0
    %3060 = vmatpush1.msra.mxu0 0.0
    %3061 = vmatprep.subr.mxu0 0.0
    %3062 = vmatpush1.msra.mxu0 0.0
    %3063 = vmatprep.subr.mxu0 0.0
    %3064 = vmatpush1.msra.mxu0 0.0
    %3065 = vmatprep.subr.mxu0 0.0
    %3066 = vmatpush1.msra.mxu0 0.0
    %3067 = vmatprep.subr.mxu0 0.0
    %3068 = vmatpush1.msra.mxu0 0.0
    %3069 = vmatprep.subr.mxu0 0.0
    %3070 = vmatpush1.msra.mxu0 0.0
    %3071 = vmatprep.subr.mxu0 0.0
    %3072 = vmatpush1.msra.mxu0 0.0
    %3073 = vmatprep.subr.mxu0 0.0
    %3074 = vmatpush1.msra.mxu0 0.0
    %3075 = vmatprep.subr.mxu0 0.0
    %3076 = vmatpush1.msra.mxu0 0.0
    %3077 = vmatprep.subr.mxu0 0.0
    %3078 = vmatpush1.msra.mxu0 0.0
    %3079 = vmatprep.subr.mxu0 0.0
    %3080 = vmatpush1.msra.mxu0 0.0
    %3081 = vmatprep.subr.mxu0 0.0
    %3082 = vmatpush1.msra.mxu0 0.0
    %3083 = vmatprep.subr.mxu0 0.0
    %3084 = vmatpush1.msra.mxu0 0.0
    %3085 = vmatprep.subr.mxu0 0.0
    %3086 = vmatpush1.msra.mxu0 0.0
    %3087 = vmatprep.subr.mxu0 0.0
    %3088 = vmatpush1.msra.mxu0 0.0
    %3089 = vmatprep.subr.mxu0 0.0
    %3090 = vmatpush1.msra.mxu0 0.0
    %3091 = vmatprep.subr.mxu0 0.0
    %3092 = vmatpush1.msra.mxu0 0.0
    %3093 = vmatprep.subr.mxu0 0.0
    %3094 = vmatpush1.msra.mxu0 0.0
    %3095 = vmatprep.subr.mxu0 0.0
    %3096 = vmatpush1.msra.mxu0 0.0
    %3097 = vmatprep.subr.mxu0 0.0
    %3098 = vmatpush1.msra.mxu0 0.0
    %3099 = vmatprep.subr.mxu0 0.0
    %3100 = vmatpush1.msra.mxu0 0.0
    %3101 = vmatprep.subr.mxu0 0.0
    %3102 = vmatpush1.msra.mxu0 0.0
    %3103 = vmatprep.subr.mxu0 0.0
    %3104 = vmatpush1.msra.mxu0 0.0
    %3105 = vmatprep.subr.mxu0 0.0
    %3106 = vmatpush1.msra.mxu0 0.0
    %3107 = vmatprep.subr.mxu0 0.0
    %3108 = vmatpush1.msra.mxu0 0.0
    %3109 = vmatprep.subr.mxu0 0.0
    %3110 = vmatpush1.msra.mxu0 0.0
    %3111 = vmatprep.subr.mxu0 0.0
    %3112 = vmatpush1.msra.mxu0 0.0
    %3113 = vmatprep.subr.mxu0 0.0
    %3114 = vmatpush1.msra.mxu0 0.0
    %3115 = vmatprep.subr.mxu0 0.0
    %3116 = vmatpush1.msra.mxu0 0.0
    %3117 = vmatprep.mubr.f32.mxu0 0.0
    %3118 = vmatmul.mubr.f32.gmra.mrb[0].mxu0 %v3046
    %v3119 = vpop.f32.mrb[0].mxu0
    %v3120 = vadd.f32 0.0, %v3119
    %v3121 = vpop.f32.mrb[0].mxu0
    %3122 = vmatprep.mubr.f32.mxu0 0.0
    %3123 = vmatmul.mubr.f32.gmra.mrb[0].mxu0 %v3049
    %v3124 = vpop.f32.mrb[0].mxu0
    %v3125 = vadd.f32 0.0, %v3124
    %v3126 = vpop.f32.mrb[0].mxu0
    %3127 = vdwg.mxu0
    %3130 = vrot.lane.b32.xlu0 %v3120, 64
    %v3131 = vpop.permute.xlu0 %3130
    %3132 = vrot.lane.b32.xlu0 %v3125, 64
    %v3133 = vpop.permute.xlu0 %3132
    %v3136 = vsel %vm546, %v2917, %v3131
    %v3137 = vsel %vm546, %v2922, %v3133
    %v3140 = vrot.slane %v3136, 7
    %v3141 = vrot.slane %v3137, 7
    %v3142 = vsel %vm314, %v3140, %v3141
    %v3145 = vsel %vm314, %v2721, %v3140
    %s3146 = scalar_lea.vmem %s5, 128
    %v3147 = vld [vmem:[%s3146] sm:$0xff]
    %v3148 = vld [vmem:[%s3146 + $0x8] sm:$0xff]
    %v3149 = vld [vmem:[%s3146 + $0x10] sm:$0xff]
    %v3150 = vld [vmem:[%s3146 + $0x18] sm:$0xff]
    %v3151 = vld [vmem:[%s3146 + $0x20] sm:$0xff]
    %v3152 = vld [vmem:[%s3146 + $0x28] sm:$0xff]
    %v3153 = vld [vmem:[%s3146 + $0x30] sm:$0xff]
    %v3154 = vld [vmem:[%s3146 + $0x38] sm:$0xff]
    %v3155 = vld [vmem:[%s3146 + $0x40] sm:$0xff]
    %v3156 = vld [vmem:[%s3146 + $0x48] sm:$0xff]
    %v3157 = vld [vmem:[%s3146 + $0x50] sm:$0xff]
    %v3158 = vld [vmem:[%s3146 + $0x58] sm:$0xff]
    %v3159 = vld [vmem:[%s3146 + $0x60] sm:$0xff]
    %v3160 = vld [vmem:[%s3146 + $0x68] sm:$0xff]
    %v3161 = vld [vmem:[%s3146 + $0x70] sm:$0xff]
    %v3162 = vld [vmem:[%s3146 + $0x78] sm:$0xff]
    %v3163 = vlaneseq
    %v3164 = vshrl.u32 %v3163, 7
    %v3165 = vsub.s32 0, %v3164
    %v3166 = vrot.slane %v2082, %v3165
    %3167 = vmatprep.subr.mxu0 0.0
    %3168 = vmatpush1.msra.mxu0 %v3147
    %3169 = vmatprep.subr.mxu0 0.0
    %3170 = vmatpush1.msra.mxu0 %v3148
    %3171 = vmatprep.subr.mxu0 0.0
    %3172 = vmatpush1.msra.mxu0 %v3149
    %3173 = vmatprep.subr.mxu0 0.0
    %3174 = vmatpush1.msra.mxu0 %v3150
    %3175 = vmatprep.subr.mxu0 0.0
    %3176 = vmatpush1.msra.mxu0 %v3151
    %3177 = vmatprep.subr.mxu0 0.0
    %3178 = vmatpush1.msra.mxu0 %v3152
    %3179 = vmatprep.subr.mxu0 0.0
    %3180 = vmatpush1.msra.mxu0 %v3153
    %3181 = vmatprep.subr.mxu0 0.0
    %3182 = vmatpush1.msra.mxu0 %v3154
    %3183 = vmatprep.subr.mxu0 0.0
    %3184 = vmatpush1.msra.mxu0 %v3155
    %3185 = vmatprep.subr.mxu0 0.0
    %3186 = vmatpush1.msra.mxu0 %v3156
    %3187 = vmatprep.subr.mxu0 0.0
    %3188 = vmatpush1.msra.mxu0 %v3157
    %3189 = vmatprep.subr.mxu0 0.0
    %3190 = vmatpush1.msra.mxu0 %v3158
    %3191 = vmatprep.subr.mxu0 0.0
    %3192 = vmatpush1.msra.mxu0 %v3159
    %3193 = vmatprep.subr.mxu0 0.0
    %3194 = vmatpush1.msra.mxu0 %v3160
    %3195 = vmatprep.subr.mxu0 0.0
    %3196 = vmatpush1.msra.mxu0 %v3161
    %3197 = vmatprep.subr.mxu0 0.0
    %3198 = vmatpush1.msra.mxu0 %v3162
    %3199 = vmatprep.subr.mxu0 0.0
    %3200 = vmatpush1.msra.mxu0 0.0
    %3201 = vmatprep.subr.mxu0 0.0
    %3202 = vmatpush1.msra.mxu0 0.0
    %3203 = vmatprep.subr.mxu0 0.0
    %3204 = vmatpush1.msra.mxu0 0.0
    %3205 = vmatprep.subr.mxu0 0.0
    %3206 = vmatpush1.msra.mxu0 0.0
    %3207 = vmatprep.subr.mxu0 0.0
    %3208 = vmatpush1.msra.mxu0 0.0
    %3209 = vmatprep.subr.mxu0 0.0
    %3210 = vmatpush1.msra.mxu0 0.0
    %3211 = vmatprep.subr.mxu0 0.0
    %3212 = vmatpush1.msra.mxu0 0.0
    %3213 = vmatprep.subr.mxu0 0.0
    %3214 = vmatpush1.msra.mxu0 0.0
    %3215 = vmatprep.subr.mxu0 0.0
    %3216 = vmatpush1.msra.mxu0 0.0
    %3217 = vmatprep.subr.mxu0 0.0
    %3218 = vmatpush1.msra.mxu0 0.0
    %3219 = vmatprep.subr.mxu0 0.0
    %3220 = vmatpush1.msra.mxu0 0.0
    %3221 = vmatprep.subr.mxu0 0.0
    %3222 = vmatpush1.msra.mxu0 0.0
    %3223 = vmatprep.subr.mxu0 0.0
    %3224 = vmatpush1.msra.mxu0 0.0
    %3225 = vmatprep.subr.mxu0 0.0
    %3226 = vmatpush1.msra.mxu0 0.0
    %3227 = vmatprep.subr.mxu0 0.0
    %3228 = vmatpush1.msra.mxu0 0.0
    %3229 = vmatprep.subr.mxu0 0.0
    %3230 = vmatpush1.msra.mxu0 0.0
    %3231 = vmatprep.mubr.f32.mxu0 0.0
    %3232 = vmatmul.mubr.f32.gmra.mrb[0].mxu0 %v2720
    %v3233 = vpop.f32.mrb[0].mxu0
    %v3234 = vadd.f32 %v3166, %v3233
    %v3235 = vpop.f32.mrb[0].mxu0
    %3236 = vmatprep.mubr.f32.mxu0 0.0
    %3237 = vmatmul.mubr.f32.gmra.mrb[0].mxu0 %v3145
    %v3238 = vpop.f32.mrb[0].mxu0
    %v3239 = vadd.f32 %v3166, %v3238
    %v3240 = vpop.f32.mrb[0].mxu0
    %3241 = vmatprep.mubr.f32.mxu0 0.0
    %3242 = vmatmul.mubr.f32.gmra.mrb[0].mxu0 %v3142
    %v3243 = vpop.f32.mrb[0].mxu0
    %v3244 = vadd.f32 %v3166, %v3243
    %v3245 = vpop.f32.mrb[0].mxu0
    %3246 = vdwg.mxu0
    %v3247 = vadd.f32 %v2078, %v3234
    %v3248 = vadd.f32 %v2079, %v3239
    %v3249 = vadd.f32 %v2080, %v3244
    %3250 = vadd.xlane.f32.xlu0 %v3247
    %v3251 = vpop.xlane.xlu0 %3250
    %3252 = vadd.xlane.f32.xlu0 %v3248
    %v3253 = vpop.xlane.xlu0 %3252
    %v3254 = vsel %vm1490, %v3249, 0.0
    %3255 = vadd.xlane.f32.xlu0 %v3254
    %v3256 = vpop.xlane.xlu0 %3255
    %v3257 = vmul.f32 %v3251, %v1494
    %v3258 = vmul.f32 %v3253, %v1494
    %v3259 = vmul.f32 %v3256, %v1494
    %v3260 = vsub.f32 %v3247, %v3257
    %v3261 = vsub.f32 %v3248, %v3258
    %v3262 = vsub.f32 %v3249, %v3259
    %v3263 = vmul.f32 %v3260, %v3260
    %v3264 = vmul.f32 %v3261, %v3261
    %v3265 = vmul.f32 %v3262, %v3262
    %3266 = vadd.xlane.f32.xlu0 %v3263
    %v3267 = vpop.xlane.xlu0 %3266
    %3268 = vadd.xlane.f32.xlu0 %v3264
    %v3269 = vpop.xlane.xlu0 %3268
    %v3270 = vsel %vm1490, %v3265, 0.0
    %3271 = vadd.xlane.f32.xlu0 %v3270
    %v3272 = vpop.xlane.xlu0 %3271
    %v3273 = vmul.f32 %v3267, %v1494
    %v3274 = vmul.f32 %v3269, %v1494
    %v3275 = vmul.f32 %v3272, %v1494
    %v3276 = vadd.f32 %v3273, 1e-05
    %v3277 = vadd.f32 %v3274, 1e-05
    %v3278 = vadd.f32 %v3275, 1e-05
    %v3279 = vrsqrt.pop %v3276
    %v3280 = vrsqrt.pop %v3277
    %v3281 = vrsqrt.pop %v3278
    %v3282 = vmul.f32 %v3260, %v3279
    %v3283 = vmul.f32 %v3261, %v3280
    %v3284 = vmul.f32 %v3262, %v3281
    %v3285 = vlaneseq
    %v3286 = vshrl.u32 %v3285, 7
    %v3287 = vsub.s32 1, %v3286
    %v3288 = vrot.slane %v2082, %v3287
    %v3289 = vmul.f32 %v3282, %v3288
    %v3290 = vmul.f32 %v3283, %v3288
    %v3291 = vmul.f32 %v3284, %v3288
    %v3292 = vlaneseq
    %v3293 = vshrl.u32 %v3292, 7
    %v3294 = vsub.s32 2, %v3293
    %v3295 = vrot.slane %v2082, %v3294
    %v3296 = vadd.f32 %v3289, %v3295
    %v3297 = vadd.f32 %v3290, %v3295
    %v3298 = vadd.f32 %v3291, %v3295
    %s3299 = scalar_lea.vmem %s7, 512
    %v3300 = vld [vmem:[%s3299] sm:$0xff]
    %v3301 = vld [vmem:[%s3299 + $0x8] sm:$0xff]
    %v3302 = vld [vmem:[%s3299 + $0x10] sm:$0xff]
    %v3303 = vld [vmem:[%s3299 + $0x18] sm:$0xff]
    %v3304 = vld [vmem:[%s3299 + $0x20] sm:$0xff]
    %v3305 = vld [vmem:[%s3299 + $0x28] sm:$0xff]
    %v3306 = vld [vmem:[%s3299 + $0x30] sm:$0xff]
    %v3307 = vld [vmem:[%s3299 + $0x38] sm:$0xff]
    %v3308 = vld [vmem:[%s3299 + $0x40] sm:$0xff]
    %v3309 = vld [vmem:[%s3299 + $0x48] sm:$0xff]
    %v3310 = vld [vmem:[%s3299 + $0x50] sm:$0xff]
    %v3311 = vld [vmem:[%s3299 + $0x58] sm:$0xff]
    %v3312 = vld [vmem:[%s3299 + $0x60] sm:$0xff]
    %v3313 = vld [vmem:[%s3299 + $0x68] sm:$0xff]
    %v3314 = vld [vmem:[%s3299 + $0x70] sm:$0xff]
    %v3315 = vld [vmem:[%s3299 + $0x78] sm:$0xff]
    %v3316 = vld [vmem:[%s3299 + $0x80] sm:$0xff]
    %v3317 = vld [vmem:[%s3299 + $0x88] sm:$0xff]
    %v3318 = vld [vmem:[%s3299 + $0x90] sm:$0xff]
    %v3319 = vld [vmem:[%s3299 + $0x98] sm:$0xff]
    %v3320 = vld [vmem:[%s3299 + $0xa0] sm:$0xff]
    %v3321 = vld [vmem:[%s3299 + $0xa8] sm:$0xff]
    %v3322 = vld [vmem:[%s3299 + $0xb0] sm:$0xff]
    %v3323 = vld [vmem:[%s3299 + $0xb8] sm:$0xff]
    %v3324 = vld [vmem:[%s3299 + $0xc0] sm:$0xff]
    %v3325 = vld [vmem:[%s3299 + $0xc8] sm:$0xff]
    %v3326 = vld [vmem:[%s3299 + $0xd0] sm:$0xff]
    %v3327 = vld [vmem:[%s3299 + $0xd8] sm:$0xff]
    %v3328 = vld [vmem:[%s3299 + $0xe0] sm:$0xff]
    %v3329 = vld [vmem:[%s3299 + $0xe8] sm:$0xff]
    %v3330 = vld [vmem:[%s3299 + $0xf0] sm:$0xff]
    %v3331 = vld [vmem:[%s3299 + $0xf8] sm:$0xff]
    %v3332 = vld [vmem:[%s3299 + $0x100] sm:$0xff]
    %v3333 = vld [vmem:[%s3299 + $0x108] sm:$0xff]
    %v3334 = vld [vmem:[%s3299 + $0x110] sm:$0xff]
    %v3335 = vld [vmem:[%s3299 + $0x118] sm:$0xff]
    %v3336 = vld [vmem:[%s3299 + $0x120] sm:$0xff]
    %v3337 = vld [vmem:[%s3299 + $0x128] sm:$0xff]
    %v3338 = vld [vmem:[%s3299 + $0x130] sm:$0xff]
    %v3339 = vld [vmem:[%s3299 + $0x138] sm:$0xff]
    %v3340 = vld [vmem:[%s3299 + $0x140] sm:$0xff]
    %v3341 = vld [vmem:[%s3299 + $0x148] sm:$0xff]
    %v3342 = vld [vmem:[%s3299 + $0x150] sm:$0xff]
    %v3343 = vld [vmem:[%s3299 + $0x158] sm:$0xff]
    %v3344 = vld [vmem:[%s3299 + $0x160] sm:$0xff]
    %v3345 = vld [vmem:[%s3299 + $0x168] sm:$0xff]
    %v3346 = vld [vmem:[%s3299 + $0x170] sm:$0xff]
    %v3347 = vld [vmem:[%s3299 + $0x178] sm:$0xff]
    %v3348 = vld [vmem:[%s3299 + $0x180] sm:$0xff]
    %v3349 = vld [vmem:[%s3299 + $0x188] sm:$0xff]
    %v3350 = vld [vmem:[%s3299 + $0x190] sm:$0xff]
    %v3351 = vld [vmem:[%s3299 + $0x198] sm:$0xff]
    %v3352 = vld [vmem:[%s3299 + $0x1a0] sm:$0xff]
    %v3353 = vld [vmem:[%s3299 + $0x1a8] sm:$0xff]
    %v3354 = vld [vmem:[%s3299 + $0x1b0] sm:$0xff]
    %v3355 = vld [vmem:[%s3299 + $0x1b8] sm:$0xff]
    %v3356 = vld [vmem:[%s3299 + $0x1c0] sm:$0xff]
    %v3357 = vld [vmem:[%s3299 + $0x1c8] sm:$0xff]
    %v3358 = vld [vmem:[%s3299 + $0x1d0] sm:$0xff]
    %v3359 = vld [vmem:[%s3299 + $0x1d8] sm:$0xff]
    %v3360 = vld [vmem:[%s3299 + $0x1e0] sm:$0xff]
    %v3361 = vld [vmem:[%s3299 + $0x1e8] sm:$0xff]
    %v3362 = vld [vmem:[%s3299 + $0x1f0] sm:$0xff]
    %v3363 = vld [vmem:[%s3299 + $0x1f8] sm:$0xff]
    %s3364 = scalar_lea.vmem %s8, 4
    %v3365 = vld [vmem:[%s3364] sm:$0xf]
    %v3367 = vlaneseq
    %v3368 = vshrl.u32 %v3367, 7
    %v3369 = vsub.s32 0, %v3368
    %v3370 = vrot.slane %v3365, %v3369
    %v3371 = vlaneseq
    %v3372 = vshrl.u32 %v3371, 7
    %v3373 = vsub.s32 1, %v3372
    %v3374 = vrot.slane %v3365, %v3373
    %v3375 = vlaneseq
    %v3376 = vshrl.u32 %v3375, 7
    %v3377 = vsub.s32 2, %v3376
    %v3378 = vrot.slane %v3365, %v3377
    %v3379 = vlaneseq
    %v3380 = vshrl.u32 %v3379, 7
    %v3381 = vsub.s32 3, %v3380
    %v3382 = vrot.slane %v3365, %v3381
    %3387 = vmatprep.subr.mxu0 %v3301
    %3388 = vmatpush1.msra.mxu0 %v3300
    %3389 = vmatprep.subr.mxu0 %v3305
    %3390 = vmatpush1.msra.mxu0 %v3304
    %3391 = vmatprep.subr.mxu0 %v3309
    %3392 = vmatpush1.msra.mxu0 %v3308
    %3393 = vmatprep.subr.mxu0 %v3313
    %3394 = vmatpush1.msra.mxu0 %v3312
    %3395 = vmatprep.subr.mxu0 %v3317
    %3396 = vmatpush1.msra.mxu0 %v3316
    %3397 = vmatprep.subr.mxu0 %v3321
    %3398 = vmatpush1.msra.mxu0 %v3320
    %3399 = vmatprep.subr.mxu0 %v3325
    %3400 = vmatpush1.msra.mxu0 %v3324
    %3401 = vmatprep.subr.mxu0 %v3329
    %3402 = vmatpush1.msra.mxu0 %v3328
    %3403 = vmatprep.subr.mxu0 %v3333
    %3404 = vmatpush1.msra.mxu0 %v3332
    %3405 = vmatprep.subr.mxu0 %v3337
    %3406 = vmatpush1.msra.mxu0 %v3336
    %3407 = vmatprep.subr.mxu0 %v3341
    %3408 = vmatpush1.msra.mxu0 %v3340
    %3409 = vmatprep.subr.mxu0 %v3345
    %3410 = vmatpush1.msra.mxu0 %v3344
    %3411 = vmatprep.subr.mxu0 %v3349
    %3412 = vmatpush1.msra.mxu0 %v3348
    %3413 = vmatprep.subr.mxu0 %v3353
    %3414 = vmatpush1.msra.mxu0 %v3352
    %3415 = vmatprep.subr.mxu0 %v3357
    %3416 = vmatpush1.msra.mxu0 %v3356
    %3417 = vmatprep.subr.mxu0 %v3361
    %3418 = vmatpush1.msra.mxu0 %v3360
    %3419 = vmatprep.subr.mxu0 0.0
    %3420 = vmatpush1.msra.mxu0 0.0
    %3421 = vmatprep.subr.mxu0 0.0
    %3422 = vmatpush1.msra.mxu0 0.0
    %3423 = vmatprep.subr.mxu0 0.0
    %3424 = vmatpush1.msra.mxu0 0.0
    %3425 = vmatprep.subr.mxu0 0.0
    %3426 = vmatpush1.msra.mxu0 0.0
    %3427 = vmatprep.subr.mxu0 0.0
    %3428 = vmatpush1.msra.mxu0 0.0
    %3429 = vmatprep.subr.mxu0 0.0
    %3430 = vmatpush1.msra.mxu0 0.0
    %3431 = vmatprep.subr.mxu0 0.0
    %3432 = vmatpush1.msra.mxu0 0.0
    %3433 = vmatprep.subr.mxu0 0.0
    %3434 = vmatpush1.msra.mxu0 0.0
    %3435 = vmatprep.subr.mxu0 0.0
    %3436 = vmatpush1.msra.mxu0 0.0
    %3437 = vmatprep.subr.mxu0 0.0
    %3438 = vmatpush1.msra.mxu0 0.0
    %3439 = vmatprep.subr.mxu0 0.0
    %3440 = vmatpush1.msra.mxu0 0.0
    %3441 = vmatprep.subr.mxu0 0.0
    %3442 = vmatpush1.msra.mxu0 0.0
    %3443 = vmatprep.subr.mxu0 0.0
    %3444 = vmatpush1.msra.mxu0 0.0
    %3445 = vmatprep.subr.mxu0 0.0
    %3446 = vmatpush1.msra.mxu0 0.0
    %3447 = vmatprep.subr.mxu0 0.0
    %3448 = vmatpush1.msra.mxu0 0.0
    %3449 = vmatprep.subr.mxu0 0.0
    %3450 = vmatpush1.msra.mxu0 0.0
    %3451 = vmatprep.mubr.f32.mxu0 0.0
    %3452 = vmatmul.mubr.f32.gmra.mrb[0].mxu0 %v3296
    %v3453 = vpop.f32.mrb[0].mxu0
    %v3454 = vadd.f32 %v3370, %v3453
    %v3455 = vpop.f32.mrb[0].mxu0
    %v3456 = vadd.f32 %v3374, %v3455
    %3457 = vmatprep.mubr.f32.mxu0 0.0
    %3458 = vmatmul.mubr.f32.gmra.mrb[0].mxu0 %v3297
    %v3459 = vpop.f32.mrb[0].mxu0
    %v3460 = vadd.f32 %v3370, %v3459
    %v3461 = vpop.f32.mrb[0].mxu0
    %v3462 = vadd.f32 %v3374, %v3461
    %3463 = vmatprep.mubr.f32.mxu0 0.0
    %3464 = vmatmul.mubr.f32.gmra.mrb[0].mxu0 %v3298
    %v3465 = vpop.f32.mrb[0].mxu0
    %v3466 = vadd.f32 %v3370, %v3465
    %v3467 = vpop.f32.mrb[0].mxu0
    %v3468 = vadd.f32 %v3374, %v3467
    %3469 = vdwg.mxu0
    %3470 = vmatprep.subr.mxu0 %v3303
    %3471 = vmatpush1.msra.mxu0 %v3302
    %3472 = vmatprep.subr.mxu0 %v3307
    %3473 = vmatpush1.msra.mxu0 %v3306
    %3474 = vmatprep.subr.mxu0 %v3311
    %3475 = vmatpush1.msra.mxu0 %v3310
    %3476 = vmatprep.subr.mxu0 %v3315
    %3477 = vmatpush1.msra.mxu0 %v3314
    %3478 = vmatprep.subr.mxu0 %v3319
    %3479 = vmatpush1.msra.mxu0 %v3318
    %3480 = vmatprep.subr.mxu0 %v3323
    %3481 = vmatpush1.msra.mxu0 %v3322
    %3482 = vmatprep.subr.mxu0 %v3327
    %3483 = vmatpush1.msra.mxu0 %v3326
    %3484 = vmatprep.subr.mxu0 %v3331
    %3485 = vmatpush1.msra.mxu0 %v3330
    %3486 = vmatprep.subr.mxu0 %v3335
    %3487 = vmatpush1.msra.mxu0 %v3334
    %3488 = vmatprep.subr.mxu0 %v3339
    %3489 = vmatpush1.msra.mxu0 %v3338
    %3490 = vmatprep.subr.mxu0 %v3343
    %3491 = vmatpush1.msra.mxu0 %v3342
    %3492 = vmatprep.subr.mxu0 %v3347
    %3493 = vmatpush1.msra.mxu0 %v3346
    %3494 = vmatprep.subr.mxu0 %v3351
    %3495 = vmatpush1.msra.mxu0 %v3350
    %3496 = vmatprep.subr.mxu0 %v3355
    %3497 = vmatpush1.msra.mxu0 %v3354
    %3498 = vmatprep.subr.mxu0 %v3359
    %3499 = vmatpush1.msra.mxu0 %v3358
    %3500 = vmatprep.subr.mxu0 %v3363
    %3501 = vmatpush1.msra.mxu0 %v3362
    %3502 = vmatprep.subr.mxu0 0.0
    %3503 = vmatpush1.msra.mxu0 0.0
    %3504 = vmatprep.subr.mxu0 0.0
    %3505 = vmatpush1.msra.mxu0 0.0
    %3506 = vmatprep.subr.mxu0 0.0
    %3507 = vmatpush1.msra.mxu0 0.0
    %3508 = vmatprep.subr.mxu0 0.0
    %3509 = vmatpush1.msra.mxu0 0.0
    %3510 = vmatprep.subr.mxu0 0.0
    %3511 = vmatpush1.msra.mxu0 0.0
    %3512 = vmatprep.subr.mxu0 0.0
    %3513 = vmatpush1.msra.mxu0 0.0
    %3514 = vmatprep.subr.mxu0 0.0
    %3515 = vmatpush1.msra.mxu0 0.0
    %3516 = vmatprep.subr.mxu0 0.0
    %3517 = vmatpush1.msra.mxu0 0.0
    %3518 = vmatprep.subr.mxu0 0.0
    %3519 = vmatpush1.msra.mxu0 0.0
    %3520 = vmatprep.subr.mxu0 0.0
    %3521 = vmatpush1.msra.mxu0 0.0
    %3522 = vmatprep.subr.mxu0 0.0
    %3523 = vmatpush1.msra.mxu0 0.0
    %3524 = vmatprep.subr.mxu0 0.0
    %3525 = vmatpush1.msra.mxu0 0.0
    %3526 = vmatprep.subr.mxu0 0.0
    %3527 = vmatpush1.msra.mxu0 0.0
    %3528 = vmatprep.subr.mxu0 0.0
    %3529 = vmatpush1.msra.mxu0 0.0
    %3530 = vmatprep.subr.mxu0 0.0
    %3531 = vmatpush1.msra.mxu0 0.0
    %3532 = vmatprep.subr.mxu0 0.0
    %3533 = vmatpush1.msra.mxu0 0.0
    %3534 = vmatprep.mubr.f32.mxu0 0.0
    %3535 = vmatmul.mubr.f32.gmra.mrb[0].mxu0 %v3296
    %v3536 = vpop.f32.mrb[0].mxu0
    %v3537 = vadd.f32 %v3378, %v3536
    %v3538 = vpop.f32.mrb[0].mxu0
    %v3539 = vadd.f32 %v3382, %v3538
    %3540 = vmatprep.mubr.f32.mxu0 0.0
    %3541 = vmatmul.mubr.f32.gmra.mrb[0].mxu0 %v3297
    %v3542 = vpop.f32.mrb[0].mxu0
    %v3543 = vadd.f32 %v3378, %v3542
    %v3544 = vpop.f32.mrb[0].mxu0
    %v3545 = vadd.f32 %v3382, %v3544
    %3546 = vmatprep.mubr.f32.mxu0 0.0
    %3547 = vmatmul.mubr.f32.gmra.mrb[0].mxu0 %v3298
    %v3548 = vpop.f32.mrb[0].mxu0
    %v3549 = vadd.f32 %v3378, %v3548
    %v3550 = vpop.f32.mrb[0].mxu0
    %v3551 = vadd.f32 %v3382, %v3550
    %3552 = vdwg.mxu0
    %v3553 = vmax.f32 %v3454, 0.0
    %v3554 = vmax.f32 %v3456, 0.0
    %v3555 = vmax.f32 %v3537, 0.0
    %v3556 = vmax.f32 %v3539, 0.0
    %v3557 = vmax.f32 %v3460, 0.0
    %v3558 = vmax.f32 %v3462, 0.0
    %v3559 = vmax.f32 %v3543, 0.0
    %v3560 = vmax.f32 %v3545, 0.0
    %v3561 = vmax.f32 %v3466, 0.0
    %v3562 = vmax.f32 %v3468, 0.0
    %v3563 = vmax.f32 %v3549, 0.0
    %v3564 = vmax.f32 %v3551, 0.0
    %s3565 = scalar_lea.vmem [#allocation2], 512
    %v3566 = vld [vmem:[%s3565] sm:$0xff]
    %v3567 = vld [vmem:[%s3565 + $0x8] sm:$0xff]
    %v3568 = vld [vmem:[%s3565 + $0x10] sm:$0xff]
    %v3569 = vld [vmem:[%s3565 + $0x18] sm:$0xff]
    %v3570 = vld [vmem:[%s3565 + $0x20] sm:$0xff]
    %v3571 = vld [vmem:[%s3565 + $0x28] sm:$0xff]
    %v3572 = vld [vmem:[%s3565 + $0x30] sm:$0xff]
    %v3573 = vld [vmem:[%s3565 + $0x38] sm:$0xff]
    %v3574 = vld [vmem:[%s3565 + $0x40] sm:$0xff]
    %v3575 = vld [vmem:[%s3565 + $0x48] sm:$0xff]
    %v3576 = vld [vmem:[%s3565 + $0x50] sm:$0xff]
    %v3577 = vld [vmem:[%s3565 + $0x58] sm:$0xff]
    %v3578 = vld [vmem:[%s3565 + $0x60] sm:$0xff]
    %v3579 = vld [vmem:[%s3565 + $0x68] sm:$0xff]
    %v3580 = vld [vmem:[%s3565 + $0x70] sm:$0xff]
    %v3581 = vld [vmem:[%s3565 + $0x78] sm:$0xff]
    %v3582 = vld [vmem:[%s3565 + $0x80] sm:$0xff]
    %v3583 = vld [vmem:[%s3565 + $0x88] sm:$0xff]
    %v3584 = vld [vmem:[%s3565 + $0x90] sm:$0xff]
    %v3585 = vld [vmem:[%s3565 + $0x98] sm:$0xff]
    %v3586 = vld [vmem:[%s3565 + $0xa0] sm:$0xff]
    %v3587 = vld [vmem:[%s3565 + $0xa8] sm:$0xff]
    %v3588 = vld [vmem:[%s3565 + $0xb0] sm:$0xff]
    %v3589 = vld [vmem:[%s3565 + $0xb8] sm:$0xff]
    %v3590 = vld [vmem:[%s3565 + $0xc0] sm:$0xff]
    %v3591 = vld [vmem:[%s3565 + $0xc8] sm:$0xff]
    %v3592 = vld [vmem:[%s3565 + $0xd0] sm:$0xff]
    %v3593 = vld [vmem:[%s3565 + $0xd8] sm:$0xff]
    %v3594 = vld [vmem:[%s3565 + $0xe0] sm:$0xff]
    %v3595 = vld [vmem:[%s3565 + $0xe8] sm:$0xff]
    %v3596 = vld [vmem:[%s3565 + $0xf0] sm:$0xff]
    %v3597 = vld [vmem:[%s3565 + $0xf8] sm:$0xff]
    %v3598 = vld [vmem:[%s3565 + $0x100] sm:$0xff]
    %v3599 = vld [vmem:[%s3565 + $0x108] sm:$0xff]
    %v3600 = vld [vmem:[%s3565 + $0x110] sm:$0xff]
    %v3601 = vld [vmem:[%s3565 + $0x118] sm:$0xff]
    %v3602 = vld [vmem:[%s3565 + $0x120] sm:$0xff]
    %v3603 = vld [vmem:[%s3565 + $0x128] sm:$0xff]
    %v3604 = vld [vmem:[%s3565 + $0x130] sm:$0xff]
    %v3605 = vld [vmem:[%s3565 + $0x138] sm:$0xff]
    %v3606 = vld [vmem:[%s3565 + $0x140] sm:$0xff]
    %v3607 = vld [vmem:[%s3565 + $0x148] sm:$0xff]
    %v3608 = vld [vmem:[%s3565 + $0x150] sm:$0xff]
    %v3609 = vld [vmem:[%s3565 + $0x158] sm:$0xff]
    %v3610 = vld [vmem:[%s3565 + $0x160] sm:$0xff]
    %v3611 = vld [vmem:[%s3565 + $0x168] sm:$0xff]
    %v3612 = vld [vmem:[%s3565 + $0x170] sm:$0xff]
    %v3613 = vld [vmem:[%s3565 + $0x178] sm:$0xff]
    %v3614 = vld [vmem:[%s3565 + $0x180] sm:$0xff]
    %v3615 = vld [vmem:[%s3565 + $0x188] sm:$0xff]
    %v3616 = vld [vmem:[%s3565 + $0x190] sm:$0xff]
    %v3617 = vld [vmem:[%s3565 + $0x198] sm:$0xff]
    %v3618 = vld [vmem:[%s3565 + $0x1a0] sm:$0xff]
    %v3619 = vld [vmem:[%s3565 + $0x1a8] sm:$0xff]
    %v3620 = vld [vmem:[%s3565 + $0x1b0] sm:$0xff]
    %v3621 = vld [vmem:[%s3565 + $0x1b8] sm:$0xff]
    %v3622 = vld [vmem:[%s3565 + $0x1c0] sm:$0xff]
    %v3623 = vld [vmem:[%s3565 + $0x1c8] sm:$0xff]
    %v3624 = vld [vmem:[%s3565 + $0x1d0] sm:$0xff]
    %v3625 = vld [vmem:[%s3565 + $0x1d8] sm:$0xff]
    %v3626 = vld [vmem:[%s3565 + $0x1e0] sm:$0xff]
    %v3627 = vld [vmem:[%s3565 + $0x1e8] sm:$0xff]
    %v3628 = vld [vmem:[%s3565 + $0x1f0] sm:$0xff]
    %v3629 = vld [vmem:[%s3565 + $0x1f8] sm:$0xff]
    %v3630 = vlaneseq
    %v3631 = vshrl.u32 %v3630, 7
    %v3632 = vsub.s32 3, %v3631
    %v3633 = vrot.slane %v2082, %v3632
    %3634 = vmatprep.subr.mxu0 0.0
    %3635 = vmatpush1.msra.mxu0 %v3566
    %3636 = vmatprep.subr.mxu0 0.0
    %3637 = vmatpush1.msra.mxu0 %v3567
    %3638 = vmatprep.subr.mxu0 0.0
    %3639 = vmatpush1.msra.mxu0 %v3568
    %3640 = vmatprep.subr.mxu0 0.0
    %3641 = vmatpush1.msra.mxu0 %v3569
    %3642 = vmatprep.subr.mxu0 0.0
    %3643 = vmatpush1.msra.mxu0 %v3570
    %3644 = vmatprep.subr.mxu0 0.0
    %3645 = vmatpush1.msra.mxu0 %v3571
    %3646 = vmatprep.subr.mxu0 0.0
    %3647 = vmatpush1.msra.mxu0 %v3572
    %3648 = vmatprep.subr.mxu0 0.0
    %3649 = vmatpush1.msra.mxu0 %v3573
    %3650 = vmatprep.subr.mxu0 0.0
    %3651 = vmatpush1.msra.mxu0 %v3574
    %3652 = vmatprep.subr.mxu0 0.0
    %3653 = vmatpush1.msra.mxu0 %v3575
    %3654 = vmatprep.subr.mxu0 0.0
    %3655 = vmatpush1.msra.mxu0 %v3576
    %3656 = vmatprep.subr.mxu0 0.0
    %3657 = vmatpush1.msra.mxu0 %v3577
    %3658 = vmatprep.subr.mxu0 0.0
    %3659 = vmatpush1.msra.mxu0 %v3578
    %3660 = vmatprep.subr.mxu0 0.0
    %3661 = vmatpush1.msra.mxu0 %v3579
    %3662 = vmatprep.subr.mxu0 0.0
    %3663 = vmatpush1.msra.mxu0 %v3580
    %3664 = vmatprep.subr.mxu0 0.0
    %3665 = vmatpush1.msra.mxu0 %v3581
    %3666 = vmatprep.subr.mxu0 0.0
    %3667 = vmatpush1.msra.mxu0 %v3582
    %3668 = vmatprep.subr.mxu0 0.0
    %3669 = vmatpush1.msra.mxu0 %v3583
    %3670 = vmatprep.subr.mxu0 0.0
    %3671 = vmatpush1.msra.mxu0 %v3584
    %3672 = vmatprep.subr.mxu0 0.0
    %3673 = vmatpush1.msra.mxu0 %v3585
    %3674 = vmatprep.subr.mxu0 0.0
    %3675 = vmatpush1.msra.mxu0 %v3586
    %3676 = vmatprep.subr.mxu0 0.0
    %3677 = vmatpush1.msra.mxu0 %v3587
    %3678 = vmatprep.subr.mxu0 0.0
    %3679 = vmatpush1.msra.mxu0 %v3588
    %3680 = vmatprep.subr.mxu0 0.0
    %3681 = vmatpush1.msra.mxu0 %v3589
    %3682 = vmatprep.subr.mxu0 0.0
    %3683 = vmatpush1.msra.mxu0 %v3590
    %3684 = vmatprep.subr.mxu0 0.0
    %3685 = vmatpush1.msra.mxu0 %v3591
    %3686 = vmatprep.subr.mxu0 0.0
    %3687 = vmatpush1.msra.mxu0 %v3592
    %3688 = vmatprep.subr.mxu0 0.0
    %3689 = vmatpush1.msra.mxu0 %v3593
    %3690 = vmatprep.subr.mxu0 0.0
    %3691 = vmatpush1.msra.mxu0 %v3594
    %3692 = vmatprep.subr.mxu0 0.0
    %3693 = vmatpush1.msra.mxu0 %v3595
    %3694 = vmatprep.subr.mxu0 0.0
    %3695 = vmatpush1.msra.mxu0 %v3596
    %3696 = vmatprep.subr.mxu0 0.0
    %3697 = vmatpush1.msra.mxu0 %v3597
    %3698 = vmatprep.mubr.f32.mxu0 %v3554
    %3699 = vmatmul.mubr.f32.gmra.mrb[0].mxu0 %v3553
    %v3700 = vpop.f32.mrb[0].mxu0
    %v3701 = vadd.f32 %v3633, %v3700
    %v3702 = vpop.f32.mrb[0].mxu0
    %3703 = vmatprep.mubr.f32.mxu0 %v3558
    %3704 = vmatmul.mubr.f32.gmra.mrb[0].mxu0 %v3557
    %v3705 = vpop.f32.mrb[0].mxu0
    %v3706 = vadd.f32 %v3633, %v3705
    %v3707 = vpop.f32.mrb[0].mxu0
    %3708 = vmatprep.mubr.f32.mxu0 %v3562
    %3709 = vmatmul.mubr.f32.gmra.mrb[0].mxu0 %v3561
    %v3710 = vpop.f32.mrb[0].mxu0
    %v3711 = vadd.f32 %v3633, %v3710
    %v3712 = vpop.f32.mrb[0].mxu0
    %3713 = vdwg.mxu0
    %3714 = vmatprep.subr.mxu0 0.0
    %3715 = vmatpush1.msra.mxu0 %v3598
    %3716 = vmatprep.subr.mxu0 0.0
    %3717 = vmatpush1.msra.mxu0 %v3599
    %3718 = vmatprep.subr.mxu0 0.0
    %3719 = vmatpush1.msra.mxu0 %v3600
    %3720 = vmatprep.subr.mxu0 0.0
    %3721 = vmatpush1.msra.mxu0 %v3601
    %3722 = vmatprep.subr.mxu0 0.0
    %3723 = vmatpush1.msra.mxu0 %v3602
    %3724 = vmatprep.subr.mxu0 0.0
    %3725 = vmatpush1.msra.mxu0 %v3603
    %3726 = vmatprep.subr.mxu0 0.0
    %3727 = vmatpush1.msra.mxu0 %v3604
    %3728 = vmatprep.subr.mxu0 0.0
    %3729 = vmatpush1.msra.mxu0 %v3605
    %3730 = vmatprep.subr.mxu0 0.0
    %3731 = vmatpush1.msra.mxu0 %v3606
    %3732 = vmatprep.subr.mxu0 0.0
    %3733 = vmatpush1.msra.mxu0 %v3607
    %3734 = vmatprep.subr.mxu0 0.0
    %3735 = vmatpush1.msra.mxu0 %v3608
    %3736 = vmatprep.subr.mxu0 0.0
    %3737 = vmatpush1.msra.mxu0 %v3609
    %3738 = vmatprep.subr.mxu0 0.0
    %3739 = vmatpush1.msra.mxu0 %v3610
    %3740 = vmatprep.subr.mxu0 0.0
    %3741 = vmatpush1.msra.mxu0 %v3611
    %3742 = vmatprep.subr.mxu0 0.0
    %3743 = vmatpush1.msra.mxu0 %v3612
    %3744 = vmatprep.subr.mxu0 0.0
    %3745 = vmatpush1.msra.mxu0 %v3613
    %3746 = vmatprep.subr.mxu0 0.0
    %3747 = vmatpush1.msra.mxu0 %v3614
    %3748 = vmatprep.subr.mxu0 0.0
    %3749 = vmatpush1.msra.mxu0 %v3615
    %3750 = vmatprep.subr.mxu0 0.0
    %3751 = vmatpush1.msra.mxu0 %v3616
    %3752 = vmatprep.subr.mxu0 0.0
    %3753 = vmatpush1.msra.mxu0 %v3617
    %3754 = vmatprep.subr.mxu0 0.0
    %3755 = vmatpush1.msra.mxu0 %v3618
    %3756 = vmatprep.subr.mxu0 0.0
    %3757 = vmatpush1.msra.mxu0 %v3619
    %3758 = vmatprep.subr.mxu0 0.0
    %3759 = vmatpush1.msra.mxu0 %v3620
    %3760 = vmatprep.subr.mxu0 0.0
    %3761 = vmatpush1.msra.mxu0 %v3621
    %3762 = vmatprep.subr.mxu0 0.0
    %3763 = vmatpush1.msra.mxu0 %v3622
    %3764 = vmatprep.subr.mxu0 0.0
    %3765 = vmatpush1.msra.mxu0 %v3623
    %3766 = vmatprep.subr.mxu0 0.0
    %3767 = vmatpush1.msra.mxu0 %v3624
    %3768 = vmatprep.subr.mxu0 0.0
    %3769 = vmatpush1.msra.mxu0 %v3625
    %3770 = vmatprep.subr.mxu0 0.0
    %3771 = vmatpush1.msra.mxu0 %v3626
    %3772 = vmatprep.subr.mxu0 0.0
    %3773 = vmatpush1.msra.mxu0 %v3627
    %3774 = vmatprep.subr.mxu0 0.0
    %3775 = vmatpush1.msra.mxu0 %v3628
    %3776 = vmatprep.subr.mxu0 0.0
    %3777 = vmatpush1.msra.mxu0 %v3629
    %3778 = vmatprep.mubr.f32.mxu0 %v3556
    %3779 = vmatmul.mubr.f32.gmra.mrb[0].mxu0 %v3555
    %v3780 = vpop.f32.mrb[0].mxu0
    %v3781 = vadd.f32 %v3701, %v3780
    %v3782 = vpop.f32.mrb[0].mxu0
    %3783 = vmatprep.mubr.f32.mxu0 %v3560
    %3784 = vmatmul.mubr.f32.gmra.mrb[0].mxu0 %v3559
    %v3785 = vpop.f32.mrb[0].mxu0
    %v3786 = vadd.f32 %v3706, %v3785
    %v3787 = vpop.f32.mrb[0].mxu0
    %3788 = vmatprep.mubr.f32.mxu0 %v3564
    %3789 = vmatmul.mubr.f32.gmra.mrb[0].mxu0 %v3563
    %v3790 = vpop.f32.mrb[0].mxu0
    %v3791 = vadd.f32 %v3711, %v3790
    %v3792 = vpop.f32.mrb[0].mxu0
    %3793 = vdwg.mxu0
    %v3794 = vadd.f32 %v3296, %v3781
    %v3795 = vadd.f32 %v3297, %v3786
    %v3796 = vadd.f32 %v3298, %v3791
    %3797 = vadd.xlane.f32.xlu0 %v3794
    %v3798 = vpop.xlane.xlu0 %3797
    %3799 = vadd.xlane.f32.xlu0 %v3795
    %v3800 = vpop.xlane.xlu0 %3799
    %v3801 = vsel %vm1490, %v3796, 0.0
    %3802 = vadd.xlane.f32.xlu0 %v3801
    %v3803 = vpop.xlane.xlu0 %3802
    %v3804 = vmul.f32 %v3798, %v1494
    %v3805 = vmul.f32 %v3800, %v1494
    %v3806 = vmul.f32 %v3803, %v1494
    %v3807 = vsub.f32 %v3794, %v3804
    %v3808 = vsub.f32 %v3795, %v3805
    %v3809 = vsub.f32 %v3796, %v3806
    %v3810 = vmul.f32 %v3807, %v3807
    %v3811 = vmul.f32 %v3808, %v3808
    %v3812 = vmul.f32 %v3809, %v3809
    %3813 = vadd.xlane.f32.xlu0 %v3810
    %v3814 = vpop.xlane.xlu0 %3813
    %3815 = vadd.xlane.f32.xlu0 %v3811
    %v3816 = vpop.xlane.xlu0 %3815
    %v3817 = vsel %vm1490, %v3812, 0.0
    %3818 = vadd.xlane.f32.xlu0 %v3817
    %v3819 = vpop.xlane.xlu0 %3818
    %v3820 = vmul.f32 %v3814, %v1494
    %v3821 = vmul.f32 %v3816, %v1494
    %v3822 = vmul.f32 %v3819, %v1494
    %v3823 = vadd.f32 %v3820, 1e-05
    %v3824 = vadd.f32 %v3821, 1e-05
    %v3825 = vadd.f32 %v3822, 1e-05
    %v3826 = vrsqrt.pop %v3823
    %v3827 = vrsqrt.pop %v3824
    %v3828 = vrsqrt.pop %v3825
    %v3829 = vmul.f32 %v3807, %v3826
    %v3830 = vmul.f32 %v3808, %v3827
    %v3831 = vmul.f32 %v3809, %v3828
    %v3832 = vlaneseq
    %v3833 = vshrl.u32 %v3832, 7
    %v3834 = vsub.s32 4, %v3833
    %v3835 = vrot.slane %v2082, %v3834
    %v3836 = vmul.f32 %v3829, %v3835
    %v3837 = vmul.f32 %v3830, %v3835
    %v3838 = vmul.f32 %v3831, %v3835
    %v3839 = vlaneseq
    %v3840 = vshrl.u32 %v3839, 7
    %v3841 = vsub.s32 5, %v3840
    %v3842 = vrot.slane %v2082, %v3841
    %v3843 = vadd.f32 %v3836, %v3842
    %v3844 = vadd.f32 %v3837, %v3842
    %v3845 = vadd.f32 %v3838, %v3842
    %s3846 = scalar_lea.vmem %s6, 16
    %v3847 = vld [vmem:[%s3846] sm:$0x3f]
    %s3848 = scalar_lea.vmem %s3, 768
    %v3849 = vld [vmem:[%s3848] sm:$0xff]
    %v3850 = vld [vmem:[%s3848 + $0x8] sm:$0xff]
    %v3851 = vld [vmem:[%s3848 + $0x10] sm:$0xff]
    %v3852 = vld [vmem:[%s3848 + $0x18] sm:$0xff]
    %v3853 = vld [vmem:[%s3848 + $0x20] sm:$0xff]
    %v3854 = vld [vmem:[%s3848 + $0x28] sm:$0xff]
    %v3855 = vld [vmem:[%s3848 + $0x30] sm:$0xff]
    %v3856 = vld [vmem:[%s3848 + $0x38] sm:$0xff]
    %v3857 = vld [vmem:[%s3848 + $0x40] sm:$0xff]
    %v3858 = vld [vmem:[%s3848 + $0x48] sm:$0xff]
    %v3859 = vld [vmem:[%s3848 + $0x50] sm:$0xff]
    %v3860 = vld [vmem:[%s3848 + $0x58] sm:$0xff]
    %v3861 = vld [vmem:[%s3848 + $0x60] sm:$0xff]
    %v3862 = vld [vmem:[%s3848 + $0x68] sm:$0xff]
    %v3863 = vld [vmem:[%s3848 + $0x70] sm:$0xff]
    %v3864 = vld [vmem:[%s3848 + $0x78] sm:$0xff]
    %v3865 = vld [vmem:[%s3848 + $0x80] sm:$0xff]
    %v3866 = vld [vmem:[%s3848 + $0x88] sm:$0xff]
    %v3867 = vld [vmem:[%s3848 + $0x90] sm:$0xff]
    %v3868 = vld [vmem:[%s3848 + $0x98] sm:$0xff]
    %v3869 = vld [vmem:[%s3848 + $0xa0] sm:$0xff]
    %v3870 = vld [vmem:[%s3848 + $0xa8] sm:$0xff]
    %v3871 = vld [vmem:[%s3848 + $0xb0] sm:$0xff]
    %v3872 = vld [vmem:[%s3848 + $0xb8] sm:$0xff]
    %v3873 = vld [vmem:[%s3848 + $0xc0] sm:$0xff]
    %v3874 = vld [vmem:[%s3848 + $0xc8] sm:$0xff]
    %v3875 = vld [vmem:[%s3848 + $0xd0] sm:$0xff]
    %v3876 = vld [vmem:[%s3848 + $0xd8] sm:$0xff]
    %v3877 = vld [vmem:[%s3848 + $0xe0] sm:$0xff]
    %v3878 = vld [vmem:[%s3848 + $0xe8] sm:$0xff]
    %v3879 = vld [vmem:[%s3848 + $0xf0] sm:$0xff]
    %v3880 = vld [vmem:[%s3848 + $0xf8] sm:$0xff]
    %v3881 = vld [vmem:[%s3848 + $0x100] sm:$0xff]
    %v3882 = vld [vmem:[%s3848 + $0x108] sm:$0xff]
    %v3883 = vld [vmem:[%s3848 + $0x110] sm:$0xff]
    %v3884 = vld [vmem:[%s3848 + $0x118] sm:$0xff]
    %v3885 = vld [vmem:[%s3848 + $0x120] sm:$0xff]
    %v3886 = vld [vmem:[%s3848 + $0x128] sm:$0xff]
    %v3887 = vld [vmem:[%s3848 + $0x130] sm:$0xff]
    %v3888 = vld [vmem:[%s3848 + $0x138] sm:$0xff]
    %v3889 = vld [vmem:[%s3848 + $0x140] sm:$0xff]
    %v3890 = vld [vmem:[%s3848 + $0x148] sm:$0xff]
    %v3891 = vld [vmem:[%s3848 + $0x150] sm:$0xff]
    %v3892 = vld [vmem:[%s3848 + $0x158] sm:$0xff]
    %v3893 = vld [vmem:[%s3848 + $0x160] sm:$0xff]
    %v3894 = vld [vmem:[%s3848 + $0x168] sm:$0xff]
    %v3895 = vld [vmem:[%s3848 + $0x170] sm:$0xff]
    %v3896 = vld [vmem:[%s3848 + $0x178] sm:$0xff]
    %s3897 = scalar_lea.vmem %s4, 6
    %v3898 = vld [vmem:[%s3897] sm:$0x7]
    %v3900 = vlaneseq
    %v3901 = vshrl.u32 %v3900, 7
    %v3902 = vsub.s32 0, %v3901
    %v3903 = vrot.slane %v3898, %v3902
    %v3904 = vlaneseq
    %v3905 = vshrl.u32 %v3904, 7
    %v3906 = vsub.s32 1, %v3905
    %v3907 = vrot.slane %v3898, %v3906
    %v3908 = vlaneseq
    %v3909 = vshrl.u32 %v3908, 7
    %v3910 = vsub.s32 2, %v3909
    %v3911 = vrot.slane %v3898, %v3910
    %3915 = vmatprep.subr.mxu0 %v3850
    %3916 = vmatpush1.msra.mxu0 %v3849
    %3917 = vmatprep.subr.mxu0 %v3853
    %3918 = vmatpush1.msra.mxu0 %v3852
    %3919 = vmatprep.subr.mxu0 %v3856
    %3920 = vmatpush1.msra.mxu0 %v3855
    %3921 = vmatprep.subr.mxu0 %v3859
    %3922 = vmatpush1.msra.mxu0 %v3858
    %3923 = vmatprep.subr.mxu0 %v3862
    %3924 = vmatpush1.msra.mxu0 %v3861
    %3925 = vmatprep.subr.mxu0 %v3865
    %3926 = vmatpush1.msra.mxu0 %v3864
    %3927 = vmatprep.subr.mxu0 %v3868
    %3928 = vmatpush1.msra.mxu0 %v3867
    %3929 = vmatprep.subr.mxu0 %v3871
    %3930 = vmatpush1.msra.mxu0 %v3870
    %3931 = vmatprep.subr.mxu0 %v3874
    %3932 = vmatpush1.msra.mxu0 %v3873
    %3933 = vmatprep.subr.mxu0 %v3877
    %3934 = vmatpush1.msra.mxu0 %v3876
    %3935 = vmatprep.subr.mxu0 %v3880
    %3936 = vmatpush1.msra.mxu0 %v3879
    %3937 = vmatprep.subr.mxu0 %v3883
    %3938 = vmatpush1.msra.mxu0 %v3882
    %3939 = vmatprep.subr.mxu0 %v3886
    %3940 = vmatpush1.msra.mxu0 %v3885
    %3941 = vmatprep.subr.mxu0 %v3889
    %3942 = vmatpush1.msra.mxu0 %v3888
    %3943 = vmatprep.subr.mxu0 %v3892
    %3944 = vmatpush1.msra.mxu0 %v3891
    %3945 = vmatprep.subr.mxu0 %v3895
    %3946 = vmatpush1.msra.mxu0 %v3894
    %3947 = vmatprep.subr.mxu0 0.0
    %3948 = vmatpush1.msra.mxu0 0.0
    %3949 = vmatprep.subr.mxu0 0.0
    %3950 = vmatpush1.msra.mxu0 0.0
    %3951 = vmatprep.subr.mxu0 0.0
    %3952 = vmatpush1.msra.mxu0 0.0
    %3953 = vmatprep.subr.mxu0 0.0
    %3954 = vmatpush1.msra.mxu0 0.0
    %3955 = vmatprep.subr.mxu0 0.0
    %3956 = vmatpush1.msra.mxu0 0.0
    %3957 = vmatprep.subr.mxu0 0.0
    %3958 = vmatpush1.msra.mxu0 0.0
    %3959 = vmatprep.subr.mxu0 0.0
    %3960 = vmatpush1.msra.mxu0 0.0
    %3961 = vmatprep.subr.mxu0 0.0
    %3962 = vmatpush1.msra.mxu0 0.0
    %3963 = vmatprep.subr.mxu0 0.0
    %3964 = vmatpush1.msra.mxu0 0.0
    %3965 = vmatprep.subr.mxu0 0.0
    %3966 = vmatpush1.msra.mxu0 0.0
    %3967 = vmatprep.subr.mxu0 0.0
    %3968 = vmatpush1.msra.mxu0 0.0
    %3969 = vmatprep.subr.mxu0 0.0
    %3970 = vmatpush1.msra.mxu0 0.0
    %3971 = vmatprep.subr.mxu0 0.0
    %3972 = vmatpush1.msra.mxu0 0.0
    %3973 = vmatprep.subr.mxu0 0.0
    %3974 = vmatpush1.msra.mxu0 0.0
    %3975 = vmatprep.subr.mxu0 0.0
    %3976 = vmatpush1.msra.mxu0 0.0
    %3977 = vmatprep.subr.mxu0 0.0
    %3978 = vmatpush1.msra.mxu0 0.0
    %3979 = vmatprep.mubr.f32.mxu0 0.0
    %3980 = vmatmul.mubr.f32.gmra.mrb[0].mxu0 %v3843
    %v3981 = vpop.f32.mrb[0].mxu0
    %v3982 = vadd.f32 %v3903, %v3981
    %v3983 = vpop.f32.mrb[0].mxu0
    %v3984 = vadd.f32 %v3907, %v3983
    %3985 = vmatprep.mubr.f32.mxu0 0.0
    %3986 = vmatmul.mubr.f32.gmra.mrb[0].mxu0 %v3844
    %v3987 = vpop.f32.mrb[0].mxu0
    %v3988 = vadd.f32 %v3903, %v3987
    %v3989 = vpop.f32.mrb[0].mxu0
    %v3990 = vadd.f32 %v3907, %v3989
    %3991 = vmatprep.mubr.f32.mxu0 0.0
    %3992 = vmatmul.mubr.f32.gmra.mrb[0].mxu0 %v3845
    %v3993 = vpop.f32.mrb[0].mxu0
    %v3994 = vadd.f32 %v3903, %v3993
    %v3995 = vpop.f32.mrb[0].mxu0
    %v3996 = vadd.f32 %v3907, %v3995
    %3997 = vdwg.mxu0
    %3998 = vmatprep.subr.mxu0 0.0
    %3999 = vmatpush1.msra.mxu0 %v3851
    %4000 = vmatprep.subr.mxu0 0.0
    %4001 = vmatpush1.msra.mxu0 %v3854
    %4002 = vmatprep.subr.mxu0 0.0
    %4003 = vmatpush1.msra.mxu0 %v3857
    %4004 = vmatprep.subr.mxu0 0.0
    %4005 = vmatpush1.msra.mxu0 %v3860
    %4006 = vmatprep.subr.mxu0 0.0
    %4007 = vmatpush1.msra.mxu0 %v3863
    %4008 = vmatprep.subr.mxu0 0.0
    %4009 = vmatpush1.msra.mxu0 %v3866
    %4010 = vmatprep.subr.mxu0 0.0
    %4011 = vmatpush1.msra.mxu0 %v3869
    %4012 = vmatprep.subr.mxu0 0.0
    %4013 = vmatpush1.msra.mxu0 %v3872
    %4014 = vmatprep.subr.mxu0 0.0
    %4015 = vmatpush1.msra.mxu0 %v3875
    %4016 = vmatprep.subr.mxu0 0.0
    %4017 = vmatpush1.msra.mxu0 %v3878
    %4018 = vmatprep.subr.mxu0 0.0
    %4019 = vmatpush1.msra.mxu0 %v3881
    %4020 = vmatprep.subr.mxu0 0.0
    %4021 = vmatpush1.msra.mxu0 %v3884
    %4022 = vmatprep.subr.mxu0 0.0
    %4023 = vmatpush1.msra.mxu0 %v3887
    %4024 = vmatprep.subr.mxu0 0.0
    %4025 = vmatpush1.msra.mxu0 %v3890
    %4026 = vmatprep.subr.mxu0 0.0
    %4027 = vmatpush1.msra.mxu0 %v3893
    %4028 = vmatprep.subr.mxu0 0.0
    %4029 = vmatpush1.msra.mxu0 %v3896
    %4030 = vmatprep.subr.mxu0 0.0
    %4031 = vmatpush1.msra.mxu0 0.0
    %4032 = vmatprep.subr.mxu0 0.0
    %4033 = vmatpush1.msra.mxu0 0.0
    %4034 = vmatprep.subr.mxu0 0.0
    %4035 = vmatpush1.msra.mxu0 0.0
    %4036 = vmatprep.subr.mxu0 0.0
    %4037 = vmatpush1.msra.mxu0 0.0
    %4038 = vmatprep.subr.mxu0 0.0
    %4039 = vmatpush1.msra.mxu0 0.0
    %4040 = vmatprep.subr.mxu0 0.0
    %4041 = vmatpush1.msra.mxu0 0.0
    %4042 = vmatprep.subr.mxu0 0.0
    %4043 = vmatpush1.msra.mxu0 0.0
    %4044 = vmatprep.subr.mxu0 0.0
    %4045 = vmatpush1.msra.mxu0 0.0
    %4046 = vmatprep.subr.mxu0 0.0
    %4047 = vmatpush1.msra.mxu0 0.0
    %4048 = vmatprep.subr.mxu0 0.0
    %4049 = vmatpush1.msra.mxu0 0.0
    %4050 = vmatprep.subr.mxu0 0.0
    %4051 = vmatpush1.msra.mxu0 0.0
    %4052 = vmatprep.subr.mxu0 0.0
    %4053 = vmatpush1.msra.mxu0 0.0
    %4054 = vmatprep.subr.mxu0 0.0
    %4055 = vmatpush1.msra.mxu0 0.0
    %4056 = vmatprep.subr.mxu0 0.0
    %4057 = vmatpush1.msra.mxu0 0.0
    %4058 = vmatprep.subr.mxu0 0.0
    %4059 = vmatpush1.msra.mxu0 0.0
    %4060 = vmatprep.subr.mxu0 0.0
    %4061 = vmatpush1.msra.mxu0 0.0
    %4062 = vmatprep.mubr.f32.mxu0 0.0
    %4063 = vmatmul.mubr.f32.gmra.mrb[0].mxu0 %v3843
    %v4064 = vpop.f32.mrb[0].mxu0
    %v4065 = vadd.f32 %v3911, %v4064
    %v4066 = vpop.f32.mrb[0].mxu0
    %4067 = vmatprep.mubr.f32.mxu0 0.0
    %4068 = vmatmul.mubr.f32.gmra.mrb[0].mxu0 %v3844
    %v4069 = vpop.f32.mrb[0].mxu0
    %v4070 = vadd.f32 %v3911, %v4069
    %v4071 = vpop.f32.mrb[0].mxu0
    %4072 = vmatprep.mubr.f32.mxu0 0.0
    %4073 = vmatmul.mubr.f32.gmra.mrb[0].mxu0 %v3845
    %v4074 = vpop.f32.mrb[0].mxu0
    %v4075 = vadd.f32 %v3911, %v4074
    %v4076 = vpop.f32.mrb[0].mxu0
    %4077 = vdwg.mxu0
    %v4079 = vsel %vm546, %v3982, 0
    %v4082 = vsel %vm546, %v3988, 0
    %v4085 = vsel %vm546, %v3984, 0
    %v4088 = vsel %vm546, %v3990, 0
    %4090 = vmatprep.subr.mxu0 0.0
    %4091 = vmatpush1.xpose.msra.mxu0 %v4085
    %4092 = vmatprep.subr.mxu0 0.0
    %4093 = vmatpush1.xpose.msra.mxu0 %v4088
    %4094 = vmatprep.subr.mxu0 0.0
    %4095 = vmatpush1.xpose.msra.mxu0 0.0
    %4096 = vmatprep.subr.mxu0 0.0
    %4097 = vmatpush1.xpose.msra.mxu0 0.0
    %4098 = vmatprep.subr.mxu0 0.0
    %4099 = vmatpush1.xpose.msra.mxu0 0.0
    %4100 = vmatprep.subr.mxu0 0.0
    %4101 = vmatpush1.xpose.msra.mxu0 0.0
    %4102 = vmatprep.subr.mxu0 0.0
    %4103 = vmatpush1.xpose.msra.mxu0 0.0
    %4104 = vmatprep.subr.mxu0 0.0
    %4105 = vmatpush1.xpose.msra.mxu0 0.0
    %4106 = vmatprep.subr.mxu0 0.0
    %4107 = vmatpush1.xpose.msra.mxu0 0.0
    %4108 = vmatprep.subr.mxu0 0.0
    %4109 = vmatpush1.xpose.msra.mxu0 0.0
    %4110 = vmatprep.subr.mxu0 0.0
    %4111 = vmatpush1.xpose.msra.mxu0 0.0
    %4112 = vmatprep.subr.mxu0 0.0
    %4113 = vmatpush1.xpose.msra.mxu0 0.0
    %4114 = vmatprep.subr.mxu0 0.0
    %4115 = vmatpush1.xpose.msra.mxu0 0.0
    %4116 = vmatprep.subr.mxu0 0.0
    %4117 = vmatpush1.xpose.msra.mxu0 0.0
    %4118 = vmatprep.subr.mxu0 0.0
    %4119 = vmatpush1.xpose.msra.mxu0 0.0
    %4120 = vmatprep.subr.mxu0 0.0
    %4121 = vmatpush1.xpose.msra.mxu0 0.0
    %4122 = vmatprep.subr.mxu0 0.0
    %4123 = vmatpush1.xpose.msra.mxu0 0.0
    %4124 = vmatprep.subr.mxu0 0.0
    %4125 = vmatpush1.xpose.msra.mxu0 0.0
    %4126 = vmatprep.subr.mxu0 0.0
    %4127 = vmatpush1.xpose.msra.mxu0 0.0
    %4128 = vmatprep.subr.mxu0 0.0
    %4129 = vmatpush1.xpose.msra.mxu0 0.0
    %4130 = vmatprep.subr.mxu0 0.0
    %4131 = vmatpush1.xpose.msra.mxu0 0.0
    %4132 = vmatprep.subr.mxu0 0.0
    %4133 = vmatpush1.xpose.msra.mxu0 0.0
    %4134 = vmatprep.subr.mxu0 0.0
    %4135 = vmatpush1.xpose.msra.mxu0 0.0
    %4136 = vmatprep.subr.mxu0 0.0
    %4137 = vmatpush1.xpose.msra.mxu0 0.0
    %4138 = vmatprep.subr.mxu0 0.0
    %4139 = vmatpush1.xpose.msra.mxu0 0.0
    %4140 = vmatprep.subr.mxu0 0.0
    %4141 = vmatpush1.xpose.msra.mxu0 0.0
    %4142 = vmatprep.subr.mxu0 0.0
    %4143 = vmatpush1.xpose.msra.mxu0 0.0
    %4144 = vmatprep.subr.mxu0 0.0
    %4145 = vmatpush1.xpose.msra.mxu0 0.0
    %4146 = vmatprep.subr.mxu0 0.0
    %4147 = vmatpush1.xpose.msra.mxu0 0.0
    %4148 = vmatprep.subr.mxu0 0.0
    %4149 = vmatpush1.xpose.msra.mxu0 0.0
    %4150 = vmatprep.subr.mxu0 0.0
    %4151 = vmatpush1.xpose.msra.mxu0 0.0
    %4152 = vmatprep.subr.mxu0 0.0
    %4153 = vmatpush1.xpose.msra.mxu0 0.0
    %4154 = vmatprep.mubr.f32.mxu0 0.0
    %4155 = vmatmul.mubr.f32.gmra.mrb[0].mxu0 %v4079
    %v4156 = vpop.f32.mrb[0].mxu0
    %v4157 = vadd.f32 0.0, %v4156
    %v4158 = vpop.f32.mrb[0].mxu0
    %4159 = vmatprep.mubr.f32.mxu0 0.0
    %4160 = vmatmul.mubr.f32.gmra.mrb[0].mxu0 %v4082
    %v4161 = vpop.f32.mrb[0].mxu0
    %v4162 = vadd.f32 0.0, %v4161
    %v4163 = vpop.f32.mrb[0].mxu0
    %4164 = vdwg.mxu0
    %v4165 = vmul.f32 %v4157, 0.125
    %v4166 = vmul.f32 %v4162, 0.125
    %v4167 = vsel %vm636, %v4165, -inf
    %4168 = vmax.xlane.f32.xlu0 %v4167
    %v4169 = vpop.xlane.xlu0 %4168
    %v4170 = vsel %vm640, %v4166, -inf
    %4171 = vmax.xlane.f32.xlu0 %v4170
    %v4172 = vpop.xlane.xlu0 %4171
    %v4173 = vsub.f32 %v4165, %v4169
    %v4174 = vsub.f32 %v4166, %v4172
    %v4175 = vmul.f32 %v4173, 1.442695
    %v4176 = vpow.pop %v4175
    %v4177 = vmul.f32 %v4174, 1.442695
    %v4178 = vpow.pop %v4177
    %v4179 = vsel %vm636, %v4176, 0.0
    %4180 = vadd.xlane.f32.xlu0 %v4179
    %v4181 = vpop.xlane.xlu0 %4180
    %v4182 = vsel %vm640, %v4178, 0.0
    %4183 = vadd.xlane.f32.xlu0 %v4182
    %v4184 = vpop.xlane.xlu0 %4183
    %v4185 = vrcp.pop %v4181
    %v4186 = vrcp.pop %v4184
    %v4187 = vmul.f32 %v4176, %v4185
    %v4188 = vmul.f32 %v4178, %v4186
    %v4190 = vsel %vm636, %v4187, 0
    %v4193 = vsel %vm636, %v4188, 0
    %v4196 = vsel %vm314, %v4070, 0
    %4198 = vmatprep.subr.mxu0 0.0
    %4199 = vmatpush1.msra.mxu0 %v4065
    %4200 = vmatprep.subr.mxu0 0.0
    %4201 = vmatpush1.msra.mxu0 %v4196
    %4202 = vmatprep.subr.mxu0 0.0
    %4203 = vmatpush1.msra.mxu0 0.0
    %4204 = vmatprep.subr.mxu0 0.0
    %4205 = vmatpush1.msra.mxu0 0.0
    %4206 = vmatprep.subr.mxu0 0.0
    %4207 = vmatpush1.msra.mxu0 0.0
    %4208 = vmatprep.subr.mxu0 0.0
    %4209 = vmatpush1.msra.mxu0 0.0
    %4210 = vmatprep.subr.mxu0 0.0
    %4211 = vmatpush1.msra.mxu0 0.0
    %4212 = vmatprep.subr.mxu0 0.0
    %4213 = vmatpush1.msra.mxu0 0.0
    %4214 = vmatprep.subr.mxu0 0.0
    %4215 = vmatpush1.msra.mxu0 0.0
    %4216 = vmatprep.subr.mxu0 0.0
    %4217 = vmatpush1.msra.mxu0 0.0
    %4218 = vmatprep.subr.mxu0 0.0
    %4219 = vmatpush1.msra.mxu0 0.0
    %4220 = vmatprep.subr.mxu0 0.0
    %4221 = vmatpush1.msra.mxu0 0.0
    %4222 = vmatprep.subr.mxu0 0.0
    %4223 = vmatpush1.msra.mxu0 0.0
    %4224 = vmatprep.subr.mxu0 0.0
    %4225 = vmatpush1.msra.mxu0 0.0
    %4226 = vmatprep.subr.mxu0 0.0
    %4227 = vmatpush1.msra.mxu0 0.0
    %4228 = vmatprep.subr.mxu0 0.0
    %4229 = vmatpush1.msra.mxu0 0.0
    %4230 = vmatprep.subr.mxu0 0.0
    %4231 = vmatpush1.msra.mxu0 0.0
    %4232 = vmatprep.subr.mxu0 0.0
    %4233 = vmatpush1.msra.mxu0 0.0
    %4234 = vmatprep.subr.mxu0 0.0
    %4235 = vmatpush1.msra.mxu0 0.0
    %4236 = vmatprep.subr.mxu0 0.0
    %4237 = vmatpush1.msra.mxu0 0.0
    %4238 = vmatprep.subr.mxu0 0.0
    %4239 = vmatpush1.msra.mxu0 0.0
    %4240 = vmatprep.subr.mxu0 0.0
    %4241 = vmatpush1.msra.mxu0 0.0
    %4242 = vmatprep.subr.mxu0 0.0
    %4243 = vmatpush1.msra.mxu0 0.0
    %4244 = vmatprep.subr.mxu0 0.0
    %4245 = vmatpush1.msra.mxu0 0.0
    %4246 = vmatprep.subr.mxu0 0.0
    %4247 = vmatpush1.msra.mxu0 0.0
    %4248 = vmatprep.subr.mxu0 0.0
    %4249 = vmatpush1.msra.mxu0 0.0
    %4250 = vmatprep.subr.mxu0 0.0
    %4251 = vmatpush1.msra.mxu0 0.0
    %4252 = vmatprep.subr.mxu0 0.0
    %4253 = vmatpush1.msra.mxu0 0.0
    %4254 = vmatprep.subr.mxu0 0.0
    %4255 = vmatpush1.msra.mxu0 0.0
    %4256 = vmatprep.subr.mxu0 0.0
    %4257 = vmatpush1.msra.mxu0 0.0
    %4258 = vmatprep.subr.mxu0 0.0
    %4259 = vmatpush1.msra.mxu0 0.0
    %4260 = vmatprep.subr.mxu0 0.0
    %4261 = vmatpush1.msra.mxu0 0.0
    %4262 = vmatprep.mubr.f32.mxu0 0.0
    %4263 = vmatmul.mubr.f32.gmra.mrb[0].mxu0 %v4190
    %v4264 = vpop.f32.mrb[0].mxu0
    %v4265 = vadd.f32 0.0, %v4264
    %v4266 = vpop.f32.mrb[0].mxu0
    %4267 = vmatprep.mubr.f32.mxu0 0.0
    %4268 = vmatmul.mubr.f32.gmra.mrb[0].mxu0 %v4193
    %v4269 = vpop.f32.mrb[0].mxu0
    %v4270 = vadd.f32 0.0, %v4269
    %v4271 = vpop.f32.mrb[0].mxu0
    %4272 = vdwg.mxu0
    %4273 = vrot.lane.b32.xlu0 %v3982, 64
    %v4274 = vpop.permute.xlu0 %4273
    %4275 = vrot.lane.b32.xlu0 %v3988, 64
    %v4276 = vpop.permute.xlu0 %4275
    %4277 = vrot.lane.b32.xlu0 %v3984, 64
    %v4278 = vpop.permute.xlu0 %4277
    %4279 = vrot.lane.b32.xlu0 %v3990, 64
    %v4280 = vpop.permute.xlu0 %4279
    %v4281 = vsel %vm546, %v4274, 0
    %v4283 = vsel %vm546, %v4276, 0
    %v4285 = vsel %vm546, %v4278, 0
    %v4287 = vsel %vm546, %v4280, 0
    %4289 = vmatprep.subr.mxu0 0.0
    %4290 = vmatpush1.xpose.msra.mxu0 %v4285
    %4291 = vmatprep.subr.mxu0 0.0
    %4292 = vmatpush1.xpose.msra.mxu0 %v4287
    %4293 = vmatprep.subr.mxu0 0.0
    %4294 = vmatpush1.xpose.msra.mxu0 0.0
    %4295 = vmatprep.subr.mxu0 0.0
    %4296 = vmatpush1.xpose.msra.mxu0 0.0
    %4297 = vmatprep.subr.mxu0 0.0
    %4298 = vmatpush1.xpose.msra.mxu0 0.0
    %4299 = vmatprep.subr.mxu0 0.0
    %4300 = vmatpush1.xpose.msra.mxu0 0.0
    %4301 = vmatprep.subr.mxu0 0.0
    %4302 = vmatpush1.xpose.msra.mxu0 0.0
    %4303 = vmatprep.subr.mxu0 0.0
    %4304 = vmatpush1.xpose.msra.mxu0 0.0
    %4305 = vmatprep.subr.mxu0 0.0
    %4306 = vmatpush1.xpose.msra.mxu0 0.0
    %4307 = vmatprep.subr.mxu0 0.0
    %4308 = vmatpush1.xpose.msra.mxu0 0.0
    %4309 = vmatprep.subr.mxu0 0.0
    %4310 = vmatpush1.xpose.msra.mxu0 0.0
    %4311 = vmatprep.subr.mxu0 0.0
    %4312 = vmatpush1.xpose.msra.mxu0 0.0
    %4313 = vmatprep.subr.mxu0 0.0
    %4314 = vmatpush1.xpose.msra.mxu0 0.0
    %4315 = vmatprep.subr.mxu0 0.0
    %4316 = vmatpush1.xpose.msra.mxu0 0.0
    %4317 = vmatprep.subr.mxu0 0.0
    %4318 = vmatpush1.xpose.msra.mxu0 0.0
    %4319 = vmatprep.subr.mxu0 0.0
    %4320 = vmatpush1.xpose.msra.mxu0 0.0
    %4321 = vmatprep.subr.mxu0 0.0
    %4322 = vmatpush1.xpose.msra.mxu0 0.0
    %4323 = vmatprep.subr.mxu0 0.0
    %4324 = vmatpush1.xpose.msra.mxu0 0.0
    %4325 = vmatprep.subr.mxu0 0.0
    %4326 = vmatpush1.xpose.msra.mxu0 0.0
    %4327 = vmatprep.subr.mxu0 0.0
    %4328 = vmatpush1.xpose.msra.mxu0 0.0
    %4329 = vmatprep.subr.mxu0 0.0
    %4330 = vmatpush1.xpose.msra.mxu0 0.0
    %4331 = vmatprep.subr.mxu0 0.0
    %4332 = vmatpush1.xpose.msra.mxu0 0.0
    %4333 = vmatprep.subr.mxu0 0.0
    %4334 = vmatpush1.xpose.msra.mxu0 0.0
    %4335 = vmatprep.subr.mxu0 0.0
    %4336 = vmatpush1.xpose.msra.mxu0 0.0
    %4337 = vmatprep.subr.mxu0 0.0
    %4338 = vmatpush1.xpose.msra.mxu0 0.0
    %4339 = vmatprep.subr.mxu0 0.0
    %4340 = vmatpush1.xpose.msra.mxu0 0.0
    %4341 = vmatprep.subr.mxu0 0.0
    %4342 = vmatpush1.xpose.msra.mxu0 0.0
    %4343 = vmatprep.subr.mxu0 0.0
    %4344 = vmatpush1.xpose.msra.mxu0 0.0
    %4345 = vmatprep.subr.mxu0 0.0
    %4346 = vmatpush1.xpose.msra.mxu0 0.0
    %4347 = vmatprep.subr.mxu0 0.0
    %4348 = vmatpush1.xpose.msra.mxu0 0.0
    %4349 = vmatprep.subr.mxu0 0.0
    %4350 = vmatpush1.xpose.msra.mxu0 0.0
    %4351 = vmatprep.subr.mxu0 0.0
    %4352 = vmatpush1.xpose.msra.mxu0 0.0
    %4353 = vmatprep.mubr.f32.mxu0 0.0
    %4354 = vmatmul.mubr.f32.gmra.mrb[0].mxu0 %v4281
    %v4355 = vpop.f32.mrb[0].mxu0
    %v4356 = vadd.f32 0.0, %v4355
    %v4357 = vpop.f32.mrb[0].mxu0
    %4358 = vmatprep.mubr.f32.mxu0 0.0
    %4359 = vmatmul.mubr.f32.gmra.mrb[0].mxu0 %v4283
    %v4360 = vpop.f32.mrb[0].mxu0
    %v4361 = vadd.f32 0.0, %v4360
    %v4362 = vpop.f32.mrb[0].mxu0
    %4363 = vdwg.mxu0
    %v4364 = vmul.f32 %v4356, 0.125
    %v4365 = vmul.f32 %v4361, 0.125
    %v4366 = vsel %vm636, %v4364, -inf
    %4367 = vmax.xlane.f32.xlu0 %v4366
    %v4368 = vpop.xlane.xlu0 %4367
    %v4369 = vsel %vm640, %v4365, -inf
    %4370 = vmax.xlane.f32.xlu0 %v4369
    %v4371 = vpop.xlane.xlu0 %4370
    %v4372 = vsub.f32 %v4364, %v4368
    %v4373 = vsub.f32 %v4365, %v4371
    %v4374 = vmul.f32 %v4372, 1.442695
    %v4375 = vpow.pop %v4374
    %v4376 = vmul.f32 %v4373, 1.442695
    %v4377 = vpow.pop %v4376
    %v4378 = vsel %vm636, %v4375, 0.0
    %4379 = vadd.xlane.f32.xlu0 %v4378
    %v4380 = vpop.xlane.xlu0 %4379
    %v4381 = vsel %vm640, %v4377, 0.0
    %4382 = vadd.xlane.f32.xlu0 %v4381
    %v4383 = vpop.xlane.xlu0 %4382
    %v4384 = vrcp.pop %v4380
    %v4385 = vrcp.pop %v4383
    %v4386 = vmul.f32 %v4375, %v4384
    %v4387 = vmul.f32 %v4377, %v4385
    %4389 = vrot.lane.b32.xlu0 %v4065, 64
    %v4390 = vpop.permute.xlu0 %4389
    %4391 = vrot.lane.b32.xlu0 %v4070, 64
    %v4392 = vpop.permute.xlu0 %4391
    %v4395 = vsel %vm636, %v4386, 0
    %v4398 = vsel %vm636, %v4387, 0
    %v4400 = vsel %vm314, %v4392, 0
    %4402 = vmatprep.subr.mxu0 0.0
    %4403 = vmatpush1.msra.mxu0 %v4390
    %4404 = vmatprep.subr.mxu0 0.0
    %4405 = vmatpush1.msra.mxu0 %v4400
    %4406 = vmatprep.subr.mxu0 0.0
    %4407 = vmatpush1.msra.mxu0 0.0
    %4408 = vmatprep.subr.mxu0 0.0
    %4409 = vmatpush1.msra.mxu0 0.0
    %4410 = vmatprep.subr.mxu0 0.0
    %4411 = vmatpush1.msra.mxu0 0.0
    %4412 = vmatprep.subr.mxu0 0.0
    %4413 = vmatpush1.msra.mxu0 0.0
    %4414 = vmatprep.subr.mxu0 0.0
    %4415 = vmatpush1.msra.mxu0 0.0
    %4416 = vmatprep.subr.mxu0 0.0
    %4417 = vmatpush1.msra.mxu0 0.0
    %4418 = vmatprep.subr.mxu0 0.0
    %4419 = vmatpush1.msra.mxu0 0.0
    %4420 = vmatprep.subr.mxu0 0.0
    %4421 = vmatpush1.msra.mxu0 0.0
    %4422 = vmatprep.subr.mxu0 0.0
    %4423 = vmatpush1.msra.mxu0 0.0
    %4424 = vmatprep.subr.mxu0 0.0
    %4425 = vmatpush1.msra.mxu0 0.0
    %4426 = vmatprep.subr.mxu0 0.0
    %4427 = vmatpush1.msra.mxu0 0.0
    %4428 = vmatprep.subr.mxu0 0.0
    %4429 = vmatpush1.msra.mxu0 0.0
    %4430 = vmatprep.subr.mxu0 0.0
    %4431 = vmatpush1.msra.mxu0 0.0
    %4432 = vmatprep.subr.mxu0 0.0
    %4433 = vmatpush1.msra.mxu0 0.0
    %4434 = vmatprep.subr.mxu0 0.0
    %4435 = vmatpush1.msra.mxu0 0.0
    %4436 = vmatprep.subr.mxu0 0.0
    %4437 = vmatpush1.msra.mxu0 0.0
    %4438 = vmatprep.subr.mxu0 0.0
    %4439 = vmatpush1.msra.mxu0 0.0
    %4440 = vmatprep.subr.mxu0 0.0
    %4441 = vmatpush1.msra.mxu0 0.0
    %4442 = vmatprep.subr.mxu0 0.0
    %4443 = vmatpush1.msra.mxu0 0.0
    %4444 = vmatprep.subr.mxu0 0.0
    %4445 = vmatpush1.msra.mxu0 0.0
    %4446 = vmatprep.subr.mxu0 0.0
    %4447 = vmatpush1.msra.mxu0 0.0
    %4448 = vmatprep.subr.mxu0 0.0
    %4449 = vmatpush1.msra.mxu0 0.0
    %4450 = vmatprep.subr.mxu0 0.0
    %4451 = vmatpush1.msra.mxu0 0.0
    %4452 = vmatprep.subr.mxu0 0.0
    %4453 = vmatpush1.msra.mxu0 0.0
    %4454 = vmatprep.subr.mxu0 0.0
    %4455 = vmatpush1.msra.mxu0 0.0
    %4456 = vmatprep.subr.mxu0 0.0
    %4457 = vmatpush1.msra.mxu0 0.0
    %4458 = vmatprep.subr.mxu0 0.0
    %4459 = vmatpush1.msra.mxu0 0.0
    %4460 = vmatprep.subr.mxu0 0.0
    %4461 = vmatpush1.msra.mxu0 0.0
    %4462 = vmatprep.subr.mxu0 0.0
    %4463 = vmatpush1.msra.mxu0 0.0
    %4464 = vmatprep.subr.mxu0 0.0
    %4465 = vmatpush1.msra.mxu0 0.0
    %4466 = vmatprep.mubr.f32.mxu0 0.0
    %4467 = vmatmul.mubr.f32.gmra.mrb[0].mxu0 %v4395
    %v4468 = vpop.f32.mrb[0].mxu0
    %v4469 = vadd.f32 0.0, %v4468
    %v4470 = vpop.f32.mrb[0].mxu0
    %4471 = vmatprep.mubr.f32.mxu0 0.0
    %4472 = vmatmul.mubr.f32.gmra.mrb[0].mxu0 %v4398
    %v4473 = vpop.f32.mrb[0].mxu0
    %v4474 = vadd.f32 0.0, %v4473
    %v4475 = vpop.f32.mrb[0].mxu0
    %4476 = vdwg.mxu0
    %4479 = vrot.lane.b32.xlu0 %v4469, 64
    %v4480 = vpop.permute.xlu0 %4479
    %4481 = vrot.lane.b32.xlu0 %v4474, 64
    %v4482 = vpop.permute.xlu0 %4481
    %v4485 = vsel %vm546, %v4265, %v4480
    %v4486 = vsel %vm546, %v4270, %v4482
    %v4488 = vrot.slane %v3988, 1
    %v4489 = vrot.slane %v3994, 1
    %v4490 = vsel %vm959, %v4488, %v4489
    %v4492 = vrot.slane %v3990, 1
    %v4493 = vrot.slane %v3996, 1
    %v4494 = vsel %vm959, %v4492, %v4493
    %v4495 = vsel %vm546, %v4490, 0
    %v4497 = vsel %vm546, %v4489, 0
    %v4499 = vsel %vm546, %v4494, 0
    %v4501 = vsel %vm546, %v4493, 0
    %4503 = vmatprep.subr.mxu0 0.0
    %4504 = vmatpush1.xpose.msra.mxu0 %v4499
    %4505 = vmatprep.subr.mxu0 0.0
    %4506 = vmatpush1.xpose.msra.mxu0 %v4501
    %4507 = vmatprep.subr.mxu0 0.0
    %4508 = vmatpush1.xpose.msra.mxu0 0.0
    %4509 = vmatprep.subr.mxu0 0.0
    %4510 = vmatpush1.xpose.msra.mxu0 0.0
    %4511 = vmatprep.subr.mxu0 0.0
    %4512 = vmatpush1.xpose.msra.mxu0 0.0
    %4513 = vmatprep.subr.mxu0 0.0
    %4514 = vmatpush1.xpose.msra.mxu0 0.0
    %4515 = vmatprep.subr.mxu0 0.0
    %4516 = vmatpush1.xpose.msra.mxu0 0.0
    %4517 = vmatprep.subr.mxu0 0.0
    %4518 = vmatpush1.xpose.msra.mxu0 0.0
    %4519 = vmatprep.subr.mxu0 0.0
    %4520 = vmatpush1.xpose.msra.mxu0 0.0
    %4521 = vmatprep.subr.mxu0 0.0
    %4522 = vmatpush1.xpose.msra.mxu0 0.0
    %4523 = vmatprep.subr.mxu0 0.0
    %4524 = vmatpush1.xpose.msra.mxu0 0.0
    %4525 = vmatprep.subr.mxu0 0.0
    %4526 = vmatpush1.xpose.msra.mxu0 0.0
    %4527 = vmatprep.subr.mxu0 0.0
    %4528 = vmatpush1.xpose.msra.mxu0 0.0
    %4529 = vmatprep.subr.mxu0 0.0
    %4530 = vmatpush1.xpose.msra.mxu0 0.0
    %4531 = vmatprep.subr.mxu0 0.0
    %4532 = vmatpush1.xpose.msra.mxu0 0.0
    %4533 = vmatprep.subr.mxu0 0.0
    %4534 = vmatpush1.xpose.msra.mxu0 0.0
    %4535 = vmatprep.subr.mxu0 0.0
    %4536 = vmatpush1.xpose.msra.mxu0 0.0
    %4537 = vmatprep.subr.mxu0 0.0
    %4538 = vmatpush1.xpose.msra.mxu0 0.0
    %4539 = vmatprep.subr.mxu0 0.0
    %4540 = vmatpush1.xpose.msra.mxu0 0.0
    %4541 = vmatprep.subr.mxu0 0.0
    %4542 = vmatpush1.xpose.msra.mxu0 0.0
    %4543 = vmatprep.subr.mxu0 0.0
    %4544 = vmatpush1.xpose.msra.mxu0 0.0
    %4545 = vmatprep.subr.mxu0 0.0
    %4546 = vmatpush1.xpose.msra.mxu0 0.0
    %4547 = vmatprep.subr.mxu0 0.0
    %4548 = vmatpush1.xpose.msra.mxu0 0.0
    %4549 = vmatprep.subr.mxu0 0.0
    %4550 = vmatpush1.xpose.msra.mxu0 0.0
    %4551 = vmatprep.subr.mxu0 0.0
    %4552 = vmatpush1.xpose.msra.mxu0 0.0
    %4553 = vmatprep.subr.mxu0 0.0
    %4554 = vmatpush1.xpose.msra.mxu0 0.0
    %4555 = vmatprep.subr.mxu0 0.0
    %4556 = vmatpush1.xpose.msra.mxu0 0.0
    %4557 = vmatprep.subr.mxu0 0.0
    %4558 = vmatpush1.xpose.msra.mxu0 0.0
    %4559 = vmatprep.subr.mxu0 0.0
    %4560 = vmatpush1.xpose.msra.mxu0 0.0
    %4561 = vmatprep.subr.mxu0 0.0
    %4562 = vmatpush1.xpose.msra.mxu0 0.0
    %4563 = vmatprep.subr.mxu0 0.0
    %4564 = vmatpush1.xpose.msra.mxu0 0.0
    %4565 = vmatprep.subr.mxu0 0.0
    %4566 = vmatpush1.xpose.msra.mxu0 0.0
    %4567 = vmatprep.mubr.f32.mxu0 0.0
    %4568 = vmatmul.mubr.f32.gmra.mrb[0].mxu0 %v4495
    %v4569 = vpop.f32.mrb[0].mxu0
    %v4570 = vadd.f32 0.0, %v4569
    %v4571 = vpop.f32.mrb[0].mxu0
    %4572 = vmatprep.mubr.f32.mxu0 0.0
    %4573 = vmatmul.mubr.f32.gmra.mrb[0].mxu0 %v4497
    %v4574 = vpop.f32.mrb[0].mxu0
    %v4575 = vadd.f32 0.0, %v4574
    %v4576 = vpop.f32.mrb[0].mxu0
    %4577 = vdwg.mxu0
    %v4578 = vmul.f32 %v4570, 0.125
    %v4579 = vmul.f32 %v4575, 0.125
    %v4580 = vsel %vm636, %v4578, -inf
    %4581 = vmax.xlane.f32.xlu0 %v4580
    %v4582 = vpop.xlane.xlu0 %4581
    %v4583 = vsel %vm640, %v4579, -inf
    %4584 = vmax.xlane.f32.xlu0 %v4583
    %v4585 = vpop.xlane.xlu0 %4584
    %v4586 = vsub.f32 %v4578, %v4582
    %v4587 = vsub.f32 %v4579, %v4585
    %v4588 = vmul.f32 %v4586, 1.442695
    %v4589 = vpow.pop %v4588
    %v4590 = vmul.f32 %v4587, 1.442695
    %v4591 = vpow.pop %v4590
    %v4592 = vsel %vm636, %v4589, 0.0
    %4593 = vadd.xlane.f32.xlu0 %v4592
    %v4594 = vpop.xlane.xlu0 %4593
    %v4595 = vsel %vm640, %v4591, 0.0
    %4596 = vadd.xlane.f32.xlu0 %v4595
    %v4597 = vpop.xlane.xlu0 %4596
    %v4598 = vrcp.pop %v4594
    %v4599 = vrcp.pop %v4597
    %v4600 = vmul.f32 %v4589, %v4598
    %v4601 = vmul.f32 %v4591, %v4599
    %v4603 = vrot.slane %v4070, 1
    %v4604 = vrot.slane %v4075, 1
    %v4605 = vsel %vm959, %v4603, %v4604
    %v4608 = vsel %vm636, %v4600, 0
    %v4611 = vsel %vm636, %v4601, 0
    %v4613 = vsel %vm314, %v4604, 0
    %4615 = vmatprep.subr.mxu0 0.0
    %4616 = vmatpush1.msra.mxu0 %v4605
    %4617 = vmatprep.subr.mxu0 0.0
    %4618 = vmatpush1.msra.mxu0 %v4613
    %4619 = vmatprep.subr.mxu0 0.0
    %4620 = vmatpush1.msra.mxu0 0.0
    %4621 = vmatprep.subr.mxu0 0.0
    %4622 = vmatpush1.msra.mxu0 0.0
    %4623 = vmatprep.subr.mxu0 0.0
    %4624 = vmatpush1.msra.mxu0 0.0
    %4625 = vmatprep.subr.mxu0 0.0
    %4626 = vmatpush1.msra.mxu0 0.0
    %4627 = vmatprep.subr.mxu0 0.0
    %4628 = vmatpush1.msra.mxu0 0.0
    %4629 = vmatprep.subr.mxu0 0.0
    %4630 = vmatpush1.msra.mxu0 0.0
    %4631 = vmatprep.subr.mxu0 0.0
    %4632 = vmatpush1.msra.mxu0 0.0
    %4633 = vmatprep.subr.mxu0 0.0
    %4634 = vmatpush1.msra.mxu0 0.0
    %4635 = vmatprep.subr.mxu0 0.0
    %4636 = vmatpush1.msra.mxu0 0.0
    %4637 = vmatprep.subr.mxu0 0.0
    %4638 = vmatpush1.msra.mxu0 0.0
    %4639 = vmatprep.subr.mxu0 0.0
    %4640 = vmatpush1.msra.mxu0 0.0
    %4641 = vmatprep.subr.mxu0 0.0
    %4642 = vmatpush1.msra.mxu0 0.0
    %4643 = vmatprep.subr.mxu0 0.0
    %4644 = vmatpush1.msra.mxu0 0.0
    %4645 = vmatprep.subr.mxu0 0.0
    %4646 = vmatpush1.msra.mxu0 0.0
    %4647 = vmatprep.subr.mxu0 0.0
    %4648 = vmatpush1.msra.mxu0 0.0
    %4649 = vmatprep.subr.mxu0 0.0
    %4650 = vmatpush1.msra.mxu0 0.0
    %4651 = vmatprep.subr.mxu0 0.0
    %4652 = vmatpush1.msra.mxu0 0.0
    %4653 = vmatprep.subr.mxu0 0.0
    %4654 = vmatpush1.msra.mxu0 0.0
    %4655 = vmatprep.subr.mxu0 0.0
    %4656 = vmatpush1.msra.mxu0 0.0
    %4657 = vmatprep.subr.mxu0 0.0
    %4658 = vmatpush1.msra.mxu0 0.0
    %4659 = vmatprep.subr.mxu0 0.0
    %4660 = vmatpush1.msra.mxu0 0.0
    %4661 = vmatprep.subr.mxu0 0.0
    %4662 = vmatpush1.msra.mxu0 0.0
    %4663 = vmatprep.subr.mxu0 0.0
    %4664 = vmatpush1.msra.mxu0 0.0
    %4665 = vmatprep.subr.mxu0 0.0
    %4666 = vmatpush1.msra.mxu0 0.0
    %4667 = vmatprep.subr.mxu0 0.0
    %4668 = vmatpush1.msra.mxu0 0.0
    %4669 = vmatprep.subr.mxu0 0.0
    %4670 = vmatpush1.msra.mxu0 0.0
    %4671 = vmatprep.subr.mxu0 0.0
    %4672 = vmatpush1.msra.mxu0 0.0
    %4673 = vmatprep.subr.mxu0 0.0
    %4674 = vmatpush1.msra.mxu0 0.0
    %4675 = vmatprep.subr.mxu0 0.0
    %4676 = vmatpush1.msra.mxu0 0.0
    %4677 = vmatprep.subr.mxu0 0.0
    %4678 = vmatpush1.msra.mxu0 0.0
    %4679 = vmatprep.mubr.f32.mxu0 0.0
    %4680 = vmatmul.mubr.f32.gmra.mrb[0].mxu0 %v4608
    %v4681 = vpop.f32.mrb[0].mxu0
    %v4682 = vadd.f32 0.0, %v4681
    %v4683 = vpop.f32.mrb[0].mxu0
    %4684 = vmatprep.mubr.f32.mxu0 0.0
    %4685 = vmatmul.mubr.f32.gmra.mrb[0].mxu0 %v4611
    %v4686 = vpop.f32.mrb[0].mxu0
    %v4687 = vadd.f32 0.0, %v4686
    %v4688 = vpop.f32.mrb[0].mxu0
    %4689 = vdwg.mxu0
    %4690 = vrot.lane.b32.xlu0 %v4490, 64
    %v4691 = vpop.permute.xlu0 %4690
    %4692 = vrot.lane.b32.xlu0 %v4489, 64
    %v4693 = vpop.permute.xlu0 %4692
    %4694 = vrot.lane.b32.xlu0 %v4494, 64
    %v4695 = vpop.permute.xlu0 %4694
    %4696 = vrot.lane.b32.xlu0 %v4493, 64
    %v4697 = vpop.permute.xlu0 %4696
    %v4698 = vsel %vm546, %v4691, 0
    %v4700 = vsel %vm546, %v4693, 0
    %v4702 = vsel %vm546, %v4695, 0
    %v4704 = vsel %vm546, %v4697, 0
    %4706 = vmatprep.subr.mxu0 0.0
    %4707 = vmatpush1.xpose.msra.mxu0 %v4702
    %4708 = vmatprep.subr.mxu0 0.0
    %4709 = vmatpush1.xpose.msra.mxu0 %v4704
    %4710 = vmatprep.subr.mxu0 0.0
    %4711 = vmatpush1.xpose.msra.mxu0 0.0
    %4712 = vmatprep.subr.mxu0 0.0
    %4713 = vmatpush1.xpose.msra.mxu0 0.0
    %4714 = vmatprep.subr.mxu0 0.0
    %4715 = vmatpush1.xpose.msra.mxu0 0.0
    %4716 = vmatprep.subr.mxu0 0.0
    %4717 = vmatpush1.xpose.msra.mxu0 0.0
    %4718 = vmatprep.subr.mxu0 0.0
    %4719 = vmatpush1.xpose.msra.mxu0 0.0
    %4720 = vmatprep.subr.mxu0 0.0
    %4721 = vmatpush1.xpose.msra.mxu0 0.0
    %4722 = vmatprep.subr.mxu0 0.0
    %4723 = vmatpush1.xpose.msra.mxu0 0.0
    %4724 = vmatprep.subr.mxu0 0.0
    %4725 = vmatpush1.xpose.msra.mxu0 0.0
    %4726 = vmatprep.subr.mxu0 0.0
    %4727 = vmatpush1.xpose.msra.mxu0 0.0
    %4728 = vmatprep.subr.mxu0 0.0
    %4729 = vmatpush1.xpose.msra.mxu0 0.0
    %4730 = vmatprep.subr.mxu0 0.0
    %4731 = vmatpush1.xpose.msra.mxu0 0.0
    %4732 = vmatprep.subr.mxu0 0.0
    %4733 = vmatpush1.xpose.msra.mxu0 0.0
    %4734 = vmatprep.subr.mxu0 0.0
    %4735 = vmatpush1.xpose.msra.mxu0 0.0
    %4736 = vmatprep.subr.mxu0 0.0
    %4737 = vmatpush1.xpose.msra.mxu0 0.0
    %4738 = vmatprep.subr.mxu0 0.0
    %4739 = vmatpush1.xpose.msra.mxu0 0.0
    %4740 = vmatprep.subr.mxu0 0.0
    %4741 = vmatpush1.xpose.msra.mxu0 0.0
    %4742 = vmatprep.subr.mxu0 0.0
    %4743 = vmatpush1.xpose.msra.mxu0 0.0
    %4744 = vmatprep.subr.mxu0 0.0
    %4745 = vmatpush1.xpose.msra.mxu0 0.0
    %4746 = vmatprep.subr.mxu0 0.0
    %4747 = vmatpush1.xpose.msra.mxu0 0.0
    %4748 = vmatprep.subr.mxu0 0.0
    %4749 = vmatpush1.xpose.msra.mxu0 0.0
    %4750 = vmatprep.subr.mxu0 0.0
    %4751 = vmatpush1.xpose.msra.mxu0 0.0
    %4752 = vmatprep.subr.mxu0 0.0
    %4753 = vmatpush1.xpose.msra.mxu0 0.0
    %4754 = vmatprep.subr.mxu0 0.0
    %4755 = vmatpush1.xpose.msra.mxu0 0.0
    %4756 = vmatprep.subr.mxu0 0.0
    %4757 = vmatpush1.xpose.msra.mxu0 0.0
    %4758 = vmatprep.subr.mxu0 0.0
    %4759 = vmatpush1.xpose.msra.mxu0 0.0
    %4760 = vmatprep.subr.mxu0 0.0
    %4761 = vmatpush1.xpose.msra.mxu0 0.0
    %4762 = vmatprep.subr.mxu0 0.0
    %4763 = vmatpush1.xpose.msra.mxu0 0.0
    %4764 = vmatprep.subr.mxu0 0.0
    %4765 = vmatpush1.xpose.msra.mxu0 0.0
    %4766 = vmatprep.subr.mxu0 0.0
    %4767 = vmatpush1.xpose.msra.mxu0 0.0
    %4768 = vmatprep.subr.mxu0 0.0
    %4769 = vmatpush1.xpose.msra.mxu0 0.0
    %4770 = vmatprep.mubr.f32.mxu0 0.0
    %4771 = vmatmul.mubr.f32.gmra.mrb[0].mxu0 %v4698
    %v4772 = vpop.f32.mrb[0].mxu0
    %v4773 = vadd.f32 0.0, %v4772
    %v4774 = vpop.f32.mrb[0].mxu0
    %4775 = vmatprep.mubr.f32.mxu0 0.0
    %4776 = vmatmul.mubr.f32.gmra.mrb[0].mxu0 %v4700
    %v4777 = vpop.f32.mrb[0].mxu0
    %v4778 = vadd.f32 0.0, %v4777
    %v4779 = vpop.f32.mrb[0].mxu0
    %4780 = vdwg.mxu0
    %v4781 = vmul.f32 %v4773, 0.125
    %v4782 = vmul.f32 %v4778, 0.125
    %v4783 = vsel %vm636, %v4781, -inf
    %4784 = vmax.xlane.f32.xlu0 %v4783
    %v4785 = vpop.xlane.xlu0 %4784
    %v4786 = vsel %vm640, %v4782, -inf
    %4787 = vmax.xlane.f32.xlu0 %v4786
    %v4788 = vpop.xlane.xlu0 %4787
    %v4789 = vsub.f32 %v4781, %v4785
    %v4790 = vsub.f32 %v4782, %v4788
    %v4791 = vmul.f32 %v4789, 1.442695
    %v4792 = vpow.pop %v4791
    %v4793 = vmul.f32 %v4790, 1.442695
    %v4794 = vpow.pop %v4793
    %v4795 = vsel %vm636, %v4792, 0.0
    %4796 = vadd.xlane.f32.xlu0 %v4795
    %v4797 = vpop.xlane.xlu0 %4796
    %v4798 = vsel %vm640, %v4794, 0.0
    %4799 = vadd.xlane.f32.xlu0 %v4798
    %v4800 = vpop.xlane.xlu0 %4799
    %v4801 = vrcp.pop %v4797
    %v4802 = vrcp.pop %v4800
    %v4803 = vmul.f32 %v4792, %v4801
    %v4804 = vmul.f32 %v4794, %v4802
    %4805 = vrot.lane.b32.xlu0 %v4605, 64
    %v4806 = vpop.permute.xlu0 %4805
    %4807 = vrot.lane.b32.xlu0 %v4604, 64
    %v4808 = vpop.permute.xlu0 %4807
    %v4811 = vsel %vm636, %v4803, 0
    %v4814 = vsel %vm636, %v4804, 0
    %v4816 = vsel %vm314, %v4808, 0
    %4818 = vmatprep.subr.mxu0 0.0
    %4819 = vmatpush1.msra.mxu0 %v4806
    %4820 = vmatprep.subr.mxu0 0.0
    %4821 = vmatpush1.msra.mxu0 %v4816
    %4822 = vmatprep.subr.mxu0 0.0
    %4823 = vmatpush1.msra.mxu0 0.0
    %4824 = vmatprep.subr.mxu0 0.0
    %4825 = vmatpush1.msra.mxu0 0.0
    %4826 = vmatprep.subr.mxu0 0.0
    %4827 = vmatpush1.msra.mxu0 0.0
    %4828 = vmatprep.subr.mxu0 0.0
    %4829 = vmatpush1.msra.mxu0 0.0
    %4830 = vmatprep.subr.mxu0 0.0
    %4831 = vmatpush1.msra.mxu0 0.0
    %4832 = vmatprep.subr.mxu0 0.0
    %4833 = vmatpush1.msra.mxu0 0.0
    %4834 = vmatprep.subr.mxu0 0.0
    %4835 = vmatpush1.msra.mxu0 0.0
    %4836 = vmatprep.subr.mxu0 0.0
    %4837 = vmatpush1.msra.mxu0 0.0
    %4838 = vmatprep.subr.mxu0 0.0
    %4839 = vmatpush1.msra.mxu0 0.0
    %4840 = vmatprep.subr.mxu0 0.0
    %4841 = vmatpush1.msra.mxu0 0.0
    %4842 = vmatprep.subr.mxu0 0.0
    %4843 = vmatpush1.msra.mxu0 0.0
    %4844 = vmatprep.subr.mxu0 0.0
    %4845 = vmatpush1.msra.mxu0 0.0
    %4846 = vmatprep.subr.mxu0 0.0
    %4847 = vmatpush1.msra.mxu0 0.0
    %4848 = vmatprep.subr.mxu0 0.0
    %4849 = vmatpush1.msra.mxu0 0.0
    %4850 = vmatprep.subr.mxu0 0.0
    %4851 = vmatpush1.msra.mxu0 0.0
    %4852 = vmatprep.subr.mxu0 0.0
    %4853 = vmatpush1.msra.mxu0 0.0
    %4854 = vmatprep.subr.mxu0 0.0
    %4855 = vmatpush1.msra.mxu0 0.0
    %4856 = vmatprep.subr.mxu0 0.0
    %4857 = vmatpush1.msra.mxu0 0.0
    %4858 = vmatprep.subr.mxu0 0.0
    %4859 = vmatpush1.msra.mxu0 0.0
    %4860 = vmatprep.subr.mxu0 0.0
    %4861 = vmatpush1.msra.mxu0 0.0
    %4862 = vmatprep.subr.mxu0 0.0
    %4863 = vmatpush1.msra.mxu0 0.0
    %4864 = vmatprep.subr.mxu0 0.0
    %4865 = vmatpush1.msra.mxu0 0.0
    %4866 = vmatprep.subr.mxu0 0.0
    %4867 = vmatpush1.msra.mxu0 0.0
    %4868 = vmatprep.subr.mxu0 0.0
    %4869 = vmatpush1.msra.mxu0 0.0
    %4870 = vmatprep.subr.mxu0 0.0
    %4871 = vmatpush1.msra.mxu0 0.0
    %4872 = vmatprep.subr.mxu0 0.0
    %4873 = vmatpush1.msra.mxu0 0.0
    %4874 = vmatprep.subr.mxu0 0.0
    %4875 = vmatpush1.msra.mxu0 0.0
    %4876 = vmatprep.subr.mxu0 0.0
    %4877 = vmatpush1.msra.mxu0 0.0
    %4878 = vmatprep.subr.mxu0 0.0
    %4879 = vmatpush1.msra.mxu0 0.0
    %4880 = vmatprep.subr.mxu0 0.0
    %4881 = vmatpush1.msra.mxu0 0.0
    %4882 = vmatprep.mubr.f32.mxu0 0.0
    %4883 = vmatmul.mubr.f32.gmra.mrb[0].mxu0 %v4811
    %v4884 = vpop.f32.mrb[0].mxu0
    %v4885 = vadd.f32 0.0, %v4884
    %v4886 = vpop.f32.mrb[0].mxu0
    %4887 = vmatprep.mubr.f32.mxu0 0.0
    %4888 = vmatmul.mubr.f32.gmra.mrb[0].mxu0 %v4814
    %v4889 = vpop.f32.mrb[0].mxu0
    %v4890 = vadd.f32 0.0, %v4889
    %v4891 = vpop.f32.mrb[0].mxu0
    %4892 = vdwg.mxu0
    %4895 = vrot.lane.b32.xlu0 %v4885, 64
    %v4896 = vpop.permute.xlu0 %4895
    %4897 = vrot.lane.b32.xlu0 %v4890, 64
    %v4898 = vpop.permute.xlu0 %4897
    %v4901 = vsel %vm546, %v4682, %v4896
    %v4902 = vsel %vm546, %v4687, %v4898
    %v4905 = vrot.slane %v4901, 7
    %v4906 = vrot.slane %v4902, 7
    %v4907 = vsel %vm314, %v4905, %v4906
    %v4910 = vsel %vm314, %v4486, %v4905
    %s4911 = scalar_lea.vmem %s5, 256
    %v4912 = vld [vmem:[%s4911] sm:$0xff]
    %v4913 = vld [vmem:[%s4911 + $0x8] sm:$0xff]
    %v4914 = vld [vmem:[%s4911 + $0x10] sm:$0xff]
    %v4915 = vld [vmem:[%s4911 + $0x18] sm:$0xff]
    %v4916 = vld [vmem:[%s4911 + $0x20] sm:$0xff]
    %v4917 = vld [vmem:[%s4911 + $0x28] sm:$0xff]
    %v4918 = vld [vmem:[%s4911 + $0x30] sm:$0xff]
    %v4919 = vld [vmem:[%s4911 + $0x38] sm:$0xff]
    %v4920 = vld [vmem:[%s4911 + $0x40] sm:$0xff]
    %v4921 = vld [vmem:[%s4911 + $0x48] sm:$0xff]
    %v4922 = vld [vmem:[%s4911 + $0x50] sm:$0xff]
    %v4923 = vld [vmem:[%s4911 + $0x58] sm:$0xff]
    %v4924 = vld [vmem:[%s4911 + $0x60] sm:$0xff]
    %v4925 = vld [vmem:[%s4911 + $0x68] sm:$0xff]
    %v4926 = vld [vmem:[%s4911 + $0x70] sm:$0xff]
    %v4927 = vld [vmem:[%s4911 + $0x78] sm:$0xff]
    %v4928 = vlaneseq
    %v4929 = vshrl.u32 %v4928, 7
    %v4930 = vsub.s32 0, %v4929
    %v4931 = vrot.slane %v3847, %v4930
    %4932 = vmatprep.subr.mxu0 0.0
    %4933 = vmatpush1.msra.mxu0 %v4912
    %4934 = vmatprep.subr.mxu0 0.0
    %4935 = vmatpush1.msra.mxu0 %v4913
    %4936 = vmatprep.subr.mxu0 0.0
    %4937 = vmatpush1.msra.mxu0 %v4914
    %4938 = vmatprep.subr.mxu0 0.0
    %4939 = vmatpush1.msra.mxu0 %v4915
    %4940 = vmatprep.subr.mxu0 0.0
    %4941 = vmatpush1.msra.mxu0 %v4916
    %4942 = vmatprep.subr.mxu0 0.0
    %4943 = vmatpush1.msra.mxu0 %v4917
    %4944 = vmatprep.subr.mxu0 0.0
    %4945 = vmatpush1.msra.mxu0 %v4918
    %4946 = vmatprep.subr.mxu0 0.0
    %4947 = vmatpush1.msra.mxu0 %v4919
    %4948 = vmatprep.subr.mxu0 0.0
    %4949 = vmatpush1.msra.mxu0 %v4920
    %4950 = vmatprep.subr.mxu0 0.0
    %4951 = vmatpush1.msra.mxu0 %v4921
    %4952 = vmatprep.subr.mxu0 0.0
    %4953 = vmatpush1.msra.mxu0 %v4922
    %4954 = vmatprep.subr.mxu0 0.0
    %4955 = vmatpush1.msra.mxu0 %v4923
    %4956 = vmatprep.subr.mxu0 0.0
    %4957 = vmatpush1.msra.mxu0 %v4924
    %4958 = vmatprep.subr.mxu0 0.0
    %4959 = vmatpush1.msra.mxu0 %v4925
    %4960 = vmatprep.subr.mxu0 0.0
    %4961 = vmatpush1.msra.mxu0 %v4926
    %4962 = vmatprep.subr.mxu0 0.0
    %4963 = vmatpush1.msra.mxu0 %v4927
    %4964 = vmatprep.subr.mxu0 0.0
    %4965 = vmatpush1.msra.mxu0 0.0
    %4966 = vmatprep.subr.mxu0 0.0
    %4967 = vmatpush1.msra.mxu0 0.0
    %4968 = vmatprep.subr.mxu0 0.0
    %4969 = vmatpush1.msra.mxu0 0.0
    %4970 = vmatprep.subr.mxu0 0.0
    %4971 = vmatpush1.msra.mxu0 0.0
    %4972 = vmatprep.subr.mxu0 0.0
    %4973 = vmatpush1.msra.mxu0 0.0
    %4974 = vmatprep.subr.mxu0 0.0
    %4975 = vmatpush1.msra.mxu0 0.0
    %4976 = vmatprep.subr.mxu0 0.0
    %4977 = vmatpush1.msra.mxu0 0.0
    %4978 = vmatprep.subr.mxu0 0.0
    %4979 = vmatpush1.msra.mxu0 0.0
    %4980 = vmatprep.subr.mxu0 0.0
    %4981 = vmatpush1.msra.mxu0 0.0
    %4982 = vmatprep.subr.mxu0 0.0
    %4983 = vmatpush1.msra.mxu0 0.0
    %4984 = vmatprep.subr.mxu0 0.0
    %4985 = vmatpush1.msra.mxu0 0.0
    %4986 = vmatprep.subr.mxu0 0.0
    %4987 = vmatpush1.msra.mxu0 0.0
    %4988 = vmatprep.subr.mxu0 0.0
    %4989 = vmatpush1.msra.mxu0 0.0
    %4990 = vmatprep.subr.mxu0 0.0
    %4991 = vmatpush1.msra.mxu0 0.0
    %4992 = vmatprep.subr.mxu0 0.0
    %4993 = vmatpush1.msra.mxu0 0.0
    %4994 = vmatprep.subr.mxu0 0.0
    %4995 = vmatpush1.msra.mxu0 0.0
    %4996 = vmatprep.mubr.f32.mxu0 0.0
    %4997 = vmatmul.mubr.f32.gmra.mrb[0].mxu0 %v4485
    %v4998 = vpop.f32.mrb[0].mxu0
    %v4999 = vadd.f32 %v4931, %v4998
    %v5000 = vpop.f32.mrb[0].mxu0
    %5001 = vmatprep.mubr.f32.mxu0 0.0
    %5002 = vmatmul.mubr.f32.gmra.mrb[0].mxu0 %v4910
    %v5003 = vpop.f32.mrb[0].mxu0
    %v5004 = vadd.f32 %v4931, %v5003
    %v5005 = vpop.f32.mrb[0].mxu0
    %5006 = vmatprep.mubr.f32.mxu0 0.0
    %5007 = vmatmul.mubr.f32.gmra.mrb[0].mxu0 %v4907
    %v5008 = vpop.f32.mrb[0].mxu0
    %v5009 = vadd.f32 %v4931, %v5008
    %v5010 = vpop.f32.mrb[0].mxu0
    %5011 = vdwg.mxu0
    %v5012 = vadd.f32 %v3843, %v4999
    %v5013 = vadd.f32 %v3844, %v5004
    %v5014 = vadd.f32 %v3845, %v5009
    %5015 = vadd.xlane.f32.xlu0 %v5012
    %v5016 = vpop.xlane.xlu0 %5015
    %5017 = vadd.xlane.f32.xlu0 %v5013
    %v5018 = vpop.xlane.xlu0 %5017
    %v5019 = vsel %vm1490, %v5014, 0.0
    %5020 = vadd.xlane.f32.xlu0 %v5019
    %v5021 = vpop.xlane.xlu0 %5020
    %v5022 = vmul.f32 %v5016, %v1494
    %v5023 = vmul.f32 %v5018, %v1494
    %v5024 = vmul.f32 %v5021, %v1494
    %v5025 = vsub.f32 %v5012, %v5022
    %v5026 = vsub.f32 %v5013, %v5023
    %v5027 = vsub.f32 %v5014, %v5024
    %v5028 = vmul.f32 %v5025, %v5025
    %v5029 = vmul.f32 %v5026, %v5026
    %v5030 = vmul.f32 %v5027, %v5027
    %5031 = vadd.xlane.f32.xlu0 %v5028
    %v5032 = vpop.xlane.xlu0 %5031
    %5033 = vadd.xlane.f32.xlu0 %v5029
    %v5034 = vpop.xlane.xlu0 %5033
    %v5035 = vsel %vm1490, %v5030, 0.0
    %5036 = vadd.xlane.f32.xlu0 %v5035
    %v5037 = vpop.xlane.xlu0 %5036
    %v5038 = vmul.f32 %v5032, %v1494
    %v5039 = vmul.f32 %v5034, %v1494
    %v5040 = vmul.f32 %v5037, %v1494
    %v5041 = vadd.f32 %v5038, 1e-05
    %v5042 = vadd.f32 %v5039, 1e-05
    %v5043 = vadd.f32 %v5040, 1e-05
    %v5044 = vrsqrt.pop %v5041
    %v5045 = vrsqrt.pop %v5042
    %v5046 = vrsqrt.pop %v5043
    %v5047 = vmul.f32 %v5025, %v5044
    %v5048 = vmul.f32 %v5026, %v5045
    %v5049 = vmul.f32 %v5027, %v5046
    %v5050 = vlaneseq
    %v5051 = vshrl.u32 %v5050, 7
    %v5052 = vsub.s32 1, %v5051
    %v5053 = vrot.slane %v3847, %v5052
    %v5054 = vmul.f32 %v5047, %v5053
    %v5055 = vmul.f32 %v5048, %v5053
    %v5056 = vmul.f32 %v5049, %v5053
    %v5057 = vlaneseq
    %v5058 = vshrl.u32 %v5057, 7
    %v5059 = vsub.s32 2, %v5058
    %v5060 = vrot.slane %v3847, %v5059
    %v5061 = vadd.f32 %v5054, %v5060
    %v5062 = vadd.f32 %v5055, %v5060
    %v5063 = vadd.f32 %v5056, %v5060
    %s5064 = scalar_lea.vmem %s7, 1024
    %v5065 = vld [vmem:[%s5064] sm:$0xff]
    %v5066 = vld [vmem:[%s5064 + $0x8] sm:$0xff]
    %v5067 = vld [vmem:[%s5064 + $0x10] sm:$0xff]
    %v5068 = vld [vmem:[%s5064 + $0x18] sm:$0xff]
    %v5069 = vld [vmem:[%s5064 + $0x20] sm:$0xff]
    %v5070 = vld [vmem:[%s5064 + $0x28] sm:$0xff]
    %v5071 = vld [vmem:[%s5064 + $0x30] sm:$0xff]
    %v5072 = vld [vmem:[%s5064 + $0x38] sm:$0xff]
    %v5073 = vld [vmem:[%s5064 + $0x40] sm:$0xff]
    %v5074 = vld [vmem:[%s5064 + $0x48] sm:$0xff]
    %v5075 = vld [vmem:[%s5064 + $0x50] sm:$0xff]
    %v5076 = vld [vmem:[%s5064 + $0x58] sm:$0xff]
    %v5077 = vld [vmem:[%s5064 + $0x60] sm:$0xff]
    %v5078 = vld [vmem:[%s5064 + $0x68] sm:$0xff]
    %v5079 = vld [vmem:[%s5064 + $0x70] sm:$0xff]
    %v5080 = vld [vmem:[%s5064 + $0x78] sm:$0xff]
    %v5081 = vld [vmem:[%s5064 + $0x80] sm:$0xff]
    %v5082 = vld [vmem:[%s5064 + $0x88] sm:$0xff]
    %v5083 = vld [vmem:[%s5064 + $0x90] sm:$0xff]
    %v5084 = vld [vmem:[%s5064 + $0x98] sm:$0xff]
    %v5085 = vld [vmem:[%s5064 + $0xa0] sm:$0xff]
    %v5086 = vld [vmem:[%s5064 + $0xa8] sm:$0xff]
    %v5087 = vld [vmem:[%s5064 + $0xb0] sm:$0xff]
    %v5088 = vld [vmem:[%s5064 + $0xb8] sm:$0xff]
    %v5089 = vld [vmem:[%s5064 + $0xc0] sm:$0xff]
    %v5090 = vld [vmem:[%s5064 + $0xc8] sm:$0xff]
    %v5091 = vld [vmem:[%s5064 + $0xd0] sm:$0xff]
    %v5092 = vld [vmem:[%s5064 + $0xd8] sm:$0xff]
    %v5093 = vld [vmem:[%s5064 + $0xe0] sm:$0xff]
    %v5094 = vld [vmem:[%s5064 + $0xe8] sm:$0xff]
    %v5095 = vld [vmem:[%s5064 + $0xf0] sm:$0xff]
    %v5096 = vld [vmem:[%s5064 + $0xf8] sm:$0xff]
    %v5097 = vld [vmem:[%s5064 + $0x100] sm:$0xff]
    %v5098 = vld [vmem:[%s5064 + $0x108] sm:$0xff]
    %v5099 = vld [vmem:[%s5064 + $0x110] sm:$0xff]
    %v5100 = vld [vmem:[%s5064 + $0x118] sm:$0xff]
    %v5101 = vld [vmem:[%s5064 + $0x120] sm:$0xff]
    %v5102 = vld [vmem:[%s5064 + $0x128] sm:$0xff]
    %v5103 = vld [vmem:[%s5064 + $0x130] sm:$0xff]
    %v5104 = vld [vmem:[%s5064 + $0x138] sm:$0xff]
    %v5105 = vld [vmem:[%s5064 + $0x140] sm:$0xff]
    %v5106 = vld [vmem:[%s5064 + $0x148] sm:$0xff]
    %v5107 = vld [vmem:[%s5064 + $0x150] sm:$0xff]
    %v5108 = vld [vmem:[%s5064 + $0x158] sm:$0xff]
    %v5109 = vld [vmem:[%s5064 + $0x160] sm:$0xff]
    %v5110 = vld [vmem:[%s5064 + $0x168] sm:$0xff]
    %v5111 = vld [vmem:[%s5064 + $0x170] sm:$0xff]
    %v5112 = vld [vmem:[%s5064 + $0x178] sm:$0xff]
    %v5113 = vld [vmem:[%s5064 + $0x180] sm:$0xff]
    %v5114 = vld [vmem:[%s5064 + $0x188] sm:$0xff]
    %v5115 = vld [vmem:[%s5064 + $0x190] sm:$0xff]
    %v5116 = vld [vmem:[%s5064 + $0x198] sm:$0xff]
    %v5117 = vld [vmem:[%s5064 + $0x1a0] sm:$0xff]
    %v5118 = vld [vmem:[%s5064 + $0x1a8] sm:$0xff]
    %v5119 = vld [vmem:[%s5064 + $0x1b0] sm:$0xff]
    %v5120 = vld [vmem:[%s5064 + $0x1b8] sm:$0xff]
    %v5121 = vld [vmem:[%s5064 + $0x1c0] sm:$0xff]
    %v5122 = vld [vmem:[%s5064 + $0x1c8] sm:$0xff]
    %v5123 = vld [vmem:[%s5064 + $0x1d0] sm:$0xff]
    %v5124 = vld [vmem:[%s5064 + $0x1d8] sm:$0xff]
    %v5125 = vld [vmem:[%s5064 + $0x1e0] sm:$0xff]
    %v5126 = vld [vmem:[%s5064 + $0x1e8] sm:$0xff]
    %v5127 = vld [vmem:[%s5064 + $0x1f0] sm:$0xff]
    %v5128 = vld [vmem:[%s5064 + $0x1f8] sm:$0xff]
    %s5129 = scalar_lea.vmem %s8, 8
    %v5130 = vld [vmem:[%s5129] sm:$0xf]
    %v5132 = vlaneseq
    %v5133 = vshrl.u32 %v5132, 7
    %v5134 = vsub.s32 0, %v5133
    %v5135 = vrot.slane %v5130, %v5134
    %v5136 = vlaneseq
    %v5137 = vshrl.u32 %v5136, 7
    %v5138 = vsub.s32 1, %v5137
    %v5139 = vrot.slane %v5130, %v5138
    %v5140 = vlaneseq
    %v5141 = vshrl.u32 %v5140, 7
    %v5142 = vsub.s32 2, %v5141
    %v5143 = vrot.slane %v5130, %v5142
    %v5144 = vlaneseq
    %v5145 = vshrl.u32 %v5144, 7
    %v5146 = vsub.s32 3, %v5145
    %v5147 = vrot.slane %v5130, %v5146
    %5152 = vmatprep.subr.mxu0 %v5066
    %5153 = vmatpush1.msra.mxu0 %v5065
    %5154 = vmatprep.subr.mxu0 %v5070
    %5155 = vmatpush1.msra.mxu0 %v5069
    %5156 = vmatprep.subr.mxu0 %v5074
    %5157 = vmatpush1.msra.mxu0 %v5073
    %5158 = vmatprep.subr.mxu0 %v5078
    %5159 = vmatpush1.msra.mxu0 %v5077
    %5160 = vmatprep.subr.mxu0 %v5082
    %5161 = vmatpush1.msra.mxu0 %v5081
    %5162 = vmatprep.subr.mxu0 %v5086
    %5163 = vmatpush1.msra.mxu0 %v5085
    %5164 = vmatprep.subr.mxu0 %v5090
    %5165 = vmatpush1.msra.mxu0 %v5089
    %5166 = vmatprep.subr.mxu0 %v5094
    %5167 = vmatpush1.msra.mxu0 %v5093
    %5168 = vmatprep.subr.mxu0 %v5098
    %5169 = vmatpush1.msra.mxu0 %v5097
    %5170 = vmatprep.subr.mxu0 %v5102
    %5171 = vmatpush1.msra.mxu0 %v5101
    %5172 = vmatprep.subr.mxu0 %v5106
    %5173 = vmatpush1.msra.mxu0 %v5105
    %5174 = vmatprep.subr.mxu0 %v5110
    %5175 = vmatpush1.msra.mxu0 %v5109
    %5176 = vmatprep.subr.mxu0 %v5114
    %5177 = vmatpush1.msra.mxu0 %v5113
    %5178 = vmatprep.subr.mxu0 %v5118
    %5179 = vmatpush1.msra.mxu0 %v5117
    %5180 = vmatprep.subr.mxu0 %v5122
    %5181 = vmatpush1.msra.mxu0 %v5121
    %5182 = vmatprep.subr.mxu0 %v5126
    %5183 = vmatpush1.msra.mxu0 %v5125
    %5184 = vmatprep.subr.mxu0 0.0
    %5185 = vmatpush1.msra.mxu0 0.0
    %5186 = vmatprep.subr.mxu0 0.0
    %5187 = vmatpush1.msra.mxu0 0.0
    %5188 = vmatprep.subr.mxu0 0.0
    %5189 = vmatpush1.msra.mxu0 0.0
    %5190 = vmatprep.subr.mxu0 0.0
    %5191 = vmatpush1.msra.mxu0 0.0
    %5192 = vmatprep.subr.mxu0 0.0
    %5193 = vmatpush1.msra.mxu0 0.0
    %5194 = vmatprep.subr.mxu0 0.0
    %5195 = vmatpush1.msra.mxu0 0.0
    %5196 = vmatprep.subr.mxu0 0.0
    %5197 = vmatpush1.msra.mxu0 0.0
    %5198 = vmatprep.subr.mxu0 0.0
    %5199 = vmatpush1.msra.mxu0 0.0
    %5200 = vmatprep.subr.mxu0 0.0
    %5201 = vmatpush1.msra.mxu0 0.0
    %5202 = vmatprep.subr.mxu0 0.0
    %5203 = vmatpush1.msra.mxu0 0.0
    %5204 = vmatprep.subr.mxu0 0.0
    %5205 = vmatpush1.msra.mxu0 0.0
    %5206 = vmatprep.subr.mxu0 0.0
    %5207 = vmatpush1.msra.mxu0 0.0
    %5208 = vmatprep.subr.mxu0 0.0
    %5209 = vmatpush1.msra.mxu0 0.0
    %5210 = vmatprep.subr.mxu0 0.0
    %5211 = vmatpush1.msra.mxu0 0.0
    %5212 = vmatprep.subr.mxu0 0.0
    %5213 = vmatpush1.msra.mxu0 0.0
    %5214 = vmatprep.subr.mxu0 0.0
    %5215 = vmatpush1.msra.mxu0 0.0
    %5216 = vmatprep.mubr.f32.mxu0 0.0
    %5217 = vmatmul.mubr.f32.gmra.mrb[0].mxu0 %v5061
    %v5218 = vpop.f32.mrb[0].mxu0
    %v5219 = vadd.f32 %v5135, %v5218
    %v5220 = vpop.f32.mrb[0].mxu0
    %v5221 = vadd.f32 %v5139, %v5220
    %5222 = vmatprep.mubr.f32.mxu0 0.0
    %5223 = vmatmul.mubr.f32.gmra.mrb[0].mxu0 %v5062
    %v5224 = vpop.f32.mrb[0].mxu0
    %v5225 = vadd.f32 %v5135, %v5224
    %v5226 = vpop.f32.mrb[0].mxu0
    %v5227 = vadd.f32 %v5139, %v5226
    %5228 = vmatprep.mubr.f32.mxu0 0.0
    %5229 = vmatmul.mubr.f32.gmra.mrb[0].mxu0 %v5063
    %v5230 = vpop.f32.mrb[0].mxu0
    %v5231 = vadd.f32 %v5135, %v5230
    %v5232 = vpop.f32.mrb[0].mxu0
    %v5233 = vadd.f32 %v5139, %v5232
    %5234 = vdwg.mxu0
    %5235 = vmatprep.subr.mxu0 %v5068
    %5236 = vmatpush1.msra.mxu0 %v5067
    %5237 = vmatprep.subr.mxu0 %v5072
    %5238 = vmatpush1.msra.mxu0 %v5071
    %5239 = vmatprep.subr.mxu0 %v5076
    %5240 = vmatpush1.msra.mxu0 %v5075
    %5241 = vmatprep.subr.mxu0 %v5080
    %5242 = vmatpush1.msra.mxu0 %v5079
    %5243 = vmatprep.subr.mxu0 %v5084
    %5244 = vmatpush1.msra.mxu0 %v5083
    %5245 = vmatprep.subr.mxu0 %v5088
    %5246 = vmatpush1.msra.mxu0 %v5087
    %5247 = vmatprep.subr.mxu0 %v5092
    %5248 = vmatpush1.msra.mxu0 %v5091
    %5249 = vmatprep.subr.mxu0 %v5096
    %5250 = vmatpush1.msra.mxu0 %v5095
    %5251 = vmatprep.subr.mxu0 %v5100
    %5252 = vmatpush1.msra.mxu0 %v5099
    %5253 = vmatprep.subr.mxu0 %v5104
    %5254 = vmatpush1.msra.mxu0 %v5103
    %5255 = vmatprep.subr.mxu0 %v5108
    %5256 = vmatpush1.msra.mxu0 %v5107
    %5257 = vmatprep.subr.mxu0 %v5112
    %5258 = vmatpush1.msra.mxu0 %v5111
    %5259 = vmatprep.subr.mxu0 %v5116
    %5260 = vmatpush1.msra.mxu0 %v5115
    %5261 = vmatprep.subr.mxu0 %v5120
    %5262 = vmatpush1.msra.mxu0 %v5119
    %5263 = vmatprep.subr.mxu0 %v5124
    %5264 = vmatpush1.msra.mxu0 %v5123
    %5265 = vmatprep.subr.mxu0 %v5128
    %5266 = vmatpush1.msra.mxu0 %v5127
    %5267 = vmatprep.subr.mxu0 0.0
    %5268 = vmatpush1.msra.mxu0 0.0
    %5269 = vmatprep.subr.mxu0 0.0
    %5270 = vmatpush1.msra.mxu0 0.0
    %5271 = vmatprep.subr.mxu0 0.0
    %5272 = vmatpush1.msra.mxu0 0.0
    %5273 = vmatprep.subr.mxu0 0.0
    %5274 = vmatpush1.msra.mxu0 0.0
    %5275 = vmatprep.subr.mxu0 0.0
    %5276 = vmatpush1.msra.mxu0 0.0
    %5277 = vmatprep.subr.mxu0 0.0
    %5278 = vmatpush1.msra.mxu0 0.0
    %5279 = vmatprep.subr.mxu0 0.0
    %5280 = vmatpush1.msra.mxu0 0.0
    %5281 = vmatprep.subr.mxu0 0.0
    %5282 = vmatpush1.msra.mxu0 0.0
    %5283 = vmatprep.subr.mxu0 0.0
    %5284 = vmatpush1.msra.mxu0 0.0
    %5285 = vmatprep.subr.mxu0 0.0
    %5286 = vmatpush1.msra.mxu0 0.0
    %5287 = vmatprep.subr.mxu0 0.0
    %5288 = vmatpush1.msra.mxu0 0.0
    %5289 = vmatprep.subr.mxu0 0.0
    %5290 = vmatpush1.msra.mxu0 0.0
    %5291 = vmatprep.subr.mxu0 0.0
    %5292 = vmatpush1.msra.mxu0 0.0
    %5293 = vmatprep.subr.mxu0 0.0
    %5294 = vmatpush1.msra.mxu0 0.0
    %5295 = vmatprep.subr.mxu0 0.0
    %5296 = vmatpush1.msra.mxu0 0.0
    %5297 = vmatprep.subr.mxu0 0.0
    %5298 = vmatpush1.msra.mxu0 0.0
    %5299 = vmatprep.mubr.f32.mxu0 0.0
    %5300 = vmatmul.mubr.f32.gmra.mrb[0].mxu0 %v5061
    %v5301 = vpop.f32.mrb[0].mxu0
    %v5302 = vadd.f32 %v5143, %v5301
    %v5303 = vpop.f32.mrb[0].mxu0
    %v5304 = vadd.f32 %v5147, %v5303
    %5305 = vmatprep.mubr.f32.mxu0 0.0
    %5306 = vmatmul.mubr.f32.gmra.mrb[0].mxu0 %v5062
    %v5307 = vpop.f32.mrb[0].mxu0
    %v5308 = vadd.f32 %v5143, %v5307
    %v5309 = vpop.f32.mrb[0].mxu0
    %v5310 = vadd.f32 %v5147, %v5309
    %5311 = vmatprep.mubr.f32.mxu0 0.0
    %5312 = vmatmul.mubr.f32.gmra.mrb[0].mxu0 %v5063
    %v5313 = vpop.f32.mrb[0].mxu0
    %v5314 = vadd.f32 %v5143, %v5313
    %v5315 = vpop.f32.mrb[0].mxu0
    %v5316 = vadd.f32 %v5147, %v5315
    %5317 = vdwg.mxu0
    %v5318 = vmax.f32 %v5219, 0.0
    %v5319 = vmax.f32 %v5221, 0.0
    %v5320 = vmax.f32 %v5302, 0.0
    %v5321 = vmax.f32 %v5304, 0.0
    %v5322 = vmax.f32 %v5225, 0.0
    %v5323 = vmax.f32 %v5227, 0.0
    %v5324 = vmax.f32 %v5308, 0.0
    %v5325 = vmax.f32 %v5310, 0.0
    %v5326 = vmax.f32 %v5231, 0.0
    %v5327 = vmax.f32 %v5233, 0.0
    %v5328 = vmax.f32 %v5314, 0.0
    %v5329 = vmax.f32 %v5316, 0.0
    %s5330 = scalar_lea.vmem [#allocation2], 1024
    %v5331 = vld [vmem:[%s5330] sm:$0xff]
    %v5332 = vld [vmem:[%s5330 + $0x8] sm:$0xff]
    %v5333 = vld [vmem:[%s5330 + $0x10] sm:$0xff]
    %v5334 = vld [vmem:[%s5330 + $0x18] sm:$0xff]
    %v5335 = vld [vmem:[%s5330 + $0x20] sm:$0xff]
    %v5336 = vld [vmem:[%s5330 + $0x28] sm:$0xff]
    %v5337 = vld [vmem:[%s5330 + $0x30] sm:$0xff]
    %v5338 = vld [vmem:[%s5330 + $0x38] sm:$0xff]
    %v5339 = vld [vmem:[%s5330 + $0x40] sm:$0xff]
    %v5340 = vld [vmem:[%s5330 + $0x48] sm:$0xff]
    %v5341 = vld [vmem:[%s5330 + $0x50] sm:$0xff]
    %v5342 = vld [vmem:[%s5330 + $0x58] sm:$0xff]
    %v5343 = vld [vmem:[%s5330 + $0x60] sm:$0xff]
    %v5344 = vld [vmem:[%s5330 + $0x68] sm:$0xff]
    %v5345 = vld [vmem:[%s5330 + $0x70] sm:$0xff]
    %v5346 = vld [vmem:[%s5330 + $0x78] sm:$0xff]
    %v5347 = vld [vmem:[%s5330 + $0x80] sm:$0xff]
    %v5348 = vld [vmem:[%s5330 + $0x88] sm:$0xff]
    %v5349 = vld [vmem:[%s5330 + $0x90] sm:$0xff]
    %v5350 = vld [vmem:[%s5330 + $0x98] sm:$0xff]
    %v5351 = vld [vmem:[%s5330 + $0xa0] sm:$0xff]
    %v5352 = vld [vmem:[%s5330 + $0xa8] sm:$0xff]
    %v5353 = vld [vmem:[%s5330 + $0xb0] sm:$0xff]
    %v5354 = vld [vmem:[%s5330 + $0xb8] sm:$0xff]
    %v5355 = vld [vmem:[%s5330 + $0xc0] sm:$0xff]
    %v5356 = vld [vmem:[%s5330 + $0xc8] sm:$0xff]
    %v5357 = vld [vmem:[%s5330 + $0xd0] sm:$0xff]
    %v5358 = vld [vmem:[%s5330 + $0xd8] sm:$0xff]
    %v5359 = vld [vmem:[%s5330 + $0xe0] sm:$0xff]
    %v5360 = vld [vmem:[%s5330 + $0xe8] sm:$0xff]
    %v5361 = vld [vmem:[%s5330 + $0xf0] sm:$0xff]
    %v5362 = vld [vmem:[%s5330 + $0xf8] sm:$0xff]
    %v5363 = vld [vmem:[%s5330 + $0x100] sm:$0xff]
    %v5364 = vld [vmem:[%s5330 + $0x108] sm:$0xff]
    %v5365 = vld [vmem:[%s5330 + $0x110] sm:$0xff]
    %v5366 = vld [vmem:[%s5330 + $0x118] sm:$0xff]
    %v5367 = vld [vmem:[%s5330 + $0x120] sm:$0xff]
    %v5368 = vld [vmem:[%s5330 + $0x128] sm:$0xff]
    %v5369 = vld [vmem:[%s5330 + $0x130] sm:$0xff]
    %v5370 = vld [vmem:[%s5330 + $0x138] sm:$0xff]
    %v5371 = vld [vmem:[%s5330 + $0x140] sm:$0xff]
    %v5372 = vld [vmem:[%s5330 + $0x148] sm:$0xff]
    %v5373 = vld [vmem:[%s5330 + $0x150] sm:$0xff]
    %v5374 = vld [vmem:[%s5330 + $0x158] sm:$0xff]
    %v5375 = vld [vmem:[%s5330 + $0x160] sm:$0xff]
    %v5376 = vld [vmem:[%s5330 + $0x168] sm:$0xff]
    %v5377 = vld [vmem:[%s5330 + $0x170] sm:$0xff]
    %v5378 = vld [vmem:[%s5330 + $0x178] sm:$0xff]
    %v5379 = vld [vmem:[%s5330 + $0x180] sm:$0xff]
    %v5380 = vld [vmem:[%s5330 + $0x188] sm:$0xff]
    %v5381 = vld [vmem:[%s5330 + $0x190] sm:$0xff]
    %v5382 = vld [vmem:[%s5330 + $0x198] sm:$0xff]
    %v5383 = vld [vmem:[%s5330 + $0x1a0] sm:$0xff]
    %v5384 = vld [vmem:[%s5330 + $0x1a8] sm:$0xff]
    %v5385 = vld [vmem:[%s5330 + $0x1b0] sm:$0xff]
    %v5386 = vld [vmem:[%s5330 + $0x1b8] sm:$0xff]
    %v5387 = vld [vmem:[%s5330 + $0x1c0] sm:$0xff]
    %v5388 = vld [vmem:[%s5330 + $0x1c8] sm:$0xff]
    %v5389 = vld [vmem:[%s5330 + $0x1d0] sm:$0xff]
    %v5390 = vld [vmem:[%s5330 + $0x1d8] sm:$0xff]
    %v5391 = vld [vmem:[%s5330 + $0x1e0] sm:$0xff]
    %v5392 = vld [vmem:[%s5330 + $0x1e8] sm:$0xff]
    %v5393 = vld [vmem:[%s5330 + $0x1f0] sm:$0xff]
    %v5394 = vld [vmem:[%s5330 + $0x1f8] sm:$0xff]
    %v5395 = vlaneseq
    %v5396 = vshrl.u32 %v5395, 7
    %v5397 = vsub.s32 3, %v5396
    %v5398 = vrot.slane %v3847, %v5397
    %5399 = vmatprep.subr.mxu0 0.0
    %5400 = vmatpush1.msra.mxu0 %v5331
    %5401 = vmatprep.subr.mxu0 0.0
    %5402 = vmatpush1.msra.mxu0 %v5332
    %5403 = vmatprep.subr.mxu0 0.0
    %5404 = vmatpush1.msra.mxu0 %v5333
    %5405 = vmatprep.subr.mxu0 0.0
    %5406 = vmatpush1.msra.mxu0 %v5334
    %5407 = vmatprep.subr.mxu0 0.0
    %5408 = vmatpush1.msra.mxu0 %v5335
    %5409 = vmatprep.subr.mxu0 0.0
    %5410 = vmatpush1.msra.mxu0 %v5336
    %5411 = vmatprep.subr.mxu0 0.0
    %5412 = vmatpush1.msra.mxu0 %v5337
    %5413 = vmatprep.subr.mxu0 0.0
    %5414 = vmatpush1.msra.mxu0 %v5338
    %5415 = vmatprep.subr.mxu0 0.0
    %5416 = vmatpush1.msra.mxu0 %v5339
    %5417 = vmatprep.subr.mxu0 0.0
    %5418 = vmatpush1.msra.mxu0 %v5340
    %5419 = vmatprep.subr.mxu0 0.0
    %5420 = vmatpush1.msra.mxu0 %v5341
    %5421 = vmatprep.subr.mxu0 0.0
    %5422 = vmatpush1.msra.mxu0 %v5342
    %5423 = vmatprep.subr.mxu0 0.0
    %5424 = vmatpush1.msra.mxu0 %v5343
    %5425 = vmatprep.subr.mxu0 0.0
    %5426 = vmatpush1.msra.mxu0 %v5344
    %5427 = vmatprep.subr.mxu0 0.0
    %5428 = vmatpush1.msra.mxu0 %v5345
    %5429 = vmatprep.subr.mxu0 0.0
    %5430 = vmatpush1.msra.mxu0 %v5346
    %5431 = vmatprep.subr.mxu0 0.0
    %5432 = vmatpush1.msra.mxu0 %v5347
    %5433 = vmatprep.subr.mxu0 0.0
    %5434 = vmatpush1.msra.mxu0 %v5348
    %5435 = vmatprep.subr.mxu0 0.0
    %5436 = vmatpush1.msra.mxu0 %v5349
    %5437 = vmatprep.subr.mxu0 0.0
    %5438 = vmatpush1.msra.mxu0 %v5350
    %5439 = vmatprep.subr.mxu0 0.0
    %5440 = vmatpush1.msra.mxu0 %v5351
    %5441 = vmatprep.subr.mxu0 0.0
    %5442 = vmatpush1.msra.mxu0 %v5352
    %5443 = vmatprep.subr.mxu0 0.0
    %5444 = vmatpush1.msra.mxu0 %v5353
    %5445 = vmatprep.subr.mxu0 0.0
    %5446 = vmatpush1.msra.mxu0 %v5354
    %5447 = vmatprep.subr.mxu0 0.0
    %5448 = vmatpush1.msra.mxu0 %v5355
    %5449 = vmatprep.subr.mxu0 0.0
    %5450 = vmatpush1.msra.mxu0 %v5356
    %5451 = vmatprep.subr.mxu0 0.0
    %5452 = vmatpush1.msra.mxu0 %v5357
    %5453 = vmatprep.subr.mxu0 0.0
    %5454 = vmatpush1.msra.mxu0 %v5358
    %5455 = vmatprep.subr.mxu0 0.0
    %5456 = vmatpush1.msra.mxu0 %v5359
    %5457 = vmatprep.subr.mxu0 0.0
    %5458 = vmatpush1.msra.mxu0 %v5360
    %5459 = vmatprep.subr.mxu0 0.0
    %5460 = vmatpush1.msra.mxu0 %v5361
    %5461 = vmatprep.subr.mxu0 0.0
    %5462 = vmatpush1.msra.mxu0 %v5362
    %5463 = vmatprep.mubr.f32.mxu0 %v5319
    %5464 = vmatmul.mubr.f32.gmra.mrb[0].mxu0 %v5318
    %v5465 = vpop.f32.mrb[0].mxu0
    %v5466 = vadd.f32 %v5398, %v5465
    %v5467 = vpop.f32.mrb[0].mxu0
    %5468 = vmatprep.mubr.f32.mxu0 %v5323
    %5469 = vmatmul.mubr.f32.gmra.mrb[0].mxu0 %v5322
    %v5470 = vpop.f32.mrb[0].mxu0
    %v5471 = vadd.f32 %v5398, %v5470
    %v5472 = vpop.f32.mrb[0].mxu0
    %5473 = vmatprep.mubr.f32.mxu0 %v5327
    %5474 = vmatmul.mubr.f32.gmra.mrb[0].mxu0 %v5326
    %v5475 = vpop.f32.mrb[0].mxu0
    %v5476 = vadd.f32 %v5398, %v5475
    %v5477 = vpop.f32.mrb[0].mxu0
    %5478 = vdwg.mxu0
    %5479 = vmatprep.subr.mxu0 0.0
    %5480 = vmatpush1.msra.mxu0 %v5363
    %5481 = vmatprep.subr.mxu0 0.0
    %5482 = vmatpush1.msra.mxu0 %v5364
    %5483 = vmatprep.subr.mxu0 0.0
    %5484 = vmatpush1.msra.mxu0 %v5365
    %5485 = vmatprep.subr.mxu0 0.0
    %5486 = vmatpush1.msra.mxu0 %v5366
    %5487 = vmatprep.subr.mxu0 0.0
    %5488 = vmatpush1.msra.mxu0 %v5367
    %5489 = vmatprep.subr.mxu0 0.0
    %5490 = vmatpush1.msra.mxu0 %v5368
    %5491 = vmatprep.subr.mxu0 0.0
    %5492 = vmatpush1.msra.mxu0 %v5369
    %5493 = vmatprep.subr.mxu0 0.0
    %5494 = vmatpush1.msra.mxu0 %v5370
    %5495 = vmatprep.subr.mxu0 0.0
    %5496 = vmatpush1.msra.mxu0 %v5371
    %5497 = vmatprep.subr.mxu0 0.0
    %5498 = vmatpush1.msra.mxu0 %v5372
    %5499 = vmatprep.subr.mxu0 0.0
    %5500 = vmatpush1.msra.mxu0 %v5373
    %5501 = vmatprep.subr.mxu0 0.0
    %5502 = vmatpush1.msra.mxu0 %v5374
    %5503 = vmatprep.subr.mxu0 0.0
    %5504 = vmatpush1.msra.mxu0 %v5375
    %5505 = vmatprep.subr.mxu0 0.0
    %5506 = vmatpush1.msra.mxu0 %v5376
    %5507 = vmatprep.subr.mxu0 0.0
    %5508 = vmatpush1.msra.mxu0 %v5377
    %5509 = vmatprep.subr.mxu0 0.0
    %5510 = vmatpush1.msra.mxu0 %v5378
    %5511 = vmatprep.subr.mxu0 0.0
    %5512 = vmatpush1.msra.mxu0 %v5379
    %5513 = vmatprep.subr.mxu0 0.0
    %5514 = vmatpush1.msra.mxu0 %v5380
    %5515 = vmatprep.subr.mxu0 0.0
    %5516 = vmatpush1.msra.mxu0 %v5381
    %5517 = vmatprep.subr.mxu0 0.0
    %5518 = vmatpush1.msra.mxu0 %v5382
    %5519 = vmatprep.subr.mxu0 0.0
    %5520 = vmatpush1.msra.mxu0 %v5383
    %5521 = vmatprep.subr.mxu0 0.0
    %5522 = vmatpush1.msra.mxu0 %v5384
    %5523 = vmatprep.subr.mxu0 0.0
    %5524 = vmatpush1.msra.mxu0 %v5385
    %5525 = vmatprep.subr.mxu0 0.0
    %5526 = vmatpush1.msra.mxu0 %v5386
    %5527 = vmatprep.subr.mxu0 0.0
    %5528 = vmatpush1.msra.mxu0 %v5387
    %5529 = vmatprep.subr.mxu0 0.0
    %5530 = vmatpush1.msra.mxu0 %v5388
    %5531 = vmatprep.subr.mxu0 0.0
    %5532 = vmatpush1.msra.mxu0 %v5389
    %5533 = vmatprep.subr.mxu0 0.0
    %5534 = vmatpush1.msra.mxu0 %v5390
    %5535 = vmatprep.subr.mxu0 0.0
    %5536 = vmatpush1.msra.mxu0 %v5391
    %5537 = vmatprep.subr.mxu0 0.0
    %5538 = vmatpush1.msra.mxu0 %v5392
    %5539 = vmatprep.subr.mxu0 0.0
    %5540 = vmatpush1.msra.mxu0 %v5393
    %5541 = vmatprep.subr.mxu0 0.0
    %5542 = vmatpush1.msra.mxu0 %v5394
    %5543 = vmatprep.mubr.f32.mxu0 %v5321
    %5544 = vmatmul.mubr.f32.gmra.mrb[0].mxu0 %v5320
    %v5545 = vpop.f32.mrb[0].mxu0
    %v5546 = vadd.f32 %v5466, %v5545
    %v5547 = vpop.f32.mrb[0].mxu0
    %5548 = vmatprep.mubr.f32.mxu0 %v5325
    %5549 = vmatmul.mubr.f32.gmra.mrb[0].mxu0 %v5324
    %v5550 = vpop.f32.mrb[0].mxu0
    %v5551 = vadd.f32 %v5471, %v5550
    %v5552 = vpop.f32.mrb[0].mxu0
    %5553 = vmatprep.mubr.f32.mxu0 %v5329
    %5554 = vmatmul.mubr.f32.gmra.mrb[0].mxu0 %v5328
    %v5555 = vpop.f32.mrb[0].mxu0
    %v5556 = vadd.f32 %v5476, %v5555
    %v5557 = vpop.f32.mrb[0].mxu0
    %5558 = vdwg.mxu0
    %v5559 = vadd.f32 %v5061, %v5546
    %v5560 = vadd.f32 %v5062, %v5551
    %v5561 = vadd.f32 %v5063, %v5556
    %5562 = vadd.xlane.f32.xlu0 %v5559
    %v5563 = vpop.xlane.xlu0 %5562
    %5564 = vadd.xlane.f32.xlu0 %v5560
    %v5565 = vpop.xlane.xlu0 %5564
    %v5566 = vsel %vm1490, %v5561, 0.0
    %5567 = vadd.xlane.f32.xlu0 %v5566
    %v5568 = vpop.xlane.xlu0 %5567
    %v5569 = vmul.f32 %v5563, %v1494
    %v5570 = vmul.f32 %v5565, %v1494
    %v5571 = vmul.f32 %v5568, %v1494
    %v5572 = vsub.f32 %v5559, %v5569
    %v5573 = vsub.f32 %v5560, %v5570
    %v5574 = vsub.f32 %v5561, %v5571
    %v5575 = vmul.f32 %v5572, %v5572
    %v5576 = vmul.f32 %v5573, %v5573
    %v5577 = vmul.f32 %v5574, %v5574
    %5578 = vadd.xlane.f32.xlu0 %v5575
    %v5579 = vpop.xlane.xlu0 %5578
    %5580 = vadd.xlane.f32.xlu0 %v5576
    %v5581 = vpop.xlane.xlu0 %5580
    %v5582 = vsel %vm1490, %v5577, 0.0
    %5583 = vadd.xlane.f32.xlu0 %v5582
    %v5584 = vpop.xlane.xlu0 %5583
    %v5585 = vmul.f32 %v5579, %v1494
    %v5586 = vmul.f32 %v5581, %v1494
    %v5587 = vmul.f32 %v5584, %v1494
    %v5588 = vadd.f32 %v5585, 1e-05
    %v5589 = vadd.f32 %v5586, 1e-05
    %v5590 = vadd.f32 %v5587, 1e-05
    %v5591 = vrsqrt.pop %v5588
    %v5592 = vrsqrt.pop %v5589
    %v5593 = vrsqrt.pop %v5590
    %v5594 = vmul.f32 %v5572, %v5591
    %v5595 = vmul.f32 %v5573, %v5592
    %v5596 = vmul.f32 %v5574, %v5593
    %v5597 = vlaneseq
    %v5598 = vshrl.u32 %v5597, 7
    %v5599 = vsub.s32 4, %v5598
    %v5600 = vrot.slane %v3847, %v5599
    %v5601 = vmul.f32 %v5594, %v5600
    %v5602 = vmul.f32 %v5595, %v5600
    %v5603 = vmul.f32 %v5596, %v5600
    %v5604 = vlaneseq
    %v5605 = vshrl.u32 %v5604, 7
    %v5606 = vsub.s32 5, %v5605
    %v5607 = vrot.slane %v3847, %v5606
    %v5608 = vadd.f32 %v5601, %v5607
    %v5609 = vadd.f32 %v5602, %v5607
    %v5610 = vadd.f32 %v5603, %v5607
    %v5611 = vld [vmem:[%s10] sm:$0xff]
    %v5612 = vld [vmem:[%s10 + $0x8] sm:$0xff]
    %v5613 = vld [vmem:[%s10 + $0x10] sm:$0xff]
    %v5614 = vld [vmem:[%s10 + $0x18] sm:$0xff]
    %v5615 = vld [vmem:[%s10 + $0x20] sm:$0xff]
    %v5616 = vld [vmem:[%s10 + $0x28] sm:$0xff]
    %v5617 = vld [vmem:[%s10 + $0x30] sm:$0xff]
    %v5618 = vld [vmem:[%s10 + $0x38] sm:$0xff]
    %v5619 = vld [vmem:[%s10 + $0x40] sm:$0xff]
    %v5620 = vld [vmem:[%s10 + $0x48] sm:$0xff]
    %v5621 = vld [vmem:[%s10 + $0x50] sm:$0xff]
    %v5622 = vld [vmem:[%s10 + $0x58] sm:$0xff]
    %v5623 = vld [vmem:[%s10 + $0x60] sm:$0xff]
    %v5624 = vld [vmem:[%s10 + $0x68] sm:$0xff]
    %v5625 = vld [vmem:[%s10 + $0x70] sm:$0xff]
    %v5626 = vld [vmem:[%s10 + $0x78] sm:$0xff]
    %v5627 = vld [vmem:[%s10 + $0x80] sm:$0x1]
    %v5628 = vlaneseq
    %v5629 = vshrl.u32 %v5628, 7
    %v5630 = vsub.s32 0, %v5629
    %v5631 = vrot.slane %v5627, %v5630
    %5632 = vmatprep.subr.mxu0 0.0
    %5633 = vmatpush1.msra.mxu0 %v5611
    %5634 = vmatprep.subr.mxu0 0.0
    %5635 = vmatpush1.msra.mxu0 %v5612
    %5636 = vmatprep.subr.mxu0 0.0
    %5637 = vmatpush1.msra.mxu0 %v5613
    %5638 = vmatprep.subr.mxu0 0.0
    %5639 = vmatpush1.msra.mxu0 %v5614
    %5640 = vmatprep.subr.mxu0 0.0
    %5641 = vmatpush1.msra.mxu0 %v5615
    %5642 = vmatprep.subr.mxu0 0.0
    %5643 = vmatpush1.msra.mxu0 %v5616
    %5644 = vmatprep.subr.mxu0 0.0
    %5645 = vmatpush1.msra.mxu0 %v5617
    %5646 = vmatprep.subr.mxu0 0.0
    %5647 = vmatpush1.msra.mxu0 %v5618
    %5648 = vmatprep.subr.mxu0 0.0
    %5649 = vmatpush1.msra.mxu0 %v5619
    %5650 = vmatprep.subr.mxu0 0.0
    %5651 = vmatpush1.msra.mxu0 %v5620
    %5652 = vmatprep.subr.mxu0 0.0
    %5653 = vmatpush1.msra.mxu0 %v5621
    %5654 = vmatprep.subr.mxu0 0.0
    %5655 = vmatpush1.msra.mxu0 %v5622
    %5656 = vmatprep.subr.mxu0 0.0
    %5657 = vmatpush1.msra.mxu0 %v5623
    %5658 = vmatprep.subr.mxu0 0.0
    %5659 = vmatpush1.msra.mxu0 %v5624
    %5660 = vmatprep.subr.mxu0 0.0
    %5661 = vmatpush1.msra.mxu0 %v5625
    %5662 = vmatprep.subr.mxu0 0.0
    %5663 = vmatpush1.msra.mxu0 %v5626
    %5664 = vmatprep.subr.mxu0 0.0
    %5665 = vmatpush1.msra.mxu0 0.0
    %5666 = vmatprep.subr.mxu0 0.0
    %5667 = vmatpush1.msra.mxu0 0.0
    %5668 = vmatprep.subr.mxu0 0.0
    %5669 = vmatpush1.msra.mxu0 0.0
    %5670 = vmatprep.subr.mxu0 0.0
    %5671 = vmatpush1.msra.mxu0 0.0
    %5672 = vmatprep.subr.mxu0 0.0
    %5673 = vmatpush1.msra.mxu0 0.0
    %5674 = vmatprep.subr.mxu0 0.0
    %5675 = vmatpush1.msra.mxu0 0.0
    %5676 = vmatprep.subr.mxu0 0.0
    %5677 = vmatpush1.msra.mxu0 0.0
    %5678 = vmatprep.subr.mxu0 0.0
    %5679 = vmatpush1.msra.mxu0 0.0
    %5680 = vmatprep.subr.mxu0 0.0
    %5681 = vmatpush1.msra.mxu0 0.0
    %5682 = vmatprep.subr.mxu0 0.0
    %5683 = vmatpush1.msra.mxu0 0.0
    %5684 = vmatprep.subr.mxu0 0.0
    %5685 = vmatpush1.msra.mxu0 0.0
    %5686 = vmatprep.subr.mxu0 0.0
    %5687 = vmatpush1.msra.mxu0 0.0
    %5688 = vmatprep.subr.mxu0 0.0
    %5689 = vmatpush1.msra.mxu0 0.0
    %5690 = vmatprep.subr.mxu0 0.0
    %5691 = vmatpush1.msra.mxu0 0.0
    %5692 = vmatprep.subr.mxu0 0.0
    %5693 = vmatpush1.msra.mxu0 0.0
    %5694 = vmatprep.subr.mxu0 0.0
    %5695 = vmatpush1.msra.mxu0 0.0
    %5696 = vmatprep.mubr.f32.mxu0 0.0
    %5697 = vmatmul.mubr.f32.gmra.mrb[0].mxu0 %v5608
    %v5698 = vpop.f32.mrb[0].mxu0
    %v5699 = vadd.f32 %v5631, %v5698
    %v5700 = vpop.f32.mrb[0].mxu0
    %5701 = vmatprep.mubr.f32.mxu0 0.0
    %5702 = vmatmul.mubr.f32.gmra.mrb[0].mxu0 %v5609
    %v5703 = vpop.f32.mrb[0].mxu0
    %v5704 = vadd.f32 %v5631, %v5703
    %v5705 = vpop.f32.mrb[0].mxu0
    %5706 = vmatprep.mubr.f32.mxu0 0.0
    %5707 = vmatmul.mubr.f32.gmra.mrb[0].mxu0 %v5610
    %v5708 = vpop.f32.mrb[0].mxu0
    %v5709 = vadd.f32 %v5631, %v5708
    %v5710 = vpop.f32.mrb[0].mxu0
    %5711 = vdwg.mxu0
    %vm5712 = vcmask 15360
    %5713 = vst.msk [vmem:[%s11] sm:$0xff] %vm5712, %v5699
    %s5714 = scalar_lea.vmem %s11, 8
    %vm5715 = vcmask 15361
    %5716 = vst.msk [vmem:[%s5714 - $0x1] sm:$0xfe] %vm5715, %v5704
    %vm5717 = vcmask 8192
    %5718 = vst.msk [vmem:[%s5714 + $0x7] sm:$0x1] %vm5717, %v5709
    // Predicated region
    $region50: #{transformer_linear_forward.1} parent=1 // pred_check
      _
    $region51: #{transformer_linear_forward.1} parent=1 // pred_check_branch
      %5720 = sbr.rel (0) target = $region53
    $region52: #{transformer_linear_forward.1} parent=1 // pred_region
      _
    $region53: #{transformer_linear_forward.1} parent=1 // pred_fallthru
      _
    // Predicated region
    $region54: #{transformer_linear_forward.1} parent=1 // pred_check
      _
    $region55: #{transformer_linear_forward.1} parent=1 // pred_check_branch
      %5722 = sbr.rel (0) target = $region57
    $region56: #{transformer_linear_forward.1} parent=1 // pred_region
      _
    $region57: #{transformer_linear_forward.1} parent=1 // pred_fallthru
      _
    %5723 = vsyncpa [#allocation3], 1

</llo_original>
